<compile_context>
chip_gen: v7x
topology: tpu7x:2x2x1
jax: 0.10.0
libtpu: 0.0.40
codegen_flags: <defaults>
</compile_context>

<pallas_src>
import functools
import math

import numpy as np
import jax
import jax.numpy as jnp
from jax.experimental import pallas as pl
from jax.experimental.pallas import tpu as pltpu


# ----------------------------- fused kernel -----------------------------

def _fused_transformer_kernel(x_ref, yemb_ref, yid_ref,
                              fcw_ref, fcbp_ref,
                              attw_ref, attb_ref,
                              fw1_ref, fw2_ref, fb_ref,
                              hw_ref, hb_ref,
                              o_ref,
                              *, n_layer, n_head, model_dim, pad_id):
    D = model_dim
    hd = D // n_head
    scale = 1.0 / math.sqrt(D)          # reference: softmax(score / sqrt(model_dim))
    f32 = jnp.float32

    def layer_norm(y, g, b):
        mean = jnp.mean(y, axis=-1, keepdims=True)
        var = jnp.mean(jnp.square(y - mean), axis=-1, keepdims=True)
        return (y - mean) * jax.lax.rsqrt(var + 1e-5) * g + b

    def mha_ln(idx, x_q, x_kv, add_mask, self_attn):
        """MultiHead (projections -> per-head softmax attention -> out projection)
        followed by the residual-with-query + LayerNorm of the surrounding block."""
        w = attw_ref[idx]                # (D, 4D) = [Wq | Wk | Wv | Wo]
        b = attb_ref[idx]                # (2, 3D): row0=[bq|bk|bv], row1=[bo|ln_g|ln_b]
        wo = w[:, 3 * D:]                # (D, D)
        bo = b[1:2, 0:D]
        ln_g = b[1:2, D:2 * D]
        ln_b = b[1:2, 2 * D:3 * D]

        if self_attn:
            # single fused q|k|v projection (one matmul)
            qkv = jnp.dot(x_q, w[:, :3 * D], preferred_element_type=f32) + b[0:1, :]
            q, k, v = qkv[:, :D], qkv[:, D:2 * D], qkv[:, 2 * D:3 * D]
        else:
            q = jnp.dot(x_q, w[:, :D], preferred_element_type=f32) + b[0:1, :D]
            kv = jnp.dot(x_kv, w[:, D:3 * D], preferred_element_type=f32) + b[0:1, D:3 * D]
            k, v = kv[:, :D], kv[:, D:]

        # per-head attention; output projection accumulated per head (no lane concat)
        o = bo
        for h in range(n_head):          # static, tiny head count
            qh = q[:, h * hd:(h + 1) * hd]
            kh = k[:, h * hd:(h + 1) * hd]
            vh = v[:, h * hd:(h + 1) * hd]
            s = jax.lax.dot_general(qh, kh, (((1,), (1,)), ((), ())),
                                    preferred_element_type=f32)       # (Lq, Lk)
            if add_mask is not None:
                s = s + add_mask          # score += mask * -1e9   (reference order)
            s = s * scale                 # then divide by sqrt(model_dim)
            s = s - jnp.max(s, axis=-1, keepdims=True)
            p = jnp.exp(s)
            p = p / jnp.sum(p, axis=-1, keepdims=True)
            ctx_h = jnp.dot(p, vh, preferred_element_type=f32)        # (Lq, hd)
            o = o + jnp.dot(ctx_h, wo[h * hd:(h + 1) * hd, :],
                            preferred_element_type=f32)               # (Lq, D)

        return layer_norm(o + x_q, ln_g, ln_b)

    def ffn_ln(idx, x):
        """relu(x@W1+b1)@W2+b2, residual add, LayerNorm."""
        w1 = fw1_ref[idx]                # (D, 4D)
        w2 = fw2_ref[idx]                # (4D, D)
        b = fb_ref[idx]                  # (2, 4D): row0=b1, row1=[b2|ln_g|ln_b|0..]
        h = jnp.maximum(jnp.dot(x, w1, preferred_element_type=f32) + b[0:1, :], 0.0)
        ff = jnp.dot(h, w2, preferred_element_type=f32) + b[1:2, 0:D]
        return layer_norm(ff + x, b[1:2, D:2 * D], b[1:2, 2 * D:3 * D])

    # ---- image-patch embedding: x @ fc_w + (fc_b + pos_embed) ----
    x_embed = jnp.dot(x_ref[...], fcw_ref[...], preferred_element_type=f32) + fcbp_ref[...]

    # ---- decoder look-ahead / padding mask, built on-chip from iota + token ids ----
    Ly = yemb_ref.shape[0]
    row = jax.lax.broadcasted_iota(jnp.int32, (Ly, Ly), 0)
    col = jax.lax.broadcasted_iota(jnp.int32, (Ly, Ly), 1)
    look_ahead = (col > row).astype(f32)                       # triu(ones, k=1)
    pad_f = (yid_ref[...] == pad_id).astype(f32)               # (1, Ly) key padding
    # where(pad, 1, look_ahead) == max(look_ahead, pad) since both are {0,1}
    trg_add_mask = jnp.maximum(look_ahead, pad_f) * (-1e9)     # (Ly, Ly)

    # ---- encoder: every layer sees the ORIGINAL x_embed; only the last layer's
    #      output is kept (faithful to the reference Encoder.forward) ----
    enc = x_embed
    for l in range(n_layer):
        a = mha_ln(l, x_embed, x_embed, None, self_attn=True)
        enc = ffn_ln(l, a)

    # ---- decoder ----
    h = yemb_ref[...]                                          # (Ly, D)
    for l in range(n_layer):
        self_idx = n_layer + 2 * l
        cross_idx = n_layer + 2 * l + 1
        ffn_idx = n_layer + l
        q = mha_ln(self_idx, h, h, trg_add_mask, self_attn=True)     # + DecoderBlock.norm
        c = mha_ln(cross_idx, q, enc, None, self_attn=False)         # cross-attn + norm1
        h = ffn_ln(ffn_idx, c)                                        # FFN + norm2

    # ---- head: fc_out1 -> ReLU -> fc_out2 (vocab padded to 128 lanes) ----
    hw = hw_ref[...]                                           # (D, D+Vp)
    hb = hb_ref[...]                                           # (1, D+Vp)
    t = jnp.maximum(jnp.dot(h, hw[:, :D], preferred_element_type=f32) + hb[:, :D], 0.0)
    o_ref[...] = jnp.dot(t, hw[:, D:], preferred_element_type=f32) + hb[:, D:]


# ----------------------------- wrapper -----------------------------

def transformer_forward(params, x, y, cfg):
    B, Lx, F = x.shape
    Ly = cfg["y_max_len"]
    D = cfg["model_dim"]
    nL = cfg["n_layer"]
    nA = 3 * nL                      # attention blocks: enc self / dec self / dec cross
    nF = 2 * nL                      # FFN blocks: encoder + decoder
    Vp = params["head_w"].shape[1] - D

    # TODO(synk): the token-embedding gather stays in XLA; a DMA-gather Pallas kernel
    # is overkill for a (B, 8) lookup.
    y_embed = (jnp.take(params["embed_table"], y, axis=0) + params["pe"]).astype(jnp.float32)
    y_ids = y.astype(jnp.int32).reshape(B, 1, Ly)

    kernel = functools.partial(
        _fused_transformer_kernel,
        n_layer=nL, n_head=cfg["n_head"], model_dim=D, pad_id=cfg["padding_idx"])

    out = pl.pallas_call(
        kernel,
        out_shape=jax.ShapeDtypeStruct((B, Ly, Vp), jnp.float32),
        grid=(B,),
        in_specs=[
            pl.BlockSpec((None, Lx, F), lambda b: (b, 0, 0)),       # image patches
            pl.BlockSpec((None, Ly, D), lambda b: (b, 0, 0)),       # token embeddings
            pl.BlockSpec((None, 1, Ly), lambda b: (b, 0, 0)),       # token ids (mask gen)
            pl.BlockSpec((F, D), lambda b: (0, 0)),                 # fc weight
            pl.BlockSpec((Lx, D), lambda b: (0, 0)),                # fc bias + pos_embed
            pl.BlockSpec((nA, D, 4 * D), lambda b: (0, 0, 0)),      # attn [Wq|Wk|Wv|Wo]
            pl.BlockSpec((nA, 2, 3 * D), lambda b: (0, 0, 0)),      # attn biases + LN
            pl.BlockSpec((nF, D, 4 * D), lambda b: (0, 0, 0)),      # FFN W1
            pl.BlockSpec((nF, 4 * D, D), lambda b: (0, 0, 0)),      # FFN W2
            pl.BlockSpec((nF, 2, 4 * D), lambda b: (0, 0, 0)),      # FFN biases + LN
            pl.BlockSpec((D, D + Vp), lambda b: (0, 0)),            # head [W1|W2pad]
            pl.BlockSpec((1, D + Vp), lambda b: (0, 0)),            # head [b1|b2pad]
        ],
        out_specs=pl.BlockSpec((None, Ly, Vp), lambda b: (b, 0, 0)),
        compiler_params=pltpu.CompilerParams(dimension_semantics=("parallel",)),
    )(x, y_embed, y_ids,
      params["fc_w"], params["fc_b_pos"],
      params["att_w"], params["att_b"],
      params["ffn_w1"], params["ffn_w2"], params["ffn_b"],
      params["head_w"], params["head_b"])
    return out[:, :, :cfg["n_vocab"]]


# ----------------------------- parameter init (pre-packed) -----------------------------

def init_params(key, cfg):
    D = cfg["model_dim"]
    V = cfg["n_vocab"]
    ff = 4 * D
    Vp = ((V + 127) // 128) * 128
    nL = cfg["n_layer"]
    keys = iter(jax.random.split(key, 512))

    def lin(i, o):
        w = jax.random.normal(next(keys), (i, o), jnp.float32) / math.sqrt(i)
        b = jax.random.normal(next(keys), (o,), jnp.float32) * 0.01
        return w, b

    ones = jnp.ones((D,), jnp.float32)
    zeros = jnp.zeros((D,), jnp.float32)

    def attn_pack():
        wq, bq = lin(D, D)
        wk, bk = lin(D, D)
        wv, bv = lin(D, D)
        wo, bo = lin(D, D)
        w = jnp.concatenate([wq, wk, wv, wo], axis=1)                     # (D, 4D)
        b = jnp.stack([jnp.concatenate([bq, bk, bv]),
                       jnp.concatenate([bo, ones, zeros])])               # (2, 3D)
        return w, b

    def ffn_pack():
        w1, b1 = lin(D, ff)
        w2, b2 = lin(ff, D)
        row1 = jnp.concatenate([b2, ones, zeros,
                                jnp.zeros((ff - 3 * D,), jnp.float32)])   # (4D,)
        return w1, w2, jnp.stack([b1, row1])                              # (2, 4D)

    att_w, att_b = [], []
    ffn_w1, ffn_w2, ffn_b = [], [], []
    for _ in range(nL):                      # encoder layers
        w, b = attn_pack(); att_w.append(w); att_b.append(b)
        w1, w2, fb = ffn_pack(); ffn_w1.append(w1); ffn_w2.append(w2); ffn_b.append(fb)
    for _ in range(nL):                      # decoder layers: self-attn, cross-attn, FFN
        for _ in range(2):
            w, b = attn_pack(); att_w.append(w); att_b.append(b)
        w1, w2, fb = ffn_pack(); ffn_w1.append(w1); ffn_w2.append(w2); ffn_b.append(fb)

    fc_w, fc_b = lin(144, D)
    pos_embed = jax.random.normal(next(keys), (cfg["x_max_len"], D), jnp.float32) * 0.02

    hw1, hb1 = lin(D, D)
    hw2, hb2 = lin(D, V)
    head_w = jnp.concatenate(
        [hw1, jnp.zeros((D, Vp), jnp.float32).at[:, :V].set(hw2)], axis=1)    # (D, D+Vp)
    head_b = jnp.concatenate(
        [hb1, jnp.zeros((Vp,), jnp.float32).at[:V].set(hb2)])[None, :]        # (1, D+Vp)

    embed_table = jax.random.normal(next(keys), (V, D), jnp.float32)

    # sinusoidal positional encoding exactly as PositionEmbedding.__init__
    pos = np.arange(cfg["y_max_len"])[:, None].astype(np.float64)
    pe = pos / np.power(10000, 2.0 * np.arange(D)[None, :] / D)
    pe[:, 0::2] = np.sin(pe[:, 0::2])
    pe[:, 1::2] = np.cos(pe[:, 1::2])
    pe = jnp.asarray(pe[None, :, :], jnp.float32)

    return dict(
        fc_w=fc_w, fc_b_pos=fc_b[None, :] + pos_embed,
        embed_table=embed_table, pe=pe,
        att_w=jnp.stack(att_w), att_b=jnp.stack(att_b),
        ffn_w1=jnp.stack(ffn_w1), ffn_w2=jnp.stack(ffn_w2), ffn_b=jnp.stack(ffn_b),
        head_w=head_w, head_b=head_b,
    )


# ----------------------------- main -----------------------------

if __name__ == "__main__":
    cfg = dict(model_dim=32, x_max_len=8, y_max_len=8, n_layer=2, n_head=4,
               n_vocab=50, padding_idx=0)
    key = jax.random.PRNGKey(0)
    kp, kx, ky = jax.random.split(key, 3)
    params = init_params(kp, cfg)

    B = 2
    x = jax.random.normal(kx, (B, cfg["x_max_len"], 144), jnp.float32)
    y = jax.random.randint(ky, (B, cfg["y_max_len"]), 0, cfg["n_vocab"])

    fwd = jax.jit(functools.partial(transformer_forward, cfg=cfg))
    out = jax.block_until_ready(fwd(params, x, y))
    assert out.shape == (B, cfg["y_max_len"], cfg["n_vocab"]), out.shape
    assert out.dtype == jnp.float32
    assert bool(jnp.all(jnp.isfinite(out)))
    print("KERNEL_OK")
</pallas_src>

<mosaic_0001>
module attributes {stable_mosaic.version = 11 : i64} {
  func.func @_fused_transformer_kernel(%arg0: i32, %arg1: memref<1x8x144xf32, #tpu.memory_space<vmem>>, %arg2: memref<1x8x32xf32, #tpu.memory_space<vmem>>, %arg3: memref<1x1x8xi32, #tpu.memory_space<vmem>>, %arg4: memref<144x32xf32, #tpu.memory_space<vmem>>, %arg5: memref<8x32xf32, #tpu.memory_space<vmem>>, %arg6: memref<6x32x128xf32, #tpu.memory_space<vmem>>, %arg7: memref<6x2x96xf32, #tpu.memory_space<vmem>>, %arg8: memref<4x32x128xf32, #tpu.memory_space<vmem>>, %arg9: memref<4x128x32xf32, #tpu.memory_space<vmem>>, %arg10: memref<4x2x128xf32, #tpu.memory_space<vmem>>, %arg11: memref<32x160xf32, #tpu.memory_space<vmem>>, %arg12: memref<1x160xf32, #tpu.memory_space<vmem>>, %arg13: memref<1x8x128xf32, #tpu.memory_space<vmem>>) attributes {dimension_semantics = [#tpu.dimension_semantics<parallel>], iteration_bounds = array<i64: 2>, scalar_prefetch = 0 : i64, scratch_operands = 0 : i64, tpu.core_type = #tpu.core_type<tc>, window_params = [{transform_indices = @transform_0, window_bounds = array<i64: 1, 8, 144>}, {transform_indices = @transform_1, window_bounds = array<i64: 1, 8, 32>}, {transform_indices = @transform_2, window_bounds = array<i64: 1, 1, 8>}, {pipeline_mode = #tpu.pipeline_mode<synchronous>, transform_indices = @transform_3, window_bounds = array<i64: 144, 32>}, {pipeline_mode = #tpu.pipeline_mode<synchronous>, transform_indices = @transform_4, window_bounds = array<i64: 8, 32>}, {pipeline_mode = #tpu.pipeline_mode<synchronous>, transform_indices = @transform_5, window_bounds = array<i64: 6, 32, 128>}, {pipeline_mode = #tpu.pipeline_mode<synchronous>, transform_indices = @transform_6, window_bounds = array<i64: 6, 2, 96>}, {pipeline_mode = #tpu.pipeline_mode<synchronous>, transform_indices = @transform_7, window_bounds = array<i64: 4, 32, 128>}, {pipeline_mode = #tpu.pipeline_mode<synchronous>, transform_indices = @transform_8, window_bounds = array<i64: 4, 128, 32>}, {pipeline_mode = #tpu.pipeline_mode<synchronous>, transform_indices = @transform_9, window_bounds = array<i64: 4, 2, 128>}, {pipeline_mode = #tpu.pipeline_mode<synchronous>, transform_indices = @transform_10, window_bounds = array<i64: 32, 160>}, {pipeline_mode = #tpu.pipeline_mode<synchronous>, transform_indices = @transform_11, window_bounds = array<i64: 1, 160>}, {transform_indices = @transform_12, window_bounds = array<i64: 1, 8, 128>}]} {
    %c0 = arith.constant 0 : index
    %c0_0 = arith.constant 0 : index
    %c0_1 = arith.constant 0 : index
    %0 = vector.load %arg1[%c0, %c0_0, %c0_1] : memref<1x8x144xf32, #tpu.memory_space<vmem>>, vector<1x8x144xf32>
    %1 = vector.shape_cast %0 : vector<1x8x144xf32> to vector<8x144xf32>
    %c0_2 = arith.constant 0 : index
    %c0_3 = arith.constant 0 : index
    %2 = vector.load %arg4[%c0_2, %c0_3] : memref<144x32xf32, #tpu.memory_space<vmem>>, vector<144x32xf32>
    %cst = arith.constant dense<0.000000e+00> : vector<8x32xf32>
    %3 = tpu.matmul %1, %2, %cst {dimension_numbers = #tpu.dot_dimension_numbers<[1], [0], [0], [1], [0, 0, 1, 1], [], []>} : vector<8x144xf32>, vector<144x32xf32>, vector<8x32xf32> -> vector<8x32xf32>
    %c0_4 = arith.constant 0 : index
    %c0_5 = arith.constant 0 : index
    %4 = vector.load %arg5[%c0_4, %c0_5] : memref<8x32xf32, #tpu.memory_space<vmem>>, vector<8x32xf32>
    %5 = arith.addf %3, %4 : vector<8x32xf32>
    %6 = tpu.iota {dimensions = array<i32: 0>} : vector<8x8xi32>
    %7 = tpu.iota {dimensions = array<i32: 1>} : vector<8x8xi32>
    %8 = arith.cmpi sgt, %7, %6 : vector<8x8xi32>
    %9 = arith.extui %8 : vector<8x8xi1> to vector<8x8xi32>
    %10 = arith.sitofp %9 : vector<8x8xi32> to vector<8x8xf32>
    %c0_6 = arith.constant 0 : index
    %c0_7 = arith.constant 0 : index
    %c0_8 = arith.constant 0 : index
    %11 = vector.load %arg3[%c0_6, %c0_7, %c0_8] : memref<1x1x8xi32, #tpu.memory_space<vmem>>, vector<1x1x8xi32>
    %12 = vector.shape_cast %11 : vector<1x1x8xi32> to vector<1x8xi32>
    %c0_i32 = arith.constant 0 : i32
    %13 = vector.broadcast %c0_i32 : i32 to vector<1x8xi32>
    %14 = arith.cmpi eq, %12, %13 : vector<1x8xi32>
    %15 = arith.extui %14 : vector<1x8xi1> to vector<1x8xi32>
    %16 = arith.sitofp %15 : vector<1x8xi32> to vector<1x8xf32>
    %17 = vector.broadcast %16 : vector<1x8xf32> to vector<8x8xf32>
    %18 = arith.maximumf %10, %17 : vector<8x8xf32>
    %cst_9 = arith.constant -1.000000e+09 : f32
    %19 = vector.broadcast %cst_9 : f32 to vector<8x8xf32>
    %20 = arith.mulf %18, %19 : vector<8x8xf32>
    %c1 = arith.constant 1 : index
    %c0_10 = arith.constant 0 : index
    %c0_11 = arith.constant 0 : index
    %21 = vector.load %arg6[%c1, %c0_10, %c0_11] : memref<6x32x128xf32, #tpu.memory_space<vmem>>, vector<1x32x128xf32>
    %22 = vector.shape_cast %21 : vector<1x32x128xf32> to vector<32x128xf32>
    %c1_12 = arith.constant 1 : index
    %c0_13 = arith.constant 0 : index
    %c0_14 = arith.constant 0 : index
    %23 = vector.load %arg7[%c1_12, %c0_13, %c0_14] : memref<6x2x96xf32, #tpu.memory_space<vmem>>, vector<1x2x96xf32>
    %24 = vector.shape_cast %23 : vector<1x2x96xf32> to vector<2x96xf32>
    %25 = vector.extract_strided_slice %22 {offsets = [0, 96], sizes = [32, 32], strides = [1, 1]} : vector<32x128xf32> to vector<32x32xf32>
    %26 = vector.extract_strided_slice %24 {offsets = [1, 0], sizes = [1, 32], strides = [1, 1]} : vector<2x96xf32> to vector<1x32xf32>
    %27 = vector.extract_strided_slice %24 {offsets = [1, 32], sizes = [1, 32], strides = [1, 1]} : vector<2x96xf32> to vector<1x32xf32>
    %28 = vector.extract_strided_slice %24 {offsets = [1, 64], sizes = [1, 32], strides = [1, 1]} : vector<2x96xf32> to vector<1x32xf32>
    %29 = vector.extract_strided_slice %22 {offsets = [0, 0], sizes = [32, 96], strides = [1, 1]} : vector<32x128xf32> to vector<32x96xf32>
    %cst_15 = arith.constant dense<0.000000e+00> : vector<8x96xf32>
    %30 = tpu.matmul %5, %29, %cst_15 {dimension_numbers = #tpu.dot_dimension_numbers<[1], [0], [0], [1], [0, 0, 1, 1], [], []>} : vector<8x32xf32>, vector<32x96xf32>, vector<8x96xf32> -> vector<8x96xf32>
    %31 = vector.extract_strided_slice %24 {offsets = [0, 0], sizes = [1, 96], strides = [1, 1]} : vector<2x96xf32> to vector<1x96xf32>
    %32 = vector.broadcast %31 : vector<1x96xf32> to vector<8x96xf32>
    %33 = arith.addf %30, %32 : vector<8x96xf32>
    %34 = vector.extract_strided_slice %33 {offsets = [0, 0], sizes = [8, 32], strides = [1, 1]} : vector<8x96xf32> to vector<8x32xf32>
    %35 = vector.extract_strided_slice %33 {offsets = [0, 32], sizes = [8, 32], strides = [1, 1]} : vector<8x96xf32> to vector<8x32xf32>
    %36 = vector.extract_strided_slice %33 {offsets = [0, 64], sizes = [8, 32], strides = [1, 1]} : vector<8x96xf32> to vector<8x32xf32>
    %37 = vector.extract_strided_slice %34 {offsets = [0, 0], sizes = [8, 8], strides = [1, 1]} : vector<8x32xf32> to vector<8x8xf32>
    %38 = vector.extract_strided_slice %35 {offsets = [0, 0], sizes = [8, 8], strides = [1, 1]} : vector<8x32xf32> to vector<8x8xf32>
    %39 = vector.extract_strided_slice %36 {offsets = [0, 0], sizes = [8, 8], strides = [1, 1]} : vector<8x32xf32> to vector<8x8xf32>
    %cst_16 = arith.constant dense<0.000000e+00> : vector<8x8xf32>
    %40 = tpu.matmul %37, %38, %cst_16 {dimension_numbers = #tpu.dot_dimension_numbers<[1], [1], [0], [0], [0, 0, 1, 0], [], []>} : vector<8x8xf32>, vector<8x8xf32>, vector<8x8xf32> -> vector<8x8xf32>
    %cst_17 = arith.constant 0.176776692 : f32
    %41 = vector.broadcast %cst_17 : f32 to vector<8x8xf32>
    %42 = arith.mulf %40, %41 : vector<8x8xf32>
    %cst_18 = arith.constant dense<0xFF800000> : vector<8xf32>
    %43 = vector.multi_reduction <maximumf>, %42, %cst_18 [1] : vector<8x8xf32> to vector<8xf32>
    %44 = vector.shape_cast %43 : vector<8xf32> to vector<8x1xf32>
    %45 = vector.broadcast %44 : vector<8x1xf32> to vector<8x8xf32>
    %46 = arith.subf %42, %45 : vector<8x8xf32>
    %47 = math.exp %46 : vector<8x8xf32>
    %cst_19 = arith.constant dense<0.000000e+00> : vector<8xf32>
    %48 = vector.multi_reduction <add>, %47, %cst_19 [1] : vector<8x8xf32> to vector<8xf32>
    %49 = vector.shape_cast %48 : vector<8xf32> to vector<8x1xf32>
    %50 = vector.broadcast %49 : vector<8x1xf32> to vector<8x8xf32>
    %51 = arith.divf %47, %50 : vector<8x8xf32>
    %cst_20 = arith.constant dense<0.000000e+00> : vector<8x8xf32>
    %52 = tpu.matmul %51, %39, %cst_20 {dimension_numbers = #tpu.dot_dimension_numbers<[1], [0], [0], [1], [0, 0, 1, 1], [], []>} : vector<8x8xf32>, vector<8x8xf32>, vector<8x8xf32> -> vector<8x8xf32>
    %53 = vector.extract_strided_slice %25 {offsets = [0, 0], sizes = [8, 32], strides = [1, 1]} : vector<32x32xf32> to vector<8x32xf32>
    %cst_21 = arith.constant dense<0.000000e+00> : vector<8x32xf32>
    %54 = tpu.matmul %52, %53, %cst_21 {dimension_numbers = #tpu.dot_dimension_numbers<[1], [0], [0], [1], [0, 0, 1, 1], [], []>} : vector<8x8xf32>, vector<8x32xf32>, vector<8x32xf32> -> vector<8x32xf32>
    %55 = vector.broadcast %26 : vector<1x32xf32> to vector<8x32xf32>
    %56 = arith.addf %55, %54 : vector<8x32xf32>
    %57 = vector.extract_strided_slice %34 {offsets = [0, 8], sizes = [8, 8], strides = [1, 1]} : vector<8x32xf32> to vector<8x8xf32>
    %58 = vector.extract_strided_slice %35 {offsets = [0, 8], sizes = [8, 8], strides = [1, 1]} : vector<8x32xf32> to vector<8x8xf32>
    %59 = vector.extract_strided_slice %36 {offsets = [0, 8], sizes = [8, 8], strides = [1, 1]} : vector<8x32xf32> to vector<8x8xf32>
    %cst_22 = arith.constant dense<0.000000e+00> : vector<8x8xf32>
    %60 = tpu.matmul %57, %58, %cst_22 {dimension_numbers = #tpu.dot_dimension_numbers<[1], [1], [0], [0], [0, 0, 1, 0], [], []>} : vector<8x8xf32>, vector<8x8xf32>, vector<8x8xf32> -> vector<8x8xf32>
    %cst_23 = arith.constant 0.176776692 : f32
    %61 = vector.broadcast %cst_23 : f32 to vector<8x8xf32>
    %62 = arith.mulf %60, %61 : vector<8x8xf32>
    %cst_24 = arith.constant dense<0xFF800000> : vector<8xf32>
    %63 = vector.multi_reduction <maximumf>, %62, %cst_24 [1] : vector<8x8xf32> to vector<8xf32>
    %64 = vector.shape_cast %63 : vector<8xf32> to vector<8x1xf32>
    %65 = vector.broadcast %64 : vector<8x1xf32> to vector<8x8xf32>
    %66 = arith.subf %62, %65 : vector<8x8xf32>
    %67 = math.exp %66 : vector<8x8xf32>
    %cst_25 = arith.constant dense<0.000000e+00> : vector<8xf32>
    %68 = vector.multi_reduction <add>, %67, %cst_25 [1] : vector<8x8xf32> to vector<8xf32>
    %69 = vector.shape_cast %68 : vector<8xf32> to vector<8x1xf32>
    %70 = vector.broadcast %69 : vector<8x1xf32> to vector<8x8xf32>
    %71 = arith.divf %67, %70 : vector<8x8xf32>
    %cst_26 = arith.constant dense<0.000000e+00> : vector<8x8xf32>
    %72 = tpu.matmul %71, %59, %cst_26 {dimension_numbers = #tpu.dot_dimension_numbers<[1], [0], [0], [1], [0, 0, 1, 1], [], []>} : vector<8x8xf32>, vector<8x8xf32>, vector<8x8xf32> -> vector<8x8xf32>
    %73 = vector.extract_strided_slice %25 {offsets = [8, 0], sizes = [8, 32], strides = [1, 1]} : vector<32x32xf32> to vector<8x32xf32>
    %cst_27 = arith.constant dense<0.000000e+00> : vector<8x32xf32>
    %74 = tpu.matmul %72, %73, %cst_27 {dimension_numbers = #tpu.dot_dimension_numbers<[1], [0], [0], [1], [0, 0, 1, 1], [], []>} : vector<8x8xf32>, vector<8x32xf32>, vector<8x32xf32> -> vector<8x32xf32>
    %75 = arith.addf %56, %74 : vector<8x32xf32>
    %76 = vector.extract_strided_slice %34 {offsets = [0, 16], sizes = [8, 8], strides = [1, 1]} : vector<8x32xf32> to vector<8x8xf32>
    %77 = vector.extract_strided_slice %35 {offsets = [0, 16], sizes = [8, 8], strides = [1, 1]} : vector<8x32xf32> to vector<8x8xf32>
    %78 = vector.extract_strided_slice %36 {offsets = [0, 16], sizes = [8, 8], strides = [1, 1]} : vector<8x32xf32> to vector<8x8xf32>
    %cst_28 = arith.constant dense<0.000000e+00> : vector<8x8xf32>
    %79 = tpu.matmul %76, %77, %cst_28 {dimension_numbers = #tpu.dot_dimension_numbers<[1], [1], [0], [0], [0, 0, 1, 0], [], []>} : vector<8x8xf32>, vector<8x8xf32>, vector<8x8xf32> -> vector<8x8xf32>
    %cst_29 = arith.constant 0.176776692 : f32
    %80 = vector.broadcast %cst_29 : f32 to vector<8x8xf32>
    %81 = arith.mulf %79, %80 : vector<8x8xf32>
    %cst_30 = arith.constant dense<0xFF800000> : vector<8xf32>
    %82 = vector.multi_reduction <maximumf>, %81, %cst_30 [1] : vector<8x8xf32> to vector<8xf32>
    %83 = vector.shape_cast %82 : vector<8xf32> to vector<8x1xf32>
    %84 = vector.broadcast %83 : vector<8x1xf32> to vector<8x8xf32>
    %85 = arith.subf %81, %84 : vector<8x8xf32>
    %86 = math.exp %85 : vector<8x8xf32>
    %cst_31 = arith.constant dense<0.000000e+00> : vector<8xf32>
    %87 = vector.multi_reduction <add>, %86, %cst_31 [1] : vector<8x8xf32> to vector<8xf32>
    %88 = vector.shape_cast %87 : vector<8xf32> to vector<8x1xf32>
    %89 = vector.broadcast %88 : vector<8x1xf32> to vector<8x8xf32>
    %90 = arith.divf %86, %89 : vector<8x8xf32>
    %cst_32 = arith.constant dense<0.000000e+00> : vector<8x8xf32>
    %91 = tpu.matmul %90, %78, %cst_32 {dimension_numbers = #tpu.dot_dimension_numbers<[1], [0], [0], [1], [0, 0, 1, 1], [], []>} : vector<8x8xf32>, vector<8x8xf32>, vector<8x8xf32> -> vector<8x8xf32>
    %92 = vector.extract_strided_slice %25 {offsets = [16, 0], sizes = [8, 32], strides = [1, 1]} : vector<32x32xf32> to vector<8x32xf32>
    %cst_33 = arith.constant dense<0.000000e+00> : vector<8x32xf32>
    %93 = tpu.matmul %91, %92, %cst_33 {dimension_numbers = #tpu.dot_dimension_numbers<[1], [0], [0], [1], [0, 0, 1, 1], [], []>} : vector<8x8xf32>, vector<8x32xf32>, vector<8x32xf32> -> vector<8x32xf32>
    %94 = arith.addf %75, %93 : vector<8x32xf32>
    %95 = vector.extract_strided_slice %34 {offsets = [0, 24], sizes = [8, 8], strides = [1, 1]} : vector<8x32xf32> to vector<8x8xf32>
    %96 = vector.extract_strided_slice %35 {offsets = [0, 24], sizes = [8, 8], strides = [1, 1]} : vector<8x32xf32> to vector<8x8xf32>
    %97 = vector.extract_strided_slice %36 {offsets = [0, 24], sizes = [8, 8], strides = [1, 1]} : vector<8x32xf32> to vector<8x8xf32>
    %cst_34 = arith.constant dense<0.000000e+00> : vector<8x8xf32>
    %98 = tpu.matmul %95, %96, %cst_34 {dimension_numbers = #tpu.dot_dimension_numbers<[1], [1], [0], [0], [0, 0, 1, 0], [], []>} : vector<8x8xf32>, vector<8x8xf32>, vector<8x8xf32> -> vector<8x8xf32>
    %cst_35 = arith.constant 0.176776692 : f32
    %99 = vector.broadcast %cst_35 : f32 to vector<8x8xf32>
    %100 = arith.mulf %98, %99 : vector<8x8xf32>
    %cst_36 = arith.constant dense<0xFF800000> : vector<8xf32>
    %101 = vector.multi_reduction <maximumf>, %100, %cst_36 [1] : vector<8x8xf32> to vector<8xf32>
    %102 = vector.shape_cast %101 : vector<8xf32> to vector<8x1xf32>
    %103 = vector.broadcast %102 : vector<8x1xf32> to vector<8x8xf32>
    %104 = arith.subf %100, %103 : vector<8x8xf32>
    %105 = math.exp %104 : vector<8x8xf32>
    %cst_37 = arith.constant dense<0.000000e+00> : vector<8xf32>
    %106 = vector.multi_reduction <add>, %105, %cst_37 [1] : vector<8x8xf32> to vector<8xf32>
    %107 = vector.shape_cast %106 : vector<8xf32> to vector<8x1xf32>
    %108 = vector.broadcast %107 : vector<8x1xf32> to vector<8x8xf32>
    %109 = arith.divf %105, %108 : vector<8x8xf32>
    %cst_38 = arith.constant dense<0.000000e+00> : vector<8x8xf32>
    %110 = tpu.matmul %109, %97, %cst_38 {dimension_numbers = #tpu.dot_dimension_numbers<[1], [0], [0], [1], [0, 0, 1, 1], [], []>} : vector<8x8xf32>, vector<8x8xf32>, vector<8x8xf32> -> vector<8x8xf32>
    %111 = vector.extract_strided_slice %25 {offsets = [24, 0], sizes = [8, 32], strides = [1, 1]} : vector<32x32xf32> to vector<8x32xf32>
    %cst_39 = arith.constant dense<0.000000e+00> : vector<8x32xf32>
    %112 = tpu.matmul %110, %111, %cst_39 {dimension_numbers = #tpu.dot_dimension_numbers<[1], [0], [0], [1], [0, 0, 1, 1], [], []>} : vector<8x8xf32>, vector<8x32xf32>, vector<8x32xf32> -> vector<8x32xf32>
    %113 = arith.addf %94, %112 : vector<8x32xf32>
    %114 = arith.addf %113, %5 : vector<8x32xf32>
    %cst_40 = arith.constant dense<0.000000e+00> : vector<8xf32>
    %115 = vector.multi_reduction <add>, %114, %cst_40 [1] : vector<8x32xf32> to vector<8xf32>
    %116 = vector.shape_cast %115 : vector<8xf32> to vector<8x1xf32>
    %cst_41 = arith.constant 3.200000e+01 : f32
    %117 = vector.broadcast %cst_41 : f32 to vector<8x1xf32>
    %118 = arith.divf %116, %117 : vector<8x1xf32>
    %119 = vector.broadcast %118 : vector<8x1xf32> to vector<8x32xf32>
    %120 = arith.subf %114, %119 : vector<8x32xf32>
    %121 = arith.mulf %120, %120 : vector<8x32xf32>
    %cst_42 = arith.constant dense<0.000000e+00> : vector<8xf32>
    %122 = vector.multi_reduction <add>, %121, %cst_42 [1] : vector<8x32xf32> to vector<8xf32>
    %123 = vector.shape_cast %122 : vector<8xf32> to vector<8x1xf32>
    %cst_43 = arith.constant 3.200000e+01 : f32
    %124 = vector.broadcast %cst_43 : f32 to vector<8x1xf32>
    %125 = arith.divf %123, %124 : vector<8x1xf32>
    %126 = vector.broadcast %118 : vector<8x1xf32> to vector<8x32xf32>
    %127 = arith.subf %114, %126 : vector<8x32xf32>
    %cst_44 = arith.constant 9.99999974E-6 : f32
    %128 = vector.broadcast %cst_44 : f32 to vector<8x1xf32>
    %129 = arith.addf %125, %128 : vector<8x1xf32>
    %130 = math.rsqrt %129 : vector<8x1xf32>
    %131 = vector.broadcast %130 : vector<8x1xf32> to vector<8x32xf32>
    %132 = arith.mulf %127, %131 : vector<8x32xf32>
    %133 = vector.broadcast %27 : vector<1x32xf32> to vector<8x32xf32>
    %134 = arith.mulf %132, %133 : vector<8x32xf32>
    %135 = vector.broadcast %28 : vector<1x32xf32> to vector<8x32xf32>
    %136 = arith.addf %134, %135 : vector<8x32xf32>
    %c1_45 = arith.constant 1 : index
    %c0_46 = arith.constant 0 : index
    %c0_47 = arith.constant 0 : index
    %137 = vector.load %arg8[%c1_45, %c0_46, %c0_47] : memref<4x32x128xf32, #tpu.memory_space<vmem>>, vector<1x32x128xf32>
    %138 = vector.shape_cast %137 : vector<1x32x128xf32> to vector<32x128xf32>
    %c1_48 = arith.constant 1 : index
    %c0_49 = arith.constant 0 : index
    %c0_50 = arith.constant 0 : index
    %139 = vector.load %arg9[%c1_48, %c0_49, %c0_50] : memref<4x128x32xf32, #tpu.memory_space<vmem>>, vector<1x128x32xf32>
    %140 = vector.shape_cast %139 : vector<1x128x32xf32> to vector<128x32xf32>
    %c1_51 = arith.constant 1 : index
    %c0_52 = arith.constant 0 : index
    %c0_53 = arith.constant 0 : index
    %141 = vector.load %arg10[%c1_51, %c0_52, %c0_53] : memref<4x2x128xf32, #tpu.memory_space<vmem>>, vector<1x2x128xf32>
    %142 = vector.shape_cast %141 : vector<1x2x128xf32> to vector<2x128xf32>
    %cst_54 = arith.constant dense<0.000000e+00> : vector<8x128xf32>
    %143 = tpu.matmul %136, %138, %cst_54 {dimension_numbers = #tpu.dot_dimension_numbers<[1], [0], [0], [1], [0, 0, 1, 1], [], []>} : vector<8x32xf32>, vector<32x128xf32>, vector<8x128xf32> -> vector<8x128xf32>
    %144 = vector.extract_strided_slice %142 {offsets = [0, 0], sizes = [1, 128], strides = [1, 1]} : vector<2x128xf32> to vector<1x128xf32>
    %145 = vector.broadcast %144 : vector<1x128xf32> to vector<8x128xf32>
    %146 = arith.addf %143, %145 : vector<8x128xf32>
    %cst_55 = arith.constant 0.000000e+00 : f32
    %147 = vector.broadcast %cst_55 : f32 to vector<8x128xf32>
    %148 = arith.maximumf %146, %147 : vector<8x128xf32>
    %cst_56 = arith.constant dense<0.000000e+00> : vector<8x32xf32>
    %149 = tpu.matmul %148, %140, %cst_56 {dimension_numbers = #tpu.dot_dimension_numbers<[1], [0], [0], [1], [0, 0, 1, 1], [], []>} : vector<8x128xf32>, vector<128x32xf32>, vector<8x32xf32> -> vector<8x32xf32>
    %150 = vector.extract_strided_slice %142 {offsets = [1, 0], sizes = [1, 32], strides = [1, 1]} : vector<2x128xf32> to vector<1x32xf32>
    %151 = vector.broadcast %150 : vector<1x32xf32> to vector<8x32xf32>
    %152 = arith.addf %149, %151 : vector<8x32xf32>
    %153 = arith.addf %152, %136 : vector<8x32xf32>
    %154 = vector.extract_strided_slice %142 {offsets = [1, 32], sizes = [1, 32], strides = [1, 1]} : vector<2x128xf32> to vector<1x32xf32>
    %155 = vector.extract_strided_slice %142 {offsets = [1, 64], sizes = [1, 32], strides = [1, 1]} : vector<2x128xf32> to vector<1x32xf32>
    %cst_57 = arith.constant dense<0.000000e+00> : vector<8xf32>
    %156 = vector.multi_reduction <add>, %153, %cst_57 [1] : vector<8x32xf32> to vector<8xf32>
    %157 = vector.shape_cast %156 : vector<8xf32> to vector<8x1xf32>
    %cst_58 = arith.constant 3.200000e+01 : f32
    %158 = vector.broadcast %cst_58 : f32 to vector<8x1xf32>
    %159 = arith.divf %157, %158 : vector<8x1xf32>
    %160 = vector.broadcast %159 : vector<8x1xf32> to vector<8x32xf32>
    %161 = arith.subf %153, %160 : vector<8x32xf32>
    %162 = arith.mulf %161, %161 : vector<8x32xf32>
    %cst_59 = arith.constant dense<0.000000e+00> : vector<8xf32>
    %163 = vector.multi_reduction <add>, %162, %cst_59 [1] : vector<8x32xf32> to vector<8xf32>
    %164 = vector.shape_cast %163 : vector<8xf32> to vector<8x1xf32>
    %cst_60 = arith.constant 3.200000e+01 : f32
    %165 = vector.broadcast %cst_60 : f32 to vector<8x1xf32>
    %166 = arith.divf %164, %165 : vector<8x1xf32>
    %167 = vector.broadcast %159 : vector<8x1xf32> to vector<8x32xf32>
    %168 = arith.subf %153, %167 : vector<8x32xf32>
    %cst_61 = arith.constant 9.99999974E-6 : f32
    %169 = vector.broadcast %cst_61 : f32 to vector<8x1xf32>
    %170 = arith.addf %166, %169 : vector<8x1xf32>
    %171 = math.rsqrt %170 : vector<8x1xf32>
    %172 = vector.broadcast %171 : vector<8x1xf32> to vector<8x32xf32>
    %173 = arith.mulf %168, %172 : vector<8x32xf32>
    %174 = vector.broadcast %154 : vector<1x32xf32> to vector<8x32xf32>
    %175 = arith.mulf %173, %174 : vector<8x32xf32>
    %176 = vector.broadcast %155 : vector<1x32xf32> to vector<8x32xf32>
    %177 = arith.addf %175, %176 : vector<8x32xf32>
    %c0_62 = arith.constant 0 : index
    %c0_63 = arith.constant 0 : index
    %c0_64 = arith.constant 0 : index
    %178 = vector.load %arg2[%c0_62, %c0_63, %c0_64] : memref<1x8x32xf32, #tpu.memory_space<vmem>>, vector<1x8x32xf32>
    %179 = vector.shape_cast %178 : vector<1x8x32xf32> to vector<8x32xf32>
    %c2 = arith.constant 2 : index
    %c0_65 = arith.constant 0 : index
    %c0_66 = arith.constant 0 : index
    %180 = vector.load %arg6[%c2, %c0_65, %c0_66] : memref<6x32x128xf32, #tpu.memory_space<vmem>>, vector<1x32x128xf32>
    %181 = vector.shape_cast %180 : vector<1x32x128xf32> to vector<32x128xf32>
    %c2_67 = arith.constant 2 : index
    %c0_68 = arith.constant 0 : index
    %c0_69 = arith.constant 0 : index
    %182 = vector.load %arg7[%c2_67, %c0_68, %c0_69] : memref<6x2x96xf32, #tpu.memory_space<vmem>>, vector<1x2x96xf32>
    %183 = vector.shape_cast %182 : vector<1x2x96xf32> to vector<2x96xf32>
    %184 = vector.extract_strided_slice %181 {offsets = [0, 96], sizes = [32, 32], strides = [1, 1]} : vector<32x128xf32> to vector<32x32xf32>
    %185 = vector.extract_strided_slice %183 {offsets = [1, 0], sizes = [1, 32], strides = [1, 1]} : vector<2x96xf32> to vector<1x32xf32>
    %186 = vector.extract_strided_slice %183 {offsets = [1, 32], sizes = [1, 32], strides = [1, 1]} : vector<2x96xf32> to vector<1x32xf32>
    %187 = vector.extract_strided_slice %183 {offsets = [1, 64], sizes = [1, 32], strides = [1, 1]} : vector<2x96xf32> to vector<1x32xf32>
    %188 = vector.extract_strided_slice %181 {offsets = [0, 0], sizes = [32, 96], strides = [1, 1]} : vector<32x128xf32> to vector<32x96xf32>
    %cst_70 = arith.constant dense<0.000000e+00> : vector<8x96xf32>
    %189 = tpu.matmul %179, %188, %cst_70 {dimension_numbers = #tpu.dot_dimension_numbers<[1], [0], [0], [1], [0, 0, 1, 1], [], []>} : vector<8x32xf32>, vector<32x96xf32>, vector<8x96xf32> -> vector<8x96xf32>
    %190 = vector.extract_strided_slice %183 {offsets = [0, 0], sizes = [1, 96], strides = [1, 1]} : vector<2x96xf32> to vector<1x96xf32>
    %191 = vector.broadcast %190 : vector<1x96xf32> to vector<8x96xf32>
    %192 = arith.addf %189, %191 : vector<8x96xf32>
    %193 = vector.extract_strided_slice %192 {offsets = [0, 0], sizes = [8, 32], strides = [1, 1]} : vector<8x96xf32> to vector<8x32xf32>
    %194 = vector.extract_strided_slice %192 {offsets = [0, 32], sizes = [8, 32], strides = [1, 1]} : vector<8x96xf32> to vector<8x32xf32>
    %195 = vector.extract_strided_slice %192 {offsets = [0, 64], sizes = [8, 32], strides = [1, 1]} : vector<8x96xf32> to vector<8x32xf32>
    %196 = vector.extract_strided_slice %193 {offsets = [0, 0], sizes = [8, 8], strides = [1, 1]} : vector<8x32xf32> to vector<8x8xf32>
    %197 = vector.extract_strided_slice %194 {offsets = [0, 0], sizes = [8, 8], strides = [1, 1]} : vector<8x32xf32> to vector<8x8xf32>
    %198 = vector.extract_strided_slice %195 {offsets = [0, 0], sizes = [8, 8], strides = [1, 1]} : vector<8x32xf32> to vector<8x8xf32>
    %cst_71 = arith.constant dense<0.000000e+00> : vector<8x8xf32>
    %199 = tpu.matmul %196, %197, %cst_71 {dimension_numbers = #tpu.dot_dimension_numbers<[1], [1], [0], [0], [0, 0, 1, 0], [], []>} : vector<8x8xf32>, vector<8x8xf32>, vector<8x8xf32> -> vector<8x8xf32>
    %200 = arith.addf %199, %20 : vector<8x8xf32>
    %cst_72 = arith.constant 0.176776692 : f32
    %201 = vector.broadcast %cst_72 : f32 to vector<8x8xf32>
    %202 = arith.mulf %200, %201 : vector<8x8xf32>
    %cst_73 = arith.constant dense<0xFF800000> : vector<8xf32>
    %203 = vector.multi_reduction <maximumf>, %202, %cst_73 [1] : vector<8x8xf32> to vector<8xf32>
    %204 = vector.shape_cast %203 : vector<8xf32> to vector<8x1xf32>
    %205 = vector.broadcast %204 : vector<8x1xf32> to vector<8x8xf32>
    %206 = arith.subf %202, %205 : vector<8x8xf32>
    %207 = math.exp %206 : vector<8x8xf32>
    %cst_74 = arith.constant dense<0.000000e+00> : vector<8xf32>
    %208 = vector.multi_reduction <add>, %207, %cst_74 [1] : vector<8x8xf32> to vector<8xf32>
    %209 = vector.shape_cast %208 : vector<8xf32> to vector<8x1xf32>
    %210 = vector.broadcast %209 : vector<8x1xf32> to vector<8x8xf32>
    %211 = arith.divf %207, %210 : vector<8x8xf32>
    %cst_75 = arith.constant dense<0.000000e+00> : vector<8x8xf32>
    %212 = tpu.matmul %211, %198, %cst_75 {dimension_numbers = #tpu.dot_dimension_numbers<[1], [0], [0], [1], [0, 0, 1, 1], [], []>} : vector<8x8xf32>, vector<8x8xf32>, vector<8x8xf32> -> vector<8x8xf32>
    %213 = vector.extract_strided_slice %184 {offsets = [0, 0], sizes = [8, 32], strides = [1, 1]} : vector<32x32xf32> to vector<8x32xf32>
    %cst_76 = arith.constant dense<0.000000e+00> : vector<8x32xf32>
    %214 = tpu.matmul %212, %213, %cst_76 {dimension_numbers = #tpu.dot_dimension_numbers<[1], [0], [0], [1], [0, 0, 1, 1], [], []>} : vector<8x8xf32>, vector<8x32xf32>, vector<8x32xf32> -> vector<8x32xf32>
    %215 = vector.broadcast %185 : vector<1x32xf32> to vector<8x32xf32>
    %216 = arith.addf %215, %214 : vector<8x32xf32>
    %217 = vector.extract_strided_slice %193 {offsets = [0, 8], sizes = [8, 8], strides = [1, 1]} : vector<8x32xf32> to vector<8x8xf32>
    %218 = vector.extract_strided_slice %194 {offsets = [0, 8], sizes = [8, 8], strides = [1, 1]} : vector<8x32xf32> to vector<8x8xf32>
    %219 = vector.extract_strided_slice %195 {offsets = [0, 8], sizes = [8, 8], strides = [1, 1]} : vector<8x32xf32> to vector<8x8xf32>
    %cst_77 = arith.constant dense<0.000000e+00> : vector<8x8xf32>
    %220 = tpu.matmul %217, %218, %cst_77 {dimension_numbers = #tpu.dot_dimension_numbers<[1], [1], [0], [0], [0, 0, 1, 0], [], []>} : vector<8x8xf32>, vector<8x8xf32>, vector<8x8xf32> -> vector<8x8xf32>
    %221 = arith.addf %220, %20 : vector<8x8xf32>
    %cst_78 = arith.constant 0.176776692 : f32
    %222 = vector.broadcast %cst_78 : f32 to vector<8x8xf32>
    %223 = arith.mulf %221, %222 : vector<8x8xf32>
    %cst_79 = arith.constant dense<0xFF800000> : vector<8xf32>
    %224 = vector.multi_reduction <maximumf>, %223, %cst_79 [1] : vector<8x8xf32> to vector<8xf32>
    %225 = vector.shape_cast %224 : vector<8xf32> to vector<8x1xf32>
    %226 = vector.broadcast %225 : vector<8x1xf32> to vector<8x8xf32>
    %227 = arith.subf %223, %226 : vector<8x8xf32>
    %228 = math.exp %227 : vector<8x8xf32>
    %cst_80 = arith.constant dense<0.000000e+00> : vector<8xf32>
    %229 = vector.multi_reduction <add>, %228, %cst_80 [1] : vector<8x8xf32> to vector<8xf32>
    %230 = vector.shape_cast %229 : vector<8xf32> to vector<8x1xf32>
    %231 = vector.broadcast %230 : vector<8x1xf32> to vector<8x8xf32>
    %232 = arith.divf %228, %231 : vector<8x8xf32>
    %cst_81 = arith.constant dense<0.000000e+00> : vector<8x8xf32>
    %233 = tpu.matmul %232, %219, %cst_81 {dimension_numbers = #tpu.dot_dimension_numbers<[1], [0], [0], [1], [0, 0, 1, 1], [], []>} : vector<8x8xf32>, vector<8x8xf32>, vector<8x8xf32> -> vector<8x8xf32>
    %234 = vector.extract_strided_slice %184 {offsets = [8, 0], sizes = [8, 32], strides = [1, 1]} : vector<32x32xf32> to vector<8x32xf32>
    %cst_82 = arith.constant dense<0.000000e+00> : vector<8x32xf32>
    %235 = tpu.matmul %233, %234, %cst_82 {dimension_numbers = #tpu.dot_dimension_numbers<[1], [0], [0], [1], [0, 0, 1, 1], [], []>} : vector<8x8xf32>, vector<8x32xf32>, vector<8x32xf32> -> vector<8x32xf32>
    %236 = arith.addf %216, %235 : vector<8x32xf32>
    %237 = vector.extract_strided_slice %193 {offsets = [0, 16], sizes = [8, 8], strides = [1, 1]} : vector<8x32xf32> to vector<8x8xf32>
    %238 = vector.extract_strided_slice %194 {offsets = [0, 16], sizes = [8, 8], strides = [1, 1]} : vector<8x32xf32> to vector<8x8xf32>
    %239 = vector.extract_strided_slice %195 {offsets = [0, 16], sizes = [8, 8], strides = [1, 1]} : vector<8x32xf32> to vector<8x8xf32>
    %cst_83 = arith.constant dense<0.000000e+00> : vector<8x8xf32>
    %240 = tpu.matmul %237, %238, %cst_83 {dimension_numbers = #tpu.dot_dimension_numbers<[1], [1], [0], [0], [0, 0, 1, 0], [], []>} : vector<8x8xf32>, vector<8x8xf32>, vector<8x8xf32> -> vector<8x8xf32>
    %241 = arith.addf %240, %20 : vector<8x8xf32>
    %cst_84 = arith.constant 0.176776692 : f32
    %242 = vector.broadcast %cst_84 : f32 to vector<8x8xf32>
    %243 = arith.mulf %241, %242 : vector<8x8xf32>
    %cst_85 = arith.constant dense<0xFF800000> : vector<8xf32>
    %244 = vector.multi_reduction <maximumf>, %243, %cst_85 [1] : vector<8x8xf32> to vector<8xf32>
    %245 = vector.shape_cast %244 : vector<8xf32> to vector<8x1xf32>
    %246 = vector.broadcast %245 : vector<8x1xf32> to vector<8x8xf32>
    %247 = arith.subf %243, %246 : vector<8x8xf32>
    %248 = math.exp %247 : vector<8x8xf32>
    %cst_86 = arith.constant dense<0.000000e+00> : vector<8xf32>
    %249 = vector.multi_reduction <add>, %248, %cst_86 [1] : vector<8x8xf32> to vector<8xf32>
    %250 = vector.shape_cast %249 : vector<8xf32> to vector<8x1xf32>
    %251 = vector.broadcast %250 : vector<8x1xf32> to vector<8x8xf32>
    %252 = arith.divf %248, %251 : vector<8x8xf32>
    %cst_87 = arith.constant dense<0.000000e+00> : vector<8x8xf32>
    %253 = tpu.matmul %252, %239, %cst_87 {dimension_numbers = #tpu.dot_dimension_numbers<[1], [0], [0], [1], [0, 0, 1, 1], [], []>} : vector<8x8xf32>, vector<8x8xf32>, vector<8x8xf32> -> vector<8x8xf32>
    %254 = vector.extract_strided_slice %184 {offsets = [16, 0], sizes = [8, 32], strides = [1, 1]} : vector<32x32xf32> to vector<8x32xf32>
    %cst_88 = arith.constant dense<0.000000e+00> : vector<8x32xf32>
    %255 = tpu.matmul %253, %254, %cst_88 {dimension_numbers = #tpu.dot_dimension_numbers<[1], [0], [0], [1], [0, 0, 1, 1], [], []>} : vector<8x8xf32>, vector<8x32xf32>, vector<8x32xf32> -> vector<8x32xf32>
    %256 = arith.addf %236, %255 : vector<8x32xf32>
    %257 = vector.extract_strided_slice %193 {offsets = [0, 24], sizes = [8, 8], strides = [1, 1]} : vector<8x32xf32> to vector<8x8xf32>
    %258 = vector.extract_strided_slice %194 {offsets = [0, 24], sizes = [8, 8], strides = [1, 1]} : vector<8x32xf32> to vector<8x8xf32>
    %259 = vector.extract_strided_slice %195 {offsets = [0, 24], sizes = [8, 8], strides = [1, 1]} : vector<8x32xf32> to vector<8x8xf32>
    %cst_89 = arith.constant dense<0.000000e+00> : vector<8x8xf32>
    %260 = tpu.matmul %257, %258, %cst_89 {dimension_numbers = #tpu.dot_dimension_numbers<[1], [1], [0], [0], [0, 0, 1, 0], [], []>} : vector<8x8xf32>, vector<8x8xf32>, vector<8x8xf32> -> vector<8x8xf32>
    %261 = arith.addf %260, %20 : vector<8x8xf32>
    %cst_90 = arith.constant 0.176776692 : f32
    %262 = vector.broadcast %cst_90 : f32 to vector<8x8xf32>
    %263 = arith.mulf %261, %262 : vector<8x8xf32>
    %cst_91 = arith.constant dense<0xFF800000> : vector<8xf32>
    %264 = vector.multi_reduction <maximumf>, %263, %cst_91 [1] : vector<8x8xf32> to vector<8xf32>
    %265 = vector.shape_cast %264 : vector<8xf32> to vector<8x1xf32>
    %266 = vector.broadcast %265 : vector<8x1xf32> to vector<8x8xf32>
    %267 = arith.subf %263, %266 : vector<8x8xf32>
    %268 = math.exp %267 : vector<8x8xf32>
    %cst_92 = arith.constant dense<0.000000e+00> : vector<8xf32>
    %269 = vector.multi_reduction <add>, %268, %cst_92 [1] : vector<8x8xf32> to vector<8xf32>
    %270 = vector.shape_cast %269 : vector<8xf32> to vector<8x1xf32>
    %271 = vector.broadcast %270 : vector<8x1xf32> to vector<8x8xf32>
    %272 = arith.divf %268, %271 : vector<8x8xf32>
    %cst_93 = arith.constant dense<0.000000e+00> : vector<8x8xf32>
    %273 = tpu.matmul %272, %259, %cst_93 {dimension_numbers = #tpu.dot_dimension_numbers<[1], [0], [0], [1], [0, 0, 1, 1], [], []>} : vector<8x8xf32>, vector<8x8xf32>, vector<8x8xf32> -> vector<8x8xf32>
    %274 = vector.extract_strided_slice %184 {offsets = [24, 0], sizes = [8, 32], strides = [1, 1]} : vector<32x32xf32> to vector<8x32xf32>
    %cst_94 = arith.constant dense<0.000000e+00> : vector<8x32xf32>
    %275 = tpu.matmul %273, %274, %cst_94 {dimension_numbers = #tpu.dot_dimension_numbers<[1], [0], [0], [1], [0, 0, 1, 1], [], []>} : vector<8x8xf32>, vector<8x32xf32>, vector<8x32xf32> -> vector<8x32xf32>
    %276 = arith.addf %256, %275 : vector<8x32xf32>
    %277 = arith.addf %276, %179 : vector<8x32xf32>
    %cst_95 = arith.constant dense<0.000000e+00> : vector<8xf32>
    %278 = vector.multi_reduction <add>, %277, %cst_95 [1] : vector<8x32xf32> to vector<8xf32>
    %279 = vector.shape_cast %278 : vector<8xf32> to vector<8x1xf32>
    %cst_96 = arith.constant 3.200000e+01 : f32
    %280 = vector.broadcast %cst_96 : f32 to vector<8x1xf32>
    %281 = arith.divf %279, %280 : vector<8x1xf32>
    %282 = vector.broadcast %281 : vector<8x1xf32> to vector<8x32xf32>
    %283 = arith.subf %277, %282 : vector<8x32xf32>
    %284 = arith.mulf %283, %283 : vector<8x32xf32>
    %cst_97 = arith.constant dense<0.000000e+00> : vector<8xf32>
    %285 = vector.multi_reduction <add>, %284, %cst_97 [1] : vector<8x32xf32> to vector<8xf32>
    %286 = vector.shape_cast %285 : vector<8xf32> to vector<8x1xf32>
    %cst_98 = arith.constant 3.200000e+01 : f32
    %287 = vector.broadcast %cst_98 : f32 to vector<8x1xf32>
    %288 = arith.divf %286, %287 : vector<8x1xf32>
    %289 = vector.broadcast %281 : vector<8x1xf32> to vector<8x32xf32>
    %290 = arith.subf %277, %289 : vector<8x32xf32>
    %cst_99 = arith.constant 9.99999974E-6 : f32
    %291 = vector.broadcast %cst_99 : f32 to vector<8x1xf32>
    %292 = arith.addf %288, %291 : vector<8x1xf32>
    %293 = math.rsqrt %292 : vector<8x1xf32>
    %294 = vector.broadcast %293 : vector<8x1xf32> to vector<8x32xf32>
    %295 = arith.mulf %290, %294 : vector<8x32xf32>
    %296 = vector.broadcast %186 : vector<1x32xf32> to vector<8x32xf32>
    %297 = arith.mulf %295, %296 : vector<8x32xf32>
    %298 = vector.broadcast %187 : vector<1x32xf32> to vector<8x32xf32>
    %299 = arith.addf %297, %298 : vector<8x32xf32>
    %c3 = arith.constant 3 : index
    %c0_100 = arith.constant 0 : index
    %c0_101 = arith.constant 0 : index
    %300 = vector.load %arg6[%c3, %c0_100, %c0_101] : memref<6x32x128xf32, #tpu.memory_space<vmem>>, vector<1x32x128xf32>
    %301 = vector.shape_cast %300 : vector<1x32x128xf32> to vector<32x128xf32>
    %c3_102 = arith.constant 3 : index
    %c0_103 = arith.constant 0 : index
    %c0_104 = arith.constant 0 : index
    %302 = vector.load %arg7[%c3_102, %c0_103, %c0_104] : memref<6x2x96xf32, #tpu.memory_space<vmem>>, vector<1x2x96xf32>
    %303 = vector.shape_cast %302 : vector<1x2x96xf32> to vector<2x96xf32>
    %304 = vector.extract_strided_slice %301 {offsets = [0, 96], sizes = [32, 32], strides = [1, 1]} : vector<32x128xf32> to vector<32x32xf32>
    %305 = vector.extract_strided_slice %303 {offsets = [1, 0], sizes = [1, 32], strides = [1, 1]} : vector<2x96xf32> to vector<1x32xf32>
    %306 = vector.extract_strided_slice %303 {offsets = [1, 32], sizes = [1, 32], strides = [1, 1]} : vector<2x96xf32> to vector<1x32xf32>
    %307 = vector.extract_strided_slice %303 {offsets = [1, 64], sizes = [1, 32], strides = [1, 1]} : vector<2x96xf32> to vector<1x32xf32>
    %308 = vector.extract_strided_slice %301 {offsets = [0, 0], sizes = [32, 32], strides = [1, 1]} : vector<32x128xf32> to vector<32x32xf32>
    %cst_105 = arith.constant dense<0.000000e+00> : vector<8x32xf32>
    %309 = tpu.matmul %299, %308, %cst_105 {dimension_numbers = #tpu.dot_dimension_numbers<[1], [0], [0], [1], [0, 0, 1, 1], [], []>} : vector<8x32xf32>, vector<32x32xf32>, vector<8x32xf32> -> vector<8x32xf32>
    %310 = vector.extract_strided_slice %303 {offsets = [0, 0], sizes = [1, 32], strides = [1, 1]} : vector<2x96xf32> to vector<1x32xf32>
    %311 = vector.broadcast %310 : vector<1x32xf32> to vector<8x32xf32>
    %312 = arith.addf %309, %311 : vector<8x32xf32>
    %313 = vector.extract_strided_slice %301 {offsets = [0, 32], sizes = [32, 64], strides = [1, 1]} : vector<32x128xf32> to vector<32x64xf32>
    %cst_106 = arith.constant dense<0.000000e+00> : vector<8x64xf32>
    %314 = tpu.matmul %177, %313, %cst_106 {dimension_numbers = #tpu.dot_dimension_numbers<[1], [0], [0], [1], [0, 0, 1, 1], [], []>} : vector<8x32xf32>, vector<32x64xf32>, vector<8x64xf32> -> vector<8x64xf32>
    %315 = vector.extract_strided_slice %303 {offsets = [0, 32], sizes = [1, 64], strides = [1, 1]} : vector<2x96xf32> to vector<1x64xf32>
    %316 = vector.broadcast %315 : vector<1x64xf32> to vector<8x64xf32>
    %317 = arith.addf %314, %316 : vector<8x64xf32>
    %318 = vector.extract_strided_slice %317 {offsets = [0, 0], sizes = [8, 32], strides = [1, 1]} : vector<8x64xf32> to vector<8x32xf32>
    %319 = vector.extract_strided_slice %317 {offsets = [0, 32], sizes = [8, 32], strides = [1, 1]} : vector<8x64xf32> to vector<8x32xf32>
    %320 = vector.extract_strided_slice %312 {offsets = [0, 0], sizes = [8, 8], strides = [1, 1]} : vector<8x32xf32> to vector<8x8xf32>
    %321 = vector.extract_strided_slice %318 {offsets = [0, 0], sizes = [8, 8], strides = [1, 1]} : vector<8x32xf32> to vector<8x8xf32>
    %322 = vector.extract_strided_slice %319 {offsets = [0, 0], sizes = [8, 8], strides = [1, 1]} : vector<8x32xf32> to vector<8x8xf32>
    %cst_107 = arith.constant dense<0.000000e+00> : vector<8x8xf32>
    %323 = tpu.matmul %320, %321, %cst_107 {dimension_numbers = #tpu.dot_dimension_numbers<[1], [1], [0], [0], [0, 0, 1, 0], [], []>} : vector<8x8xf32>, vector<8x8xf32>, vector<8x8xf32> -> vector<8x8xf32>
    %cst_108 = arith.constant 0.176776692 : f32
    %324 = vector.broadcast %cst_108 : f32 to vector<8x8xf32>
    %325 = arith.mulf %323, %324 : vector<8x8xf32>
    %cst_109 = arith.constant dense<0xFF800000> : vector<8xf32>
    %326 = vector.multi_reduction <maximumf>, %325, %cst_109 [1] : vector<8x8xf32> to vector<8xf32>
    %327 = vector.shape_cast %326 : vector<8xf32> to vector<8x1xf32>
    %328 = vector.broadcast %327 : vector<8x1xf32> to vector<8x8xf32>
    %329 = arith.subf %325, %328 : vector<8x8xf32>
    %330 = math.exp %329 : vector<8x8xf32>
    %cst_110 = arith.constant dense<0.000000e+00> : vector<8xf32>
    %331 = vector.multi_reduction <add>, %330, %cst_110 [1] : vector<8x8xf32> to vector<8xf32>
    %332 = vector.shape_cast %331 : vector<8xf32> to vector<8x1xf32>
    %333 = vector.broadcast %332 : vector<8x1xf32> to vector<8x8xf32>
    %334 = arith.divf %330, %333 : vector<8x8xf32>
    %cst_111 = arith.constant dense<0.000000e+00> : vector<8x8xf32>
    %335 = tpu.matmul %334, %322, %cst_111 {dimension_numbers = #tpu.dot_dimension_numbers<[1], [0], [0], [1], [0, 0, 1, 1], [], []>} : vector<8x8xf32>, vector<8x8xf32>, vector<8x8xf32> -> vector<8x8xf32>
    %336 = vector.extract_strided_slice %304 {offsets = [0, 0], sizes = [8, 32], strides = [1, 1]} : vector<32x32xf32> to vector<8x32xf32>
    %cst_112 = arith.constant dense<0.000000e+00> : vector<8x32xf32>
    %337 = tpu.matmul %335, %336, %cst_112 {dimension_numbers = #tpu.dot_dimension_numbers<[1], [0], [0], [1], [0, 0, 1, 1], [], []>} : vector<8x8xf32>, vector<8x32xf32>, vector<8x32xf32> -> vector<8x32xf32>
    %338 = vector.broadcast %305 : vector<1x32xf32> to vector<8x32xf32>
    %339 = arith.addf %338, %337 : vector<8x32xf32>
    %340 = vector.extract_strided_slice %312 {offsets = [0, 8], sizes = [8, 8], strides = [1, 1]} : vector<8x32xf32> to vector<8x8xf32>
    %341 = vector.extract_strided_slice %318 {offsets = [0, 8], sizes = [8, 8], strides = [1, 1]} : vector<8x32xf32> to vector<8x8xf32>
    %342 = vector.extract_strided_slice %319 {offsets = [0, 8], sizes = [8, 8], strides = [1, 1]} : vector<8x32xf32> to vector<8x8xf32>
    %cst_113 = arith.constant dense<0.000000e+00> : vector<8x8xf32>
    %343 = tpu.matmul %340, %341, %cst_113 {dimension_numbers = #tpu.dot_dimension_numbers<[1], [1], [0], [0], [0, 0, 1, 0], [], []>} : vector<8x8xf32>, vector<8x8xf32>, vector<8x8xf32> -> vector<8x8xf32>
    %cst_114 = arith.constant 0.176776692 : f32
    %344 = vector.broadcast %cst_114 : f32 to vector<8x8xf32>
    %345 = arith.mulf %343, %344 : vector<8x8xf32>
    %cst_115 = arith.constant dense<0xFF800000> : vector<8xf32>
    %346 = vector.multi_reduction <maximumf>, %345, %cst_115 [1] : vector<8x8xf32> to vector<8xf32>
    %347 = vector.shape_cast %346 : vector<8xf32> to vector<8x1xf32>
    %348 = vector.broadcast %347 : vector<8x1xf32> to vector<8x8xf32>
    %349 = arith.subf %345, %348 : vector<8x8xf32>
    %350 = math.exp %349 : vector<8x8xf32>
    %cst_116 = arith.constant dense<0.000000e+00> : vector<8xf32>
    %351 = vector.multi_reduction <add>, %350, %cst_116 [1] : vector<8x8xf32> to vector<8xf32>
    %352 = vector.shape_cast %351 : vector<8xf32> to vector<8x1xf32>
    %353 = vector.broadcast %352 : vector<8x1xf32> to vector<8x8xf32>
    %354 = arith.divf %350, %353 : vector<8x8xf32>
    %cst_117 = arith.constant dense<0.000000e+00> : vector<8x8xf32>
    %355 = tpu.matmul %354, %342, %cst_117 {dimension_numbers = #tpu.dot_dimension_numbers<[1], [0], [0], [1], [0, 0, 1, 1], [], []>} : vector<8x8xf32>, vector<8x8xf32>, vector<8x8xf32> -> vector<8x8xf32>
    %356 = vector.extract_strided_slice %304 {offsets = [8, 0], sizes = [8, 32], strides = [1, 1]} : vector<32x32xf32> to vector<8x32xf32>
    %cst_118 = arith.constant dense<0.000000e+00> : vector<8x32xf32>
    %357 = tpu.matmul %355, %356, %cst_118 {dimension_numbers = #tpu.dot_dimension_numbers<[1], [0], [0], [1], [0, 0, 1, 1], [], []>} : vector<8x8xf32>, vector<8x32xf32>, vector<8x32xf32> -> vector<8x32xf32>
    %358 = arith.addf %339, %357 : vector<8x32xf32>
    %359 = vector.extract_strided_slice %312 {offsets = [0, 16], sizes = [8, 8], strides = [1, 1]} : vector<8x32xf32> to vector<8x8xf32>
    %360 = vector.extract_strided_slice %318 {offsets = [0, 16], sizes = [8, 8], strides = [1, 1]} : vector<8x32xf32> to vector<8x8xf32>
    %361 = vector.extract_strided_slice %319 {offsets = [0, 16], sizes = [8, 8], strides = [1, 1]} : vector<8x32xf32> to vector<8x8xf32>
    %cst_119 = arith.constant dense<0.000000e+00> : vector<8x8xf32>
    %362 = tpu.matmul %359, %360, %cst_119 {dimension_numbers = #tpu.dot_dimension_numbers<[1], [1], [0], [0], [0, 0, 1, 0], [], []>} : vector<8x8xf32>, vector<8x8xf32>, vector<8x8xf32> -> vector<8x8xf32>
    %cst_120 = arith.constant 0.176776692 : f32
    %363 = vector.broadcast %cst_120 : f32 to vector<8x8xf32>
    %364 = arith.mulf %362, %363 : vector<8x8xf32>
    %cst_121 = arith.constant dense<0xFF800000> : vector<8xf32>
    %365 = vector.multi_reduction <maximumf>, %364, %cst_121 [1] : vector<8x8xf32> to vector<8xf32>
    %366 = vector.shape_cast %365 : vector<8xf32> to vector<8x1xf32>
    %367 = vector.broadcast %366 : vector<8x1xf32> to vector<8x8xf32>
    %368 = arith.subf %364, %367 : vector<8x8xf32>
    %369 = math.exp %368 : vector<8x8xf32>
    %cst_122 = arith.constant dense<0.000000e+00> : vector<8xf32>
    %370 = vector.multi_reduction <add>, %369, %cst_122 [1] : vector<8x8xf32> to vector<8xf32>
    %371 = vector.shape_cast %370 : vector<8xf32> to vector<8x1xf32>
    %372 = vector.broadcast %371 : vector<8x1xf32> to vector<8x8xf32>
    %373 = arith.divf %369, %372 : vector<8x8xf32>
    %cst_123 = arith.constant dense<0.000000e+00> : vector<8x8xf32>
    %374 = tpu.matmul %373, %361, %cst_123 {dimension_numbers = #tpu.dot_dimension_numbers<[1], [0], [0], [1], [0, 0, 1, 1], [], []>} : vector<8x8xf32>, vector<8x8xf32>, vector<8x8xf32> -> vector<8x8xf32>
    %375 = vector.extract_strided_slice %304 {offsets = [16, 0], sizes = [8, 32], strides = [1, 1]} : vector<32x32xf32> to vector<8x32xf32>
    %cst_124 = arith.constant dense<0.000000e+00> : vector<8x32xf32>
    %376 = tpu.matmul %374, %375, %cst_124 {dimension_numbers = #tpu.dot_dimension_numbers<[1], [0], [0], [1], [0, 0, 1, 1], [], []>} : vector<8x8xf32>, vector<8x32xf32>, vector<8x32xf32> -> vector<8x32xf32>
    %377 = arith.addf %358, %376 : vector<8x32xf32>
    %378 = vector.extract_strided_slice %312 {offsets = [0, 24], sizes = [8, 8], strides = [1, 1]} : vector<8x32xf32> to vector<8x8xf32>
    %379 = vector.extract_strided_slice %318 {offsets = [0, 24], sizes = [8, 8], strides = [1, 1]} : vector<8x32xf32> to vector<8x8xf32>
    %380 = vector.extract_strided_slice %319 {offsets = [0, 24], sizes = [8, 8], strides = [1, 1]} : vector<8x32xf32> to vector<8x8xf32>
    %cst_125 = arith.constant dense<0.000000e+00> : vector<8x8xf32>
    %381 = tpu.matmul %378, %379, %cst_125 {dimension_numbers = #tpu.dot_dimension_numbers<[1], [1], [0], [0], [0, 0, 1, 0], [], []>} : vector<8x8xf32>, vector<8x8xf32>, vector<8x8xf32> -> vector<8x8xf32>
    %cst_126 = arith.constant 0.176776692 : f32
    %382 = vector.broadcast %cst_126 : f32 to vector<8x8xf32>
    %383 = arith.mulf %381, %382 : vector<8x8xf32>
    %cst_127 = arith.constant dense<0xFF800000> : vector<8xf32>
    %384 = vector.multi_reduction <maximumf>, %383, %cst_127 [1] : vector<8x8xf32> to vector<8xf32>
    %385 = vector.shape_cast %384 : vector<8xf32> to vector<8x1xf32>
    %386 = vector.broadcast %385 : vector<8x1xf32> to vector<8x8xf32>
    %387 = arith.subf %383, %386 : vector<8x8xf32>
    %388 = math.exp %387 : vector<8x8xf32>
    %cst_128 = arith.constant dense<0.000000e+00> : vector<8xf32>
    %389 = vector.multi_reduction <add>, %388, %cst_128 [1] : vector<8x8xf32> to vector<8xf32>
    %390 = vector.shape_cast %389 : vector<8xf32> to vector<8x1xf32>
    %391 = vector.broadcast %390 : vector<8x1xf32> to vector<8x8xf32>
    %392 = arith.divf %388, %391 : vector<8x8xf32>
    %cst_129 = arith.constant dense<0.000000e+00> : vector<8x8xf32>
    %393 = tpu.matmul %392, %380, %cst_129 {dimension_numbers = #tpu.dot_dimension_numbers<[1], [0], [0], [1], [0, 0, 1, 1], [], []>} : vector<8x8xf32>, vector<8x8xf32>, vector<8x8xf32> -> vector<8x8xf32>
    %394 = vector.extract_strided_slice %304 {offsets = [24, 0], sizes = [8, 32], strides = [1, 1]} : vector<32x32xf32> to vector<8x32xf32>
    %cst_130 = arith.constant dense<0.000000e+00> : vector<8x32xf32>
    %395 = tpu.matmul %393, %394, %cst_130 {dimension_numbers = #tpu.dot_dimension_numbers<[1], [0], [0], [1], [0, 0, 1, 1], [], []>} : vector<8x8xf32>, vector<8x32xf32>, vector<8x32xf32> -> vector<8x32xf32>
    %396 = arith.addf %377, %395 : vector<8x32xf32>
    %397 = arith.addf %396, %299 : vector<8x32xf32>
    %cst_131 = arith.constant dense<0.000000e+00> : vector<8xf32>
    %398 = vector.multi_reduction <add>, %397, %cst_131 [1] : vector<8x32xf32> to vector<8xf32>
    %399 = vector.shape_cast %398 : vector<8xf32> to vector<8x1xf32>
    %cst_132 = arith.constant 3.200000e+01 : f32
    %400 = vector.broadcast %cst_132 : f32 to vector<8x1xf32>
    %401 = arith.divf %399, %400 : vector<8x1xf32>
    %402 = vector.broadcast %401 : vector<8x1xf32> to vector<8x32xf32>
    %403 = arith.subf %397, %402 : vector<8x32xf32>
    %404 = arith.mulf %403, %403 : vector<8x32xf32>
    %cst_133 = arith.constant dense<0.000000e+00> : vector<8xf32>
    %405 = vector.multi_reduction <add>, %404, %cst_133 [1] : vector<8x32xf32> to vector<8xf32>
    %406 = vector.shape_cast %405 : vector<8xf32> to vector<8x1xf32>
    %cst_134 = arith.constant 3.200000e+01 : f32
    %407 = vector.broadcast %cst_134 : f32 to vector<8x1xf32>
    %408 = arith.divf %406, %407 : vector<8x1xf32>
    %409 = vector.broadcast %401 : vector<8x1xf32> to vector<8x32xf32>
    %410 = arith.subf %397, %409 : vector<8x32xf32>
    %cst_135 = arith.constant 9.99999974E-6 : f32
    %411 = vector.broadcast %cst_135 : f32 to vector<8x1xf32>
    %412 = arith.addf %408, %411 : vector<8x1xf32>
    %413 = math.rsqrt %412 : vector<8x1xf32>
    %414 = vector.broadcast %413 : vector<8x1xf32> to vector<8x32xf32>
    %415 = arith.mulf %410, %414 : vector<8x32xf32>
    %416 = vector.broadcast %306 : vector<1x32xf32> to vector<8x32xf32>
    %417 = arith.mulf %415, %416 : vector<8x32xf32>
    %418 = vector.broadcast %307 : vector<1x32xf32> to vector<8x32xf32>
    %419 = arith.addf %417, %418 : vector<8x32xf32>
    %c2_136 = arith.constant 2 : index
    %c0_137 = arith.constant 0 : index
    %c0_138 = arith.constant 0 : index
    %420 = vector.load %arg8[%c2_136, %c0_137, %c0_138] : memref<4x32x128xf32, #tpu.memory_space<vmem>>, vector<1x32x128xf32>
    %421 = vector.shape_cast %420 : vector<1x32x128xf32> to vector<32x128xf32>
    %c2_139 = arith.constant 2 : index
    %c0_140 = arith.constant 0 : index
    %c0_141 = arith.constant 0 : index
    %422 = vector.load %arg9[%c2_139, %c0_140, %c0_141] : memref<4x128x32xf32, #tpu.memory_space<vmem>>, vector<1x128x32xf32>
    %423 = vector.shape_cast %422 : vector<1x128x32xf32> to vector<128x32xf32>
    %c2_142 = arith.constant 2 : index
    %c0_143 = arith.constant 0 : index
    %c0_144 = arith.constant 0 : index
    %424 = vector.load %arg10[%c2_142, %c0_143, %c0_144] : memref<4x2x128xf32, #tpu.memory_space<vmem>>, vector<1x2x128xf32>
    %425 = vector.shape_cast %424 : vector<1x2x128xf32> to vector<2x128xf32>
    %cst_145 = arith.constant dense<0.000000e+00> : vector<8x128xf32>
    %426 = tpu.matmul %419, %421, %cst_145 {dimension_numbers = #tpu.dot_dimension_numbers<[1], [0], [0], [1], [0, 0, 1, 1], [], []>} : vector<8x32xf32>, vector<32x128xf32>, vector<8x128xf32> -> vector<8x128xf32>
    %427 = vector.extract_strided_slice %425 {offsets = [0, 0], sizes = [1, 128], strides = [1, 1]} : vector<2x128xf32> to vector<1x128xf32>
    %428 = vector.broadcast %427 : vector<1x128xf32> to vector<8x128xf32>
    %429 = arith.addf %426, %428 : vector<8x128xf32>
    %cst_146 = arith.constant 0.000000e+00 : f32
    %430 = vector.broadcast %cst_146 : f32 to vector<8x128xf32>
    %431 = arith.maximumf %429, %430 : vector<8x128xf32>
    %cst_147 = arith.constant dense<0.000000e+00> : vector<8x32xf32>
    %432 = tpu.matmul %431, %423, %cst_147 {dimension_numbers = #tpu.dot_dimension_numbers<[1], [0], [0], [1], [0, 0, 1, 1], [], []>} : vector<8x128xf32>, vector<128x32xf32>, vector<8x32xf32> -> vector<8x32xf32>
    %433 = vector.extract_strided_slice %425 {offsets = [1, 0], sizes = [1, 32], strides = [1, 1]} : vector<2x128xf32> to vector<1x32xf32>
    %434 = vector.broadcast %433 : vector<1x32xf32> to vector<8x32xf32>
    %435 = arith.addf %432, %434 : vector<8x32xf32>
    %436 = arith.addf %435, %419 : vector<8x32xf32>
    %437 = vector.extract_strided_slice %425 {offsets = [1, 32], sizes = [1, 32], strides = [1, 1]} : vector<2x128xf32> to vector<1x32xf32>
    %438 = vector.extract_strided_slice %425 {offsets = [1, 64], sizes = [1, 32], strides = [1, 1]} : vector<2x128xf32> to vector<1x32xf32>
    %cst_148 = arith.constant dense<0.000000e+00> : vector<8xf32>
    %439 = vector.multi_reduction <add>, %436, %cst_148 [1] : vector<8x32xf32> to vector<8xf32>
    %440 = vector.shape_cast %439 : vector<8xf32> to vector<8x1xf32>
    %cst_149 = arith.constant 3.200000e+01 : f32
    %441 = vector.broadcast %cst_149 : f32 to vector<8x1xf32>
    %442 = arith.divf %440, %441 : vector<8x1xf32>
    %443 = vector.broadcast %442 : vector<8x1xf32> to vector<8x32xf32>
    %444 = arith.subf %436, %443 : vector<8x32xf32>
    %445 = arith.mulf %444, %444 : vector<8x32xf32>
    %cst_150 = arith.constant dense<0.000000e+00> : vector<8xf32>
    %446 = vector.multi_reduction <add>, %445, %cst_150 [1] : vector<8x32xf32> to vector<8xf32>
    %447 = vector.shape_cast %446 : vector<8xf32> to vector<8x1xf32>
    %cst_151 = arith.constant 3.200000e+01 : f32
    %448 = vector.broadcast %cst_151 : f32 to vector<8x1xf32>
    %449 = arith.divf %447, %448 : vector<8x1xf32>
    %450 = vector.broadcast %442 : vector<8x1xf32> to vector<8x32xf32>
    %451 = arith.subf %436, %450 : vector<8x32xf32>
    %cst_152 = arith.constant 9.99999974E-6 : f32
    %452 = vector.broadcast %cst_152 : f32 to vector<8x1xf32>
    %453 = arith.addf %449, %452 : vector<8x1xf32>
    %454 = math.rsqrt %453 : vector<8x1xf32>
    %455 = vector.broadcast %454 : vector<8x1xf32> to vector<8x32xf32>
    %456 = arith.mulf %451, %455 : vector<8x32xf32>
    %457 = vector.broadcast %437 : vector<1x32xf32> to vector<8x32xf32>
    %458 = arith.mulf %456, %457 : vector<8x32xf32>
    %459 = vector.broadcast %438 : vector<1x32xf32> to vector<8x32xf32>
    %460 = arith.addf %458, %459 : vector<8x32xf32>
    %c4 = arith.constant 4 : index
    %c0_153 = arith.constant 0 : index
    %c0_154 = arith.constant 0 : index
    %461 = vector.load %arg6[%c4, %c0_153, %c0_154] : memref<6x32x128xf32, #tpu.memory_space<vmem>>, vector<1x32x128xf32>
    %462 = vector.shape_cast %461 : vector<1x32x128xf32> to vector<32x128xf32>
    %c4_155 = arith.constant 4 : index
    %c0_156 = arith.constant 0 : index
    %c0_157 = arith.constant 0 : index
    %463 = vector.load %arg7[%c4_155, %c0_156, %c0_157] : memref<6x2x96xf32, #tpu.memory_space<vmem>>, vector<1x2x96xf32>
    %464 = vector.shape_cast %463 : vector<1x2x96xf32> to vector<2x96xf32>
    %465 = vector.extract_strided_slice %462 {offsets = [0, 96], sizes = [32, 32], strides = [1, 1]} : vector<32x128xf32> to vector<32x32xf32>
    %466 = vector.extract_strided_slice %464 {offsets = [1, 0], sizes = [1, 32], strides = [1, 1]} : vector<2x96xf32> to vector<1x32xf32>
    %467 = vector.extract_strided_slice %464 {offsets = [1, 32], sizes = [1, 32], strides = [1, 1]} : vector<2x96xf32> to vector<1x32xf32>
    %468 = vector.extract_strided_slice %464 {offsets = [1, 64], sizes = [1, 32], strides = [1, 1]} : vector<2x96xf32> to vector<1x32xf32>
    %469 = vector.extract_strided_slice %462 {offsets = [0, 0], sizes = [32, 96], strides = [1, 1]} : vector<32x128xf32> to vector<32x96xf32>
    %cst_158 = arith.constant dense<0.000000e+00> : vector<8x96xf32>
    %470 = tpu.matmul %460, %469, %cst_158 {dimension_numbers = #tpu.dot_dimension_numbers<[1], [0], [0], [1], [0, 0, 1, 1], [], []>} : vector<8x32xf32>, vector<32x96xf32>, vector<8x96xf32> -> vector<8x96xf32>
    %471 = vector.extract_strided_slice %464 {offsets = [0, 0], sizes = [1, 96], strides = [1, 1]} : vector<2x96xf32> to vector<1x96xf32>
    %472 = vector.broadcast %471 : vector<1x96xf32> to vector<8x96xf32>
    %473 = arith.addf %470, %472 : vector<8x96xf32>
    %474 = vector.extract_strided_slice %473 {offsets = [0, 0], sizes = [8, 32], strides = [1, 1]} : vector<8x96xf32> to vector<8x32xf32>
    %475 = vector.extract_strided_slice %473 {offsets = [0, 32], sizes = [8, 32], strides = [1, 1]} : vector<8x96xf32> to vector<8x32xf32>
    %476 = vector.extract_strided_slice %473 {offsets = [0, 64], sizes = [8, 32], strides = [1, 1]} : vector<8x96xf32> to vector<8x32xf32>
    %477 = vector.extract_strided_slice %474 {offsets = [0, 0], sizes = [8, 8], strides = [1, 1]} : vector<8x32xf32> to vector<8x8xf32>
    %478 = vector.extract_strided_slice %475 {offsets = [0, 0], sizes = [8, 8], strides = [1, 1]} : vector<8x32xf32> to vector<8x8xf32>
    %479 = vector.extract_strided_slice %476 {offsets = [0, 0], sizes = [8, 8], strides = [1, 1]} : vector<8x32xf32> to vector<8x8xf32>
    %cst_159 = arith.constant dense<0.000000e+00> : vector<8x8xf32>
    %480 = tpu.matmul %477, %478, %cst_159 {dimension_numbers = #tpu.dot_dimension_numbers<[1], [1], [0], [0], [0, 0, 1, 0], [], []>} : vector<8x8xf32>, vector<8x8xf32>, vector<8x8xf32> -> vector<8x8xf32>
    %481 = arith.addf %480, %20 : vector<8x8xf32>
    %cst_160 = arith.constant 0.176776692 : f32
    %482 = vector.broadcast %cst_160 : f32 to vector<8x8xf32>
    %483 = arith.mulf %481, %482 : vector<8x8xf32>
    %cst_161 = arith.constant dense<0xFF800000> : vector<8xf32>
    %484 = vector.multi_reduction <maximumf>, %483, %cst_161 [1] : vector<8x8xf32> to vector<8xf32>
    %485 = vector.shape_cast %484 : vector<8xf32> to vector<8x1xf32>
    %486 = vector.broadcast %485 : vector<8x1xf32> to vector<8x8xf32>
    %487 = arith.subf %483, %486 : vector<8x8xf32>
    %488 = math.exp %487 : vector<8x8xf32>
    %cst_162 = arith.constant dense<0.000000e+00> : vector<8xf32>
    %489 = vector.multi_reduction <add>, %488, %cst_162 [1] : vector<8x8xf32> to vector<8xf32>
    %490 = vector.shape_cast %489 : vector<8xf32> to vector<8x1xf32>
    %491 = vector.broadcast %490 : vector<8x1xf32> to vector<8x8xf32>
    %492 = arith.divf %488, %491 : vector<8x8xf32>
    %cst_163 = arith.constant dense<0.000000e+00> : vector<8x8xf32>
    %493 = tpu.matmul %492, %479, %cst_163 {dimension_numbers = #tpu.dot_dimension_numbers<[1], [0], [0], [1], [0, 0, 1, 1], [], []>} : vector<8x8xf32>, vector<8x8xf32>, vector<8x8xf32> -> vector<8x8xf32>
    %494 = vector.extract_strided_slice %465 {offsets = [0, 0], sizes = [8, 32], strides = [1, 1]} : vector<32x32xf32> to vector<8x32xf32>
    %cst_164 = arith.constant dense<0.000000e+00> : vector<8x32xf32>
    %495 = tpu.matmul %493, %494, %cst_164 {dimension_numbers = #tpu.dot_dimension_numbers<[1], [0], [0], [1], [0, 0, 1, 1], [], []>} : vector<8x8xf32>, vector<8x32xf32>, vector<8x32xf32> -> vector<8x32xf32>
    %496 = vector.broadcast %466 : vector<1x32xf32> to vector<8x32xf32>
    %497 = arith.addf %496, %495 : vector<8x32xf32>
    %498 = vector.extract_strided_slice %474 {offsets = [0, 8], sizes = [8, 8], strides = [1, 1]} : vector<8x32xf32> to vector<8x8xf32>
    %499 = vector.extract_strided_slice %475 {offsets = [0, 8], sizes = [8, 8], strides = [1, 1]} : vector<8x32xf32> to vector<8x8xf32>
    %500 = vector.extract_strided_slice %476 {offsets = [0, 8], sizes = [8, 8], strides = [1, 1]} : vector<8x32xf32> to vector<8x8xf32>
    %cst_165 = arith.constant dense<0.000000e+00> : vector<8x8xf32>
    %501 = tpu.matmul %498, %499, %cst_165 {dimension_numbers = #tpu.dot_dimension_numbers<[1], [1], [0], [0], [0, 0, 1, 0], [], []>} : vector<8x8xf32>, vector<8x8xf32>, vector<8x8xf32> -> vector<8x8xf32>
    %502 = arith.addf %501, %20 : vector<8x8xf32>
    %cst_166 = arith.constant 0.176776692 : f32
    %503 = vector.broadcast %cst_166 : f32 to vector<8x8xf32>
    %504 = arith.mulf %502, %503 : vector<8x8xf32>
    %cst_167 = arith.constant dense<0xFF800000> : vector<8xf32>
    %505 = vector.multi_reduction <maximumf>, %504, %cst_167 [1] : vector<8x8xf32> to vector<8xf32>
    %506 = vector.shape_cast %505 : vector<8xf32> to vector<8x1xf32>
    %507 = vector.broadcast %506 : vector<8x1xf32> to vector<8x8xf32>
    %508 = arith.subf %504, %507 : vector<8x8xf32>
    %509 = math.exp %508 : vector<8x8xf32>
    %cst_168 = arith.constant dense<0.000000e+00> : vector<8xf32>
    %510 = vector.multi_reduction <add>, %509, %cst_168 [1] : vector<8x8xf32> to vector<8xf32>
    %511 = vector.shape_cast %510 : vector<8xf32> to vector<8x1xf32>
    %512 = vector.broadcast %511 : vector<8x1xf32> to vector<8x8xf32>
    %513 = arith.divf %509, %512 : vector<8x8xf32>
    %cst_169 = arith.constant dense<0.000000e+00> : vector<8x8xf32>
    %514 = tpu.matmul %513, %500, %cst_169 {dimension_numbers = #tpu.dot_dimension_numbers<[1], [0], [0], [1], [0, 0, 1, 1], [], []>} : vector<8x8xf32>, vector<8x8xf32>, vector<8x8xf32> -> vector<8x8xf32>
    %515 = vector.extract_strided_slice %465 {offsets = [8, 0], sizes = [8, 32], strides = [1, 1]} : vector<32x32xf32> to vector<8x32xf32>
    %cst_170 = arith.constant dense<0.000000e+00> : vector<8x32xf32>
    %516 = tpu.matmul %514, %515, %cst_170 {dimension_numbers = #tpu.dot_dimension_numbers<[1], [0], [0], [1], [0, 0, 1, 1], [], []>} : vector<8x8xf32>, vector<8x32xf32>, vector<8x32xf32> -> vector<8x32xf32>
    %517 = arith.addf %497, %516 : vector<8x32xf32>
    %518 = vector.extract_strided_slice %474 {offsets = [0, 16], sizes = [8, 8], strides = [1, 1]} : vector<8x32xf32> to vector<8x8xf32>
    %519 = vector.extract_strided_slice %475 {offsets = [0, 16], sizes = [8, 8], strides = [1, 1]} : vector<8x32xf32> to vector<8x8xf32>
    %520 = vector.extract_strided_slice %476 {offsets = [0, 16], sizes = [8, 8], strides = [1, 1]} : vector<8x32xf32> to vector<8x8xf32>
    %cst_171 = arith.constant dense<0.000000e+00> : vector<8x8xf32>
    %521 = tpu.matmul %518, %519, %cst_171 {dimension_numbers = #tpu.dot_dimension_numbers<[1], [1], [0], [0], [0, 0, 1, 0], [], []>} : vector<8x8xf32>, vector<8x8xf32>, vector<8x8xf32> -> vector<8x8xf32>
    %522 = arith.addf %521, %20 : vector<8x8xf32>
    %cst_172 = arith.constant 0.176776692 : f32
    %523 = vector.broadcast %cst_172 : f32 to vector<8x8xf32>
    %524 = arith.mulf %522, %523 : vector<8x8xf32>
    %cst_173 = arith.constant dense<0xFF800000> : vector<8xf32>
    %525 = vector.multi_reduction <maximumf>, %524, %cst_173 [1] : vector<8x8xf32> to vector<8xf32>
    %526 = vector.shape_cast %525 : vector<8xf32> to vector<8x1xf32>
    %527 = vector.broadcast %526 : vector<8x1xf32> to vector<8x8xf32>
    %528 = arith.subf %524, %527 : vector<8x8xf32>
    %529 = math.exp %528 : vector<8x8xf32>
    %cst_174 = arith.constant dense<0.000000e+00> : vector<8xf32>
    %530 = vector.multi_reduction <add>, %529, %cst_174 [1] : vector<8x8xf32> to vector<8xf32>
    %531 = vector.shape_cast %530 : vector<8xf32> to vector<8x1xf32>
    %532 = vector.broadcast %531 : vector<8x1xf32> to vector<8x8xf32>
    %533 = arith.divf %529, %532 : vector<8x8xf32>
    %cst_175 = arith.constant dense<0.000000e+00> : vector<8x8xf32>
    %534 = tpu.matmul %533, %520, %cst_175 {dimension_numbers = #tpu.dot_dimension_numbers<[1], [0], [0], [1], [0, 0, 1, 1], [], []>} : vector<8x8xf32>, vector<8x8xf32>, vector<8x8xf32> -> vector<8x8xf32>
    %535 = vector.extract_strided_slice %465 {offsets = [16, 0], sizes = [8, 32], strides = [1, 1]} : vector<32x32xf32> to vector<8x32xf32>
    %cst_176 = arith.constant dense<0.000000e+00> : vector<8x32xf32>
    %536 = tpu.matmul %534, %535, %cst_176 {dimension_numbers = #tpu.dot_dimension_numbers<[1], [0], [0], [1], [0, 0, 1, 1], [], []>} : vector<8x8xf32>, vector<8x32xf32>, vector<8x32xf32> -> vector<8x32xf32>
    %537 = arith.addf %517, %536 : vector<8x32xf32>
    %538 = vector.extract_strided_slice %474 {offsets = [0, 24], sizes = [8, 8], strides = [1, 1]} : vector<8x32xf32> to vector<8x8xf32>
    %539 = vector.extract_strided_slice %475 {offsets = [0, 24], sizes = [8, 8], strides = [1, 1]} : vector<8x32xf32> to vector<8x8xf32>
    %540 = vector.extract_strided_slice %476 {offsets = [0, 24], sizes = [8, 8], strides = [1, 1]} : vector<8x32xf32> to vector<8x8xf32>
    %cst_177 = arith.constant dense<0.000000e+00> : vector<8x8xf32>
    %541 = tpu.matmul %538, %539, %cst_177 {dimension_numbers = #tpu.dot_dimension_numbers<[1], [1], [0], [0], [0, 0, 1, 0], [], []>} : vector<8x8xf32>, vector<8x8xf32>, vector<8x8xf32> -> vector<8x8xf32>
    %542 = arith.addf %541, %20 : vector<8x8xf32>
    %cst_178 = arith.constant 0.176776692 : f32
    %543 = vector.broadcast %cst_178 : f32 to vector<8x8xf32>
    %544 = arith.mulf %542, %543 : vector<8x8xf32>
    %cst_179 = arith.constant dense<0xFF800000> : vector<8xf32>
    %545 = vector.multi_reduction <maximumf>, %544, %cst_179 [1] : vector<8x8xf32> to vector<8xf32>
    %546 = vector.shape_cast %545 : vector<8xf32> to vector<8x1xf32>
    %547 = vector.broadcast %546 : vector<8x1xf32> to vector<8x8xf32>
    %548 = arith.subf %544, %547 : vector<8x8xf32>
    %549 = math.exp %548 : vector<8x8xf32>
    %cst_180 = arith.constant dense<0.000000e+00> : vector<8xf32>
    %550 = vector.multi_reduction <add>, %549, %cst_180 [1] : vector<8x8xf32> to vector<8xf32>
    %551 = vector.shape_cast %550 : vector<8xf32> to vector<8x1xf32>
    %552 = vector.broadcast %551 : vector<8x1xf32> to vector<8x8xf32>
    %553 = arith.divf %549, %552 : vector<8x8xf32>
    %cst_181 = arith.constant dense<0.000000e+00> : vector<8x8xf32>
    %554 = tpu.matmul %553, %540, %cst_181 {dimension_numbers = #tpu.dot_dimension_numbers<[1], [0], [0], [1], [0, 0, 1, 1], [], []>} : vector<8x8xf32>, vector<8x8xf32>, vector<8x8xf32> -> vector<8x8xf32>
    %555 = vector.extract_strided_slice %465 {offsets = [24, 0], sizes = [8, 32], strides = [1, 1]} : vector<32x32xf32> to vector<8x32xf32>
    %cst_182 = arith.constant dense<0.000000e+00> : vector<8x32xf32>
    %556 = tpu.matmul %554, %555, %cst_182 {dimension_numbers = #tpu.dot_dimension_numbers<[1], [0], [0], [1], [0, 0, 1, 1], [], []>} : vector<8x8xf32>, vector<8x32xf32>, vector<8x32xf32> -> vector<8x32xf32>
    %557 = arith.addf %537, %556 : vector<8x32xf32>
    %558 = arith.addf %557, %460 : vector<8x32xf32>
    %cst_183 = arith.constant dense<0.000000e+00> : vector<8xf32>
    %559 = vector.multi_reduction <add>, %558, %cst_183 [1] : vector<8x32xf32> to vector<8xf32>
    %560 = vector.shape_cast %559 : vector<8xf32> to vector<8x1xf32>
    %cst_184 = arith.constant 3.200000e+01 : f32
    %561 = vector.broadcast %cst_184 : f32 to vector<8x1xf32>
    %562 = arith.divf %560, %561 : vector<8x1xf32>
    %563 = vector.broadcast %562 : vector<8x1xf32> to vector<8x32xf32>
    %564 = arith.subf %558, %563 : vector<8x32xf32>
    %565 = arith.mulf %564, %564 : vector<8x32xf32>
    %cst_185 = arith.constant dense<0.000000e+00> : vector<8xf32>
    %566 = vector.multi_reduction <add>, %565, %cst_185 [1] : vector<8x32xf32> to vector<8xf32>
    %567 = vector.shape_cast %566 : vector<8xf32> to vector<8x1xf32>
    %cst_186 = arith.constant 3.200000e+01 : f32
    %568 = vector.broadcast %cst_186 : f32 to vector<8x1xf32>
    %569 = arith.divf %567, %568 : vector<8x1xf32>
    %570 = vector.broadcast %562 : vector<8x1xf32> to vector<8x32xf32>
    %571 = arith.subf %558, %570 : vector<8x32xf32>
    %cst_187 = arith.constant 9.99999974E-6 : f32
    %572 = vector.broadcast %cst_187 : f32 to vector<8x1xf32>
    %573 = arith.addf %569, %572 : vector<8x1xf32>
    %574 = math.rsqrt %573 : vector<8x1xf32>
    %575 = vector.broadcast %574 : vector<8x1xf32> to vector<8x32xf32>
    %576 = arith.mulf %571, %575 : vector<8x32xf32>
    %577 = vector.broadcast %467 : vector<1x32xf32> to vector<8x32xf32>
    %578 = arith.mulf %576, %577 : vector<8x32xf32>
    %579 = vector.broadcast %468 : vector<1x32xf32> to vector<8x32xf32>
    %580 = arith.addf %578, %579 : vector<8x32xf32>
    %c5 = arith.constant 5 : index
    %c0_188 = arith.constant 0 : index
    %c0_189 = arith.constant 0 : index
    %581 = vector.load %arg6[%c5, %c0_188, %c0_189] : memref<6x32x128xf32, #tpu.memory_space<vmem>>, vector<1x32x128xf32>
    %582 = vector.shape_cast %581 : vector<1x32x128xf32> to vector<32x128xf32>
    %c5_190 = arith.constant 5 : index
    %c0_191 = arith.constant 0 : index
    %c0_192 = arith.constant 0 : index
    %583 = vector.load %arg7[%c5_190, %c0_191, %c0_192] : memref<6x2x96xf32, #tpu.memory_space<vmem>>, vector<1x2x96xf32>
    %584 = vector.shape_cast %583 : vector<1x2x96xf32> to vector<2x96xf32>
    %585 = vector.extract_strided_slice %582 {offsets = [0, 96], sizes = [32, 32], strides = [1, 1]} : vector<32x128xf32> to vector<32x32xf32>
    %586 = vector.extract_strided_slice %584 {offsets = [1, 0], sizes = [1, 32], strides = [1, 1]} : vector<2x96xf32> to vector<1x32xf32>
    %587 = vector.extract_strided_slice %584 {offsets = [1, 32], sizes = [1, 32], strides = [1, 1]} : vector<2x96xf32> to vector<1x32xf32>
    %588 = vector.extract_strided_slice %584 {offsets = [1, 64], sizes = [1, 32], strides = [1, 1]} : vector<2x96xf32> to vector<1x32xf32>
    %589 = vector.extract_strided_slice %582 {offsets = [0, 0], sizes = [32, 32], strides = [1, 1]} : vector<32x128xf32> to vector<32x32xf32>
    %cst_193 = arith.constant dense<0.000000e+00> : vector<8x32xf32>
    %590 = tpu.matmul %580, %589, %cst_193 {dimension_numbers = #tpu.dot_dimension_numbers<[1], [0], [0], [1], [0, 0, 1, 1], [], []>} : vector<8x32xf32>, vector<32x32xf32>, vector<8x32xf32> -> vector<8x32xf32>
    %591 = vector.extract_strided_slice %584 {offsets = [0, 0], sizes = [1, 32], strides = [1, 1]} : vector<2x96xf32> to vector<1x32xf32>
    %592 = vector.broadcast %591 : vector<1x32xf32> to vector<8x32xf32>
    %593 = arith.addf %590, %592 : vector<8x32xf32>
    %594 = vector.extract_strided_slice %582 {offsets = [0, 32], sizes = [32, 64], strides = [1, 1]} : vector<32x128xf32> to vector<32x64xf32>
    %cst_194 = arith.constant dense<0.000000e+00> : vector<8x64xf32>
    %595 = tpu.matmul %177, %594, %cst_194 {dimension_numbers = #tpu.dot_dimension_numbers<[1], [0], [0], [1], [0, 0, 1, 1], [], []>} : vector<8x32xf32>, vector<32x64xf32>, vector<8x64xf32> -> vector<8x64xf32>
    %596 = vector.extract_strided_slice %584 {offsets = [0, 32], sizes = [1, 64], strides = [1, 1]} : vector<2x96xf32> to vector<1x64xf32>
    %597 = vector.broadcast %596 : vector<1x64xf32> to vector<8x64xf32>
    %598 = arith.addf %595, %597 : vector<8x64xf32>
    %599 = vector.extract_strided_slice %598 {offsets = [0, 0], sizes = [8, 32], strides = [1, 1]} : vector<8x64xf32> to vector<8x32xf32>
    %600 = vector.extract_strided_slice %598 {offsets = [0, 32], sizes = [8, 32], strides = [1, 1]} : vector<8x64xf32> to vector<8x32xf32>
    %601 = vector.extract_strided_slice %593 {offsets = [0, 0], sizes = [8, 8], strides = [1, 1]} : vector<8x32xf32> to vector<8x8xf32>
    %602 = vector.extract_strided_slice %599 {offsets = [0, 0], sizes = [8, 8], strides = [1, 1]} : vector<8x32xf32> to vector<8x8xf32>
    %603 = vector.extract_strided_slice %600 {offsets = [0, 0], sizes = [8, 8], strides = [1, 1]} : vector<8x32xf32> to vector<8x8xf32>
    %cst_195 = arith.constant dense<0.000000e+00> : vector<8x8xf32>
    %604 = tpu.matmul %601, %602, %cst_195 {dimension_numbers = #tpu.dot_dimension_numbers<[1], [1], [0], [0], [0, 0, 1, 0], [], []>} : vector<8x8xf32>, vector<8x8xf32>, vector<8x8xf32> -> vector<8x8xf32>
    %cst_196 = arith.constant 0.176776692 : f32
    %605 = vector.broadcast %cst_196 : f32 to vector<8x8xf32>
    %606 = arith.mulf %604, %605 : vector<8x8xf32>
    %cst_197 = arith.constant dense<0xFF800000> : vector<8xf32>
    %607 = vector.multi_reduction <maximumf>, %606, %cst_197 [1] : vector<8x8xf32> to vector<8xf32>
    %608 = vector.shape_cast %607 : vector<8xf32> to vector<8x1xf32>
    %609 = vector.broadcast %608 : vector<8x1xf32> to vector<8x8xf32>
    %610 = arith.subf %606, %609 : vector<8x8xf32>
    %611 = math.exp %610 : vector<8x8xf32>
    %cst_198 = arith.constant dense<0.000000e+00> : vector<8xf32>
    %612 = vector.multi_reduction <add>, %611, %cst_198 [1] : vector<8x8xf32> to vector<8xf32>
    %613 = vector.shape_cast %612 : vector<8xf32> to vector<8x1xf32>
    %614 = vector.broadcast %613 : vector<8x1xf32> to vector<8x8xf32>
    %615 = arith.divf %611, %614 : vector<8x8xf32>
    %cst_199 = arith.constant dense<0.000000e+00> : vector<8x8xf32>
    %616 = tpu.matmul %615, %603, %cst_199 {dimension_numbers = #tpu.dot_dimension_numbers<[1], [0], [0], [1], [0, 0, 1, 1], [], []>} : vector<8x8xf32>, vector<8x8xf32>, vector<8x8xf32> -> vector<8x8xf32>
    %617 = vector.extract_strided_slice %585 {offsets = [0, 0], sizes = [8, 32], strides = [1, 1]} : vector<32x32xf32> to vector<8x32xf32>
    %cst_200 = arith.constant dense<0.000000e+00> : vector<8x32xf32>
    %618 = tpu.matmul %616, %617, %cst_200 {dimension_numbers = #tpu.dot_dimension_numbers<[1], [0], [0], [1], [0, 0, 1, 1], [], []>} : vector<8x8xf32>, vector<8x32xf32>, vector<8x32xf32> -> vector<8x32xf32>
    %619 = vector.broadcast %586 : vector<1x32xf32> to vector<8x32xf32>
    %620 = arith.addf %619, %618 : vector<8x32xf32>
    %621 = vector.extract_strided_slice %593 {offsets = [0, 8], sizes = [8, 8], strides = [1, 1]} : vector<8x32xf32> to vector<8x8xf32>
    %622 = vector.extract_strided_slice %599 {offsets = [0, 8], sizes = [8, 8], strides = [1, 1]} : vector<8x32xf32> to vector<8x8xf32>
    %623 = vector.extract_strided_slice %600 {offsets = [0, 8], sizes = [8, 8], strides = [1, 1]} : vector<8x32xf32> to vector<8x8xf32>
    %cst_201 = arith.constant dense<0.000000e+00> : vector<8x8xf32>
    %624 = tpu.matmul %621, %622, %cst_201 {dimension_numbers = #tpu.dot_dimension_numbers<[1], [1], [0], [0], [0, 0, 1, 0], [], []>} : vector<8x8xf32>, vector<8x8xf32>, vector<8x8xf32> -> vector<8x8xf32>
    %cst_202 = arith.constant 0.176776692 : f32
    %625 = vector.broadcast %cst_202 : f32 to vector<8x8xf32>
    %626 = arith.mulf %624, %625 : vector<8x8xf32>
    %cst_203 = arith.constant dense<0xFF800000> : vector<8xf32>
    %627 = vector.multi_reduction <maximumf>, %626, %cst_203 [1] : vector<8x8xf32> to vector<8xf32>
    %628 = vector.shape_cast %627 : vector<8xf32> to vector<8x1xf32>
    %629 = vector.broadcast %628 : vector<8x1xf32> to vector<8x8xf32>
    %630 = arith.subf %626, %629 : vector<8x8xf32>
    %631 = math.exp %630 : vector<8x8xf32>
    %cst_204 = arith.constant dense<0.000000e+00> : vector<8xf32>
    %632 = vector.multi_reduction <add>, %631, %cst_204 [1] : vector<8x8xf32> to vector<8xf32>
    %633 = vector.shape_cast %632 : vector<8xf32> to vector<8x1xf32>
    %634 = vector.broadcast %633 : vector<8x1xf32> to vector<8x8xf32>
    %635 = arith.divf %631, %634 : vector<8x8xf32>
    %cst_205 = arith.constant dense<0.000000e+00> : vector<8x8xf32>
    %636 = tpu.matmul %635, %623, %cst_205 {dimension_numbers = #tpu.dot_dimension_numbers<[1], [0], [0], [1], [0, 0, 1, 1], [], []>} : vector<8x8xf32>, vector<8x8xf32>, vector<8x8xf32> -> vector<8x8xf32>
    %637 = vector.extract_strided_slice %585 {offsets = [8, 0], sizes = [8, 32], strides = [1, 1]} : vector<32x32xf32> to vector<8x32xf32>
    %cst_206 = arith.constant dense<0.000000e+00> : vector<8x32xf32>
    %638 = tpu.matmul %636, %637, %cst_206 {dimension_numbers = #tpu.dot_dimension_numbers<[1], [0], [0], [1], [0, 0, 1, 1], [], []>} : vector<8x8xf32>, vector<8x32xf32>, vector<8x32xf32> -> vector<8x32xf32>
    %639 = arith.addf %620, %638 : vector<8x32xf32>
    %640 = vector.extract_strided_slice %593 {offsets = [0, 16], sizes = [8, 8], strides = [1, 1]} : vector<8x32xf32> to vector<8x8xf32>
    %641 = vector.extract_strided_slice %599 {offsets = [0, 16], sizes = [8, 8], strides = [1, 1]} : vector<8x32xf32> to vector<8x8xf32>
    %642 = vector.extract_strided_slice %600 {offsets = [0, 16], sizes = [8, 8], strides = [1, 1]} : vector<8x32xf32> to vector<8x8xf32>
    %cst_207 = arith.constant dense<0.000000e+00> : vector<8x8xf32>
    %643 = tpu.matmul %640, %641, %cst_207 {dimension_numbers = #tpu.dot_dimension_numbers<[1], [1], [0], [0], [0, 0, 1, 0], [], []>} : vector<8x8xf32>, vector<8x8xf32>, vector<8x8xf32> -> vector<8x8xf32>
    %cst_208 = arith.constant 0.176776692 : f32
    %644 = vector.broadcast %cst_208 : f32 to vector<8x8xf32>
    %645 = arith.mulf %643, %644 : vector<8x8xf32>
    %cst_209 = arith.constant dense<0xFF800000> : vector<8xf32>
    %646 = vector.multi_reduction <maximumf>, %645, %cst_209 [1] : vector<8x8xf32> to vector<8xf32>
    %647 = vector.shape_cast %646 : vector<8xf32> to vector<8x1xf32>
    %648 = vector.broadcast %647 : vector<8x1xf32> to vector<8x8xf32>
    %649 = arith.subf %645, %648 : vector<8x8xf32>
    %650 = math.exp %649 : vector<8x8xf32>
    %cst_210 = arith.constant dense<0.000000e+00> : vector<8xf32>
    %651 = vector.multi_reduction <add>, %650, %cst_210 [1] : vector<8x8xf32> to vector<8xf32>
    %652 = vector.shape_cast %651 : vector<8xf32> to vector<8x1xf32>
    %653 = vector.broadcast %652 : vector<8x1xf32> to vector<8x8xf32>
    %654 = arith.divf %650, %653 : vector<8x8xf32>
    %cst_211 = arith.constant dense<0.000000e+00> : vector<8x8xf32>
    %655 = tpu.matmul %654, %642, %cst_211 {dimension_numbers = #tpu.dot_dimension_numbers<[1], [0], [0], [1], [0, 0, 1, 1], [], []>} : vector<8x8xf32>, vector<8x8xf32>, vector<8x8xf32> -> vector<8x8xf32>
    %656 = vector.extract_strided_slice %585 {offsets = [16, 0], sizes = [8, 32], strides = [1, 1]} : vector<32x32xf32> to vector<8x32xf32>
    %cst_212 = arith.constant dense<0.000000e+00> : vector<8x32xf32>
    %657 = tpu.matmul %655, %656, %cst_212 {dimension_numbers = #tpu.dot_dimension_numbers<[1], [0], [0], [1], [0, 0, 1, 1], [], []>} : vector<8x8xf32>, vector<8x32xf32>, vector<8x32xf32> -> vector<8x32xf32>
    %658 = arith.addf %639, %657 : vector<8x32xf32>
    %659 = vector.extract_strided_slice %593 {offsets = [0, 24], sizes = [8, 8], strides = [1, 1]} : vector<8x32xf32> to vector<8x8xf32>
    %660 = vector.extract_strided_slice %599 {offsets = [0, 24], sizes = [8, 8], strides = [1, 1]} : vector<8x32xf32> to vector<8x8xf32>
    %661 = vector.extract_strided_slice %600 {offsets = [0, 24], sizes = [8, 8], strides = [1, 1]} : vector<8x32xf32> to vector<8x8xf32>
    %cst_213 = arith.constant dense<0.000000e+00> : vector<8x8xf32>
    %662 = tpu.matmul %659, %660, %cst_213 {dimension_numbers = #tpu.dot_dimension_numbers<[1], [1], [0], [0], [0, 0, 1, 0], [], []>} : vector<8x8xf32>, vector<8x8xf32>, vector<8x8xf32> -> vector<8x8xf32>
    %cst_214 = arith.constant 0.176776692 : f32
    %663 = vector.broadcast %cst_214 : f32 to vector<8x8xf32>
    %664 = arith.mulf %662, %663 : vector<8x8xf32>
    %cst_215 = arith.constant dense<0xFF800000> : vector<8xf32>
    %665 = vector.multi_reduction <maximumf>, %664, %cst_215 [1] : vector<8x8xf32> to vector<8xf32>
    %666 = vector.shape_cast %665 : vector<8xf32> to vector<8x1xf32>
    %667 = vector.broadcast %666 : vector<8x1xf32> to vector<8x8xf32>
    %668 = arith.subf %664, %667 : vector<8x8xf32>
    %669 = math.exp %668 : vector<8x8xf32>
    %cst_216 = arith.constant dense<0.000000e+00> : vector<8xf32>
    %670 = vector.multi_reduction <add>, %669, %cst_216 [1] : vector<8x8xf32> to vector<8xf32>
    %671 = vector.shape_cast %670 : vector<8xf32> to vector<8x1xf32>
    %672 = vector.broadcast %671 : vector<8x1xf32> to vector<8x8xf32>
    %673 = arith.divf %669, %672 : vector<8x8xf32>
    %cst_217 = arith.constant dense<0.000000e+00> : vector<8x8xf32>
    %674 = tpu.matmul %673, %661, %cst_217 {dimension_numbers = #tpu.dot_dimension_numbers<[1], [0], [0], [1], [0, 0, 1, 1], [], []>} : vector<8x8xf32>, vector<8x8xf32>, vector<8x8xf32> -> vector<8x8xf32>
    %675 = vector.extract_strided_slice %585 {offsets = [24, 0], sizes = [8, 32], strides = [1, 1]} : vector<32x32xf32> to vector<8x32xf32>
    %cst_218 = arith.constant dense<0.000000e+00> : vector<8x32xf32>
    %676 = tpu.matmul %674, %675, %cst_218 {dimension_numbers = #tpu.dot_dimension_numbers<[1], [0], [0], [1], [0, 0, 1, 1], [], []>} : vector<8x8xf32>, vector<8x32xf32>, vector<8x32xf32> -> vector<8x32xf32>
    %677 = arith.addf %658, %676 : vector<8x32xf32>
    %678 = arith.addf %677, %580 : vector<8x32xf32>
    %cst_219 = arith.constant dense<0.000000e+00> : vector<8xf32>
    %679 = vector.multi_reduction <add>, %678, %cst_219 [1] : vector<8x32xf32> to vector<8xf32>
    %680 = vector.shape_cast %679 : vector<8xf32> to vector<8x1xf32>
    %cst_220 = arith.constant 3.200000e+01 : f32
    %681 = vector.broadcast %cst_220 : f32 to vector<8x1xf32>
    %682 = arith.divf %680, %681 : vector<8x1xf32>
    %683 = vector.broadcast %682 : vector<8x1xf32> to vector<8x32xf32>
    %684 = arith.subf %678, %683 : vector<8x32xf32>
    %685 = arith.mulf %684, %684 : vector<8x32xf32>
    %cst_221 = arith.constant dense<0.000000e+00> : vector<8xf32>
    %686 = vector.multi_reduction <add>, %685, %cst_221 [1] : vector<8x32xf32> to vector<8xf32>
    %687 = vector.shape_cast %686 : vector<8xf32> to vector<8x1xf32>
    %cst_222 = arith.constant 3.200000e+01 : f32
    %688 = vector.broadcast %cst_222 : f32 to vector<8x1xf32>
    %689 = arith.divf %687, %688 : vector<8x1xf32>
    %690 = vector.broadcast %682 : vector<8x1xf32> to vector<8x32xf32>
    %691 = arith.subf %678, %690 : vector<8x32xf32>
    %cst_223 = arith.constant 9.99999974E-6 : f32
    %692 = vector.broadcast %cst_223 : f32 to vector<8x1xf32>
    %693 = arith.addf %689, %692 : vector<8x1xf32>
    %694 = math.rsqrt %693 : vector<8x1xf32>
    %695 = vector.broadcast %694 : vector<8x1xf32> to vector<8x32xf32>
    %696 = arith.mulf %691, %695 : vector<8x32xf32>
    %697 = vector.broadcast %587 : vector<1x32xf32> to vector<8x32xf32>
    %698 = arith.mulf %696, %697 : vector<8x32xf32>
    %699 = vector.broadcast %588 : vector<1x32xf32> to vector<8x32xf32>
    %700 = arith.addf %698, %699 : vector<8x32xf32>
    %c3_224 = arith.constant 3 : index
    %c0_225 = arith.constant 0 : index
    %c0_226 = arith.constant 0 : index
    %701 = vector.load %arg8[%c3_224, %c0_225, %c0_226] : memref<4x32x128xf32, #tpu.memory_space<vmem>>, vector<1x32x128xf32>
    %702 = vector.shape_cast %701 : vector<1x32x128xf32> to vector<32x128xf32>
    %c3_227 = arith.constant 3 : index
    %c0_228 = arith.constant 0 : index
    %c0_229 = arith.constant 0 : index
    %703 = vector.load %arg9[%c3_227, %c0_228, %c0_229] : memref<4x128x32xf32, #tpu.memory_space<vmem>>, vector<1x128x32xf32>
    %704 = vector.shape_cast %703 : vector<1x128x32xf32> to vector<128x32xf32>
    %c3_230 = arith.constant 3 : index
    %c0_231 = arith.constant 0 : index
    %c0_232 = arith.constant 0 : index
    %705 = vector.load %arg10[%c3_230, %c0_231, %c0_232] : memref<4x2x128xf32, #tpu.memory_space<vmem>>, vector<1x2x128xf32>
    %706 = vector.shape_cast %705 : vector<1x2x128xf32> to vector<2x128xf32>
    %cst_233 = arith.constant dense<0.000000e+00> : vector<8x128xf32>
    %707 = tpu.matmul %700, %702, %cst_233 {dimension_numbers = #tpu.dot_dimension_numbers<[1], [0], [0], [1], [0, 0, 1, 1], [], []>} : vector<8x32xf32>, vector<32x128xf32>, vector<8x128xf32> -> vector<8x128xf32>
    %708 = vector.extract_strided_slice %706 {offsets = [0, 0], sizes = [1, 128], strides = [1, 1]} : vector<2x128xf32> to vector<1x128xf32>
    %709 = vector.broadcast %708 : vector<1x128xf32> to vector<8x128xf32>
    %710 = arith.addf %707, %709 : vector<8x128xf32>
    %cst_234 = arith.constant 0.000000e+00 : f32
    %711 = vector.broadcast %cst_234 : f32 to vector<8x128xf32>
    %712 = arith.maximumf %710, %711 : vector<8x128xf32>
    %cst_235 = arith.constant dense<0.000000e+00> : vector<8x32xf32>
    %713 = tpu.matmul %712, %704, %cst_235 {dimension_numbers = #tpu.dot_dimension_numbers<[1], [0], [0], [1], [0, 0, 1, 1], [], []>} : vector<8x128xf32>, vector<128x32xf32>, vector<8x32xf32> -> vector<8x32xf32>
    %714 = vector.extract_strided_slice %706 {offsets = [1, 0], sizes = [1, 32], strides = [1, 1]} : vector<2x128xf32> to vector<1x32xf32>
    %715 = vector.broadcast %714 : vector<1x32xf32> to vector<8x32xf32>
    %716 = arith.addf %713, %715 : vector<8x32xf32>
    %717 = arith.addf %716, %700 : vector<8x32xf32>
    %718 = vector.extract_strided_slice %706 {offsets = [1, 32], sizes = [1, 32], strides = [1, 1]} : vector<2x128xf32> to vector<1x32xf32>
    %719 = vector.extract_strided_slice %706 {offsets = [1, 64], sizes = [1, 32], strides = [1, 1]} : vector<2x128xf32> to vector<1x32xf32>
    %cst_236 = arith.constant dense<0.000000e+00> : vector<8xf32>
    %720 = vector.multi_reduction <add>, %717, %cst_236 [1] : vector<8x32xf32> to vector<8xf32>
    %721 = vector.shape_cast %720 : vector<8xf32> to vector<8x1xf32>
    %cst_237 = arith.constant 3.200000e+01 : f32
    %722 = vector.broadcast %cst_237 : f32 to vector<8x1xf32>
    %723 = arith.divf %721, %722 : vector<8x1xf32>
    %724 = vector.broadcast %723 : vector<8x1xf32> to vector<8x32xf32>
    %725 = arith.subf %717, %724 : vector<8x32xf32>
    %726 = arith.mulf %725, %725 : vector<8x32xf32>
    %cst_238 = arith.constant dense<0.000000e+00> : vector<8xf32>
    %727 = vector.multi_reduction <add>, %726, %cst_238 [1] : vector<8x32xf32> to vector<8xf32>
    %728 = vector.shape_cast %727 : vector<8xf32> to vector<8x1xf32>
    %cst_239 = arith.constant 3.200000e+01 : f32
    %729 = vector.broadcast %cst_239 : f32 to vector<8x1xf32>
    %730 = arith.divf %728, %729 : vector<8x1xf32>
    %731 = vector.broadcast %723 : vector<8x1xf32> to vector<8x32xf32>
    %732 = arith.subf %717, %731 : vector<8x32xf32>
    %cst_240 = arith.constant 9.99999974E-6 : f32
    %733 = vector.broadcast %cst_240 : f32 to vector<8x1xf32>
    %734 = arith.addf %730, %733 : vector<8x1xf32>
    %735 = math.rsqrt %734 : vector<8x1xf32>
    %736 = vector.broadcast %735 : vector<8x1xf32> to vector<8x32xf32>
    %737 = arith.mulf %732, %736 : vector<8x32xf32>
    %738 = vector.broadcast %718 : vector<1x32xf32> to vector<8x32xf32>
    %739 = arith.mulf %737, %738 : vector<8x32xf32>
    %740 = vector.broadcast %719 : vector<1x32xf32> to vector<8x32xf32>
    %741 = arith.addf %739, %740 : vector<8x32xf32>
    %c0_241 = arith.constant 0 : index
    %c0_242 = arith.constant 0 : index
    %742 = vector.load %arg11[%c0_241, %c0_242] : memref<32x160xf32, #tpu.memory_space<vmem>>, vector<32x160xf32>
    %c0_243 = arith.constant 0 : index
    %c0_244 = arith.constant 0 : index
    %743 = vector.load %arg12[%c0_243, %c0_244] : memref<1x160xf32, #tpu.memory_space<vmem>>, vector<1x160xf32>
    %744 = vector.extract_strided_slice %742 {offsets = [0, 0], sizes = [32, 32], strides = [1, 1]} : vector<32x160xf32> to vector<32x32xf32>
    %cst_245 = arith.constant dense<0.000000e+00> : vector<8x32xf32>
    %745 = tpu.matmul %741, %744, %cst_245 {dimension_numbers = #tpu.dot_dimension_numbers<[1], [0], [0], [1], [0, 0, 1, 1], [], []>} : vector<8x32xf32>, vector<32x32xf32>, vector<8x32xf32> -> vector<8x32xf32>
    %746 = vector.extract_strided_slice %743 {offsets = [0, 0], sizes = [1, 32], strides = [1, 1]} : vector<1x160xf32> to vector<1x32xf32>
    %747 = vector.broadcast %746 : vector<1x32xf32> to vector<8x32xf32>
    %748 = arith.addf %745, %747 : vector<8x32xf32>
    %cst_246 = arith.constant 0.000000e+00 : f32
    %749 = vector.broadcast %cst_246 : f32 to vector<8x32xf32>
    %750 = arith.maximumf %748, %749 : vector<8x32xf32>
    %751 = vector.extract_strided_slice %742 {offsets = [0, 32], sizes = [32, 128], strides = [1, 1]} : vector<32x160xf32> to vector<32x128xf32>
    %cst_247 = arith.constant dense<0.000000e+00> : vector<8x128xf32>
    %752 = tpu.matmul %750, %751, %cst_247 {dimension_numbers = #tpu.dot_dimension_numbers<[1], [0], [0], [1], [0, 0, 1, 1], [], []>} : vector<8x32xf32>, vector<32x128xf32>, vector<8x128xf32> -> vector<8x128xf32>
    %753 = vector.extract_strided_slice %743 {offsets = [0, 32], sizes = [1, 128], strides = [1, 1]} : vector<1x160xf32> to vector<1x128xf32>
    %754 = vector.broadcast %753 : vector<1x128xf32> to vector<8x128xf32>
    %755 = arith.addf %752, %754 : vector<8x128xf32>
    %c0_248 = arith.constant 0 : index
    %c0_249 = arith.constant 0 : index
    %c0_250 = arith.constant 0 : index
    %756 = vector.load %arg13[%c0_248, %c0_249, %c0_250] : memref<1x8x128xf32, #tpu.memory_space<vmem>>, vector<1x8x128xf32>
    %757 = vector.shape_cast %756 : vector<1x8x128xf32> to vector<8x128xf32>
    %758 = vector.shape_cast %755 : vector<8x128xf32> to vector<1x8x128xf32>
    tpu.vector_store %arg13[%c0_248, %c0_249, %c0_250], %758 {strides = array<i32>} : memref<1x8x128xf32, #tpu.memory_space<vmem>>, vector<1x8x128xf32>,
    return
  }
  func.func @transform_0(%arg0: i32) -> (i32, i32, i32) {
    %c0_i32 = arith.constant 0 : i32
    %c0_i32_0 = arith.constant 0 : i32
    %c0_i32_1 = arith.constant 0 : i32
    return %arg0, %c0_i32, %c0_i32_0 : i32, i32, i32
  }
  func.func @transform_1(%arg0: i32) -> (i32, i32, i32) {
    %c0_i32 = arith.constant 0 : i32
    %c0_i32_0 = arith.constant 0 : i32
    %c0_i32_1 = arith.constant 0 : i32
    return %arg0, %c0_i32, %c0_i32_0 : i32, i32, i32
  }
  func.func @transform_2(%arg0: i32) -> (i32, i32, i32) {
    %c0_i32 = arith.constant 0 : i32
    %c0_i32_0 = arith.constant 0 : i32
    %c0_i32_1 = arith.constant 0 : i32
    return %arg0, %c0_i32, %c0_i32_0 : i32, i32, i32
  }
  func.func @transform_3(%arg0: i32) -> (i32, i32) {
    %c0_i32 = arith.constant 0 : i32
    %c0_i32_0 = arith.constant 0 : i32
    %c0_i32_1 = arith.constant 0 : i32
    return %c0_i32, %c0_i32_0 : i32, i32
  }
  func.func @transform_4(%arg0: i32) -> (i32, i32) {
    %c0_i32 = arith.constant 0 : i32
    %c0_i32_0 = arith.constant 0 : i32
    %c0_i32_1 = arith.constant 0 : i32
    return %c0_i32, %c0_i32_0 : i32, i32
  }
  func.func @transform_5(%arg0: i32) -> (i32, i32, i32) {
    %c0_i32 = arith.constant 0 : i32
    %c0_i32_0 = arith.constant 0 : i32
    %c0_i32_1 = arith.constant 0 : i32
    %c0_i32_2 = arith.constant 0 : i32
    return %c0_i32, %c0_i32_0, %c0_i32_1 : i32, i32, i32
  }
  func.func @transform_6(%arg0: i32) -> (i32, i32, i32) {
    %c0_i32 = arith.constant 0 : i32
    %c0_i32_0 = arith.constant 0 : i32
    %c0_i32_1 = arith.constant 0 : i32
    %c0_i32_2 = arith.constant 0 : i32
    return %c0_i32, %c0_i32_0, %c0_i32_1 : i32, i32, i32
  }
  func.func @transform_7(%arg0: i32) -> (i32, i32, i32) {
    %c0_i32 = arith.constant 0 : i32
    %c0_i32_0 = arith.constant 0 : i32
    %c0_i32_1 = arith.constant 0 : i32
    %c0_i32_2 = arith.constant 0 : i32
    return %c0_i32, %c0_i32_0, %c0_i32_1 : i32, i32, i32
  }
  func.func @transform_8(%arg0: i32) -> (i32, i32, i32) {
    %c0_i32 = arith.constant 0 : i32
    %c0_i32_0 = arith.constant 0 : i32
    %c0_i32_1 = arith.constant 0 : i32
    %c0_i32_2 = arith.constant 0 : i32
    return %c0_i32, %c0_i32_0, %c0_i32_1 : i32, i32, i32
  }
  func.func @transform_9(%arg0: i32) -> (i32, i32, i32) {
    %c0_i32 = arith.constant 0 : i32
    %c0_i32_0 = arith.constant 0 : i32
    %c0_i32_1 = arith.constant 0 : i32
    %c0_i32_2 = arith.constant 0 : i32
    return %c0_i32, %c0_i32_0, %c0_i32_1 : i32, i32, i32
  }
  func.func @transform_10(%arg0: i32) -> (i32, i32) {
    %c0_i32 = arith.constant 0 : i32
    %c0_i32_0 = arith.constant 0 : i32
    %c0_i32_1 = arith.constant 0 : i32
    return %c0_i32, %c0_i32_0 : i32, i32
  }
  func.func @transform_11(%arg0: i32) -> (i32, i32) {
    %c0_i32 = arith.constant 0 : i32
    %c0_i32_0 = arith.constant 0 : i32
    %c0_i32_1 = arith.constant 0 : i32
    return %c0_i32, %c0_i32_0 : i32, i32
  }
  func.func @transform_12(%arg0: i32) -> (i32, i32, i32) {
    %c0_i32 = arith.constant 0 : i32
    %c0_i32_0 = arith.constant 0 : i32
    %c0_i32_1 = arith.constant 0 : i32
    return %arg0, %c0_i32, %c0_i32_0 : i32, i32, i32
  }
}

</mosaic_0001>

<llo_original>
// kernel: transformer_forward.1
$region0: #{transformer_forward.1}
  #allocation0 [shape = 'u32[]', space=smem, size = 0x4, offset = 0x4, fixed_abs, tag = 'smem constant byte address 0x4 - core index']
  #allocation1 [shape = 'u32[144,128]{1,0:T(1,128)}', space=vmem, size = 0x12000, scoped, tag = 'internal scratch']
  %s0 = inlined_call_operand.vmem [shape: f32[2,8,144], index: 0, kind: input, shape index: {}]
  %s1 = inlined_call_operand.vmem [shape: f32[2,8,32], index: 1, kind: input, shape index: {}]
  %s2 = inlined_call_operand.vmem [shape: s32[2,1,8], index: 2, kind: input, shape index: {}]
  %s3 = inlined_call_operand.vmem [shape: f32[144,32], index: 3, kind: input, shape index: {}]
  %s4 = inlined_call_operand.vmem [shape: f32[8,32], index: 4, kind: input, shape index: {}]
  %s5 = inlined_call_operand.vmem [shape: f32[6,32,128], index: 5, kind: input, shape index: {}]
  %s6 = inlined_call_operand.vmem [shape: f32[6,2,96], index: 6, kind: input, shape index: {}]
  %s7 = inlined_call_operand.vmem [shape: f32[4,32,128], index: 7, kind: input, shape index: {}]
  %s8 = inlined_call_operand.vmem [shape: f32[4,128,32], index: 8, kind: input, shape index: {}]
  %s9 = inlined_call_operand.vmem [shape: f32[4,2,128], index: 9, kind: input, shape index: {}]
  %s10 = inlined_call_operand.vmem [shape: f32[32,160], index: 10, kind: input, shape index: {}]
  %s11 = inlined_call_operand.vmem [shape: f32[1,160], index: 11, kind: input, shape index: {}]
  %s12 = inlined_call_operand.hbm [shape: f32[2,8,128], index: 12, kind: output, shape index: {}]
  %s13 = sld [smem:[#allocation0]]
  $region81: #{transformer_forward.1} parent=0
    _
  %s15 = ssub.s32 1, %s13
  %s16 = scalar_select 0, %s15, %s13
  $region1: #{transformer_forward.1} parent=0
    #allocation2 [shape = 'u8[8192]{0}', space=vmem, size = 0x2000, scoped, tag = 'output window, operand 0']
    #allocation3 [shape = 's32[2]{0}', space=sflag, size = 0x8, scoped, tag = 'scoped memory for transformer_forward.1']
    %17 = vsyncpa [#allocation3], 0
    %s18 = scalar_lea.sflag [#allocation3], 1
    %19 = vsyncpa %s18, 0
    loop: start=0, step=1, limit=4
    $region2: #{transformer_forward.1} parent=1 // loop_pre_header
      _
    $region3: #{transformer_forward.1} parent=1 // loop_header
      %s21 = sphi 0, %s25
      %p22 = scmp.ge.s32.totalorder %s21, 4
      %s31 = sphi 0, %s33
      %s34 = sphi 0, %s31
      %s35 = sphi 0, %s34
      %s51 = sphi 0, %s35
      %s57 = sphi 0, %s59
      %s60 = sphi 0, %s57
      %s61 = sphi 0, %s60
      %s77 = sphi 0, %s61
      %s83 = sphi 0, %s85
      %s86 = sphi 0, %s83
      %s87 = sphi 0, %s86
      %s103 = sphi 0, %s87
      %s107 = sphi 0, %s107
      %s109 = sphi 0, %s107
      %s110 = sphi 0, %s109
      %s124 = sphi 0, %s110
      %s128 = sphi 0, %s128
      %s130 = sphi 0, %s128
      %s131 = sphi 0, %s130
      %s145 = sphi 0, %s131
      %s149 = sphi 0, %s149
      %s151 = sphi 0, %s149
      %s152 = sphi 0, %s151
      %s166 = sphi 0, %s152
      %s170 = sphi 0, %s170
      %s172 = sphi 0, %s170
      %s173 = sphi 0, %s172
      %s187 = sphi 0, %s173
      %s191 = sphi 0, %s191
      %s193 = sphi 0, %s191
      %s194 = sphi 0, %s193
      %s208 = sphi 0, %s194
      %s212 = sphi 0, %s212
      %s214 = sphi 0, %s212
      %s215 = sphi 0, %s214
      %s229 = sphi 0, %s215
      %s233 = sphi 0, %s233
      %s235 = sphi 0, %s233
      %s236 = sphi 0, %s235
      %s250 = sphi 0, %s236
      %s254 = sphi 0, %s254
      %s256 = sphi 0, %s254
      %s257 = sphi 0, %s256
      %s271 = sphi 0, %s257
      %s275 = sphi 0, %s275
      %s277 = sphi 0, %s275
      %s278 = sphi 0, %s277
      %s292 = sphi 0, %s278
      %s298 = sphi 0, %s300
      %s301 = sphi 0, %s298
      %s302 = sphi 0, %s301
      %s318 = sphi 0, %s302
    $region4: #{transformer_forward.1} parent=1 // loop_header_branch
      %24 = sbr.rel (%p22) target = $region8
    $region5: #{transformer_forward.1} parent=1 // loop_body
      %s26 = ssub.s32 %s21, 1
      %s27 = ssub.s32 %s21, 2
      %s28 = sadd.s32 %s21, 1
      %s29 = ssub.s32 %s21, %s28
      %p30 = scmp.eq.s32.totalorder %s29, 0
      %s32 = sadd.s32 %s31, 1
      %s33 = scalar_select %p30, %s31, %s32
      %p36 = pneg %p30
      %p37 = scmp.eq.s32.totalorder %s21, 1
      %p38 = por %p36, %p37
      %p39 = scmp.ne.s32.totalorder %s31, %s34
      %p40 = scmp.eq.s32.totalorder %s21, 0
      %p41 = por %p39, %p40
      %p42 = scmp.ne.s32.totalorder %s31, %s34
      %p43 = scmp.eq.s32.totalorder %s26, 1
      %p44 = por %p42, %p43
      %p45 = scmp.ne.s32.totalorder %s34, %s35
      %p46 = scmp.eq.s32.totalorder %s26, 0
      %p47 = por %p45, %p46
      %p48 = scmp.ne.s32.totalorder %s34, %s35
      %p49 = scmp.eq.s32.totalorder %s27, 1
      %p50 = por %p48, %p49
      %p52 = scmp.ne.s32.totalorder %s35, %s51
      %p53 = scmp.eq.s32.totalorder %s27, 0
      %p54 = por %p52, %p53
      %s55 = ssub.s32 %s21, %s28
      %p56 = scmp.eq.s32.totalorder %s55, 0
      %s58 = sadd.s32 %s57, 1
      %s59 = scalar_select %p56, %s57, %s58
      %p62 = pneg %p56
      %p63 = scmp.eq.s32.totalorder %s21, 1
      %p64 = por %p62, %p63
      %p65 = scmp.ne.s32.totalorder %s57, %s60
      %p66 = scmp.eq.s32.totalorder %s21, 0
      %p67 = por %p65, %p66
      %p68 = scmp.ne.s32.totalorder %s57, %s60
      %p69 = scmp.eq.s32.totalorder %s26, 1
      %p70 = por %p68, %p69
      %p71 = scmp.ne.s32.totalorder %s60, %s61
      %p72 = scmp.eq.s32.totalorder %s26, 0
      %p73 = por %p71, %p72
      %p74 = scmp.ne.s32.totalorder %s60, %s61
      %p75 = scmp.eq.s32.totalorder %s27, 1
      %p76 = por %p74, %p75
      %p78 = scmp.ne.s32.totalorder %s61, %s77
      %p79 = scmp.eq.s32.totalorder %s27, 0
      %p80 = por %p78, %p79
      %s81 = ssub.s32 %s21, %s28
      %p82 = scmp.eq.s32.totalorder %s81, 0
      %s84 = sadd.s32 %s83, 1
      %s85 = scalar_select %p82, %s83, %s84
      %p88 = pneg %p82
      %p89 = scmp.eq.s32.totalorder %s21, 1
      %p90 = por %p88, %p89
      %p91 = scmp.ne.s32.totalorder %s83, %s86
      %p92 = scmp.eq.s32.totalorder %s21, 0
      %p93 = por %p91, %p92
      %p94 = scmp.ne.s32.totalorder %s83, %s86
      %p95 = scmp.eq.s32.totalorder %s26, 1
      %p96 = por %p94, %p95
      %p97 = scmp.ne.s32.totalorder %s86, %s87
      %p98 = scmp.eq.s32.totalorder %s26, 0
      %p99 = por %p97, %p98
      %p100 = scmp.ne.s32.totalorder %s86, %s87
      %p101 = scmp.eq.s32.totalorder %s27, 1
      %p102 = por %p100, %p101
      %p104 = scmp.ne.s32.totalorder %s87, %s103
      %p105 = scmp.eq.s32.totalorder %s27, 0
      %p106 = por %p104, %p105
      %s108 = sadd.s32 %s107, 1
      %p111 = scmp.eq.s32.totalorder %s21, 1
      %p112 = scmp.ne.s32.totalorder %s107, %s109
      %p113 = scmp.eq.s32.totalorder %s21, 0
      %p114 = por %p112, %p113
      %p115 = scmp.ne.s32.totalorder %s107, %s109
      %p116 = scmp.eq.s32.totalorder %s26, 1
      %p117 = por %p115, %p116
      %p118 = scmp.ne.s32.totalorder %s109, %s110
      %p119 = scmp.eq.s32.totalorder %s26, 0
      %p120 = por %p118, %p119
      %p121 = scmp.ne.s32.totalorder %s109, %s110
      %p122 = scmp.eq.s32.totalorder %s27, 1
      %p123 = por %p121, %p122
      %p125 = scmp.ne.s32.totalorder %s110, %s124
      %p126 = scmp.eq.s32.totalorder %s27, 0
      %p127 = por %p125, %p126
      %s129 = sadd.s32 %s128, 1
      %p132 = scmp.eq.s32.totalorder %s21, 1
      %p133 = scmp.ne.s32.totalorder %s128, %s130
      %p134 = scmp.eq.s32.totalorder %s21, 0
      %p135 = por %p133, %p134
      %p136 = scmp.ne.s32.totalorder %s128, %s130
      %p137 = scmp.eq.s32.totalorder %s26, 1
      %p138 = por %p136, %p137
      %p139 = scmp.ne.s32.totalorder %s130, %s131
      %p140 = scmp.eq.s32.totalorder %s26, 0
      %p141 = por %p139, %p140
      %p142 = scmp.ne.s32.totalorder %s130, %s131
      %p143 = scmp.eq.s32.totalorder %s27, 1
      %p144 = por %p142, %p143
      %p146 = scmp.ne.s32.totalorder %s131, %s145
      %p147 = scmp.eq.s32.totalorder %s27, 0
      %p148 = por %p146, %p147
      %s150 = sadd.s32 %s149, 1
      %p153 = scmp.eq.s32.totalorder %s21, 1
      %p154 = scmp.ne.s32.totalorder %s149, %s151
      %p155 = scmp.eq.s32.totalorder %s21, 0
      %p156 = por %p154, %p155
      %p157 = scmp.ne.s32.totalorder %s149, %s151
      %p158 = scmp.eq.s32.totalorder %s26, 1
      %p159 = por %p157, %p158
      %p160 = scmp.ne.s32.totalorder %s151, %s152
      %p161 = scmp.eq.s32.totalorder %s26, 0
      %p162 = por %p160, %p161
      %p163 = scmp.ne.s32.totalorder %s151, %s152
      %p164 = scmp.eq.s32.totalorder %s27, 1
      %p165 = por %p163, %p164
      %p167 = scmp.ne.s32.totalorder %s152, %s166
      %p168 = scmp.eq.s32.totalorder %s27, 0
      %p169 = por %p167, %p168
      %s171 = sadd.s32 %s170, 1
      %p174 = scmp.eq.s32.totalorder %s21, 1
      %p175 = scmp.ne.s32.totalorder %s170, %s172
      %p176 = scmp.eq.s32.totalorder %s21, 0
      %p177 = por %p175, %p176
      %p178 = scmp.ne.s32.totalorder %s170, %s172
      %p179 = scmp.eq.s32.totalorder %s26, 1
      %p180 = por %p178, %p179
      %p181 = scmp.ne.s32.totalorder %s172, %s173
      %p182 = scmp.eq.s32.totalorder %s26, 0
      %p183 = por %p181, %p182
      %p184 = scmp.ne.s32.totalorder %s172, %s173
      %p185 = scmp.eq.s32.totalorder %s27, 1
      %p186 = por %p184, %p185
      %p188 = scmp.ne.s32.totalorder %s173, %s187
      %p189 = scmp.eq.s32.totalorder %s27, 0
      %p190 = por %p188, %p189
      %s192 = sadd.s32 %s191, 1
      %p195 = scmp.eq.s32.totalorder %s21, 1
      %p196 = scmp.ne.s32.totalorder %s191, %s193
      %p197 = scmp.eq.s32.totalorder %s21, 0
      %p198 = por %p196, %p197
      %p199 = scmp.ne.s32.totalorder %s191, %s193
      %p200 = scmp.eq.s32.totalorder %s26, 1
      %p201 = por %p199, %p200
      %p202 = scmp.ne.s32.totalorder %s193, %s194
      %p203 = scmp.eq.s32.totalorder %s26, 0
      %p204 = por %p202, %p203
      %p205 = scmp.ne.s32.totalorder %s193, %s194
      %p206 = scmp.eq.s32.totalorder %s27, 1
      %p207 = por %p205, %p206
      %p209 = scmp.ne.s32.totalorder %s194, %s208
      %p210 = scmp.eq.s32.totalorder %s27, 0
      %p211 = por %p209, %p210
      %s213 = sadd.s32 %s212, 1
      %p216 = scmp.eq.s32.totalorder %s21, 1
      %p217 = scmp.ne.s32.totalorder %s212, %s214
      %p218 = scmp.eq.s32.totalorder %s21, 0
      %p219 = por %p217, %p218
      %p220 = scmp.ne.s32.totalorder %s212, %s214
      %p221 = scmp.eq.s32.totalorder %s26, 1
      %p222 = por %p220, %p221
      %p223 = scmp.ne.s32.totalorder %s214, %s215
      %p224 = scmp.eq.s32.totalorder %s26, 0
      %p225 = por %p223, %p224
      %p226 = scmp.ne.s32.totalorder %s214, %s215
      %p227 = scmp.eq.s32.totalorder %s27, 1
      %p228 = por %p226, %p227
      %p230 = scmp.ne.s32.totalorder %s215, %s229
      %p231 = scmp.eq.s32.totalorder %s27, 0
      %p232 = por %p230, %p231
      %s234 = sadd.s32 %s233, 1
      %p237 = scmp.eq.s32.totalorder %s21, 1
      %p238 = scmp.ne.s32.totalorder %s233, %s235
      %p239 = scmp.eq.s32.totalorder %s21, 0
      %p240 = por %p238, %p239
      %p241 = scmp.ne.s32.totalorder %s233, %s235
      %p242 = scmp.eq.s32.totalorder %s26, 1
      %p243 = por %p241, %p242
      %p244 = scmp.ne.s32.totalorder %s235, %s236
      %p245 = scmp.eq.s32.totalorder %s26, 0
      %p246 = por %p244, %p245
      %p247 = scmp.ne.s32.totalorder %s235, %s236
      %p248 = scmp.eq.s32.totalorder %s27, 1
      %p249 = por %p247, %p248
      %p251 = scmp.ne.s32.totalorder %s236, %s250
      %p252 = scmp.eq.s32.totalorder %s27, 0
      %p253 = por %p251, %p252
      %s255 = sadd.s32 %s254, 1
      %p258 = scmp.eq.s32.totalorder %s21, 1
      %p259 = scmp.ne.s32.totalorder %s254, %s256
      %p260 = scmp.eq.s32.totalorder %s21, 0
      %p261 = por %p259, %p260
      %p262 = scmp.ne.s32.totalorder %s254, %s256
      %p263 = scmp.eq.s32.totalorder %s26, 1
      %p264 = por %p262, %p263
      %p265 = scmp.ne.s32.totalorder %s256, %s257
      %p266 = scmp.eq.s32.totalorder %s26, 0
      %p267 = por %p265, %p266
      %p268 = scmp.ne.s32.totalorder %s256, %s257
      %p269 = scmp.eq.s32.totalorder %s27, 1
      %p270 = por %p268, %p269
      %p272 = scmp.ne.s32.totalorder %s257, %s271
      %p273 = scmp.eq.s32.totalorder %s27, 0
      %p274 = por %p272, %p273
      %s276 = sadd.s32 %s275, 1
      %p279 = scmp.eq.s32.totalorder %s21, 1
      %p280 = scmp.ne.s32.totalorder %s275, %s277
      %p281 = scmp.eq.s32.totalorder %s21, 0
      %p282 = por %p280, %p281
      %p283 = scmp.ne.s32.totalorder %s275, %s277
      %p284 = scmp.eq.s32.totalorder %s26, 1
      %p285 = por %p283, %p284
      %p286 = scmp.ne.s32.totalorder %s277, %s278
      %p287 = scmp.eq.s32.totalorder %s26, 0
      %p288 = por %p286, %p287
      %p289 = scmp.ne.s32.totalorder %s277, %s278
      %p290 = scmp.eq.s32.totalorder %s27, 1
      %p291 = por %p289, %p290
      %p293 = scmp.ne.s32.totalorder %s278, %s292
      %p294 = scmp.eq.s32.totalorder %s27, 0
      %p295 = por %p293, %p294
      %s296 = ssub.s32 %s21, %s28
      %p297 = scmp.eq.s32.totalorder %s296, 0
      %s299 = sadd.s32 %s298, 1
      %s300 = scalar_select %p297, %s298, %s299
      %p303 = pneg %p297
      %p304 = scmp.eq.s32.totalorder %s21, 1
      %p305 = por %p303, %p304
      %p306 = scmp.ne.s32.totalorder %s298, %s301
      %p307 = scmp.eq.s32.totalorder %s21, 0
      %p308 = por %p306, %p307
      %p309 = scmp.ne.s32.totalorder %s298, %s301
      %p310 = scmp.eq.s32.totalorder %s26, 1
      %p311 = por %p309, %p310
      %p312 = scmp.ne.s32.totalorder %s301, %s302
      %p313 = scmp.eq.s32.totalorder %s26, 0
      %p314 = por %p312, %p313
      %p315 = scmp.ne.s32.totalorder %s301, %s302
      %p316 = scmp.eq.s32.totalorder %s27, 1
      %p317 = por %p315, %p316
      %p319 = scmp.ne.s32.totalorder %s302, %s318
      %p320 = scmp.eq.s32.totalorder %s27, 0
      %p321 = por %p319, %p320
      %p322 = scmp.le.s32.totalorder 1, %s21
      %p323 = scmp.lt.s32.totalorder %s21, 3
      %p324 = pnand %p322, %p323
      %p325 = pneg %p324
      // Predicated region
      $region9: #{transformer_forward.1} parent=5 // pred_check
        _
      $region10: #{transformer_forward.1} parent=5 // pred_check_branch
        %327 = sbr.rel (%p324) target = $region12
      $region11: #{transformer_forward.1} parent=5 // pred_region
        %s328 = ssub.s32 %s21, 1
        // Predicated region
        $region13: #{transformer_forward.1} parent=11 // pred_check
          %p329 = pneg %p120
        $region14: #{transformer_forward.1} parent=11 // pred_check_branch
          %331 = sbr.rel (%p329) target = $region16
        $region15: #{transformer_forward.1} parent=11 // pred_region
          _
        $region16: #{transformer_forward.1} parent=11 // pred_fallthru
          _
        // Predicated region
        $region17: #{transformer_forward.1} parent=11 // pred_check
          %p332 = pneg %p141
        $region18: #{transformer_forward.1} parent=11 // pred_check_branch
          %334 = sbr.rel (%p332) target = $region20
        $region19: #{transformer_forward.1} parent=11 // pred_region
          _
        $region20: #{transformer_forward.1} parent=11 // pred_fallthru
          _
        // Predicated region
        $region21: #{transformer_forward.1} parent=11 // pred_check
          %p335 = pneg %p162
        $region22: #{transformer_forward.1} parent=11 // pred_check_branch
          %337 = sbr.rel (%p335) target = $region24
        $region23: #{transformer_forward.1} parent=11 // pred_region
          _
        $region24: #{transformer_forward.1} parent=11 // pred_fallthru
          _
        // Predicated region
        $region25: #{transformer_forward.1} parent=11 // pred_check
          %p338 = pneg %p183
        $region26: #{transformer_forward.1} parent=11 // pred_check_branch
          %340 = sbr.rel (%p338) target = $region28
        $region27: #{transformer_forward.1} parent=11 // pred_region
          _
        $region28: #{transformer_forward.1} parent=11 // pred_fallthru
          _
        // Predicated region
        $region29: #{transformer_forward.1} parent=11 // pred_check
          %p341 = pneg %p204
        $region30: #{transformer_forward.1} parent=11 // pred_check_branch
          %343 = sbr.rel (%p341) target = $region32
        $region31: #{transformer_forward.1} parent=11 // pred_region
          _
        $region32: #{transformer_forward.1} parent=11 // pred_fallthru
          _
        // Predicated region
        $region33: #{transformer_forward.1} parent=11 // pred_check
          %p344 = pneg %p225
        $region34: #{transformer_forward.1} parent=11 // pred_check_branch
          %346 = sbr.rel (%p344) target = $region36
        $region35: #{transformer_forward.1} parent=11 // pred_region
          _
        $region36: #{transformer_forward.1} parent=11 // pred_fallthru
          _
        // Predicated region
        $region37: #{transformer_forward.1} parent=11 // pred_check
          %p347 = pneg %p246
        $region38: #{transformer_forward.1} parent=11 // pred_check_branch
          %349 = sbr.rel (%p347) target = $region40
        $region39: #{transformer_forward.1} parent=11 // pred_region
          _
        $region40: #{transformer_forward.1} parent=11 // pred_fallthru
          _
        // Predicated region
        $region41: #{transformer_forward.1} parent=11 // pred_check
          %p350 = pneg %p267
        $region42: #{transformer_forward.1} parent=11 // pred_check_branch
          %352 = sbr.rel (%p350) target = $region44
        $region43: #{transformer_forward.1} parent=11 // pred_region
          _
        $region44: #{transformer_forward.1} parent=11 // pred_fallthru
          _
        // Predicated region
        $region45: #{transformer_forward.1} parent=11 // pred_check
          %p353 = pneg %p288
        $region46: #{transformer_forward.1} parent=11 // pred_check_branch
          %355 = sbr.rel (%p353) target = $region48
        $region47: #{transformer_forward.1} parent=11 // pred_region
          _
        $region48: #{transformer_forward.1} parent=11 // pred_fallthru
          _
      $region12: #{transformer_forward.1} parent=5 // pred_fallthru
        _
      %p356 = scmp.lt.s32.totalorder %s21, 2
      // Predicated region
      $region49: #{transformer_forward.1} parent=5 // pred_check
        %p357 = pneg %p356
      $region50: #{transformer_forward.1} parent=5 // pred_check_branch
        %359 = sbr.rel (%p357) target = $region52
      $region51: #{transformer_forward.1} parent=5 // pred_region
        // Predicated region
        $region53: #{transformer_forward.1} parent=51 // pred_check
          %p360 = pneg %p41
        $region54: #{transformer_forward.1} parent=51 // pred_check_branch
          %362 = sbr.rel (%p360) target = $region56
        $region55: #{transformer_forward.1} parent=51 // pred_region
          %p363 = scmp.lt.s32.totalorder %s21, 1
          %s364 = scalar_select %p363, %s21, 1
          %s365 = smul.addr %s364, 2
          %s366 = smul.addr %s365, 8
          %s367 = scalar_lea.vmem %s0, %s366
        $region56: #{transformer_forward.1} parent=51 // pred_fallthru
          _
        // Predicated region
        $region57: #{transformer_forward.1} parent=51 // pred_check
          %p368 = pneg %p67
        $region58: #{transformer_forward.1} parent=51 // pred_check_branch
          %370 = sbr.rel (%p368) target = $region60
        $region59: #{transformer_forward.1} parent=51 // pred_region
          %p371 = scmp.lt.s32.totalorder %s21, 1
          %s372 = scalar_select %p371, %s21, 1
          %s373 = smul.addr %s372, 8
          %s374 = scalar_lea.vmem %s1, %s373
        $region60: #{transformer_forward.1} parent=51 // pred_fallthru
          _
        // Predicated region
        $region61: #{transformer_forward.1} parent=51 // pred_check
          %p375 = pneg %p93
        $region62: #{transformer_forward.1} parent=51 // pred_check_branch
          %377 = sbr.rel (%p375) target = $region64
        $region63: #{transformer_forward.1} parent=51 // pred_region
          %p378 = scmp.lt.s32.totalorder %s21, 1
          %s379 = scalar_select %p378, %s21, 1
          %s380 = scalar_lea.vmem %s2, %s379
        $region64: #{transformer_forward.1} parent=51 // pred_fallthru
          _
      $region52: #{transformer_forward.1} parent=5 // pred_fallthru
        _
      %p381 = scmp.le.s32.totalorder 1, %s21
      %p382 = scmp.lt.s32.totalorder %s21, 3
      %p383 = pnand %p381, %p382
      %p384 = pneg %p383
      // Predicated region
      $region65: #{transformer_forward.1} parent=5 // pred_check
        _
      $region66: #{transformer_forward.1} parent=5 // pred_check_branch
        %386 = sbr.rel (%p383) target = $region68
      $region67: #{transformer_forward.1} parent=5 // pred_region
        %s387 = ssub.s32 %s21, 1
        %p388 = scmp.lt.s32.totalorder %s26, 1
        %s389 = scalar_select %p388, %s26, 1
        %s390 = smul.addr %s389, 2
        %s391 = smul.addr %s390, 8
        %s392 = scalar_lea.vmem %s0, %s391
        %p393 = pneg %p47
        %p394 = pneg %p44
        %p395 = scmp.lt.s32.totalorder %s26, 1
        %s396 = scalar_select %p395, %s26, 1
        %s397 = smul.addr %s396, 8
        %s398 = scalar_lea.vmem %s1, %s397
        %p399 = pneg %p73
        %p400 = pneg %p70
        %p401 = scmp.lt.s32.totalorder %s26, 1
        %s402 = scalar_select %p401, %s26, 1
        %s403 = scalar_lea.vmem %s2, %s402
        %p404 = pneg %p99
        %p405 = pneg %p96
        %p406 = pneg %p120
        %p407 = pneg %p117
        %p408 = pneg %p141
        %p409 = pneg %p138
        %p410 = pneg %p162
        %p411 = pneg %p159
        %p412 = pneg %p183
        %p413 = pneg %p180
        %p414 = pneg %p204
        %p415 = pneg %p201
        %p416 = pneg %p225
        %p417 = pneg %p222
        %p418 = pneg %p246
        %p419 = pneg %p243
        %p420 = pneg %p267
        %p421 = pneg %p264
        %p422 = pneg %p288
        %p423 = pneg %p285
        %p424 = pneg %p314
        %p425 = pneg %p311
        %s426 = sand.u32 %s301, 1
        %s427 = scalar_lea.sflag [#allocation3], %s426
        %s428 = sand.u32 %s301, 1
        %s429 = smul.addr %s428, 8
        %s430 = scalar_lea.vmem [#allocation2], %s429
        %p431 = scmp.lt.s32.totalorder %s26, 1
        %s432 = scalar_select %p431, %s26, 1
        %s433 = smul.addr %s432, 2
        %s434 = smul.addr %s433, 8
        %s435 = scalar_lea.vmem %s0, %s434
        %p436 = scmp.lt.s32.totalorder %s26, 1
        %s437 = scalar_select %p436, %s26, 1
        %s438 = smul.addr %s437, 8
        %s439 = scalar_lea.vmem %s1, %s438
        %p440 = scmp.lt.s32.totalorder %s26, 1
        %s441 = scalar_select %p440, %s26, 1
        %s442 = scalar_lea.vmem %s2, %s441
        %v443 = vld [vmem:[%s435] sm:$0xff]
        %v444 = vld [vmem:[%s435 + $0x8] sm:$0xff]
        %v445 = vld [vmem:[%s3] sm:$0xff]
        %v446 = vld [vmem:[%s3 + $0x8] sm:$0xff]
        %v447 = vld [vmem:[%s3 + $0x10] sm:$0xff]
        %v448 = vld [vmem:[%s3 + $0x18] sm:$0xff]
        %v449 = vld [vmem:[%s3 + $0x20] sm:$0xff]
        %v450 = vld [vmem:[%s3 + $0x28] sm:$0xff]
        %v451 = vld [vmem:[%s3 + $0x30] sm:$0xff]
        %v452 = vld [vmem:[%s3 + $0x38] sm:$0xff]
        %v453 = vld [vmem:[%s3 + $0x40] sm:$0xff]
        %v454 = vld [vmem:[%s3 + $0x48] sm:$0xff]
        %v455 = vld [vmem:[%s3 + $0x50] sm:$0xff]
        %v456 = vld [vmem:[%s3 + $0x58] sm:$0xff]
        %v457 = vld [vmem:[%s3 + $0x60] sm:$0xff]
        %v458 = vld [vmem:[%s3 + $0x68] sm:$0xff]
        %v459 = vld [vmem:[%s3 + $0x70] sm:$0xff]
        %v460 = vld [vmem:[%s3 + $0x78] sm:$0xff]
        %v461 = vld [vmem:[%s3 + $0x80] sm:$0xff]
        %v462 = vld [vmem:[%s3 + $0x88] sm:$0xff]
        %v463 = vld [vmem:[%s4] sm:$0xff]
        %vm464 = vcmask 130048
        %v466 = vsel %vm464, %v444, 0
        %468 = vmatprep.subr.mxu0 0.0
        %469 = vmatpush1.msra.mxu0 %v445
        %470 = vmatprep.subr.mxu0 0.0
        %471 = vmatpush1.msra.mxu0 %v446
        %472 = vmatprep.subr.mxu0 0.0
        %473 = vmatpush1.msra.mxu0 %v447
        %474 = vmatprep.subr.mxu0 0.0
        %475 = vmatpush1.msra.mxu0 %v448
        %476 = vmatprep.subr.mxu0 0.0
        %477 = vmatpush1.msra.mxu0 %v449
        %478 = vmatprep.subr.mxu0 0.0
        %479 = vmatpush1.msra.mxu0 %v450
        %480 = vmatprep.subr.mxu0 0.0
        %481 = vmatpush1.msra.mxu0 %v451
        %482 = vmatprep.subr.mxu0 0.0
        %483 = vmatpush1.msra.mxu0 %v452
        %484 = vmatprep.subr.mxu0 0.0
        %485 = vmatpush1.msra.mxu0 %v453
        %486 = vmatprep.subr.mxu0 0.0
        %487 = vmatpush1.msra.mxu0 %v454
        %488 = vmatprep.subr.mxu0 0.0
        %489 = vmatpush1.msra.mxu0 %v455
        %490 = vmatprep.subr.mxu0 0.0
        %491 = vmatpush1.msra.mxu0 %v456
        %492 = vmatprep.subr.mxu0 0.0
        %493 = vmatpush1.msra.mxu0 %v457
        %494 = vmatprep.subr.mxu0 0.0
        %495 = vmatpush1.msra.mxu0 %v458
        %496 = vmatprep.subr.mxu0 0.0
        %497 = vmatpush1.msra.mxu0 %v459
        %498 = vmatprep.subr.mxu0 0.0
        %499 = vmatpush1.msra.mxu0 %v460
        %500 = vmatprep.subr.mxu0 0.0
        %501 = vmatpush1.msra.mxu0 %v461
        %502 = vmatprep.subr.mxu0 0.0
        %503 = vmatpush1.msra.mxu0 %v462
        %504 = vmatprep.subr.mxu0 0.0
        %505 = vmatpush1.msra.mxu0 0.0
        %506 = vmatprep.subr.mxu0 0.0
        %507 = vmatpush1.msra.mxu0 0.0
        %508 = vmatprep.subr.mxu0 0.0
        %509 = vmatpush1.msra.mxu0 0.0
        %510 = vmatprep.subr.mxu0 0.0
        %511 = vmatpush1.msra.mxu0 0.0
        %512 = vmatprep.subr.mxu0 0.0
        %513 = vmatpush1.msra.mxu0 0.0
        %514 = vmatprep.subr.mxu0 0.0
        %515 = vmatpush1.msra.mxu0 0.0
        %516 = vmatprep.subr.mxu0 0.0
        %517 = vmatpush1.msra.mxu0 0.0
        %518 = vmatprep.subr.mxu0 0.0
        %519 = vmatpush1.msra.mxu0 0.0
        %520 = vmatprep.subr.mxu0 0.0
        %521 = vmatpush1.msra.mxu0 0.0
        %522 = vmatprep.subr.mxu0 0.0
        %523 = vmatpush1.msra.mxu0 0.0
        %524 = vmatprep.subr.mxu0 0.0
        %525 = vmatpush1.msra.mxu0 0.0
        %526 = vmatprep.subr.mxu0 0.0
        %527 = vmatpush1.msra.mxu0 0.0
        %528 = vmatprep.subr.mxu0 0.0
        %529 = vmatpush1.msra.mxu0 0.0
        %530 = vmatprep.subr.mxu0 0.0
        %531 = vmatpush1.msra.mxu0 0.0
        %532 = vmatprep.mubr.f32.mxu0 %v466
        %533 = vmatmul.mubr.f32.gmra.mrb[0].mxu0 %v443
        %v534 = vpop.f32.mrb[0].mxu0
        %v535 = vadd.f32 %v463, %v534
        %v536 = vpop.f32.mrb[0].mxu0
        %537 = vdwg.mxu0
        %v538 = vlaneseq
        %v539 = vshrl.u32 %v538, 7
        %v540 = vlaneseq
        %v541 = vand.u32 %v540, 127
        %vm542 = vcmp.gt.s32.totalorder %v541, %v539
        %v543 = vsel %vm542, 1, 0
        %v544 = vcvt.s32.f32 %v543
        %v545 = vld [vmem:[%s442] sm:$0x1]
        %vm546 = vcmp.eq.s32.totalorder %v545, 0
        %v547 = vsel %vm546, 1, 0
        %v548 = vcvt.s32.f32 %v547
        %v550 = vlaneseq
        %v551 = vshrl.u32 %v550, 7
        %v552 = vsub.s32 0, %v551
        %v553 = vrot.slane %v548, %v552
        %v555 = vmax.f32 %v544, %v553
        %v556 = vmul.f32 %v555, -1e+09
        %s557 = scalar_lea.vmem %s5, 32
        %v558 = vld [vmem:[%s557] sm:$0xff]
        %v559 = vld [vmem:[%s557 + $0x8] sm:$0xff]
        %v560 = vld [vmem:[%s557 + $0x10] sm:$0xff]
        %v561 = vld [vmem:[%s557 + $0x18] sm:$0xff]
        %s562 = scalar_lea.vmem %s6, 2
        %v563 = vld [vmem:[%s562] sm:$0x3]
        %v564 = vlaneseq
        %v565 = vshrl.u32 %v564, 7
        %v566 = vsub.s32 0, %v565
        %v567 = vrot.slane %v563, %v566
        %vm568 = vcmask 261120
        %v570 = vsel %vm568, %v535, 0
        %572 = vmatprep.subr.mxu0 0.0
        %573 = vmatpush1.msra.mxu0 %v558
        %574 = vmatprep.subr.mxu0 0.0
        %575 = vmatpush1.msra.mxu0 %v559
        %576 = vmatprep.subr.mxu0 0.0
        %577 = vmatpush1.msra.mxu0 %v560
        %578 = vmatprep.subr.mxu0 0.0
        %579 = vmatpush1.msra.mxu0 %v561
        %580 = vmatprep.subr.mxu0 0.0
        %581 = vmatpush1.msra.mxu0 0.0
        %582 = vmatprep.subr.mxu0 0.0
        %583 = vmatpush1.msra.mxu0 0.0
        %584 = vmatprep.subr.mxu0 0.0
        %585 = vmatpush1.msra.mxu0 0.0
        %586 = vmatprep.subr.mxu0 0.0
        %587 = vmatpush1.msra.mxu0 0.0
        %588 = vmatprep.subr.mxu0 0.0
        %589 = vmatpush1.msra.mxu0 0.0
        %590 = vmatprep.subr.mxu0 0.0
        %591 = vmatpush1.msra.mxu0 0.0
        %592 = vmatprep.subr.mxu0 0.0
        %593 = vmatpush1.msra.mxu0 0.0
        %594 = vmatprep.subr.mxu0 0.0
        %595 = vmatpush1.msra.mxu0 0.0
        %596 = vmatprep.subr.mxu0 0.0
        %597 = vmatpush1.msra.mxu0 0.0
        %598 = vmatprep.subr.mxu0 0.0
        %599 = vmatpush1.msra.mxu0 0.0
        %600 = vmatprep.subr.mxu0 0.0
        %601 = vmatpush1.msra.mxu0 0.0
        %602 = vmatprep.subr.mxu0 0.0
        %603 = vmatpush1.msra.mxu0 0.0
        %604 = vmatprep.subr.mxu0 0.0
        %605 = vmatpush1.msra.mxu0 0.0
        %606 = vmatprep.subr.mxu0 0.0
        %607 = vmatpush1.msra.mxu0 0.0
        %608 = vmatprep.subr.mxu0 0.0
        %609 = vmatpush1.msra.mxu0 0.0
        %610 = vmatprep.subr.mxu0 0.0
        %611 = vmatpush1.msra.mxu0 0.0
        %612 = vmatprep.subr.mxu0 0.0
        %613 = vmatpush1.msra.mxu0 0.0
        %614 = vmatprep.subr.mxu0 0.0
        %615 = vmatpush1.msra.mxu0 0.0
        %616 = vmatprep.subr.mxu0 0.0
        %617 = vmatpush1.msra.mxu0 0.0
        %618 = vmatprep.subr.mxu0 0.0
        %619 = vmatpush1.msra.mxu0 0.0
        %620 = vmatprep.subr.mxu0 0.0
        %621 = vmatpush1.msra.mxu0 0.0
        %622 = vmatprep.subr.mxu0 0.0
        %623 = vmatpush1.msra.mxu0 0.0
        %624 = vmatprep.subr.mxu0 0.0
        %625 = vmatpush1.msra.mxu0 0.0
        %626 = vmatprep.subr.mxu0 0.0
        %627 = vmatpush1.msra.mxu0 0.0
        %628 = vmatprep.subr.mxu0 0.0
        %629 = vmatpush1.msra.mxu0 0.0
        %630 = vmatprep.subr.mxu0 0.0
        %631 = vmatpush1.msra.mxu0 0.0
        %632 = vmatprep.subr.mxu0 0.0
        %633 = vmatpush1.msra.mxu0 0.0
        %634 = vmatprep.subr.mxu0 0.0
        %635 = vmatpush1.msra.mxu0 0.0
        %636 = vmatprep.mubr.f32.mxu0 0.0
        %637 = vmatmul.mubr.f32.gmra.mrb[0].mxu0 %v570
        %v638 = vpop.f32.mrb[0].mxu0
        %v639 = vadd.f32 %v567, %v638
        %v640 = vpop.f32.mrb[0].mxu0
        %641 = vdwg.mxu0
        %643 = vrot.lane.b32.xlu0 %v639, 96
        %v644 = vpop.permute.xlu0 %643
        %vm645 = vcmask 64512
        %v646 = vsel %vm645, %v639, 0
        %v648 = vsel %vm645, %v644, 0
        %650 = vmatprep.subr.mxu0 0.0
        %651 = vmatpush1.xpose.msra.mxu0 %v648
        %652 = vmatprep.subr.mxu0 0.0
        %653 = vmatpush1.xpose.msra.mxu0 0.0
        %654 = vmatprep.subr.mxu0 0.0
        %655 = vmatpush1.xpose.msra.mxu0 0.0
        %656 = vmatprep.subr.mxu0 0.0
        %657 = vmatpush1.xpose.msra.mxu0 0.0
        %658 = vmatprep.subr.mxu0 0.0
        %659 = vmatpush1.xpose.msra.mxu0 0.0
        %660 = vmatprep.subr.mxu0 0.0
        %661 = vmatpush1.xpose.msra.mxu0 0.0
        %662 = vmatprep.subr.mxu0 0.0
        %663 = vmatpush1.xpose.msra.mxu0 0.0
        %664 = vmatprep.subr.mxu0 0.0
        %665 = vmatpush1.xpose.msra.mxu0 0.0
        %666 = vmatprep.subr.mxu0 0.0
        %667 = vmatpush1.xpose.msra.mxu0 0.0
        %668 = vmatprep.subr.mxu0 0.0
        %669 = vmatpush1.xpose.msra.mxu0 0.0
        %670 = vmatprep.subr.mxu0 0.0
        %671 = vmatpush1.xpose.msra.mxu0 0.0
        %672 = vmatprep.subr.mxu0 0.0
        %673 = vmatpush1.xpose.msra.mxu0 0.0
        %674 = vmatprep.subr.mxu0 0.0
        %675 = vmatpush1.xpose.msra.mxu0 0.0
        %676 = vmatprep.subr.mxu0 0.0
        %677 = vmatpush1.xpose.msra.mxu0 0.0
        %678 = vmatprep.subr.mxu0 0.0
        %679 = vmatpush1.xpose.msra.mxu0 0.0
        %680 = vmatprep.subr.mxu0 0.0
        %681 = vmatpush1.xpose.msra.mxu0 0.0
        %682 = vmatprep.subr.mxu0 0.0
        %683 = vmatpush1.xpose.msra.mxu0 0.0
        %684 = vmatprep.subr.mxu0 0.0
        %685 = vmatpush1.xpose.msra.mxu0 0.0
        %686 = vmatprep.subr.mxu0 0.0
        %687 = vmatpush1.xpose.msra.mxu0 0.0
        %688 = vmatprep.subr.mxu0 0.0
        %689 = vmatpush1.xpose.msra.mxu0 0.0
        %690 = vmatprep.subr.mxu0 0.0
        %691 = vmatpush1.xpose.msra.mxu0 0.0
        %692 = vmatprep.subr.mxu0 0.0
        %693 = vmatpush1.xpose.msra.mxu0 0.0
        %694 = vmatprep.subr.mxu0 0.0
        %695 = vmatpush1.xpose.msra.mxu0 0.0
        %696 = vmatprep.subr.mxu0 0.0
        %697 = vmatpush1.xpose.msra.mxu0 0.0
        %698 = vmatprep.subr.mxu0 0.0
        %699 = vmatpush1.xpose.msra.mxu0 0.0
        %700 = vmatprep.subr.mxu0 0.0
        %701 = vmatpush1.xpose.msra.mxu0 0.0
        %702 = vmatprep.subr.mxu0 0.0
        %703 = vmatpush1.xpose.msra.mxu0 0.0
        %704 = vmatprep.subr.mxu0 0.0
        %705 = vmatpush1.xpose.msra.mxu0 0.0
        %706 = vmatprep.subr.mxu0 0.0
        %707 = vmatpush1.xpose.msra.mxu0 0.0
        %708 = vmatprep.subr.mxu0 0.0
        %709 = vmatpush1.xpose.msra.mxu0 0.0
        %710 = vmatprep.subr.mxu0 0.0
        %711 = vmatpush1.xpose.msra.mxu0 0.0
        %712 = vmatprep.subr.mxu0 0.0
        %713 = vmatpush1.xpose.msra.mxu0 0.0
        %714 = vmatprep.mubr.f32.mxu0 0.0
        %715 = vmatmul.mubr.f32.gmra.mrb[0].mxu0 %v646
        %v716 = vpop.f32.mrb[0].mxu0
        %v717 = vadd.f32 0.0, %v716
        %v718 = vpop.f32.mrb[0].mxu0
        %719 = vdwg.mxu0
        %v720 = vmul.f32 %v717, 0.17677669
        %v721 = vsel %vm645, %v720, -inf
        %722 = vmax.xlane.f32.xlu0 %v721
        %v723 = vpop.xlane.xlu0 %722
        %v724 = vsub.f32 %v720, %v723
        %v725 = vmul.f32 %v724, 1.442695
        %v726 = vpow.pop %v725
        %v727 = vsel %vm645, %v726, 0.0
        %728 = vadd.xlane.f32.xlu0 %v727
        %v729 = vpop.xlane.xlu0 %728
        %v730 = vrcp.pop %v729
        %v731 = vmul.f32 %v726, %v730
        %732 = vrot.lane.b32.xlu0 %v639, 64
        %v733 = vpop.permute.xlu0 %732
        %v736 = vsel %vm645, %v731, 0
        %738 = vmatprep.subr.mxu0 0.0
        %739 = vmatpush1.msra.mxu0 %v733
        %740 = vmatprep.subr.mxu0 0.0
        %741 = vmatpush1.msra.mxu0 0.0
        %742 = vmatprep.subr.mxu0 0.0
        %743 = vmatpush1.msra.mxu0 0.0
        %744 = vmatprep.subr.mxu0 0.0
        %745 = vmatpush1.msra.mxu0 0.0
        %746 = vmatprep.subr.mxu0 0.0
        %747 = vmatpush1.msra.mxu0 0.0
        %748 = vmatprep.subr.mxu0 0.0
        %749 = vmatpush1.msra.mxu0 0.0
        %750 = vmatprep.subr.mxu0 0.0
        %751 = vmatpush1.msra.mxu0 0.0
        %752 = vmatprep.subr.mxu0 0.0
        %753 = vmatpush1.msra.mxu0 0.0
        %754 = vmatprep.subr.mxu0 0.0
        %755 = vmatpush1.msra.mxu0 0.0
        %756 = vmatprep.subr.mxu0 0.0
        %757 = vmatpush1.msra.mxu0 0.0
        %758 = vmatprep.subr.mxu0 0.0
        %759 = vmatpush1.msra.mxu0 0.0
        %760 = vmatprep.subr.mxu0 0.0
        %761 = vmatpush1.msra.mxu0 0.0
        %762 = vmatprep.subr.mxu0 0.0
        %763 = vmatpush1.msra.mxu0 0.0
        %764 = vmatprep.subr.mxu0 0.0
        %765 = vmatpush1.msra.mxu0 0.0
        %766 = vmatprep.subr.mxu0 0.0
        %767 = vmatpush1.msra.mxu0 0.0
        %768 = vmatprep.subr.mxu0 0.0
        %769 = vmatpush1.msra.mxu0 0.0
        %770 = vmatprep.subr.mxu0 0.0
        %771 = vmatpush1.msra.mxu0 0.0
        %772 = vmatprep.subr.mxu0 0.0
        %773 = vmatpush1.msra.mxu0 0.0
        %774 = vmatprep.subr.mxu0 0.0
        %775 = vmatpush1.msra.mxu0 0.0
        %776 = vmatprep.subr.mxu0 0.0
        %777 = vmatpush1.msra.mxu0 0.0
        %778 = vmatprep.subr.mxu0 0.0
        %779 = vmatpush1.msra.mxu0 0.0
        %780 = vmatprep.subr.mxu0 0.0
        %781 = vmatpush1.msra.mxu0 0.0
        %782 = vmatprep.subr.mxu0 0.0
        %783 = vmatpush1.msra.mxu0 0.0
        %784 = vmatprep.subr.mxu0 0.0
        %785 = vmatpush1.msra.mxu0 0.0
        %786 = vmatprep.subr.mxu0 0.0
        %787 = vmatpush1.msra.mxu0 0.0
        %788 = vmatprep.subr.mxu0 0.0
        %789 = vmatpush1.msra.mxu0 0.0
        %790 = vmatprep.subr.mxu0 0.0
        %791 = vmatpush1.msra.mxu0 0.0
        %792 = vmatprep.subr.mxu0 0.0
        %793 = vmatpush1.msra.mxu0 0.0
        %794 = vmatprep.subr.mxu0 0.0
        %795 = vmatpush1.msra.mxu0 0.0
        %796 = vmatprep.subr.mxu0 0.0
        %797 = vmatpush1.msra.mxu0 0.0
        %798 = vmatprep.subr.mxu0 0.0
        %799 = vmatpush1.msra.mxu0 0.0
        %800 = vmatprep.subr.mxu0 0.0
        %801 = vmatpush1.msra.mxu0 0.0
        %802 = vmatprep.mubr.f32.mxu0 0.0
        %803 = vmatmul.mubr.f32.gmra.mrb[0].mxu0 %v736
        %v804 = vpop.f32.mrb[0].mxu0
        %v805 = vadd.f32 0.0, %v804
        %v806 = vpop.f32.mrb[0].mxu0
        %807 = vdwg.mxu0
        %809 = vrot.lane.b32.xlu0 %v558, 32
        %v810 = vpop.permute.xlu0 %809
        %v813 = vsel %vm645, %v805, 0
        %815 = vmatprep.subr.mxu0 0.0
        %816 = vmatpush1.msra.mxu0 %v810
        %817 = vmatprep.subr.mxu0 0.0
        %818 = vmatpush1.msra.mxu0 0.0
        %819 = vmatprep.subr.mxu0 0.0
        %820 = vmatpush1.msra.mxu0 0.0
        %821 = vmatprep.subr.mxu0 0.0
        %822 = vmatpush1.msra.mxu0 0.0
        %823 = vmatprep.subr.mxu0 0.0
        %824 = vmatpush1.msra.mxu0 0.0
        %825 = vmatprep.subr.mxu0 0.0
        %826 = vmatpush1.msra.mxu0 0.0
        %827 = vmatprep.subr.mxu0 0.0
        %828 = vmatpush1.msra.mxu0 0.0
        %829 = vmatprep.subr.mxu0 0.0
        %830 = vmatpush1.msra.mxu0 0.0
        %831 = vmatprep.subr.mxu0 0.0
        %832 = vmatpush1.msra.mxu0 0.0
        %833 = vmatprep.subr.mxu0 0.0
        %834 = vmatpush1.msra.mxu0 0.0
        %835 = vmatprep.subr.mxu0 0.0
        %836 = vmatpush1.msra.mxu0 0.0
        %837 = vmatprep.subr.mxu0 0.0
        %838 = vmatpush1.msra.mxu0 0.0
        %839 = vmatprep.subr.mxu0 0.0
        %840 = vmatpush1.msra.mxu0 0.0
        %841 = vmatprep.subr.mxu0 0.0
        %842 = vmatpush1.msra.mxu0 0.0
        %843 = vmatprep.subr.mxu0 0.0
        %844 = vmatpush1.msra.mxu0 0.0
        %845 = vmatprep.subr.mxu0 0.0
        %846 = vmatpush1.msra.mxu0 0.0
        %847 = vmatprep.subr.mxu0 0.0
        %848 = vmatpush1.msra.mxu0 0.0
        %849 = vmatprep.subr.mxu0 0.0
        %850 = vmatpush1.msra.mxu0 0.0
        %851 = vmatprep.subr.mxu0 0.0
        %852 = vmatpush1.msra.mxu0 0.0
        %853 = vmatprep.subr.mxu0 0.0
        %854 = vmatpush1.msra.mxu0 0.0
        %855 = vmatprep.subr.mxu0 0.0
        %856 = vmatpush1.msra.mxu0 0.0
        %857 = vmatprep.subr.mxu0 0.0
        %858 = vmatpush1.msra.mxu0 0.0
        %859 = vmatprep.subr.mxu0 0.0
        %860 = vmatpush1.msra.mxu0 0.0
        %861 = vmatprep.subr.mxu0 0.0
        %862 = vmatpush1.msra.mxu0 0.0
        %863 = vmatprep.subr.mxu0 0.0
        %864 = vmatpush1.msra.mxu0 0.0
        %865 = vmatprep.subr.mxu0 0.0
        %866 = vmatpush1.msra.mxu0 0.0
        %867 = vmatprep.subr.mxu0 0.0
        %868 = vmatpush1.msra.mxu0 0.0
        %869 = vmatprep.subr.mxu0 0.0
        %870 = vmatpush1.msra.mxu0 0.0
        %871 = vmatprep.subr.mxu0 0.0
        %872 = vmatpush1.msra.mxu0 0.0
        %873 = vmatprep.subr.mxu0 0.0
        %874 = vmatpush1.msra.mxu0 0.0
        %875 = vmatprep.subr.mxu0 0.0
        %876 = vmatpush1.msra.mxu0 0.0
        %877 = vmatprep.subr.mxu0 0.0
        %878 = vmatpush1.msra.mxu0 0.0
        %879 = vmatprep.mubr.f32.mxu0 0.0
        %880 = vmatmul.mubr.f32.gmra.mrb[0].mxu0 %v813
        %v881 = vpop.f32.mrb[0].mxu0
        %v882 = vadd.f32 0.0, %v881
        %v883 = vpop.f32.mrb[0].mxu0
        %884 = vdwg.mxu0
        %v885 = vlaneseq
        %v886 = vshrl.u32 %v885, 7
        %v887 = vsub.s32 1, %v886
        %v888 = vrot.slane %v563, %v887
        %v889 = vadd.f32 %v888, %v882
        %890 = vrot.lane.b32.xlu0 %v639, 120
        %v891 = vpop.permute.xlu0 %890
        %892 = vrot.lane.b32.xlu0 %v639, 88
        %v893 = vpop.permute.xlu0 %892
        %v894 = vsel %vm645, %v891, 0
        %v896 = vsel %vm645, %v893, 0
        %898 = vmatprep.subr.mxu0 0.0
        %899 = vmatpush1.xpose.msra.mxu0 %v896
        %900 = vmatprep.subr.mxu0 0.0
        %901 = vmatpush1.xpose.msra.mxu0 0.0
        %902 = vmatprep.subr.mxu0 0.0
        %903 = vmatpush1.xpose.msra.mxu0 0.0
        %904 = vmatprep.subr.mxu0 0.0
        %905 = vmatpush1.xpose.msra.mxu0 0.0
        %906 = vmatprep.subr.mxu0 0.0
        %907 = vmatpush1.xpose.msra.mxu0 0.0
        %908 = vmatprep.subr.mxu0 0.0
        %909 = vmatpush1.xpose.msra.mxu0 0.0
        %910 = vmatprep.subr.mxu0 0.0
        %911 = vmatpush1.xpose.msra.mxu0 0.0
        %912 = vmatprep.subr.mxu0 0.0
        %913 = vmatpush1.xpose.msra.mxu0 0.0
        %914 = vmatprep.subr.mxu0 0.0
        %915 = vmatpush1.xpose.msra.mxu0 0.0
        %916 = vmatprep.subr.mxu0 0.0
        %917 = vmatpush1.xpose.msra.mxu0 0.0
        %918 = vmatprep.subr.mxu0 0.0
        %919 = vmatpush1.xpose.msra.mxu0 0.0
        %920 = vmatprep.subr.mxu0 0.0
        %921 = vmatpush1.xpose.msra.mxu0 0.0
        %922 = vmatprep.subr.mxu0 0.0
        %923 = vmatpush1.xpose.msra.mxu0 0.0
        %924 = vmatprep.subr.mxu0 0.0
        %925 = vmatpush1.xpose.msra.mxu0 0.0
        %926 = vmatprep.subr.mxu0 0.0
        %927 = vmatpush1.xpose.msra.mxu0 0.0
        %928 = vmatprep.subr.mxu0 0.0
        %929 = vmatpush1.xpose.msra.mxu0 0.0
        %930 = vmatprep.subr.mxu0 0.0
        %931 = vmatpush1.xpose.msra.mxu0 0.0
        %932 = vmatprep.subr.mxu0 0.0
        %933 = vmatpush1.xpose.msra.mxu0 0.0
        %934 = vmatprep.subr.mxu0 0.0
        %935 = vmatpush1.xpose.msra.mxu0 0.0
        %936 = vmatprep.subr.mxu0 0.0
        %937 = vmatpush1.xpose.msra.mxu0 0.0
        %938 = vmatprep.subr.mxu0 0.0
        %939 = vmatpush1.xpose.msra.mxu0 0.0
        %940 = vmatprep.subr.mxu0 0.0
        %941 = vmatpush1.xpose.msra.mxu0 0.0
        %942 = vmatprep.subr.mxu0 0.0
        %943 = vmatpush1.xpose.msra.mxu0 0.0
        %944 = vmatprep.subr.mxu0 0.0
        %945 = vmatpush1.xpose.msra.mxu0 0.0
        %946 = vmatprep.subr.mxu0 0.0
        %947 = vmatpush1.xpose.msra.mxu0 0.0
        %948 = vmatprep.subr.mxu0 0.0
        %949 = vmatpush1.xpose.msra.mxu0 0.0
        %950 = vmatprep.subr.mxu0 0.0
        %951 = vmatpush1.xpose.msra.mxu0 0.0
        %952 = vmatprep.subr.mxu0 0.0
        %953 = vmatpush1.xpose.msra.mxu0 0.0
        %954 = vmatprep.subr.mxu0 0.0
        %955 = vmatpush1.xpose.msra.mxu0 0.0
        %956 = vmatprep.subr.mxu0 0.0
        %957 = vmatpush1.xpose.msra.mxu0 0.0
        %958 = vmatprep.subr.mxu0 0.0
        %959 = vmatpush1.xpose.msra.mxu0 0.0
        %960 = vmatprep.subr.mxu0 0.0
        %961 = vmatpush1.xpose.msra.mxu0 0.0
        %962 = vmatprep.mubr.f32.mxu0 0.0
        %963 = vmatmul.mubr.f32.gmra.mrb[0].mxu0 %v894
        %v964 = vpop.f32.mrb[0].mxu0
        %v965 = vadd.f32 0.0, %v964
        %v966 = vpop.f32.mrb[0].mxu0
        %967 = vdwg.mxu0
        %v968 = vmul.f32 %v965, 0.17677669
        %v969 = vsel %vm645, %v968, -inf
        %970 = vmax.xlane.f32.xlu0 %v969
        %v971 = vpop.xlane.xlu0 %970
        %v972 = vsub.f32 %v968, %v971
        %v973 = vmul.f32 %v972, 1.442695
        %v974 = vpow.pop %v973
        %v975 = vsel %vm645, %v974, 0.0
        %976 = vadd.xlane.f32.xlu0 %v975
        %v977 = vpop.xlane.xlu0 %976
        %v978 = vrcp.pop %v977
        %v979 = vmul.f32 %v974, %v978
        %980 = vrot.lane.b32.xlu0 %v639, 56
        %v981 = vpop.permute.xlu0 %980
        %v984 = vsel %vm645, %v979, 0
        %986 = vmatprep.subr.mxu0 0.0
        %987 = vmatpush1.msra.mxu0 %v981
        %988 = vmatprep.subr.mxu0 0.0
        %989 = vmatpush1.msra.mxu0 0.0
        %990 = vmatprep.subr.mxu0 0.0
        %991 = vmatpush1.msra.mxu0 0.0
        %992 = vmatprep.subr.mxu0 0.0
        %993 = vmatpush1.msra.mxu0 0.0
        %994 = vmatprep.subr.mxu0 0.0
        %995 = vmatpush1.msra.mxu0 0.0
        %996 = vmatprep.subr.mxu0 0.0
        %997 = vmatpush1.msra.mxu0 0.0
        %998 = vmatprep.subr.mxu0 0.0
        %999 = vmatpush1.msra.mxu0 0.0
        %1000 = vmatprep.subr.mxu0 0.0
        %1001 = vmatpush1.msra.mxu0 0.0
        %1002 = vmatprep.subr.mxu0 0.0
        %1003 = vmatpush1.msra.mxu0 0.0
        %1004 = vmatprep.subr.mxu0 0.0
        %1005 = vmatpush1.msra.mxu0 0.0
        %1006 = vmatprep.subr.mxu0 0.0
        %1007 = vmatpush1.msra.mxu0 0.0
        %1008 = vmatprep.subr.mxu0 0.0
        %1009 = vmatpush1.msra.mxu0 0.0
        %1010 = vmatprep.subr.mxu0 0.0
        %1011 = vmatpush1.msra.mxu0 0.0
        %1012 = vmatprep.subr.mxu0 0.0
        %1013 = vmatpush1.msra.mxu0 0.0
        %1014 = vmatprep.subr.mxu0 0.0
        %1015 = vmatpush1.msra.mxu0 0.0
        %1016 = vmatprep.subr.mxu0 0.0
        %1017 = vmatpush1.msra.mxu0 0.0
        %1018 = vmatprep.subr.mxu0 0.0
        %1019 = vmatpush1.msra.mxu0 0.0
        %1020 = vmatprep.subr.mxu0 0.0
        %1021 = vmatpush1.msra.mxu0 0.0
        %1022 = vmatprep.subr.mxu0 0.0
        %1023 = vmatpush1.msra.mxu0 0.0
        %1024 = vmatprep.subr.mxu0 0.0
        %1025 = vmatpush1.msra.mxu0 0.0
        %1026 = vmatprep.subr.mxu0 0.0
        %1027 = vmatpush1.msra.mxu0 0.0
        %1028 = vmatprep.subr.mxu0 0.0
        %1029 = vmatpush1.msra.mxu0 0.0
        %1030 = vmatprep.subr.mxu0 0.0
        %1031 = vmatpush1.msra.mxu0 0.0
        %1032 = vmatprep.subr.mxu0 0.0
        %1033 = vmatpush1.msra.mxu0 0.0
        %1034 = vmatprep.subr.mxu0 0.0
        %1035 = vmatpush1.msra.mxu0 0.0
        %1036 = vmatprep.subr.mxu0 0.0
        %1037 = vmatpush1.msra.mxu0 0.0
        %1038 = vmatprep.subr.mxu0 0.0
        %1039 = vmatpush1.msra.mxu0 0.0
        %1040 = vmatprep.subr.mxu0 0.0
        %1041 = vmatpush1.msra.mxu0 0.0
        %1042 = vmatprep.subr.mxu0 0.0
        %1043 = vmatpush1.msra.mxu0 0.0
        %1044 = vmatprep.subr.mxu0 0.0
        %1045 = vmatpush1.msra.mxu0 0.0
        %1046 = vmatprep.subr.mxu0 0.0
        %1047 = vmatpush1.msra.mxu0 0.0
        %1048 = vmatprep.subr.mxu0 0.0
        %1049 = vmatpush1.msra.mxu0 0.0
        %1050 = vmatprep.mubr.f32.mxu0 0.0
        %1051 = vmatmul.mubr.f32.gmra.mrb[0].mxu0 %v984
        %v1052 = vpop.f32.mrb[0].mxu0
        %v1053 = vadd.f32 0.0, %v1052
        %v1054 = vpop.f32.mrb[0].mxu0
        %1055 = vdwg.mxu0
        %1057 = vrot.lane.b32.xlu0 %v559, 32
        %v1058 = vpop.permute.xlu0 %1057
        %v1061 = vsel %vm645, %v1053, 0
        %1063 = vmatprep.subr.mxu0 0.0
        %1064 = vmatpush1.msra.mxu0 %v1058
        %1065 = vmatprep.subr.mxu0 0.0
        %1066 = vmatpush1.msra.mxu0 0.0
        %1067 = vmatprep.subr.mxu0 0.0
        %1068 = vmatpush1.msra.mxu0 0.0
        %1069 = vmatprep.subr.mxu0 0.0
        %1070 = vmatpush1.msra.mxu0 0.0
        %1071 = vmatprep.subr.mxu0 0.0
        %1072 = vmatpush1.msra.mxu0 0.0
        %1073 = vmatprep.subr.mxu0 0.0
        %1074 = vmatpush1.msra.mxu0 0.0
        %1075 = vmatprep.subr.mxu0 0.0
        %1076 = vmatpush1.msra.mxu0 0.0
        %1077 = vmatprep.subr.mxu0 0.0
        %1078 = vmatpush1.msra.mxu0 0.0
        %1079 = vmatprep.subr.mxu0 0.0
        %1080 = vmatpush1.msra.mxu0 0.0
        %1081 = vmatprep.subr.mxu0 0.0
        %1082 = vmatpush1.msra.mxu0 0.0
        %1083 = vmatprep.subr.mxu0 0.0
        %1084 = vmatpush1.msra.mxu0 0.0
        %1085 = vmatprep.subr.mxu0 0.0
        %1086 = vmatpush1.msra.mxu0 0.0
        %1087 = vmatprep.subr.mxu0 0.0
        %1088 = vmatpush1.msra.mxu0 0.0
        %1089 = vmatprep.subr.mxu0 0.0
        %1090 = vmatpush1.msra.mxu0 0.0
        %1091 = vmatprep.subr.mxu0 0.0
        %1092 = vmatpush1.msra.mxu0 0.0
        %1093 = vmatprep.subr.mxu0 0.0
        %1094 = vmatpush1.msra.mxu0 0.0
        %1095 = vmatprep.subr.mxu0 0.0
        %1096 = vmatpush1.msra.mxu0 0.0
        %1097 = vmatprep.subr.mxu0 0.0
        %1098 = vmatpush1.msra.mxu0 0.0
        %1099 = vmatprep.subr.mxu0 0.0
        %1100 = vmatpush1.msra.mxu0 0.0
        %1101 = vmatprep.subr.mxu0 0.0
        %1102 = vmatpush1.msra.mxu0 0.0
        %1103 = vmatprep.subr.mxu0 0.0
        %1104 = vmatpush1.msra.mxu0 0.0
        %1105 = vmatprep.subr.mxu0 0.0
        %1106 = vmatpush1.msra.mxu0 0.0
        %1107 = vmatprep.subr.mxu0 0.0
        %1108 = vmatpush1.msra.mxu0 0.0
        %1109 = vmatprep.subr.mxu0 0.0
        %1110 = vmatpush1.msra.mxu0 0.0
        %1111 = vmatprep.subr.mxu0 0.0
        %1112 = vmatpush1.msra.mxu0 0.0
        %1113 = vmatprep.subr.mxu0 0.0
        %1114 = vmatpush1.msra.mxu0 0.0
        %1115 = vmatprep.subr.mxu0 0.0
        %1116 = vmatpush1.msra.mxu0 0.0
        %1117 = vmatprep.subr.mxu0 0.0
        %1118 = vmatpush1.msra.mxu0 0.0
        %1119 = vmatprep.subr.mxu0 0.0
        %1120 = vmatpush1.msra.mxu0 0.0
        %1121 = vmatprep.subr.mxu0 0.0
        %1122 = vmatpush1.msra.mxu0 0.0
        %1123 = vmatprep.subr.mxu0 0.0
        %1124 = vmatpush1.msra.mxu0 0.0
        %1125 = vmatprep.subr.mxu0 0.0
        %1126 = vmatpush1.msra.mxu0 0.0
        %1127 = vmatprep.mubr.f32.mxu0 0.0
        %1128 = vmatmul.mubr.f32.gmra.mrb[0].mxu0 %v1061
        %v1129 = vpop.f32.mrb[0].mxu0
        %v1130 = vadd.f32 0.0, %v1129
        %v1131 = vpop.f32.mrb[0].mxu0
        %1132 = vdwg.mxu0
        %v1133 = vadd.f32 %v889, %v1130
        %1134 = vrot.lane.b32.xlu0 %v639, 112
        %v1135 = vpop.permute.xlu0 %1134
        %1136 = vrot.lane.b32.xlu0 %v639, 80
        %v1137 = vpop.permute.xlu0 %1136
        %v1138 = vsel %vm645, %v1135, 0
        %v1140 = vsel %vm645, %v1137, 0
        %1142 = vmatprep.subr.mxu0 0.0
        %1143 = vmatpush1.xpose.msra.mxu0 %v1140
        %1144 = vmatprep.subr.mxu0 0.0
        %1145 = vmatpush1.xpose.msra.mxu0 0.0
        %1146 = vmatprep.subr.mxu0 0.0
        %1147 = vmatpush1.xpose.msra.mxu0 0.0
        %1148 = vmatprep.subr.mxu0 0.0
        %1149 = vmatpush1.xpose.msra.mxu0 0.0
        %1150 = vmatprep.subr.mxu0 0.0
        %1151 = vmatpush1.xpose.msra.mxu0 0.0
        %1152 = vmatprep.subr.mxu0 0.0
        %1153 = vmatpush1.xpose.msra.mxu0 0.0
        %1154 = vmatprep.subr.mxu0 0.0
        %1155 = vmatpush1.xpose.msra.mxu0 0.0
        %1156 = vmatprep.subr.mxu0 0.0
        %1157 = vmatpush1.xpose.msra.mxu0 0.0
        %1158 = vmatprep.subr.mxu0 0.0
        %1159 = vmatpush1.xpose.msra.mxu0 0.0
        %1160 = vmatprep.subr.mxu0 0.0
        %1161 = vmatpush1.xpose.msra.mxu0 0.0
        %1162 = vmatprep.subr.mxu0 0.0
        %1163 = vmatpush1.xpose.msra.mxu0 0.0
        %1164 = vmatprep.subr.mxu0 0.0
        %1165 = vmatpush1.xpose.msra.mxu0 0.0
        %1166 = vmatprep.subr.mxu0 0.0
        %1167 = vmatpush1.xpose.msra.mxu0 0.0
        %1168 = vmatprep.subr.mxu0 0.0
        %1169 = vmatpush1.xpose.msra.mxu0 0.0
        %1170 = vmatprep.subr.mxu0 0.0
        %1171 = vmatpush1.xpose.msra.mxu0 0.0
        %1172 = vmatprep.subr.mxu0 0.0
        %1173 = vmatpush1.xpose.msra.mxu0 0.0
        %1174 = vmatprep.subr.mxu0 0.0
        %1175 = vmatpush1.xpose.msra.mxu0 0.0
        %1176 = vmatprep.subr.mxu0 0.0
        %1177 = vmatpush1.xpose.msra.mxu0 0.0
        %1178 = vmatprep.subr.mxu0 0.0
        %1179 = vmatpush1.xpose.msra.mxu0 0.0
        %1180 = vmatprep.subr.mxu0 0.0
        %1181 = vmatpush1.xpose.msra.mxu0 0.0
        %1182 = vmatprep.subr.mxu0 0.0
        %1183 = vmatpush1.xpose.msra.mxu0 0.0
        %1184 = vmatprep.subr.mxu0 0.0
        %1185 = vmatpush1.xpose.msra.mxu0 0.0
        %1186 = vmatprep.subr.mxu0 0.0
        %1187 = vmatpush1.xpose.msra.mxu0 0.0
        %1188 = vmatprep.subr.mxu0 0.0
        %1189 = vmatpush1.xpose.msra.mxu0 0.0
        %1190 = vmatprep.subr.mxu0 0.0
        %1191 = vmatpush1.xpose.msra.mxu0 0.0
        %1192 = vmatprep.subr.mxu0 0.0
        %1193 = vmatpush1.xpose.msra.mxu0 0.0
        %1194 = vmatprep.subr.mxu0 0.0
        %1195 = vmatpush1.xpose.msra.mxu0 0.0
        %1196 = vmatprep.subr.mxu0 0.0
        %1197 = vmatpush1.xpose.msra.mxu0 0.0
        %1198 = vmatprep.subr.mxu0 0.0
        %1199 = vmatpush1.xpose.msra.mxu0 0.0
        %1200 = vmatprep.subr.mxu0 0.0
        %1201 = vmatpush1.xpose.msra.mxu0 0.0
        %1202 = vmatprep.subr.mxu0 0.0
        %1203 = vmatpush1.xpose.msra.mxu0 0.0
        %1204 = vmatprep.subr.mxu0 0.0
        %1205 = vmatpush1.xpose.msra.mxu0 0.0
        %1206 = vmatprep.mubr.f32.mxu0 0.0
        %1207 = vmatmul.mubr.f32.gmra.mrb[0].mxu0 %v1138
        %v1208 = vpop.f32.mrb[0].mxu0
        %v1209 = vadd.f32 0.0, %v1208
        %v1210 = vpop.f32.mrb[0].mxu0
        %1211 = vdwg.mxu0
        %v1212 = vmul.f32 %v1209, 0.17677669
        %v1213 = vsel %vm645, %v1212, -inf
        %1214 = vmax.xlane.f32.xlu0 %v1213
        %v1215 = vpop.xlane.xlu0 %1214
        %v1216 = vsub.f32 %v1212, %v1215
        %v1217 = vmul.f32 %v1216, 1.442695
        %v1218 = vpow.pop %v1217
        %v1219 = vsel %vm645, %v1218, 0.0
        %1220 = vadd.xlane.f32.xlu0 %v1219
        %v1221 = vpop.xlane.xlu0 %1220
        %v1222 = vrcp.pop %v1221
        %v1223 = vmul.f32 %v1218, %v1222
        %1224 = vrot.lane.b32.xlu0 %v639, 48
        %v1225 = vpop.permute.xlu0 %1224
        %v1228 = vsel %vm645, %v1223, 0
        %1230 = vmatprep.subr.mxu0 0.0
        %1231 = vmatpush1.msra.mxu0 %v1225
        %1232 = vmatprep.subr.mxu0 0.0
        %1233 = vmatpush1.msra.mxu0 0.0
        %1234 = vmatprep.subr.mxu0 0.0
        %1235 = vmatpush1.msra.mxu0 0.0
        %1236 = vmatprep.subr.mxu0 0.0
        %1237 = vmatpush1.msra.mxu0 0.0
        %1238 = vmatprep.subr.mxu0 0.0
        %1239 = vmatpush1.msra.mxu0 0.0
        %1240 = vmatprep.subr.mxu0 0.0
        %1241 = vmatpush1.msra.mxu0 0.0
        %1242 = vmatprep.subr.mxu0 0.0
        %1243 = vmatpush1.msra.mxu0 0.0
        %1244 = vmatprep.subr.mxu0 0.0
        %1245 = vmatpush1.msra.mxu0 0.0
        %1246 = vmatprep.subr.mxu0 0.0
        %1247 = vmatpush1.msra.mxu0 0.0
        %1248 = vmatprep.subr.mxu0 0.0
        %1249 = vmatpush1.msra.mxu0 0.0
        %1250 = vmatprep.subr.mxu0 0.0
        %1251 = vmatpush1.msra.mxu0 0.0
        %1252 = vmatprep.subr.mxu0 0.0
        %1253 = vmatpush1.msra.mxu0 0.0
        %1254 = vmatprep.subr.mxu0 0.0
        %1255 = vmatpush1.msra.mxu0 0.0
        %1256 = vmatprep.subr.mxu0 0.0
        %1257 = vmatpush1.msra.mxu0 0.0
        %1258 = vmatprep.subr.mxu0 0.0
        %1259 = vmatpush1.msra.mxu0 0.0
        %1260 = vmatprep.subr.mxu0 0.0
        %1261 = vmatpush1.msra.mxu0 0.0
        %1262 = vmatprep.subr.mxu0 0.0
        %1263 = vmatpush1.msra.mxu0 0.0
        %1264 = vmatprep.subr.mxu0 0.0
        %1265 = vmatpush1.msra.mxu0 0.0
        %1266 = vmatprep.subr.mxu0 0.0
        %1267 = vmatpush1.msra.mxu0 0.0
        %1268 = vmatprep.subr.mxu0 0.0
        %1269 = vmatpush1.msra.mxu0 0.0
        %1270 = vmatprep.subr.mxu0 0.0
        %1271 = vmatpush1.msra.mxu0 0.0
        %1272 = vmatprep.subr.mxu0 0.0
        %1273 = vmatpush1.msra.mxu0 0.0
        %1274 = vmatprep.subr.mxu0 0.0
        %1275 = vmatpush1.msra.mxu0 0.0
        %1276 = vmatprep.subr.mxu0 0.0
        %1277 = vmatpush1.msra.mxu0 0.0
        %1278 = vmatprep.subr.mxu0 0.0
        %1279 = vmatpush1.msra.mxu0 0.0
        %1280 = vmatprep.subr.mxu0 0.0
        %1281 = vmatpush1.msra.mxu0 0.0
        %1282 = vmatprep.subr.mxu0 0.0
        %1283 = vmatpush1.msra.mxu0 0.0
        %1284 = vmatprep.subr.mxu0 0.0
        %1285 = vmatpush1.msra.mxu0 0.0
        %1286 = vmatprep.subr.mxu0 0.0
        %1287 = vmatpush1.msra.mxu0 0.0
        %1288 = vmatprep.subr.mxu0 0.0
        %1289 = vmatpush1.msra.mxu0 0.0
        %1290 = vmatprep.subr.mxu0 0.0
        %1291 = vmatpush1.msra.mxu0 0.0
        %1292 = vmatprep.subr.mxu0 0.0
        %1293 = vmatpush1.msra.mxu0 0.0
        %1294 = vmatprep.mubr.f32.mxu0 0.0
        %1295 = vmatmul.mubr.f32.gmra.mrb[0].mxu0 %v1228
        %v1296 = vpop.f32.mrb[0].mxu0
        %v1297 = vadd.f32 0.0, %v1296
        %v1298 = vpop.f32.mrb[0].mxu0
        %1299 = vdwg.mxu0
        %1301 = vrot.lane.b32.xlu0 %v560, 32
        %v1302 = vpop.permute.xlu0 %1301
        %v1305 = vsel %vm645, %v1297, 0
        %1307 = vmatprep.subr.mxu0 0.0
        %1308 = vmatpush1.msra.mxu0 %v1302
        %1309 = vmatprep.subr.mxu0 0.0
        %1310 = vmatpush1.msra.mxu0 0.0
        %1311 = vmatprep.subr.mxu0 0.0
        %1312 = vmatpush1.msra.mxu0 0.0
        %1313 = vmatprep.subr.mxu0 0.0
        %1314 = vmatpush1.msra.mxu0 0.0
        %1315 = vmatprep.subr.mxu0 0.0
        %1316 = vmatpush1.msra.mxu0 0.0
        %1317 = vmatprep.subr.mxu0 0.0
        %1318 = vmatpush1.msra.mxu0 0.0
        %1319 = vmatprep.subr.mxu0 0.0
        %1320 = vmatpush1.msra.mxu0 0.0
        %1321 = vmatprep.subr.mxu0 0.0
        %1322 = vmatpush1.msra.mxu0 0.0
        %1323 = vmatprep.subr.mxu0 0.0
        %1324 = vmatpush1.msra.mxu0 0.0
        %1325 = vmatprep.subr.mxu0 0.0
        %1326 = vmatpush1.msra.mxu0 0.0
        %1327 = vmatprep.subr.mxu0 0.0
        %1328 = vmatpush1.msra.mxu0 0.0
        %1329 = vmatprep.subr.mxu0 0.0
        %1330 = vmatpush1.msra.mxu0 0.0
        %1331 = vmatprep.subr.mxu0 0.0
        %1332 = vmatpush1.msra.mxu0 0.0
        %1333 = vmatprep.subr.mxu0 0.0
        %1334 = vmatpush1.msra.mxu0 0.0
        %1335 = vmatprep.subr.mxu0 0.0
        %1336 = vmatpush1.msra.mxu0 0.0
        %1337 = vmatprep.subr.mxu0 0.0
        %1338 = vmatpush1.msra.mxu0 0.0
        %1339 = vmatprep.subr.mxu0 0.0
        %1340 = vmatpush1.msra.mxu0 0.0
        %1341 = vmatprep.subr.mxu0 0.0
        %1342 = vmatpush1.msra.mxu0 0.0
        %1343 = vmatprep.subr.mxu0 0.0
        %1344 = vmatpush1.msra.mxu0 0.0
        %1345 = vmatprep.subr.mxu0 0.0
        %1346 = vmatpush1.msra.mxu0 0.0
        %1347 = vmatprep.subr.mxu0 0.0
        %1348 = vmatpush1.msra.mxu0 0.0
        %1349 = vmatprep.subr.mxu0 0.0
        %1350 = vmatpush1.msra.mxu0 0.0
        %1351 = vmatprep.subr.mxu0 0.0
        %1352 = vmatpush1.msra.mxu0 0.0
        %1353 = vmatprep.subr.mxu0 0.0
        %1354 = vmatpush1.msra.mxu0 0.0
        %1355 = vmatprep.subr.mxu0 0.0
        %1356 = vmatpush1.msra.mxu0 0.0
        %1357 = vmatprep.subr.mxu0 0.0
        %1358 = vmatpush1.msra.mxu0 0.0
        %1359 = vmatprep.subr.mxu0 0.0
        %1360 = vmatpush1.msra.mxu0 0.0
        %1361 = vmatprep.subr.mxu0 0.0
        %1362 = vmatpush1.msra.mxu0 0.0
        %1363 = vmatprep.subr.mxu0 0.0
        %1364 = vmatpush1.msra.mxu0 0.0
        %1365 = vmatprep.subr.mxu0 0.0
        %1366 = vmatpush1.msra.mxu0 0.0
        %1367 = vmatprep.subr.mxu0 0.0
        %1368 = vmatpush1.msra.mxu0 0.0
        %1369 = vmatprep.subr.mxu0 0.0
        %1370 = vmatpush1.msra.mxu0 0.0
        %1371 = vmatprep.mubr.f32.mxu0 0.0
        %1372 = vmatmul.mubr.f32.gmra.mrb[0].mxu0 %v1305
        %v1373 = vpop.f32.mrb[0].mxu0
        %v1374 = vadd.f32 0.0, %v1373
        %v1375 = vpop.f32.mrb[0].mxu0
        %1376 = vdwg.mxu0
        %v1377 = vadd.f32 %v1133, %v1374
        %1378 = vrot.lane.b32.xlu0 %v639, 104
        %v1379 = vpop.permute.xlu0 %1378
        %1380 = vrot.lane.b32.xlu0 %v639, 72
        %v1381 = vpop.permute.xlu0 %1380
        %v1382 = vsel %vm645, %v1379, 0
        %v1384 = vsel %vm645, %v1381, 0
        %1386 = vmatprep.subr.mxu0 0.0
        %1387 = vmatpush1.xpose.msra.mxu0 %v1384
        %1388 = vmatprep.subr.mxu0 0.0
        %1389 = vmatpush1.xpose.msra.mxu0 0.0
        %1390 = vmatprep.subr.mxu0 0.0
        %1391 = vmatpush1.xpose.msra.mxu0 0.0
        %1392 = vmatprep.subr.mxu0 0.0
        %1393 = vmatpush1.xpose.msra.mxu0 0.0
        %1394 = vmatprep.subr.mxu0 0.0
        %1395 = vmatpush1.xpose.msra.mxu0 0.0
        %1396 = vmatprep.subr.mxu0 0.0
        %1397 = vmatpush1.xpose.msra.mxu0 0.0
        %1398 = vmatprep.subr.mxu0 0.0
        %1399 = vmatpush1.xpose.msra.mxu0 0.0
        %1400 = vmatprep.subr.mxu0 0.0
        %1401 = vmatpush1.xpose.msra.mxu0 0.0
        %1402 = vmatprep.subr.mxu0 0.0
        %1403 = vmatpush1.xpose.msra.mxu0 0.0
        %1404 = vmatprep.subr.mxu0 0.0
        %1405 = vmatpush1.xpose.msra.mxu0 0.0
        %1406 = vmatprep.subr.mxu0 0.0
        %1407 = vmatpush1.xpose.msra.mxu0 0.0
        %1408 = vmatprep.subr.mxu0 0.0
        %1409 = vmatpush1.xpose.msra.mxu0 0.0
        %1410 = vmatprep.subr.mxu0 0.0
        %1411 = vmatpush1.xpose.msra.mxu0 0.0
        %1412 = vmatprep.subr.mxu0 0.0
        %1413 = vmatpush1.xpose.msra.mxu0 0.0
        %1414 = vmatprep.subr.mxu0 0.0
        %1415 = vmatpush1.xpose.msra.mxu0 0.0
        %1416 = vmatprep.subr.mxu0 0.0
        %1417 = vmatpush1.xpose.msra.mxu0 0.0
        %1418 = vmatprep.subr.mxu0 0.0
        %1419 = vmatpush1.xpose.msra.mxu0 0.0
        %1420 = vmatprep.subr.mxu0 0.0
        %1421 = vmatpush1.xpose.msra.mxu0 0.0
        %1422 = vmatprep.subr.mxu0 0.0
        %1423 = vmatpush1.xpose.msra.mxu0 0.0
        %1424 = vmatprep.subr.mxu0 0.0
        %1425 = vmatpush1.xpose.msra.mxu0 0.0
        %1426 = vmatprep.subr.mxu0 0.0
        %1427 = vmatpush1.xpose.msra.mxu0 0.0
        %1428 = vmatprep.subr.mxu0 0.0
        %1429 = vmatpush1.xpose.msra.mxu0 0.0
        %1430 = vmatprep.subr.mxu0 0.0
        %1431 = vmatpush1.xpose.msra.mxu0 0.0
        %1432 = vmatprep.subr.mxu0 0.0
        %1433 = vmatpush1.xpose.msra.mxu0 0.0
        %1434 = vmatprep.subr.mxu0 0.0
        %1435 = vmatpush1.xpose.msra.mxu0 0.0
        %1436 = vmatprep.subr.mxu0 0.0
        %1437 = vmatpush1.xpose.msra.mxu0 0.0
        %1438 = vmatprep.subr.mxu0 0.0
        %1439 = vmatpush1.xpose.msra.mxu0 0.0
        %1440 = vmatprep.subr.mxu0 0.0
        %1441 = vmatpush1.xpose.msra.mxu0 0.0
        %1442 = vmatprep.subr.mxu0 0.0
        %1443 = vmatpush1.xpose.msra.mxu0 0.0
        %1444 = vmatprep.subr.mxu0 0.0
        %1445 = vmatpush1.xpose.msra.mxu0 0.0
        %1446 = vmatprep.subr.mxu0 0.0
        %1447 = vmatpush1.xpose.msra.mxu0 0.0
        %1448 = vmatprep.subr.mxu0 0.0
        %1449 = vmatpush1.xpose.msra.mxu0 0.0
        %1450 = vmatprep.mubr.f32.mxu0 0.0
        %1451 = vmatmul.mubr.f32.gmra.mrb[0].mxu0 %v1382
        %v1452 = vpop.f32.mrb[0].mxu0
        %v1453 = vadd.f32 0.0, %v1452
        %v1454 = vpop.f32.mrb[0].mxu0
        %1455 = vdwg.mxu0
        %v1456 = vmul.f32 %v1453, 0.17677669
        %v1457 = vsel %vm645, %v1456, -inf
        %1458 = vmax.xlane.f32.xlu0 %v1457
        %v1459 = vpop.xlane.xlu0 %1458
        %v1460 = vsub.f32 %v1456, %v1459
        %v1461 = vmul.f32 %v1460, 1.442695
        %v1462 = vpow.pop %v1461
        %v1463 = vsel %vm645, %v1462, 0.0
        %1464 = vadd.xlane.f32.xlu0 %v1463
        %v1465 = vpop.xlane.xlu0 %1464
        %v1466 = vrcp.pop %v1465
        %v1467 = vmul.f32 %v1462, %v1466
        %1468 = vrot.lane.b32.xlu0 %v639, 40
        %v1469 = vpop.permute.xlu0 %1468
        %v1472 = vsel %vm645, %v1467, 0
        %1474 = vmatprep.subr.mxu0 0.0
        %1475 = vmatpush1.msra.mxu0 %v1469
        %1476 = vmatprep.subr.mxu0 0.0
        %1477 = vmatpush1.msra.mxu0 0.0
        %1478 = vmatprep.subr.mxu0 0.0
        %1479 = vmatpush1.msra.mxu0 0.0
        %1480 = vmatprep.subr.mxu0 0.0
        %1481 = vmatpush1.msra.mxu0 0.0
        %1482 = vmatprep.subr.mxu0 0.0
        %1483 = vmatpush1.msra.mxu0 0.0
        %1484 = vmatprep.subr.mxu0 0.0
        %1485 = vmatpush1.msra.mxu0 0.0
        %1486 = vmatprep.subr.mxu0 0.0
        %1487 = vmatpush1.msra.mxu0 0.0
        %1488 = vmatprep.subr.mxu0 0.0
        %1489 = vmatpush1.msra.mxu0 0.0
        %1490 = vmatprep.subr.mxu0 0.0
        %1491 = vmatpush1.msra.mxu0 0.0
        %1492 = vmatprep.subr.mxu0 0.0
        %1493 = vmatpush1.msra.mxu0 0.0
        %1494 = vmatprep.subr.mxu0 0.0
        %1495 = vmatpush1.msra.mxu0 0.0
        %1496 = vmatprep.subr.mxu0 0.0
        %1497 = vmatpush1.msra.mxu0 0.0
        %1498 = vmatprep.subr.mxu0 0.0
        %1499 = vmatpush1.msra.mxu0 0.0
        %1500 = vmatprep.subr.mxu0 0.0
        %1501 = vmatpush1.msra.mxu0 0.0
        %1502 = vmatprep.subr.mxu0 0.0
        %1503 = vmatpush1.msra.mxu0 0.0
        %1504 = vmatprep.subr.mxu0 0.0
        %1505 = vmatpush1.msra.mxu0 0.0
        %1506 = vmatprep.subr.mxu0 0.0
        %1507 = vmatpush1.msra.mxu0 0.0
        %1508 = vmatprep.subr.mxu0 0.0
        %1509 = vmatpush1.msra.mxu0 0.0
        %1510 = vmatprep.subr.mxu0 0.0
        %1511 = vmatpush1.msra.mxu0 0.0
        %1512 = vmatprep.subr.mxu0 0.0
        %1513 = vmatpush1.msra.mxu0 0.0
        %1514 = vmatprep.subr.mxu0 0.0
        %1515 = vmatpush1.msra.mxu0 0.0
        %1516 = vmatprep.subr.mxu0 0.0
        %1517 = vmatpush1.msra.mxu0 0.0
        %1518 = vmatprep.subr.mxu0 0.0
        %1519 = vmatpush1.msra.mxu0 0.0
        %1520 = vmatprep.subr.mxu0 0.0
        %1521 = vmatpush1.msra.mxu0 0.0
        %1522 = vmatprep.subr.mxu0 0.0
        %1523 = vmatpush1.msra.mxu0 0.0
        %1524 = vmatprep.subr.mxu0 0.0
        %1525 = vmatpush1.msra.mxu0 0.0
        %1526 = vmatprep.subr.mxu0 0.0
        %1527 = vmatpush1.msra.mxu0 0.0
        %1528 = vmatprep.subr.mxu0 0.0
        %1529 = vmatpush1.msra.mxu0 0.0
        %1530 = vmatprep.subr.mxu0 0.0
        %1531 = vmatpush1.msra.mxu0 0.0
        %1532 = vmatprep.subr.mxu0 0.0
        %1533 = vmatpush1.msra.mxu0 0.0
        %1534 = vmatprep.subr.mxu0 0.0
        %1535 = vmatpush1.msra.mxu0 0.0
        %1536 = vmatprep.subr.mxu0 0.0
        %1537 = vmatpush1.msra.mxu0 0.0
        %1538 = vmatprep.mubr.f32.mxu0 0.0
        %1539 = vmatmul.mubr.f32.gmra.mrb[0].mxu0 %v1472
        %v1540 = vpop.f32.mrb[0].mxu0
        %v1541 = vadd.f32 0.0, %v1540
        %v1542 = vpop.f32.mrb[0].mxu0
        %1543 = vdwg.mxu0
        %1545 = vrot.lane.b32.xlu0 %v561, 32
        %v1546 = vpop.permute.xlu0 %1545
        %v1549 = vsel %vm645, %v1541, 0
        %1551 = vmatprep.subr.mxu0 0.0
        %1552 = vmatpush1.msra.mxu0 %v1546
        %1553 = vmatprep.subr.mxu0 0.0
        %1554 = vmatpush1.msra.mxu0 0.0
        %1555 = vmatprep.subr.mxu0 0.0
        %1556 = vmatpush1.msra.mxu0 0.0
        %1557 = vmatprep.subr.mxu0 0.0
        %1558 = vmatpush1.msra.mxu0 0.0
        %1559 = vmatprep.subr.mxu0 0.0
        %1560 = vmatpush1.msra.mxu0 0.0
        %1561 = vmatprep.subr.mxu0 0.0
        %1562 = vmatpush1.msra.mxu0 0.0
        %1563 = vmatprep.subr.mxu0 0.0
        %1564 = vmatpush1.msra.mxu0 0.0
        %1565 = vmatprep.subr.mxu0 0.0
        %1566 = vmatpush1.msra.mxu0 0.0
        %1567 = vmatprep.subr.mxu0 0.0
        %1568 = vmatpush1.msra.mxu0 0.0
        %1569 = vmatprep.subr.mxu0 0.0
        %1570 = vmatpush1.msra.mxu0 0.0
        %1571 = vmatprep.subr.mxu0 0.0
        %1572 = vmatpush1.msra.mxu0 0.0
        %1573 = vmatprep.subr.mxu0 0.0
        %1574 = vmatpush1.msra.mxu0 0.0
        %1575 = vmatprep.subr.mxu0 0.0
        %1576 = vmatpush1.msra.mxu0 0.0
        %1577 = vmatprep.subr.mxu0 0.0
        %1578 = vmatpush1.msra.mxu0 0.0
        %1579 = vmatprep.subr.mxu0 0.0
        %1580 = vmatpush1.msra.mxu0 0.0
        %1581 = vmatprep.subr.mxu0 0.0
        %1582 = vmatpush1.msra.mxu0 0.0
        %1583 = vmatprep.subr.mxu0 0.0
        %1584 = vmatpush1.msra.mxu0 0.0
        %1585 = vmatprep.subr.mxu0 0.0
        %1586 = vmatpush1.msra.mxu0 0.0
        %1587 = vmatprep.subr.mxu0 0.0
        %1588 = vmatpush1.msra.mxu0 0.0
        %1589 = vmatprep.subr.mxu0 0.0
        %1590 = vmatpush1.msra.mxu0 0.0
        %1591 = vmatprep.subr.mxu0 0.0
        %1592 = vmatpush1.msra.mxu0 0.0
        %1593 = vmatprep.subr.mxu0 0.0
        %1594 = vmatpush1.msra.mxu0 0.0
        %1595 = vmatprep.subr.mxu0 0.0
        %1596 = vmatpush1.msra.mxu0 0.0
        %1597 = vmatprep.subr.mxu0 0.0
        %1598 = vmatpush1.msra.mxu0 0.0
        %1599 = vmatprep.subr.mxu0 0.0
        %1600 = vmatpush1.msra.mxu0 0.0
        %1601 = vmatprep.subr.mxu0 0.0
        %1602 = vmatpush1.msra.mxu0 0.0
        %1603 = vmatprep.subr.mxu0 0.0
        %1604 = vmatpush1.msra.mxu0 0.0
        %1605 = vmatprep.subr.mxu0 0.0
        %1606 = vmatpush1.msra.mxu0 0.0
        %1607 = vmatprep.subr.mxu0 0.0
        %1608 = vmatpush1.msra.mxu0 0.0
        %1609 = vmatprep.subr.mxu0 0.0
        %1610 = vmatpush1.msra.mxu0 0.0
        %1611 = vmatprep.subr.mxu0 0.0
        %1612 = vmatpush1.msra.mxu0 0.0
        %1613 = vmatprep.subr.mxu0 0.0
        %1614 = vmatpush1.msra.mxu0 0.0
        %1615 = vmatprep.mubr.f32.mxu0 0.0
        %1616 = vmatmul.mubr.f32.gmra.mrb[0].mxu0 %v1549
        %v1617 = vpop.f32.mrb[0].mxu0
        %v1618 = vadd.f32 0.0, %v1617
        %v1619 = vpop.f32.mrb[0].mxu0
        %1620 = vdwg.mxu0
        %v1621 = vadd.f32 %v1377, %v1618
        %v1622 = vadd.f32 %v1621, %v535
        %v1623 = vsel %vm568, %v1622, 0.0
        %1624 = vadd.xlane.f32.xlu0 %v1623
        %v1625 = vpop.xlane.xlu0 %1624
        %v1626 = vrcp.pop 32.0
        %v1627 = vmul.f32 %v1625, %v1626
        %v1628 = vsub.f32 %v1622, %v1627
        %v1629 = vmul.f32 %v1628, %v1628
        %v1630 = vsel %vm568, %v1629, 0.0
        %1631 = vadd.xlane.f32.xlu0 %v1630
        %v1632 = vpop.xlane.xlu0 %1631
        %v1633 = vmul.f32 %v1632, %v1626
        %v1634 = vadd.f32 %v1633, 1e-05
        %v1635 = vrsqrt.pop %v1634
        %v1636 = vmul.f32 %v1628, %v1635
        %1638 = vrot.lane.b32.xlu0 %v888, 96
        %v1639 = vpop.permute.xlu0 %1638
        %v1641 = vmul.f32 %v1636, %v1639
        %1642 = vrot.lane.b32.xlu0 %v888, 64
        %v1643 = vpop.permute.xlu0 %1642
        %v1645 = vadd.f32 %v1641, %v1643
        %s1646 = scalar_lea.vmem %s7, 32
        %v1647 = vld [vmem:[%s1646] sm:$0xff]
        %v1648 = vld [vmem:[%s1646 + $0x8] sm:$0xff]
        %v1649 = vld [vmem:[%s1646 + $0x10] sm:$0xff]
        %v1650 = vld [vmem:[%s1646 + $0x18] sm:$0xff]
        %s1651 = scalar_lea.vmem %s8, 128
        %v1652 = vld [vmem:[%s1651] sm:$0xff]
        %v1653 = vld [vmem:[%s1651 + $0x8] sm:$0xff]
        %v1654 = vld [vmem:[%s1651 + $0x10] sm:$0xff]
        %v1655 = vld [vmem:[%s1651 + $0x18] sm:$0xff]
        %v1656 = vld [vmem:[%s1651 + $0x20] sm:$0xff]
        %v1657 = vld [vmem:[%s1651 + $0x28] sm:$0xff]
        %v1658 = vld [vmem:[%s1651 + $0x30] sm:$0xff]
        %v1659 = vld [vmem:[%s1651 + $0x38] sm:$0xff]
        %v1660 = vld [vmem:[%s1651 + $0x40] sm:$0xff]
        %v1661 = vld [vmem:[%s1651 + $0x48] sm:$0xff]
        %v1662 = vld [vmem:[%s1651 + $0x50] sm:$0xff]
        %v1663 = vld [vmem:[%s1651 + $0x58] sm:$0xff]
        %v1664 = vld [vmem:[%s1651 + $0x60] sm:$0xff]
        %v1665 = vld [vmem:[%s1651 + $0x68] sm:$0xff]
        %v1666 = vld [vmem:[%s1651 + $0x70] sm:$0xff]
        %v1667 = vld [vmem:[%s1651 + $0x78] sm:$0xff]
        %s1668 = scalar_lea.vmem %s9, 2
        %v1669 = vld [vmem:[%s1668] sm:$0x3]
        %v1670 = vlaneseq
        %v1671 = vshrl.u32 %v1670, 7
        %v1672 = vsub.s32 0, %v1671
        %v1673 = vrot.slane %v1669, %v1672
        %v1675 = vsel %vm568, %v1645, 0
        %1677 = vmatprep.subr.mxu0 0.0
        %1678 = vmatpush1.msra.mxu0 %v1647
        %1679 = vmatprep.subr.mxu0 0.0
        %1680 = vmatpush1.msra.mxu0 %v1648
        %1681 = vmatprep.subr.mxu0 0.0
        %1682 = vmatpush1.msra.mxu0 %v1649
        %1683 = vmatprep.subr.mxu0 0.0
        %1684 = vmatpush1.msra.mxu0 %v1650
        %1685 = vmatprep.subr.mxu0 0.0
        %1686 = vmatpush1.msra.mxu0 0.0
        %1687 = vmatprep.subr.mxu0 0.0
        %1688 = vmatpush1.msra.mxu0 0.0
        %1689 = vmatprep.subr.mxu0 0.0
        %1690 = vmatpush1.msra.mxu0 0.0
        %1691 = vmatprep.subr.mxu0 0.0
        %1692 = vmatpush1.msra.mxu0 0.0
        %1693 = vmatprep.subr.mxu0 0.0
        %1694 = vmatpush1.msra.mxu0 0.0
        %1695 = vmatprep.subr.mxu0 0.0
        %1696 = vmatpush1.msra.mxu0 0.0
        %1697 = vmatprep.subr.mxu0 0.0
        %1698 = vmatpush1.msra.mxu0 0.0
        %1699 = vmatprep.subr.mxu0 0.0
        %1700 = vmatpush1.msra.mxu0 0.0
        %1701 = vmatprep.subr.mxu0 0.0
        %1702 = vmatpush1.msra.mxu0 0.0
        %1703 = vmatprep.subr.mxu0 0.0
        %1704 = vmatpush1.msra.mxu0 0.0
        %1705 = vmatprep.subr.mxu0 0.0
        %1706 = vmatpush1.msra.mxu0 0.0
        %1707 = vmatprep.subr.mxu0 0.0
        %1708 = vmatpush1.msra.mxu0 0.0
        %1709 = vmatprep.subr.mxu0 0.0
        %1710 = vmatpush1.msra.mxu0 0.0
        %1711 = vmatprep.subr.mxu0 0.0
        %1712 = vmatpush1.msra.mxu0 0.0
        %1713 = vmatprep.subr.mxu0 0.0
        %1714 = vmatpush1.msra.mxu0 0.0
        %1715 = vmatprep.subr.mxu0 0.0
        %1716 = vmatpush1.msra.mxu0 0.0
        %1717 = vmatprep.subr.mxu0 0.0
        %1718 = vmatpush1.msra.mxu0 0.0
        %1719 = vmatprep.subr.mxu0 0.0
        %1720 = vmatpush1.msra.mxu0 0.0
        %1721 = vmatprep.subr.mxu0 0.0
        %1722 = vmatpush1.msra.mxu0 0.0
        %1723 = vmatprep.subr.mxu0 0.0
        %1724 = vmatpush1.msra.mxu0 0.0
        %1725 = vmatprep.subr.mxu0 0.0
        %1726 = vmatpush1.msra.mxu0 0.0
        %1727 = vmatprep.subr.mxu0 0.0
        %1728 = vmatpush1.msra.mxu0 0.0
        %1729 = vmatprep.subr.mxu0 0.0
        %1730 = vmatpush1.msra.mxu0 0.0
        %1731 = vmatprep.subr.mxu0 0.0
        %1732 = vmatpush1.msra.mxu0 0.0
        %1733 = vmatprep.subr.mxu0 0.0
        %1734 = vmatpush1.msra.mxu0 0.0
        %1735 = vmatprep.subr.mxu0 0.0
        %1736 = vmatpush1.msra.mxu0 0.0
        %1737 = vmatprep.subr.mxu0 0.0
        %1738 = vmatpush1.msra.mxu0 0.0
        %1739 = vmatprep.subr.mxu0 0.0
        %1740 = vmatpush1.msra.mxu0 0.0
        %1741 = vmatprep.mubr.f32.mxu0 0.0
        %1742 = vmatmul.mubr.f32.gmra.mrb[0].mxu0 %v1675
        %v1743 = vpop.f32.mrb[0].mxu0
        %v1744 = vadd.f32 %v1673, %v1743
        %v1745 = vpop.f32.mrb[0].mxu0
        %1746 = vdwg.mxu0
        %v1747 = vmax.f32 %v1744, 0.0
        %v1748 = vlaneseq
        %v1749 = vshrl.u32 %v1748, 7
        %v1750 = vsub.s32 1, %v1749
        %v1751 = vrot.slane %v1669, %v1750
        %1752 = vmatprep.subr.mxu0 0.0
        %1753 = vmatpush1.msra.mxu0 %v1652
        %1754 = vmatprep.subr.mxu0 0.0
        %1755 = vmatpush1.msra.mxu0 %v1653
        %1756 = vmatprep.subr.mxu0 0.0
        %1757 = vmatpush1.msra.mxu0 %v1654
        %1758 = vmatprep.subr.mxu0 0.0
        %1759 = vmatpush1.msra.mxu0 %v1655
        %1760 = vmatprep.subr.mxu0 0.0
        %1761 = vmatpush1.msra.mxu0 %v1656
        %1762 = vmatprep.subr.mxu0 0.0
        %1763 = vmatpush1.msra.mxu0 %v1657
        %1764 = vmatprep.subr.mxu0 0.0
        %1765 = vmatpush1.msra.mxu0 %v1658
        %1766 = vmatprep.subr.mxu0 0.0
        %1767 = vmatpush1.msra.mxu0 %v1659
        %1768 = vmatprep.subr.mxu0 0.0
        %1769 = vmatpush1.msra.mxu0 %v1660
        %1770 = vmatprep.subr.mxu0 0.0
        %1771 = vmatpush1.msra.mxu0 %v1661
        %1772 = vmatprep.subr.mxu0 0.0
        %1773 = vmatpush1.msra.mxu0 %v1662
        %1774 = vmatprep.subr.mxu0 0.0
        %1775 = vmatpush1.msra.mxu0 %v1663
        %1776 = vmatprep.subr.mxu0 0.0
        %1777 = vmatpush1.msra.mxu0 %v1664
        %1778 = vmatprep.subr.mxu0 0.0
        %1779 = vmatpush1.msra.mxu0 %v1665
        %1780 = vmatprep.subr.mxu0 0.0
        %1781 = vmatpush1.msra.mxu0 %v1666
        %1782 = vmatprep.subr.mxu0 0.0
        %1783 = vmatpush1.msra.mxu0 %v1667
        %1784 = vmatprep.subr.mxu0 0.0
        %1785 = vmatpush1.msra.mxu0 0.0
        %1786 = vmatprep.subr.mxu0 0.0
        %1787 = vmatpush1.msra.mxu0 0.0
        %1788 = vmatprep.subr.mxu0 0.0
        %1789 = vmatpush1.msra.mxu0 0.0
        %1790 = vmatprep.subr.mxu0 0.0
        %1791 = vmatpush1.msra.mxu0 0.0
        %1792 = vmatprep.subr.mxu0 0.0
        %1793 = vmatpush1.msra.mxu0 0.0
        %1794 = vmatprep.subr.mxu0 0.0
        %1795 = vmatpush1.msra.mxu0 0.0
        %1796 = vmatprep.subr.mxu0 0.0
        %1797 = vmatpush1.msra.mxu0 0.0
        %1798 = vmatprep.subr.mxu0 0.0
        %1799 = vmatpush1.msra.mxu0 0.0
        %1800 = vmatprep.subr.mxu0 0.0
        %1801 = vmatpush1.msra.mxu0 0.0
        %1802 = vmatprep.subr.mxu0 0.0
        %1803 = vmatpush1.msra.mxu0 0.0
        %1804 = vmatprep.subr.mxu0 0.0
        %1805 = vmatpush1.msra.mxu0 0.0
        %1806 = vmatprep.subr.mxu0 0.0
        %1807 = vmatpush1.msra.mxu0 0.0
        %1808 = vmatprep.subr.mxu0 0.0
        %1809 = vmatpush1.msra.mxu0 0.0
        %1810 = vmatprep.subr.mxu0 0.0
        %1811 = vmatpush1.msra.mxu0 0.0
        %1812 = vmatprep.subr.mxu0 0.0
        %1813 = vmatpush1.msra.mxu0 0.0
        %1814 = vmatprep.subr.mxu0 0.0
        %1815 = vmatpush1.msra.mxu0 0.0
        %1816 = vmatprep.mubr.f32.mxu0 0.0
        %1817 = vmatmul.mubr.f32.gmra.mrb[0].mxu0 %v1747
        %v1818 = vpop.f32.mrb[0].mxu0
        %v1819 = vadd.f32 %v1751, %v1818
        %v1820 = vpop.f32.mrb[0].mxu0
        %1821 = vdwg.mxu0
        %v1822 = vadd.f32 %v1819, %v1645
        %v1823 = vsel %vm568, %v1822, 0.0
        %1824 = vadd.xlane.f32.xlu0 %v1823
        %v1825 = vpop.xlane.xlu0 %1824
        %v1826 = vmul.f32 %v1825, %v1626
        %v1827 = vsub.f32 %v1822, %v1826
        %v1828 = vmul.f32 %v1827, %v1827
        %v1829 = vsel %vm568, %v1828, 0.0
        %1830 = vadd.xlane.f32.xlu0 %v1829
        %v1831 = vpop.xlane.xlu0 %1830
        %v1832 = vmul.f32 %v1831, %v1626
        %v1833 = vadd.f32 %v1832, 1e-05
        %v1834 = vrsqrt.pop %v1833
        %v1835 = vmul.f32 %v1827, %v1834
        %1837 = vrot.lane.b32.xlu0 %v1751, 96
        %v1838 = vpop.permute.xlu0 %1837
        %v1840 = vmul.f32 %v1835, %v1838
        %1841 = vrot.lane.b32.xlu0 %v1751, 64
        %v1842 = vpop.permute.xlu0 %1841
        %v1844 = vadd.f32 %v1840, %v1842
        %v1845 = vld [vmem:[%s439] sm:$0xff]
        %s1846 = scalar_lea.vmem %s5, 64
        %v1847 = vld [vmem:[%s1846] sm:$0xff]
        %v1848 = vld [vmem:[%s1846 + $0x8] sm:$0xff]
        %v1849 = vld [vmem:[%s1846 + $0x10] sm:$0xff]
        %v1850 = vld [vmem:[%s1846 + $0x18] sm:$0xff]
        %s1851 = scalar_lea.vmem %s6, 4
        %v1852 = vld [vmem:[%s1851] sm:$0x3]
        %v1853 = vlaneseq
        %v1854 = vshrl.u32 %v1853, 7
        %v1855 = vsub.s32 0, %v1854
        %v1856 = vrot.slane %v1852, %v1855
        %v1858 = vsel %vm568, %v1845, 0
        %1860 = vmatprep.subr.mxu0 0.0
        %1861 = vmatpush1.msra.mxu0 %v1847
        %1862 = vmatprep.subr.mxu0 0.0
        %1863 = vmatpush1.msra.mxu0 %v1848
        %1864 = vmatprep.subr.mxu0 0.0
        %1865 = vmatpush1.msra.mxu0 %v1849
        %1866 = vmatprep.subr.mxu0 0.0
        %1867 = vmatpush1.msra.mxu0 %v1850
        %1868 = vmatprep.subr.mxu0 0.0
        %1869 = vmatpush1.msra.mxu0 0.0
        %1870 = vmatprep.subr.mxu0 0.0
        %1871 = vmatpush1.msra.mxu0 0.0
        %1872 = vmatprep.subr.mxu0 0.0
        %1873 = vmatpush1.msra.mxu0 0.0
        %1874 = vmatprep.subr.mxu0 0.0
        %1875 = vmatpush1.msra.mxu0 0.0
        %1876 = vmatprep.subr.mxu0 0.0
        %1877 = vmatpush1.msra.mxu0 0.0
        %1878 = vmatprep.subr.mxu0 0.0
        %1879 = vmatpush1.msra.mxu0 0.0
        %1880 = vmatprep.subr.mxu0 0.0
        %1881 = vmatpush1.msra.mxu0 0.0
        %1882 = vmatprep.subr.mxu0 0.0
        %1883 = vmatpush1.msra.mxu0 0.0
        %1884 = vmatprep.subr.mxu0 0.0
        %1885 = vmatpush1.msra.mxu0 0.0
        %1886 = vmatprep.subr.mxu0 0.0
        %1887 = vmatpush1.msra.mxu0 0.0
        %1888 = vmatprep.subr.mxu0 0.0
        %1889 = vmatpush1.msra.mxu0 0.0
        %1890 = vmatprep.subr.mxu0 0.0
        %1891 = vmatpush1.msra.mxu0 0.0
        %1892 = vmatprep.subr.mxu0 0.0
        %1893 = vmatpush1.msra.mxu0 0.0
        %1894 = vmatprep.subr.mxu0 0.0
        %1895 = vmatpush1.msra.mxu0 0.0
        %1896 = vmatprep.subr.mxu0 0.0
        %1897 = vmatpush1.msra.mxu0 0.0
        %1898 = vmatprep.subr.mxu0 0.0
        %1899 = vmatpush1.msra.mxu0 0.0
        %1900 = vmatprep.subr.mxu0 0.0
        %1901 = vmatpush1.msra.mxu0 0.0
        %1902 = vmatprep.subr.mxu0 0.0
        %1903 = vmatpush1.msra.mxu0 0.0
        %1904 = vmatprep.subr.mxu0 0.0
        %1905 = vmatpush1.msra.mxu0 0.0
        %1906 = vmatprep.subr.mxu0 0.0
        %1907 = vmatpush1.msra.mxu0 0.0
        %1908 = vmatprep.subr.mxu0 0.0
        %1909 = vmatpush1.msra.mxu0 0.0
        %1910 = vmatprep.subr.mxu0 0.0
        %1911 = vmatpush1.msra.mxu0 0.0
        %1912 = vmatprep.subr.mxu0 0.0
        %1913 = vmatpush1.msra.mxu0 0.0
        %1914 = vmatprep.subr.mxu0 0.0
        %1915 = vmatpush1.msra.mxu0 0.0
        %1916 = vmatprep.subr.mxu0 0.0
        %1917 = vmatpush1.msra.mxu0 0.0
        %1918 = vmatprep.subr.mxu0 0.0
        %1919 = vmatpush1.msra.mxu0 0.0
        %1920 = vmatprep.subr.mxu0 0.0
        %1921 = vmatpush1.msra.mxu0 0.0
        %1922 = vmatprep.subr.mxu0 0.0
        %1923 = vmatpush1.msra.mxu0 0.0
        %1924 = vmatprep.mubr.f32.mxu0 0.0
        %1925 = vmatmul.mubr.f32.gmra.mrb[0].mxu0 %v1858
        %v1926 = vpop.f32.mrb[0].mxu0
        %v1927 = vadd.f32 %v1856, %v1926
        %v1928 = vpop.f32.mrb[0].mxu0
        %1929 = vdwg.mxu0
        %1931 = vrot.lane.b32.xlu0 %v1927, 96
        %v1932 = vpop.permute.xlu0 %1931
        %v1933 = vsel %vm645, %v1927, 0
        %v1935 = vsel %vm645, %v1932, 0
        %1937 = vmatprep.subr.mxu0 0.0
        %1938 = vmatpush1.xpose.msra.mxu0 %v1935
        %1939 = vmatprep.subr.mxu0 0.0
        %1940 = vmatpush1.xpose.msra.mxu0 0.0
        %1941 = vmatprep.subr.mxu0 0.0
        %1942 = vmatpush1.xpose.msra.mxu0 0.0
        %1943 = vmatprep.subr.mxu0 0.0
        %1944 = vmatpush1.xpose.msra.mxu0 0.0
        %1945 = vmatprep.subr.mxu0 0.0
        %1946 = vmatpush1.xpose.msra.mxu0 0.0
        %1947 = vmatprep.subr.mxu0 0.0
        %1948 = vmatpush1.xpose.msra.mxu0 0.0
        %1949 = vmatprep.subr.mxu0 0.0
        %1950 = vmatpush1.xpose.msra.mxu0 0.0
        %1951 = vmatprep.subr.mxu0 0.0
        %1952 = vmatpush1.xpose.msra.mxu0 0.0
        %1953 = vmatprep.subr.mxu0 0.0
        %1954 = vmatpush1.xpose.msra.mxu0 0.0
        %1955 = vmatprep.subr.mxu0 0.0
        %1956 = vmatpush1.xpose.msra.mxu0 0.0
        %1957 = vmatprep.subr.mxu0 0.0
        %1958 = vmatpush1.xpose.msra.mxu0 0.0
        %1959 = vmatprep.subr.mxu0 0.0
        %1960 = vmatpush1.xpose.msra.mxu0 0.0
        %1961 = vmatprep.subr.mxu0 0.0
        %1962 = vmatpush1.xpose.msra.mxu0 0.0
        %1963 = vmatprep.subr.mxu0 0.0
        %1964 = vmatpush1.xpose.msra.mxu0 0.0
        %1965 = vmatprep.subr.mxu0 0.0
        %1966 = vmatpush1.xpose.msra.mxu0 0.0
        %1967 = vmatprep.subr.mxu0 0.0
        %1968 = vmatpush1.xpose.msra.mxu0 0.0
        %1969 = vmatprep.subr.mxu0 0.0
        %1970 = vmatpush1.xpose.msra.mxu0 0.0
        %1971 = vmatprep.subr.mxu0 0.0
        %1972 = vmatpush1.xpose.msra.mxu0 0.0
        %1973 = vmatprep.subr.mxu0 0.0
        %1974 = vmatpush1.xpose.msra.mxu0 0.0
        %1975 = vmatprep.subr.mxu0 0.0
        %1976 = vmatpush1.xpose.msra.mxu0 0.0
        %1977 = vmatprep.subr.mxu0 0.0
        %1978 = vmatpush1.xpose.msra.mxu0 0.0
        %1979 = vmatprep.subr.mxu0 0.0
        %1980 = vmatpush1.xpose.msra.mxu0 0.0
        %1981 = vmatprep.subr.mxu0 0.0
        %1982 = vmatpush1.xpose.msra.mxu0 0.0
        %1983 = vmatprep.subr.mxu0 0.0
        %1984 = vmatpush1.xpose.msra.mxu0 0.0
        %1985 = vmatprep.subr.mxu0 0.0
        %1986 = vmatpush1.xpose.msra.mxu0 0.0
        %1987 = vmatprep.subr.mxu0 0.0
        %1988 = vmatpush1.xpose.msra.mxu0 0.0
        %1989 = vmatprep.subr.mxu0 0.0
        %1990 = vmatpush1.xpose.msra.mxu0 0.0
        %1991 = vmatprep.subr.mxu0 0.0
        %1992 = vmatpush1.xpose.msra.mxu0 0.0
        %1993 = vmatprep.subr.mxu0 0.0
        %1994 = vmatpush1.xpose.msra.mxu0 0.0
        %1995 = vmatprep.subr.mxu0 0.0
        %1996 = vmatpush1.xpose.msra.mxu0 0.0
        %1997 = vmatprep.subr.mxu0 0.0
        %1998 = vmatpush1.xpose.msra.mxu0 0.0
        %1999 = vmatprep.subr.mxu0 0.0
        %2000 = vmatpush1.xpose.msra.mxu0 0.0
        %2001 = vmatprep.mubr.f32.mxu0 0.0
        %2002 = vmatmul.mubr.f32.gmra.mrb[0].mxu0 %v1933
        %v2003 = vpop.f32.mrb[0].mxu0
        %v2004 = vadd.f32 %v556, %v2003
        %v2005 = vpop.f32.mrb[0].mxu0
        %2006 = vdwg.mxu0
        %v2007 = vmul.f32 %v2004, 0.17677669
        %v2008 = vsel %vm645, %v2007, -inf
        %2009 = vmax.xlane.f32.xlu0 %v2008
        %v2010 = vpop.xlane.xlu0 %2009
        %v2011 = vsub.f32 %v2007, %v2010
        %v2012 = vmul.f32 %v2011, 1.442695
        %v2013 = vpow.pop %v2012
        %v2014 = vsel %vm645, %v2013, 0.0
        %2015 = vadd.xlane.f32.xlu0 %v2014
        %v2016 = vpop.xlane.xlu0 %2015
        %v2017 = vrcp.pop %v2016
        %v2018 = vmul.f32 %v2013, %v2017
        %2019 = vrot.lane.b32.xlu0 %v1927, 64
        %v2020 = vpop.permute.xlu0 %2019
        %v2023 = vsel %vm645, %v2018, 0
        %2025 = vmatprep.subr.mxu0 0.0
        %2026 = vmatpush1.msra.mxu0 %v2020
        %2027 = vmatprep.subr.mxu0 0.0
        %2028 = vmatpush1.msra.mxu0 0.0
        %2029 = vmatprep.subr.mxu0 0.0
        %2030 = vmatpush1.msra.mxu0 0.0
        %2031 = vmatprep.subr.mxu0 0.0
        %2032 = vmatpush1.msra.mxu0 0.0
        %2033 = vmatprep.subr.mxu0 0.0
        %2034 = vmatpush1.msra.mxu0 0.0
        %2035 = vmatprep.subr.mxu0 0.0
        %2036 = vmatpush1.msra.mxu0 0.0
        %2037 = vmatprep.subr.mxu0 0.0
        %2038 = vmatpush1.msra.mxu0 0.0
        %2039 = vmatprep.subr.mxu0 0.0
        %2040 = vmatpush1.msra.mxu0 0.0
        %2041 = vmatprep.subr.mxu0 0.0
        %2042 = vmatpush1.msra.mxu0 0.0
        %2043 = vmatprep.subr.mxu0 0.0
        %2044 = vmatpush1.msra.mxu0 0.0
        %2045 = vmatprep.subr.mxu0 0.0
        %2046 = vmatpush1.msra.mxu0 0.0
        %2047 = vmatprep.subr.mxu0 0.0
        %2048 = vmatpush1.msra.mxu0 0.0
        %2049 = vmatprep.subr.mxu0 0.0
        %2050 = vmatpush1.msra.mxu0 0.0
        %2051 = vmatprep.subr.mxu0 0.0
        %2052 = vmatpush1.msra.mxu0 0.0
        %2053 = vmatprep.subr.mxu0 0.0
        %2054 = vmatpush1.msra.mxu0 0.0
        %2055 = vmatprep.subr.mxu0 0.0
        %2056 = vmatpush1.msra.mxu0 0.0
        %2057 = vmatprep.subr.mxu0 0.0
        %2058 = vmatpush1.msra.mxu0 0.0
        %2059 = vmatprep.subr.mxu0 0.0
        %2060 = vmatpush1.msra.mxu0 0.0
        %2061 = vmatprep.subr.mxu0 0.0
        %2062 = vmatpush1.msra.mxu0 0.0
        %2063 = vmatprep.subr.mxu0 0.0
        %2064 = vmatpush1.msra.mxu0 0.0
        %2065 = vmatprep.subr.mxu0 0.0
        %2066 = vmatpush1.msra.mxu0 0.0
        %2067 = vmatprep.subr.mxu0 0.0
        %2068 = vmatpush1.msra.mxu0 0.0
        %2069 = vmatprep.subr.mxu0 0.0
        %2070 = vmatpush1.msra.mxu0 0.0
        %2071 = vmatprep.subr.mxu0 0.0
        %2072 = vmatpush1.msra.mxu0 0.0
        %2073 = vmatprep.subr.mxu0 0.0
        %2074 = vmatpush1.msra.mxu0 0.0
        %2075 = vmatprep.subr.mxu0 0.0
        %2076 = vmatpush1.msra.mxu0 0.0
        %2077 = vmatprep.subr.mxu0 0.0
        %2078 = vmatpush1.msra.mxu0 0.0
        %2079 = vmatprep.subr.mxu0 0.0
        %2080 = vmatpush1.msra.mxu0 0.0
        %2081 = vmatprep.subr.mxu0 0.0
        %2082 = vmatpush1.msra.mxu0 0.0
        %2083 = vmatprep.subr.mxu0 0.0
        %2084 = vmatpush1.msra.mxu0 0.0
        %2085 = vmatprep.subr.mxu0 0.0
        %2086 = vmatpush1.msra.mxu0 0.0
        %2087 = vmatprep.subr.mxu0 0.0
        %2088 = vmatpush1.msra.mxu0 0.0
        %2089 = vmatprep.mubr.f32.mxu0 0.0
        %2090 = vmatmul.mubr.f32.gmra.mrb[0].mxu0 %v2023
        %v2091 = vpop.f32.mrb[0].mxu0
        %v2092 = vadd.f32 0.0, %v2091
        %v2093 = vpop.f32.mrb[0].mxu0
        %2094 = vdwg.mxu0
        %2096 = vrot.lane.b32.xlu0 %v1847, 32
        %v2097 = vpop.permute.xlu0 %2096
        %v2100 = vsel %vm645, %v2092, 0
        %2102 = vmatprep.subr.mxu0 0.0
        %2103 = vmatpush1.msra.mxu0 %v2097
        %2104 = vmatprep.subr.mxu0 0.0
        %2105 = vmatpush1.msra.mxu0 0.0
        %2106 = vmatprep.subr.mxu0 0.0
        %2107 = vmatpush1.msra.mxu0 0.0
        %2108 = vmatprep.subr.mxu0 0.0
        %2109 = vmatpush1.msra.mxu0 0.0
        %2110 = vmatprep.subr.mxu0 0.0
        %2111 = vmatpush1.msra.mxu0 0.0
        %2112 = vmatprep.subr.mxu0 0.0
        %2113 = vmatpush1.msra.mxu0 0.0
        %2114 = vmatprep.subr.mxu0 0.0
        %2115 = vmatpush1.msra.mxu0 0.0
        %2116 = vmatprep.subr.mxu0 0.0
        %2117 = vmatpush1.msra.mxu0 0.0
        %2118 = vmatprep.subr.mxu0 0.0
        %2119 = vmatpush1.msra.mxu0 0.0
        %2120 = vmatprep.subr.mxu0 0.0
        %2121 = vmatpush1.msra.mxu0 0.0
        %2122 = vmatprep.subr.mxu0 0.0
        %2123 = vmatpush1.msra.mxu0 0.0
        %2124 = vmatprep.subr.mxu0 0.0
        %2125 = vmatpush1.msra.mxu0 0.0
        %2126 = vmatprep.subr.mxu0 0.0
        %2127 = vmatpush1.msra.mxu0 0.0
        %2128 = vmatprep.subr.mxu0 0.0
        %2129 = vmatpush1.msra.mxu0 0.0
        %2130 = vmatprep.subr.mxu0 0.0
        %2131 = vmatpush1.msra.mxu0 0.0
        %2132 = vmatprep.subr.mxu0 0.0
        %2133 = vmatpush1.msra.mxu0 0.0
        %2134 = vmatprep.subr.mxu0 0.0
        %2135 = vmatpush1.msra.mxu0 0.0
        %2136 = vmatprep.subr.mxu0 0.0
        %2137 = vmatpush1.msra.mxu0 0.0
        %2138 = vmatprep.subr.mxu0 0.0
        %2139 = vmatpush1.msra.mxu0 0.0
        %2140 = vmatprep.subr.mxu0 0.0
        %2141 = vmatpush1.msra.mxu0 0.0
        %2142 = vmatprep.subr.mxu0 0.0
        %2143 = vmatpush1.msra.mxu0 0.0
        %2144 = vmatprep.subr.mxu0 0.0
        %2145 = vmatpush1.msra.mxu0 0.0
        %2146 = vmatprep.subr.mxu0 0.0
        %2147 = vmatpush1.msra.mxu0 0.0
        %2148 = vmatprep.subr.mxu0 0.0
        %2149 = vmatpush1.msra.mxu0 0.0
        %2150 = vmatprep.subr.mxu0 0.0
        %2151 = vmatpush1.msra.mxu0 0.0
        %2152 = vmatprep.subr.mxu0 0.0
        %2153 = vmatpush1.msra.mxu0 0.0
        %2154 = vmatprep.subr.mxu0 0.0
        %2155 = vmatpush1.msra.mxu0 0.0
        %2156 = vmatprep.subr.mxu0 0.0
        %2157 = vmatpush1.msra.mxu0 0.0
        %2158 = vmatprep.subr.mxu0 0.0
        %2159 = vmatpush1.msra.mxu0 0.0
        %2160 = vmatprep.subr.mxu0 0.0
        %2161 = vmatpush1.msra.mxu0 0.0
        %2162 = vmatprep.subr.mxu0 0.0
        %2163 = vmatpush1.msra.mxu0 0.0
        %2164 = vmatprep.subr.mxu0 0.0
        %2165 = vmatpush1.msra.mxu0 0.0
        %2166 = vmatprep.mubr.f32.mxu0 0.0
        %2167 = vmatmul.mubr.f32.gmra.mrb[0].mxu0 %v2100
        %v2168 = vpop.f32.mrb[0].mxu0
        %v2169 = vadd.f32 0.0, %v2168
        %v2170 = vpop.f32.mrb[0].mxu0
        %2171 = vdwg.mxu0
        %v2172 = vlaneseq
        %v2173 = vshrl.u32 %v2172, 7
        %v2174 = vsub.s32 1, %v2173
        %v2175 = vrot.slane %v1852, %v2174
        %v2176 = vadd.f32 %v2175, %v2169
        %2177 = vrot.lane.b32.xlu0 %v1927, 120
        %v2178 = vpop.permute.xlu0 %2177
        %2179 = vrot.lane.b32.xlu0 %v1927, 88
        %v2180 = vpop.permute.xlu0 %2179
        %v2181 = vsel %vm645, %v2178, 0
        %v2183 = vsel %vm645, %v2180, 0
        %2185 = vmatprep.subr.mxu0 0.0
        %2186 = vmatpush1.xpose.msra.mxu0 %v2183
        %2187 = vmatprep.subr.mxu0 0.0
        %2188 = vmatpush1.xpose.msra.mxu0 0.0
        %2189 = vmatprep.subr.mxu0 0.0
        %2190 = vmatpush1.xpose.msra.mxu0 0.0
        %2191 = vmatprep.subr.mxu0 0.0
        %2192 = vmatpush1.xpose.msra.mxu0 0.0
        %2193 = vmatprep.subr.mxu0 0.0
        %2194 = vmatpush1.xpose.msra.mxu0 0.0
        %2195 = vmatprep.subr.mxu0 0.0
        %2196 = vmatpush1.xpose.msra.mxu0 0.0
        %2197 = vmatprep.subr.mxu0 0.0
        %2198 = vmatpush1.xpose.msra.mxu0 0.0
        %2199 = vmatprep.subr.mxu0 0.0
        %2200 = vmatpush1.xpose.msra.mxu0 0.0
        %2201 = vmatprep.subr.mxu0 0.0
        %2202 = vmatpush1.xpose.msra.mxu0 0.0
        %2203 = vmatprep.subr.mxu0 0.0
        %2204 = vmatpush1.xpose.msra.mxu0 0.0
        %2205 = vmatprep.subr.mxu0 0.0
        %2206 = vmatpush1.xpose.msra.mxu0 0.0
        %2207 = vmatprep.subr.mxu0 0.0
        %2208 = vmatpush1.xpose.msra.mxu0 0.0
        %2209 = vmatprep.subr.mxu0 0.0
        %2210 = vmatpush1.xpose.msra.mxu0 0.0
        %2211 = vmatprep.subr.mxu0 0.0
        %2212 = vmatpush1.xpose.msra.mxu0 0.0
        %2213 = vmatprep.subr.mxu0 0.0
        %2214 = vmatpush1.xpose.msra.mxu0 0.0
        %2215 = vmatprep.subr.mxu0 0.0
        %2216 = vmatpush1.xpose.msra.mxu0 0.0
        %2217 = vmatprep.subr.mxu0 0.0
        %2218 = vmatpush1.xpose.msra.mxu0 0.0
        %2219 = vmatprep.subr.mxu0 0.0
        %2220 = vmatpush1.xpose.msra.mxu0 0.0
        %2221 = vmatprep.subr.mxu0 0.0
        %2222 = vmatpush1.xpose.msra.mxu0 0.0
        %2223 = vmatprep.subr.mxu0 0.0
        %2224 = vmatpush1.xpose.msra.mxu0 0.0
        %2225 = vmatprep.subr.mxu0 0.0
        %2226 = vmatpush1.xpose.msra.mxu0 0.0
        %2227 = vmatprep.subr.mxu0 0.0
        %2228 = vmatpush1.xpose.msra.mxu0 0.0
        %2229 = vmatprep.subr.mxu0 0.0
        %2230 = vmatpush1.xpose.msra.mxu0 0.0
        %2231 = vmatprep.subr.mxu0 0.0
        %2232 = vmatpush1.xpose.msra.mxu0 0.0
        %2233 = vmatprep.subr.mxu0 0.0
        %2234 = vmatpush1.xpose.msra.mxu0 0.0
        %2235 = vmatprep.subr.mxu0 0.0
        %2236 = vmatpush1.xpose.msra.mxu0 0.0
        %2237 = vmatprep.subr.mxu0 0.0
        %2238 = vmatpush1.xpose.msra.mxu0 0.0
        %2239 = vmatprep.subr.mxu0 0.0
        %2240 = vmatpush1.xpose.msra.mxu0 0.0
        %2241 = vmatprep.subr.mxu0 0.0
        %2242 = vmatpush1.xpose.msra.mxu0 0.0
        %2243 = vmatprep.subr.mxu0 0.0
        %2244 = vmatpush1.xpose.msra.mxu0 0.0
        %2245 = vmatprep.subr.mxu0 0.0
        %2246 = vmatpush1.xpose.msra.mxu0 0.0
        %2247 = vmatprep.subr.mxu0 0.0
        %2248 = vmatpush1.xpose.msra.mxu0 0.0
        %2249 = vmatprep.mubr.f32.mxu0 0.0
        %2250 = vmatmul.mubr.f32.gmra.mrb[0].mxu0 %v2181
        %v2251 = vpop.f32.mrb[0].mxu0
        %v2252 = vadd.f32 %v556, %v2251
        %v2253 = vpop.f32.mrb[0].mxu0
        %2254 = vdwg.mxu0
        %v2255 = vmul.f32 %v2252, 0.17677669
        %v2256 = vsel %vm645, %v2255, -inf
        %2257 = vmax.xlane.f32.xlu0 %v2256
        %v2258 = vpop.xlane.xlu0 %2257
        %v2259 = vsub.f32 %v2255, %v2258
        %v2260 = vmul.f32 %v2259, 1.442695
        %v2261 = vpow.pop %v2260
        %v2262 = vsel %vm645, %v2261, 0.0
        %2263 = vadd.xlane.f32.xlu0 %v2262
        %v2264 = vpop.xlane.xlu0 %2263
        %v2265 = vrcp.pop %v2264
        %v2266 = vmul.f32 %v2261, %v2265
        %2267 = vrot.lane.b32.xlu0 %v1927, 56
        %v2268 = vpop.permute.xlu0 %2267
        %v2271 = vsel %vm645, %v2266, 0
        %2273 = vmatprep.subr.mxu0 0.0
        %2274 = vmatpush1.msra.mxu0 %v2268
        %2275 = vmatprep.subr.mxu0 0.0
        %2276 = vmatpush1.msra.mxu0 0.0
        %2277 = vmatprep.subr.mxu0 0.0
        %2278 = vmatpush1.msra.mxu0 0.0
        %2279 = vmatprep.subr.mxu0 0.0
        %2280 = vmatpush1.msra.mxu0 0.0
        %2281 = vmatprep.subr.mxu0 0.0
        %2282 = vmatpush1.msra.mxu0 0.0
        %2283 = vmatprep.subr.mxu0 0.0
        %2284 = vmatpush1.msra.mxu0 0.0
        %2285 = vmatprep.subr.mxu0 0.0
        %2286 = vmatpush1.msra.mxu0 0.0
        %2287 = vmatprep.subr.mxu0 0.0
        %2288 = vmatpush1.msra.mxu0 0.0
        %2289 = vmatprep.subr.mxu0 0.0
        %2290 = vmatpush1.msra.mxu0 0.0
        %2291 = vmatprep.subr.mxu0 0.0
        %2292 = vmatpush1.msra.mxu0 0.0
        %2293 = vmatprep.subr.mxu0 0.0
        %2294 = vmatpush1.msra.mxu0 0.0
        %2295 = vmatprep.subr.mxu0 0.0
        %2296 = vmatpush1.msra.mxu0 0.0
        %2297 = vmatprep.subr.mxu0 0.0
        %2298 = vmatpush1.msra.mxu0 0.0
        %2299 = vmatprep.subr.mxu0 0.0
        %2300 = vmatpush1.msra.mxu0 0.0
        %2301 = vmatprep.subr.mxu0 0.0
        %2302 = vmatpush1.msra.mxu0 0.0
        %2303 = vmatprep.subr.mxu0 0.0
        %2304 = vmatpush1.msra.mxu0 0.0
        %2305 = vmatprep.subr.mxu0 0.0
        %2306 = vmatpush1.msra.mxu0 0.0
        %2307 = vmatprep.subr.mxu0 0.0
        %2308 = vmatpush1.msra.mxu0 0.0
        %2309 = vmatprep.subr.mxu0 0.0
        %2310 = vmatpush1.msra.mxu0 0.0
        %2311 = vmatprep.subr.mxu0 0.0
        %2312 = vmatpush1.msra.mxu0 0.0
        %2313 = vmatprep.subr.mxu0 0.0
        %2314 = vmatpush1.msra.mxu0 0.0
        %2315 = vmatprep.subr.mxu0 0.0
        %2316 = vmatpush1.msra.mxu0 0.0
        %2317 = vmatprep.subr.mxu0 0.0
        %2318 = vmatpush1.msra.mxu0 0.0
        %2319 = vmatprep.subr.mxu0 0.0
        %2320 = vmatpush1.msra.mxu0 0.0
        %2321 = vmatprep.subr.mxu0 0.0
        %2322 = vmatpush1.msra.mxu0 0.0
        %2323 = vmatprep.subr.mxu0 0.0
        %2324 = vmatpush1.msra.mxu0 0.0
        %2325 = vmatprep.subr.mxu0 0.0
        %2326 = vmatpush1.msra.mxu0 0.0
        %2327 = vmatprep.subr.mxu0 0.0
        %2328 = vmatpush1.msra.mxu0 0.0
        %2329 = vmatprep.subr.mxu0 0.0
        %2330 = vmatpush1.msra.mxu0 0.0
        %2331 = vmatprep.subr.mxu0 0.0
        %2332 = vmatpush1.msra.mxu0 0.0
        %2333 = vmatprep.subr.mxu0 0.0
        %2334 = vmatpush1.msra.mxu0 0.0
        %2335 = vmatprep.subr.mxu0 0.0
        %2336 = vmatpush1.msra.mxu0 0.0
        %2337 = vmatprep.mubr.f32.mxu0 0.0
        %2338 = vmatmul.mubr.f32.gmra.mrb[0].mxu0 %v2271
        %v2339 = vpop.f32.mrb[0].mxu0
        %v2340 = vadd.f32 0.0, %v2339
        %v2341 = vpop.f32.mrb[0].mxu0
        %2342 = vdwg.mxu0
        %2344 = vrot.lane.b32.xlu0 %v1848, 32
        %v2345 = vpop.permute.xlu0 %2344
        %v2348 = vsel %vm645, %v2340, 0
        %2350 = vmatprep.subr.mxu0 0.0
        %2351 = vmatpush1.msra.mxu0 %v2345
        %2352 = vmatprep.subr.mxu0 0.0
        %2353 = vmatpush1.msra.mxu0 0.0
        %2354 = vmatprep.subr.mxu0 0.0
        %2355 = vmatpush1.msra.mxu0 0.0
        %2356 = vmatprep.subr.mxu0 0.0
        %2357 = vmatpush1.msra.mxu0 0.0
        %2358 = vmatprep.subr.mxu0 0.0
        %2359 = vmatpush1.msra.mxu0 0.0
        %2360 = vmatprep.subr.mxu0 0.0
        %2361 = vmatpush1.msra.mxu0 0.0
        %2362 = vmatprep.subr.mxu0 0.0
        %2363 = vmatpush1.msra.mxu0 0.0
        %2364 = vmatprep.subr.mxu0 0.0
        %2365 = vmatpush1.msra.mxu0 0.0
        %2366 = vmatprep.subr.mxu0 0.0
        %2367 = vmatpush1.msra.mxu0 0.0
        %2368 = vmatprep.subr.mxu0 0.0
        %2369 = vmatpush1.msra.mxu0 0.0
        %2370 = vmatprep.subr.mxu0 0.0
        %2371 = vmatpush1.msra.mxu0 0.0
        %2372 = vmatprep.subr.mxu0 0.0
        %2373 = vmatpush1.msra.mxu0 0.0
        %2374 = vmatprep.subr.mxu0 0.0
        %2375 = vmatpush1.msra.mxu0 0.0
        %2376 = vmatprep.subr.mxu0 0.0
        %2377 = vmatpush1.msra.mxu0 0.0
        %2378 = vmatprep.subr.mxu0 0.0
        %2379 = vmatpush1.msra.mxu0 0.0
        %2380 = vmatprep.subr.mxu0 0.0
        %2381 = vmatpush1.msra.mxu0 0.0
        %2382 = vmatprep.subr.mxu0 0.0
        %2383 = vmatpush1.msra.mxu0 0.0
        %2384 = vmatprep.subr.mxu0 0.0
        %2385 = vmatpush1.msra.mxu0 0.0
        %2386 = vmatprep.subr.mxu0 0.0
        %2387 = vmatpush1.msra.mxu0 0.0
        %2388 = vmatprep.subr.mxu0 0.0
        %2389 = vmatpush1.msra.mxu0 0.0
        %2390 = vmatprep.subr.mxu0 0.0
        %2391 = vmatpush1.msra.mxu0 0.0
        %2392 = vmatprep.subr.mxu0 0.0
        %2393 = vmatpush1.msra.mxu0 0.0
        %2394 = vmatprep.subr.mxu0 0.0
        %2395 = vmatpush1.msra.mxu0 0.0
        %2396 = vmatprep.subr.mxu0 0.0
        %2397 = vmatpush1.msra.mxu0 0.0
        %2398 = vmatprep.subr.mxu0 0.0
        %2399 = vmatpush1.msra.mxu0 0.0
        %2400 = vmatprep.subr.mxu0 0.0
        %2401 = vmatpush1.msra.mxu0 0.0
        %2402 = vmatprep.subr.mxu0 0.0
        %2403 = vmatpush1.msra.mxu0 0.0
        %2404 = vmatprep.subr.mxu0 0.0
        %2405 = vmatpush1.msra.mxu0 0.0
        %2406 = vmatprep.subr.mxu0 0.0
        %2407 = vmatpush1.msra.mxu0 0.0
        %2408 = vmatprep.subr.mxu0 0.0
        %2409 = vmatpush1.msra.mxu0 0.0
        %2410 = vmatprep.subr.mxu0 0.0
        %2411 = vmatpush1.msra.mxu0 0.0
        %2412 = vmatprep.subr.mxu0 0.0
        %2413 = vmatpush1.msra.mxu0 0.0
        %2414 = vmatprep.mubr.f32.mxu0 0.0
        %2415 = vmatmul.mubr.f32.gmra.mrb[0].mxu0 %v2348
        %v2416 = vpop.f32.mrb[0].mxu0
        %v2417 = vadd.f32 0.0, %v2416
        %v2418 = vpop.f32.mrb[0].mxu0
        %2419 = vdwg.mxu0
        %v2420 = vadd.f32 %v2176, %v2417
        %2421 = vrot.lane.b32.xlu0 %v1927, 112
        %v2422 = vpop.permute.xlu0 %2421
        %2423 = vrot.lane.b32.xlu0 %v1927, 80
        %v2424 = vpop.permute.xlu0 %2423
        %v2425 = vsel %vm645, %v2422, 0
        %v2427 = vsel %vm645, %v2424, 0
        %2429 = vmatprep.subr.mxu0 0.0
        %2430 = vmatpush1.xpose.msra.mxu0 %v2427
        %2431 = vmatprep.subr.mxu0 0.0
        %2432 = vmatpush1.xpose.msra.mxu0 0.0
        %2433 = vmatprep.subr.mxu0 0.0
        %2434 = vmatpush1.xpose.msra.mxu0 0.0
        %2435 = vmatprep.subr.mxu0 0.0
        %2436 = vmatpush1.xpose.msra.mxu0 0.0
        %2437 = vmatprep.subr.mxu0 0.0
        %2438 = vmatpush1.xpose.msra.mxu0 0.0
        %2439 = vmatprep.subr.mxu0 0.0
        %2440 = vmatpush1.xpose.msra.mxu0 0.0
        %2441 = vmatprep.subr.mxu0 0.0
        %2442 = vmatpush1.xpose.msra.mxu0 0.0
        %2443 = vmatprep.subr.mxu0 0.0
        %2444 = vmatpush1.xpose.msra.mxu0 0.0
        %2445 = vmatprep.subr.mxu0 0.0
        %2446 = vmatpush1.xpose.msra.mxu0 0.0
        %2447 = vmatprep.subr.mxu0 0.0
        %2448 = vmatpush1.xpose.msra.mxu0 0.0
        %2449 = vmatprep.subr.mxu0 0.0
        %2450 = vmatpush1.xpose.msra.mxu0 0.0
        %2451 = vmatprep.subr.mxu0 0.0
        %2452 = vmatpush1.xpose.msra.mxu0 0.0
        %2453 = vmatprep.subr.mxu0 0.0
        %2454 = vmatpush1.xpose.msra.mxu0 0.0
        %2455 = vmatprep.subr.mxu0 0.0
        %2456 = vmatpush1.xpose.msra.mxu0 0.0
        %2457 = vmatprep.subr.mxu0 0.0
        %2458 = vmatpush1.xpose.msra.mxu0 0.0
        %2459 = vmatprep.subr.mxu0 0.0
        %2460 = vmatpush1.xpose.msra.mxu0 0.0
        %2461 = vmatprep.subr.mxu0 0.0
        %2462 = vmatpush1.xpose.msra.mxu0 0.0
        %2463 = vmatprep.subr.mxu0 0.0
        %2464 = vmatpush1.xpose.msra.mxu0 0.0
        %2465 = vmatprep.subr.mxu0 0.0
        %2466 = vmatpush1.xpose.msra.mxu0 0.0
        %2467 = vmatprep.subr.mxu0 0.0
        %2468 = vmatpush1.xpose.msra.mxu0 0.0
        %2469 = vmatprep.subr.mxu0 0.0
        %2470 = vmatpush1.xpose.msra.mxu0 0.0
        %2471 = vmatprep.subr.mxu0 0.0
        %2472 = vmatpush1.xpose.msra.mxu0 0.0
        %2473 = vmatprep.subr.mxu0 0.0
        %2474 = vmatpush1.xpose.msra.mxu0 0.0
        %2475 = vmatprep.subr.mxu0 0.0
        %2476 = vmatpush1.xpose.msra.mxu0 0.0
        %2477 = vmatprep.subr.mxu0 0.0
        %2478 = vmatpush1.xpose.msra.mxu0 0.0
        %2479 = vmatprep.subr.mxu0 0.0
        %2480 = vmatpush1.xpose.msra.mxu0 0.0
        %2481 = vmatprep.subr.mxu0 0.0
        %2482 = vmatpush1.xpose.msra.mxu0 0.0
        %2483 = vmatprep.subr.mxu0 0.0
        %2484 = vmatpush1.xpose.msra.mxu0 0.0
        %2485 = vmatprep.subr.mxu0 0.0
        %2486 = vmatpush1.xpose.msra.mxu0 0.0
        %2487 = vmatprep.subr.mxu0 0.0
        %2488 = vmatpush1.xpose.msra.mxu0 0.0
        %2489 = vmatprep.subr.mxu0 0.0
        %2490 = vmatpush1.xpose.msra.mxu0 0.0
        %2491 = vmatprep.subr.mxu0 0.0
        %2492 = vmatpush1.xpose.msra.mxu0 0.0
        %2493 = vmatprep.mubr.f32.mxu0 0.0
        %2494 = vmatmul.mubr.f32.gmra.mrb[0].mxu0 %v2425
        %v2495 = vpop.f32.mrb[0].mxu0
        %v2496 = vadd.f32 %v556, %v2495
        %v2497 = vpop.f32.mrb[0].mxu0
        %2498 = vdwg.mxu0
        %v2499 = vmul.f32 %v2496, 0.17677669
        %v2500 = vsel %vm645, %v2499, -inf
        %2501 = vmax.xlane.f32.xlu0 %v2500
        %v2502 = vpop.xlane.xlu0 %2501
        %v2503 = vsub.f32 %v2499, %v2502
        %v2504 = vmul.f32 %v2503, 1.442695
        %v2505 = vpow.pop %v2504
        %v2506 = vsel %vm645, %v2505, 0.0
        %2507 = vadd.xlane.f32.xlu0 %v2506
        %v2508 = vpop.xlane.xlu0 %2507
        %v2509 = vrcp.pop %v2508
        %v2510 = vmul.f32 %v2505, %v2509
        %2511 = vrot.lane.b32.xlu0 %v1927, 48
        %v2512 = vpop.permute.xlu0 %2511
        %v2515 = vsel %vm645, %v2510, 0
        %2517 = vmatprep.subr.mxu0 0.0
        %2518 = vmatpush1.msra.mxu0 %v2512
        %2519 = vmatprep.subr.mxu0 0.0
        %2520 = vmatpush1.msra.mxu0 0.0
        %2521 = vmatprep.subr.mxu0 0.0
        %2522 = vmatpush1.msra.mxu0 0.0
        %2523 = vmatprep.subr.mxu0 0.0
        %2524 = vmatpush1.msra.mxu0 0.0
        %2525 = vmatprep.subr.mxu0 0.0
        %2526 = vmatpush1.msra.mxu0 0.0
        %2527 = vmatprep.subr.mxu0 0.0
        %2528 = vmatpush1.msra.mxu0 0.0
        %2529 = vmatprep.subr.mxu0 0.0
        %2530 = vmatpush1.msra.mxu0 0.0
        %2531 = vmatprep.subr.mxu0 0.0
        %2532 = vmatpush1.msra.mxu0 0.0
        %2533 = vmatprep.subr.mxu0 0.0
        %2534 = vmatpush1.msra.mxu0 0.0
        %2535 = vmatprep.subr.mxu0 0.0
        %2536 = vmatpush1.msra.mxu0 0.0
        %2537 = vmatprep.subr.mxu0 0.0
        %2538 = vmatpush1.msra.mxu0 0.0
        %2539 = vmatprep.subr.mxu0 0.0
        %2540 = vmatpush1.msra.mxu0 0.0
        %2541 = vmatprep.subr.mxu0 0.0
        %2542 = vmatpush1.msra.mxu0 0.0
        %2543 = vmatprep.subr.mxu0 0.0
        %2544 = vmatpush1.msra.mxu0 0.0
        %2545 = vmatprep.subr.mxu0 0.0
        %2546 = vmatpush1.msra.mxu0 0.0
        %2547 = vmatprep.subr.mxu0 0.0
        %2548 = vmatpush1.msra.mxu0 0.0
        %2549 = vmatprep.subr.mxu0 0.0
        %2550 = vmatpush1.msra.mxu0 0.0
        %2551 = vmatprep.subr.mxu0 0.0
        %2552 = vmatpush1.msra.mxu0 0.0
        %2553 = vmatprep.subr.mxu0 0.0
        %2554 = vmatpush1.msra.mxu0 0.0
        %2555 = vmatprep.subr.mxu0 0.0
        %2556 = vmatpush1.msra.mxu0 0.0
        %2557 = vmatprep.subr.mxu0 0.0
        %2558 = vmatpush1.msra.mxu0 0.0
        %2559 = vmatprep.subr.mxu0 0.0
        %2560 = vmatpush1.msra.mxu0 0.0
        %2561 = vmatprep.subr.mxu0 0.0
        %2562 = vmatpush1.msra.mxu0 0.0
        %2563 = vmatprep.subr.mxu0 0.0
        %2564 = vmatpush1.msra.mxu0 0.0
        %2565 = vmatprep.subr.mxu0 0.0
        %2566 = vmatpush1.msra.mxu0 0.0
        %2567 = vmatprep.subr.mxu0 0.0
        %2568 = vmatpush1.msra.mxu0 0.0
        %2569 = vmatprep.subr.mxu0 0.0
        %2570 = vmatpush1.msra.mxu0 0.0
        %2571 = vmatprep.subr.mxu0 0.0
        %2572 = vmatpush1.msra.mxu0 0.0
        %2573 = vmatprep.subr.mxu0 0.0
        %2574 = vmatpush1.msra.mxu0 0.0
        %2575 = vmatprep.subr.mxu0 0.0
        %2576 = vmatpush1.msra.mxu0 0.0
        %2577 = vmatprep.subr.mxu0 0.0
        %2578 = vmatpush1.msra.mxu0 0.0
        %2579 = vmatprep.subr.mxu0 0.0
        %2580 = vmatpush1.msra.mxu0 0.0
        %2581 = vmatprep.mubr.f32.mxu0 0.0
        %2582 = vmatmul.mubr.f32.gmra.mrb[0].mxu0 %v2515
        %v2583 = vpop.f32.mrb[0].mxu0
        %v2584 = vadd.f32 0.0, %v2583
        %v2585 = vpop.f32.mrb[0].mxu0
        %2586 = vdwg.mxu0
        %2588 = vrot.lane.b32.xlu0 %v1849, 32
        %v2589 = vpop.permute.xlu0 %2588
        %v2592 = vsel %vm645, %v2584, 0
        %2594 = vmatprep.subr.mxu0 0.0
        %2595 = vmatpush1.msra.mxu0 %v2589
        %2596 = vmatprep.subr.mxu0 0.0
        %2597 = vmatpush1.msra.mxu0 0.0
        %2598 = vmatprep.subr.mxu0 0.0
        %2599 = vmatpush1.msra.mxu0 0.0
        %2600 = vmatprep.subr.mxu0 0.0
        %2601 = vmatpush1.msra.mxu0 0.0
        %2602 = vmatprep.subr.mxu0 0.0
        %2603 = vmatpush1.msra.mxu0 0.0
        %2604 = vmatprep.subr.mxu0 0.0
        %2605 = vmatpush1.msra.mxu0 0.0
        %2606 = vmatprep.subr.mxu0 0.0
        %2607 = vmatpush1.msra.mxu0 0.0
        %2608 = vmatprep.subr.mxu0 0.0
        %2609 = vmatpush1.msra.mxu0 0.0
        %2610 = vmatprep.subr.mxu0 0.0
        %2611 = vmatpush1.msra.mxu0 0.0
        %2612 = vmatprep.subr.mxu0 0.0
        %2613 = vmatpush1.msra.mxu0 0.0
        %2614 = vmatprep.subr.mxu0 0.0
        %2615 = vmatpush1.msra.mxu0 0.0
        %2616 = vmatprep.subr.mxu0 0.0
        %2617 = vmatpush1.msra.mxu0 0.0
        %2618 = vmatprep.subr.mxu0 0.0
        %2619 = vmatpush1.msra.mxu0 0.0
        %2620 = vmatprep.subr.mxu0 0.0
        %2621 = vmatpush1.msra.mxu0 0.0
        %2622 = vmatprep.subr.mxu0 0.0
        %2623 = vmatpush1.msra.mxu0 0.0
        %2624 = vmatprep.subr.mxu0 0.0
        %2625 = vmatpush1.msra.mxu0 0.0
        %2626 = vmatprep.subr.mxu0 0.0
        %2627 = vmatpush1.msra.mxu0 0.0
        %2628 = vmatprep.subr.mxu0 0.0
        %2629 = vmatpush1.msra.mxu0 0.0
        %2630 = vmatprep.subr.mxu0 0.0
        %2631 = vmatpush1.msra.mxu0 0.0
        %2632 = vmatprep.subr.mxu0 0.0
        %2633 = vmatpush1.msra.mxu0 0.0
        %2634 = vmatprep.subr.mxu0 0.0
        %2635 = vmatpush1.msra.mxu0 0.0
        %2636 = vmatprep.subr.mxu0 0.0
        %2637 = vmatpush1.msra.mxu0 0.0
        %2638 = vmatprep.subr.mxu0 0.0
        %2639 = vmatpush1.msra.mxu0 0.0
        %2640 = vmatprep.subr.mxu0 0.0
        %2641 = vmatpush1.msra.mxu0 0.0
        %2642 = vmatprep.subr.mxu0 0.0
        %2643 = vmatpush1.msra.mxu0 0.0
        %2644 = vmatprep.subr.mxu0 0.0
        %2645 = vmatpush1.msra.mxu0 0.0
        %2646 = vmatprep.subr.mxu0 0.0
        %2647 = vmatpush1.msra.mxu0 0.0
        %2648 = vmatprep.subr.mxu0 0.0
        %2649 = vmatpush1.msra.mxu0 0.0
        %2650 = vmatprep.subr.mxu0 0.0
        %2651 = vmatpush1.msra.mxu0 0.0
        %2652 = vmatprep.subr.mxu0 0.0
        %2653 = vmatpush1.msra.mxu0 0.0
        %2654 = vmatprep.subr.mxu0 0.0
        %2655 = vmatpush1.msra.mxu0 0.0
        %2656 = vmatprep.subr.mxu0 0.0
        %2657 = vmatpush1.msra.mxu0 0.0
        %2658 = vmatprep.mubr.f32.mxu0 0.0
        %2659 = vmatmul.mubr.f32.gmra.mrb[0].mxu0 %v2592
        %v2660 = vpop.f32.mrb[0].mxu0
        %v2661 = vadd.f32 0.0, %v2660
        %v2662 = vpop.f32.mrb[0].mxu0
        %2663 = vdwg.mxu0
        %v2664 = vadd.f32 %v2420, %v2661
        %2665 = vrot.lane.b32.xlu0 %v1927, 104
        %v2666 = vpop.permute.xlu0 %2665
        %2667 = vrot.lane.b32.xlu0 %v1927, 72
        %v2668 = vpop.permute.xlu0 %2667
        %v2669 = vsel %vm645, %v2666, 0
        %v2671 = vsel %vm645, %v2668, 0
        %2673 = vmatprep.subr.mxu0 0.0
        %2674 = vmatpush1.xpose.msra.mxu0 %v2671
        %2675 = vmatprep.subr.mxu0 0.0
        %2676 = vmatpush1.xpose.msra.mxu0 0.0
        %2677 = vmatprep.subr.mxu0 0.0
        %2678 = vmatpush1.xpose.msra.mxu0 0.0
        %2679 = vmatprep.subr.mxu0 0.0
        %2680 = vmatpush1.xpose.msra.mxu0 0.0
        %2681 = vmatprep.subr.mxu0 0.0
        %2682 = vmatpush1.xpose.msra.mxu0 0.0
        %2683 = vmatprep.subr.mxu0 0.0
        %2684 = vmatpush1.xpose.msra.mxu0 0.0
        %2685 = vmatprep.subr.mxu0 0.0
        %2686 = vmatpush1.xpose.msra.mxu0 0.0
        %2687 = vmatprep.subr.mxu0 0.0
        %2688 = vmatpush1.xpose.msra.mxu0 0.0
        %2689 = vmatprep.subr.mxu0 0.0
        %2690 = vmatpush1.xpose.msra.mxu0 0.0
        %2691 = vmatprep.subr.mxu0 0.0
        %2692 = vmatpush1.xpose.msra.mxu0 0.0
        %2693 = vmatprep.subr.mxu0 0.0
        %2694 = vmatpush1.xpose.msra.mxu0 0.0
        %2695 = vmatprep.subr.mxu0 0.0
        %2696 = vmatpush1.xpose.msra.mxu0 0.0
        %2697 = vmatprep.subr.mxu0 0.0
        %2698 = vmatpush1.xpose.msra.mxu0 0.0
        %2699 = vmatprep.subr.mxu0 0.0
        %2700 = vmatpush1.xpose.msra.mxu0 0.0
        %2701 = vmatprep.subr.mxu0 0.0
        %2702 = vmatpush1.xpose.msra.mxu0 0.0
        %2703 = vmatprep.subr.mxu0 0.0
        %2704 = vmatpush1.xpose.msra.mxu0 0.0
        %2705 = vmatprep.subr.mxu0 0.0
        %2706 = vmatpush1.xpose.msra.mxu0 0.0
        %2707 = vmatprep.subr.mxu0 0.0
        %2708 = vmatpush1.xpose.msra.mxu0 0.0
        %2709 = vmatprep.subr.mxu0 0.0
        %2710 = vmatpush1.xpose.msra.mxu0 0.0
        %2711 = vmatprep.subr.mxu0 0.0
        %2712 = vmatpush1.xpose.msra.mxu0 0.0
        %2713 = vmatprep.subr.mxu0 0.0
        %2714 = vmatpush1.xpose.msra.mxu0 0.0
        %2715 = vmatprep.subr.mxu0 0.0
        %2716 = vmatpush1.xpose.msra.mxu0 0.0
        %2717 = vmatprep.subr.mxu0 0.0
        %2718 = vmatpush1.xpose.msra.mxu0 0.0
        %2719 = vmatprep.subr.mxu0 0.0
        %2720 = vmatpush1.xpose.msra.mxu0 0.0
        %2721 = vmatprep.subr.mxu0 0.0
        %2722 = vmatpush1.xpose.msra.mxu0 0.0
        %2723 = vmatprep.subr.mxu0 0.0
        %2724 = vmatpush1.xpose.msra.mxu0 0.0
        %2725 = vmatprep.subr.mxu0 0.0
        %2726 = vmatpush1.xpose.msra.mxu0 0.0
        %2727 = vmatprep.subr.mxu0 0.0
        %2728 = vmatpush1.xpose.msra.mxu0 0.0
        %2729 = vmatprep.subr.mxu0 0.0
        %2730 = vmatpush1.xpose.msra.mxu0 0.0
        %2731 = vmatprep.subr.mxu0 0.0
        %2732 = vmatpush1.xpose.msra.mxu0 0.0
        %2733 = vmatprep.subr.mxu0 0.0
        %2734 = vmatpush1.xpose.msra.mxu0 0.0
        %2735 = vmatprep.subr.mxu0 0.0
        %2736 = vmatpush1.xpose.msra.mxu0 0.0
        %2737 = vmatprep.mubr.f32.mxu0 0.0
        %2738 = vmatmul.mubr.f32.gmra.mrb[0].mxu0 %v2669
        %v2739 = vpop.f32.mrb[0].mxu0
        %v2740 = vadd.f32 %v556, %v2739
        %v2741 = vpop.f32.mrb[0].mxu0
        %2742 = vdwg.mxu0
        %v2743 = vmul.f32 %v2740, 0.17677669
        %v2744 = vsel %vm645, %v2743, -inf
        %2745 = vmax.xlane.f32.xlu0 %v2744
        %v2746 = vpop.xlane.xlu0 %2745
        %v2747 = vsub.f32 %v2743, %v2746
        %v2748 = vmul.f32 %v2747, 1.442695
        %v2749 = vpow.pop %v2748
        %v2750 = vsel %vm645, %v2749, 0.0
        %2751 = vadd.xlane.f32.xlu0 %v2750
        %v2752 = vpop.xlane.xlu0 %2751
        %v2753 = vrcp.pop %v2752
        %v2754 = vmul.f32 %v2749, %v2753
        %2755 = vrot.lane.b32.xlu0 %v1927, 40
        %v2756 = vpop.permute.xlu0 %2755
        %v2759 = vsel %vm645, %v2754, 0
        %2761 = vmatprep.subr.mxu0 0.0
        %2762 = vmatpush1.msra.mxu0 %v2756
        %2763 = vmatprep.subr.mxu0 0.0
        %2764 = vmatpush1.msra.mxu0 0.0
        %2765 = vmatprep.subr.mxu0 0.0
        %2766 = vmatpush1.msra.mxu0 0.0
        %2767 = vmatprep.subr.mxu0 0.0
        %2768 = vmatpush1.msra.mxu0 0.0
        %2769 = vmatprep.subr.mxu0 0.0
        %2770 = vmatpush1.msra.mxu0 0.0
        %2771 = vmatprep.subr.mxu0 0.0
        %2772 = vmatpush1.msra.mxu0 0.0
        %2773 = vmatprep.subr.mxu0 0.0
        %2774 = vmatpush1.msra.mxu0 0.0
        %2775 = vmatprep.subr.mxu0 0.0
        %2776 = vmatpush1.msra.mxu0 0.0
        %2777 = vmatprep.subr.mxu0 0.0
        %2778 = vmatpush1.msra.mxu0 0.0
        %2779 = vmatprep.subr.mxu0 0.0
        %2780 = vmatpush1.msra.mxu0 0.0
        %2781 = vmatprep.subr.mxu0 0.0
        %2782 = vmatpush1.msra.mxu0 0.0
        %2783 = vmatprep.subr.mxu0 0.0
        %2784 = vmatpush1.msra.mxu0 0.0
        %2785 = vmatprep.subr.mxu0 0.0
        %2786 = vmatpush1.msra.mxu0 0.0
        %2787 = vmatprep.subr.mxu0 0.0
        %2788 = vmatpush1.msra.mxu0 0.0
        %2789 = vmatprep.subr.mxu0 0.0
        %2790 = vmatpush1.msra.mxu0 0.0
        %2791 = vmatprep.subr.mxu0 0.0
        %2792 = vmatpush1.msra.mxu0 0.0
        %2793 = vmatprep.subr.mxu0 0.0
        %2794 = vmatpush1.msra.mxu0 0.0
        %2795 = vmatprep.subr.mxu0 0.0
        %2796 = vmatpush1.msra.mxu0 0.0
        %2797 = vmatprep.subr.mxu0 0.0
        %2798 = vmatpush1.msra.mxu0 0.0
        %2799 = vmatprep.subr.mxu0 0.0
        %2800 = vmatpush1.msra.mxu0 0.0
        %2801 = vmatprep.subr.mxu0 0.0
        %2802 = vmatpush1.msra.mxu0 0.0
        %2803 = vmatprep.subr.mxu0 0.0
        %2804 = vmatpush1.msra.mxu0 0.0
        %2805 = vmatprep.subr.mxu0 0.0
        %2806 = vmatpush1.msra.mxu0 0.0
        %2807 = vmatprep.subr.mxu0 0.0
        %2808 = vmatpush1.msra.mxu0 0.0
        %2809 = vmatprep.subr.mxu0 0.0
        %2810 = vmatpush1.msra.mxu0 0.0
        %2811 = vmatprep.subr.mxu0 0.0
        %2812 = vmatpush1.msra.mxu0 0.0
        %2813 = vmatprep.subr.mxu0 0.0
        %2814 = vmatpush1.msra.mxu0 0.0
        %2815 = vmatprep.subr.mxu0 0.0
        %2816 = vmatpush1.msra.mxu0 0.0
        %2817 = vmatprep.subr.mxu0 0.0
        %2818 = vmatpush1.msra.mxu0 0.0
        %2819 = vmatprep.subr.mxu0 0.0
        %2820 = vmatpush1.msra.mxu0 0.0
        %2821 = vmatprep.subr.mxu0 0.0
        %2822 = vmatpush1.msra.mxu0 0.0
        %2823 = vmatprep.subr.mxu0 0.0
        %2824 = vmatpush1.msra.mxu0 0.0
        %2825 = vmatprep.mubr.f32.mxu0 0.0
        %2826 = vmatmul.mubr.f32.gmra.mrb[0].mxu0 %v2759
        %v2827 = vpop.f32.mrb[0].mxu0
        %v2828 = vadd.f32 0.0, %v2827
        %v2829 = vpop.f32.mrb[0].mxu0
        %2830 = vdwg.mxu0
        %2832 = vrot.lane.b32.xlu0 %v1850, 32
        %v2833 = vpop.permute.xlu0 %2832
        %v2836 = vsel %vm645, %v2828, 0
        %2838 = vmatprep.subr.mxu0 0.0
        %2839 = vmatpush1.msra.mxu0 %v2833
        %2840 = vmatprep.subr.mxu0 0.0
        %2841 = vmatpush1.msra.mxu0 0.0
        %2842 = vmatprep.subr.mxu0 0.0
        %2843 = vmatpush1.msra.mxu0 0.0
        %2844 = vmatprep.subr.mxu0 0.0
        %2845 = vmatpush1.msra.mxu0 0.0
        %2846 = vmatprep.subr.mxu0 0.0
        %2847 = vmatpush1.msra.mxu0 0.0
        %2848 = vmatprep.subr.mxu0 0.0
        %2849 = vmatpush1.msra.mxu0 0.0
        %2850 = vmatprep.subr.mxu0 0.0
        %2851 = vmatpush1.msra.mxu0 0.0
        %2852 = vmatprep.subr.mxu0 0.0
        %2853 = vmatpush1.msra.mxu0 0.0
        %2854 = vmatprep.subr.mxu0 0.0
        %2855 = vmatpush1.msra.mxu0 0.0
        %2856 = vmatprep.subr.mxu0 0.0
        %2857 = vmatpush1.msra.mxu0 0.0
        %2858 = vmatprep.subr.mxu0 0.0
        %2859 = vmatpush1.msra.mxu0 0.0
        %2860 = vmatprep.subr.mxu0 0.0
        %2861 = vmatpush1.msra.mxu0 0.0
        %2862 = vmatprep.subr.mxu0 0.0
        %2863 = vmatpush1.msra.mxu0 0.0
        %2864 = vmatprep.subr.mxu0 0.0
        %2865 = vmatpush1.msra.mxu0 0.0
        %2866 = vmatprep.subr.mxu0 0.0
        %2867 = vmatpush1.msra.mxu0 0.0
        %2868 = vmatprep.subr.mxu0 0.0
        %2869 = vmatpush1.msra.mxu0 0.0
        %2870 = vmatprep.subr.mxu0 0.0
        %2871 = vmatpush1.msra.mxu0 0.0
        %2872 = vmatprep.subr.mxu0 0.0
        %2873 = vmatpush1.msra.mxu0 0.0
        %2874 = vmatprep.subr.mxu0 0.0
        %2875 = vmatpush1.msra.mxu0 0.0
        %2876 = vmatprep.subr.mxu0 0.0
        %2877 = vmatpush1.msra.mxu0 0.0
        %2878 = vmatprep.subr.mxu0 0.0
        %2879 = vmatpush1.msra.mxu0 0.0
        %2880 = vmatprep.subr.mxu0 0.0
        %2881 = vmatpush1.msra.mxu0 0.0
        %2882 = vmatprep.subr.mxu0 0.0
        %2883 = vmatpush1.msra.mxu0 0.0
        %2884 = vmatprep.subr.mxu0 0.0
        %2885 = vmatpush1.msra.mxu0 0.0
        %2886 = vmatprep.subr.mxu0 0.0
        %2887 = vmatpush1.msra.mxu0 0.0
        %2888 = vmatprep.subr.mxu0 0.0
        %2889 = vmatpush1.msra.mxu0 0.0
        %2890 = vmatprep.subr.mxu0 0.0
        %2891 = vmatpush1.msra.mxu0 0.0
        %2892 = vmatprep.subr.mxu0 0.0
        %2893 = vmatpush1.msra.mxu0 0.0
        %2894 = vmatprep.subr.mxu0 0.0
        %2895 = vmatpush1.msra.mxu0 0.0
        %2896 = vmatprep.subr.mxu0 0.0
        %2897 = vmatpush1.msra.mxu0 0.0
        %2898 = vmatprep.subr.mxu0 0.0
        %2899 = vmatpush1.msra.mxu0 0.0
        %2900 = vmatprep.subr.mxu0 0.0
        %2901 = vmatpush1.msra.mxu0 0.0
        %2902 = vmatprep.mubr.f32.mxu0 0.0
        %2903 = vmatmul.mubr.f32.gmra.mrb[0].mxu0 %v2836
        %v2904 = vpop.f32.mrb[0].mxu0
        %v2905 = vadd.f32 0.0, %v2904
        %v2906 = vpop.f32.mrb[0].mxu0
        %2907 = vdwg.mxu0
        %v2908 = vadd.f32 %v2664, %v2905
        %v2909 = vadd.f32 %v2908, %v1845
        %v2910 = vsel %vm568, %v2909, 0.0
        %2911 = vadd.xlane.f32.xlu0 %v2910
        %v2912 = vpop.xlane.xlu0 %2911
        %v2913 = vmul.f32 %v2912, %v1626
        %v2914 = vsub.f32 %v2909, %v2913
        %v2915 = vmul.f32 %v2914, %v2914
        %v2916 = vsel %vm568, %v2915, 0.0
        %2917 = vadd.xlane.f32.xlu0 %v2916
        %v2918 = vpop.xlane.xlu0 %2917
        %v2919 = vmul.f32 %v2918, %v1626
        %v2920 = vadd.f32 %v2919, 1e-05
        %v2921 = vrsqrt.pop %v2920
        %v2922 = vmul.f32 %v2914, %v2921
        %2924 = vrot.lane.b32.xlu0 %v2175, 96
        %v2925 = vpop.permute.xlu0 %2924
        %v2927 = vmul.f32 %v2922, %v2925
        %2928 = vrot.lane.b32.xlu0 %v2175, 64
        %v2929 = vpop.permute.xlu0 %2928
        %v2931 = vadd.f32 %v2927, %v2929
        %s2932 = scalar_lea.vmem %s5, 96
        %v2933 = vld [vmem:[%s2932] sm:$0xff]
        %v2934 = vld [vmem:[%s2932 + $0x8] sm:$0xff]
        %v2935 = vld [vmem:[%s2932 + $0x10] sm:$0xff]
        %v2936 = vld [vmem:[%s2932 + $0x18] sm:$0xff]
        %s2937 = scalar_lea.vmem %s6, 6
        %v2938 = vld [vmem:[%s2937] sm:$0x3]
        %v2939 = vlaneseq
        %v2940 = vshrl.u32 %v2939, 7
        %v2941 = vsub.s32 0, %v2940
        %v2942 = vrot.slane %v2938, %v2941
        %v2944 = vsel %vm568, %v2931, 0
        %2946 = vmatprep.subr.mxu0 0.0
        %2947 = vmatpush1.msra.mxu0 %v2933
        %2948 = vmatprep.subr.mxu0 0.0
        %2949 = vmatpush1.msra.mxu0 %v2934
        %2950 = vmatprep.subr.mxu0 0.0
        %2951 = vmatpush1.msra.mxu0 %v2935
        %2952 = vmatprep.subr.mxu0 0.0
        %2953 = vmatpush1.msra.mxu0 %v2936
        %2954 = vmatprep.subr.mxu0 0.0
        %2955 = vmatpush1.msra.mxu0 0.0
        %2956 = vmatprep.subr.mxu0 0.0
        %2957 = vmatpush1.msra.mxu0 0.0
        %2958 = vmatprep.subr.mxu0 0.0
        %2959 = vmatpush1.msra.mxu0 0.0
        %2960 = vmatprep.subr.mxu0 0.0
        %2961 = vmatpush1.msra.mxu0 0.0
        %2962 = vmatprep.subr.mxu0 0.0
        %2963 = vmatpush1.msra.mxu0 0.0
        %2964 = vmatprep.subr.mxu0 0.0
        %2965 = vmatpush1.msra.mxu0 0.0
        %2966 = vmatprep.subr.mxu0 0.0
        %2967 = vmatpush1.msra.mxu0 0.0
        %2968 = vmatprep.subr.mxu0 0.0
        %2969 = vmatpush1.msra.mxu0 0.0
        %2970 = vmatprep.subr.mxu0 0.0
        %2971 = vmatpush1.msra.mxu0 0.0
        %2972 = vmatprep.subr.mxu0 0.0
        %2973 = vmatpush1.msra.mxu0 0.0
        %2974 = vmatprep.subr.mxu0 0.0
        %2975 = vmatpush1.msra.mxu0 0.0
        %2976 = vmatprep.subr.mxu0 0.0
        %2977 = vmatpush1.msra.mxu0 0.0
        %2978 = vmatprep.subr.mxu0 0.0
        %2979 = vmatpush1.msra.mxu0 0.0
        %2980 = vmatprep.subr.mxu0 0.0
        %2981 = vmatpush1.msra.mxu0 0.0
        %2982 = vmatprep.subr.mxu0 0.0
        %2983 = vmatpush1.msra.mxu0 0.0
        %2984 = vmatprep.subr.mxu0 0.0
        %2985 = vmatpush1.msra.mxu0 0.0
        %2986 = vmatprep.subr.mxu0 0.0
        %2987 = vmatpush1.msra.mxu0 0.0
        %2988 = vmatprep.subr.mxu0 0.0
        %2989 = vmatpush1.msra.mxu0 0.0
        %2990 = vmatprep.subr.mxu0 0.0
        %2991 = vmatpush1.msra.mxu0 0.0
        %2992 = vmatprep.subr.mxu0 0.0
        %2993 = vmatpush1.msra.mxu0 0.0
        %2994 = vmatprep.subr.mxu0 0.0
        %2995 = vmatpush1.msra.mxu0 0.0
        %2996 = vmatprep.subr.mxu0 0.0
        %2997 = vmatpush1.msra.mxu0 0.0
        %2998 = vmatprep.subr.mxu0 0.0
        %2999 = vmatpush1.msra.mxu0 0.0
        %3000 = vmatprep.subr.mxu0 0.0
        %3001 = vmatpush1.msra.mxu0 0.0
        %3002 = vmatprep.subr.mxu0 0.0
        %3003 = vmatpush1.msra.mxu0 0.0
        %3004 = vmatprep.subr.mxu0 0.0
        %3005 = vmatpush1.msra.mxu0 0.0
        %3006 = vmatprep.subr.mxu0 0.0
        %3007 = vmatpush1.msra.mxu0 0.0
        %3008 = vmatprep.subr.mxu0 0.0
        %3009 = vmatpush1.msra.mxu0 0.0
        %3010 = vmatprep.mubr.f32.mxu0 0.0
        %3011 = vmatmul.mubr.f32.gmra.mrb[0].mxu0 %v2944
        %v3012 = vpop.f32.mrb[0].mxu0
        %v3013 = vadd.f32 %v2942, %v3012
        %v3014 = vpop.f32.mrb[0].mxu0
        %3015 = vdwg.mxu0
        %3020 = vrot.lane.b32.xlu0 %v2933, 96
        %v3021 = vpop.permute.xlu0 %3020
        %3022 = vrot.lane.b32.xlu0 %v2934, 96
        %v3023 = vpop.permute.xlu0 %3022
        %3024 = vrot.lane.b32.xlu0 %v2935, 96
        %v3025 = vpop.permute.xlu0 %3024
        %3026 = vrot.lane.b32.xlu0 %v2936, 96
        %v3027 = vpop.permute.xlu0 %3026
        %3033 = vrot.lane.b32.xlu0 %v2942, 96
        %v3034 = vpop.permute.xlu0 %3033
        %v3037 = vsel %vm568, %v1844, 0
        %3039 = vmatprep.subr.mxu0 0.0
        %3040 = vmatpush1.msra.mxu0 %v3021
        %3041 = vmatprep.subr.mxu0 0.0
        %3042 = vmatpush1.msra.mxu0 %v3023
        %3043 = vmatprep.subr.mxu0 0.0
        %3044 = vmatpush1.msra.mxu0 %v3025
        %3045 = vmatprep.subr.mxu0 0.0
        %3046 = vmatpush1.msra.mxu0 %v3027
        %3047 = vmatprep.subr.mxu0 0.0
        %3048 = vmatpush1.msra.mxu0 0.0
        %3049 = vmatprep.subr.mxu0 0.0
        %3050 = vmatpush1.msra.mxu0 0.0
        %3051 = vmatprep.subr.mxu0 0.0
        %3052 = vmatpush1.msra.mxu0 0.0
        %3053 = vmatprep.subr.mxu0 0.0
        %3054 = vmatpush1.msra.mxu0 0.0
        %3055 = vmatprep.subr.mxu0 0.0
        %3056 = vmatpush1.msra.mxu0 0.0
        %3057 = vmatprep.subr.mxu0 0.0
        %3058 = vmatpush1.msra.mxu0 0.0
        %3059 = vmatprep.subr.mxu0 0.0
        %3060 = vmatpush1.msra.mxu0 0.0
        %3061 = vmatprep.subr.mxu0 0.0
        %3062 = vmatpush1.msra.mxu0 0.0
        %3063 = vmatprep.subr.mxu0 0.0
        %3064 = vmatpush1.msra.mxu0 0.0
        %3065 = vmatprep.subr.mxu0 0.0
        %3066 = vmatpush1.msra.mxu0 0.0
        %3067 = vmatprep.subr.mxu0 0.0
        %3068 = vmatpush1.msra.mxu0 0.0
        %3069 = vmatprep.subr.mxu0 0.0
        %3070 = vmatpush1.msra.mxu0 0.0
        %3071 = vmatprep.subr.mxu0 0.0
        %3072 = vmatpush1.msra.mxu0 0.0
        %3073 = vmatprep.subr.mxu0 0.0
        %3074 = vmatpush1.msra.mxu0 0.0
        %3075 = vmatprep.subr.mxu0 0.0
        %3076 = vmatpush1.msra.mxu0 0.0
        %3077 = vmatprep.subr.mxu0 0.0
        %3078 = vmatpush1.msra.mxu0 0.0
        %3079 = vmatprep.subr.mxu0 0.0
        %3080 = vmatpush1.msra.mxu0 0.0
        %3081 = vmatprep.subr.mxu0 0.0
        %3082 = vmatpush1.msra.mxu0 0.0
        %3083 = vmatprep.subr.mxu0 0.0
        %3084 = vmatpush1.msra.mxu0 0.0
        %3085 = vmatprep.subr.mxu0 0.0
        %3086 = vmatpush1.msra.mxu0 0.0
        %3087 = vmatprep.subr.mxu0 0.0
        %3088 = vmatpush1.msra.mxu0 0.0
        %3089 = vmatprep.subr.mxu0 0.0
        %3090 = vmatpush1.msra.mxu0 0.0
        %3091 = vmatprep.subr.mxu0 0.0
        %3092 = vmatpush1.msra.mxu0 0.0
        %3093 = vmatprep.subr.mxu0 0.0
        %3094 = vmatpush1.msra.mxu0 0.0
        %3095 = vmatprep.subr.mxu0 0.0
        %3096 = vmatpush1.msra.mxu0 0.0
        %3097 = vmatprep.subr.mxu0 0.0
        %3098 = vmatpush1.msra.mxu0 0.0
        %3099 = vmatprep.subr.mxu0 0.0
        %3100 = vmatpush1.msra.mxu0 0.0
        %3101 = vmatprep.subr.mxu0 0.0
        %3102 = vmatpush1.msra.mxu0 0.0
        %3103 = vmatprep.mubr.f32.mxu0 0.0
        %3104 = vmatmul.mubr.f32.gmra.mrb[0].mxu0 %v3037
        %v3105 = vpop.f32.mrb[0].mxu0
        %v3106 = vadd.f32 %v3034, %v3105
        %v3107 = vpop.f32.mrb[0].mxu0
        %3108 = vdwg.mxu0
        %v3110 = vsel %vm645, %v3013, 0
        %v3113 = vsel %vm645, %v3106, 0
        %3115 = vmatprep.subr.mxu0 0.0
        %3116 = vmatpush1.xpose.msra.mxu0 %v3113
        %3117 = vmatprep.subr.mxu0 0.0
        %3118 = vmatpush1.xpose.msra.mxu0 0.0
        %3119 = vmatprep.subr.mxu0 0.0
        %3120 = vmatpush1.xpose.msra.mxu0 0.0
        %3121 = vmatprep.subr.mxu0 0.0
        %3122 = vmatpush1.xpose.msra.mxu0 0.0
        %3123 = vmatprep.subr.mxu0 0.0
        %3124 = vmatpush1.xpose.msra.mxu0 0.0
        %3125 = vmatprep.subr.mxu0 0.0
        %3126 = vmatpush1.xpose.msra.mxu0 0.0
        %3127 = vmatprep.subr.mxu0 0.0
        %3128 = vmatpush1.xpose.msra.mxu0 0.0
        %3129 = vmatprep.subr.mxu0 0.0
        %3130 = vmatpush1.xpose.msra.mxu0 0.0
        %3131 = vmatprep.subr.mxu0 0.0
        %3132 = vmatpush1.xpose.msra.mxu0 0.0
        %3133 = vmatprep.subr.mxu0 0.0
        %3134 = vmatpush1.xpose.msra.mxu0 0.0
        %3135 = vmatprep.subr.mxu0 0.0
        %3136 = vmatpush1.xpose.msra.mxu0 0.0
        %3137 = vmatprep.subr.mxu0 0.0
        %3138 = vmatpush1.xpose.msra.mxu0 0.0
        %3139 = vmatprep.subr.mxu0 0.0
        %3140 = vmatpush1.xpose.msra.mxu0 0.0
        %3141 = vmatprep.subr.mxu0 0.0
        %3142 = vmatpush1.xpose.msra.mxu0 0.0
        %3143 = vmatprep.subr.mxu0 0.0
        %3144 = vmatpush1.xpose.msra.mxu0 0.0
        %3145 = vmatprep.subr.mxu0 0.0
        %3146 = vmatpush1.xpose.msra.mxu0 0.0
        %3147 = vmatprep.subr.mxu0 0.0
        %3148 = vmatpush1.xpose.msra.mxu0 0.0
        %3149 = vmatprep.subr.mxu0 0.0
        %3150 = vmatpush1.xpose.msra.mxu0 0.0
        %3151 = vmatprep.subr.mxu0 0.0
        %3152 = vmatpush1.xpose.msra.mxu0 0.0
        %3153 = vmatprep.subr.mxu0 0.0
        %3154 = vmatpush1.xpose.msra.mxu0 0.0
        %3155 = vmatprep.subr.mxu0 0.0
        %3156 = vmatpush1.xpose.msra.mxu0 0.0
        %3157 = vmatprep.subr.mxu0 0.0
        %3158 = vmatpush1.xpose.msra.mxu0 0.0
        %3159 = vmatprep.subr.mxu0 0.0
        %3160 = vmatpush1.xpose.msra.mxu0 0.0
        %3161 = vmatprep.subr.mxu0 0.0
        %3162 = vmatpush1.xpose.msra.mxu0 0.0
        %3163 = vmatprep.subr.mxu0 0.0
        %3164 = vmatpush1.xpose.msra.mxu0 0.0
        %3165 = vmatprep.subr.mxu0 0.0
        %3166 = vmatpush1.xpose.msra.mxu0 0.0
        %3167 = vmatprep.subr.mxu0 0.0
        %3168 = vmatpush1.xpose.msra.mxu0 0.0
        %3169 = vmatprep.subr.mxu0 0.0
        %3170 = vmatpush1.xpose.msra.mxu0 0.0
        %3171 = vmatprep.subr.mxu0 0.0
        %3172 = vmatpush1.xpose.msra.mxu0 0.0
        %3173 = vmatprep.subr.mxu0 0.0
        %3174 = vmatpush1.xpose.msra.mxu0 0.0
        %3175 = vmatprep.subr.mxu0 0.0
        %3176 = vmatpush1.xpose.msra.mxu0 0.0
        %3177 = vmatprep.subr.mxu0 0.0
        %3178 = vmatpush1.xpose.msra.mxu0 0.0
        %3179 = vmatprep.mubr.f32.mxu0 0.0
        %3180 = vmatmul.mubr.f32.gmra.mrb[0].mxu0 %v3110
        %v3181 = vpop.f32.mrb[0].mxu0
        %v3182 = vadd.f32 0.0, %v3181
        %v3183 = vpop.f32.mrb[0].mxu0
        %3184 = vdwg.mxu0
        %v3185 = vmul.f32 %v3182, 0.17677669
        %v3186 = vsel %vm645, %v3185, -inf
        %3187 = vmax.xlane.f32.xlu0 %v3186
        %v3188 = vpop.xlane.xlu0 %3187
        %v3189 = vsub.f32 %v3185, %v3188
        %v3190 = vmul.f32 %v3189, 1.442695
        %v3191 = vpow.pop %v3190
        %v3192 = vsel %vm645, %v3191, 0.0
        %3193 = vadd.xlane.f32.xlu0 %v3192
        %v3194 = vpop.xlane.xlu0 %3193
        %v3195 = vrcp.pop %v3194
        %v3196 = vmul.f32 %v3191, %v3195
        %3197 = vrot.lane.b32.xlu0 %v3106, 96
        %v3198 = vpop.permute.xlu0 %3197
        %v3201 = vsel %vm645, %v3196, 0
        %3203 = vmatprep.subr.mxu0 0.0
        %3204 = vmatpush1.msra.mxu0 %v3198
        %3205 = vmatprep.subr.mxu0 0.0
        %3206 = vmatpush1.msra.mxu0 0.0
        %3207 = vmatprep.subr.mxu0 0.0
        %3208 = vmatpush1.msra.mxu0 0.0
        %3209 = vmatprep.subr.mxu0 0.0
        %3210 = vmatpush1.msra.mxu0 0.0
        %3211 = vmatprep.subr.mxu0 0.0
        %3212 = vmatpush1.msra.mxu0 0.0
        %3213 = vmatprep.subr.mxu0 0.0
        %3214 = vmatpush1.msra.mxu0 0.0
        %3215 = vmatprep.subr.mxu0 0.0
        %3216 = vmatpush1.msra.mxu0 0.0
        %3217 = vmatprep.subr.mxu0 0.0
        %3218 = vmatpush1.msra.mxu0 0.0
        %3219 = vmatprep.subr.mxu0 0.0
        %3220 = vmatpush1.msra.mxu0 0.0
        %3221 = vmatprep.subr.mxu0 0.0
        %3222 = vmatpush1.msra.mxu0 0.0
        %3223 = vmatprep.subr.mxu0 0.0
        %3224 = vmatpush1.msra.mxu0 0.0
        %3225 = vmatprep.subr.mxu0 0.0
        %3226 = vmatpush1.msra.mxu0 0.0
        %3227 = vmatprep.subr.mxu0 0.0
        %3228 = vmatpush1.msra.mxu0 0.0
        %3229 = vmatprep.subr.mxu0 0.0
        %3230 = vmatpush1.msra.mxu0 0.0
        %3231 = vmatprep.subr.mxu0 0.0
        %3232 = vmatpush1.msra.mxu0 0.0
        %3233 = vmatprep.subr.mxu0 0.0
        %3234 = vmatpush1.msra.mxu0 0.0
        %3235 = vmatprep.subr.mxu0 0.0
        %3236 = vmatpush1.msra.mxu0 0.0
        %3237 = vmatprep.subr.mxu0 0.0
        %3238 = vmatpush1.msra.mxu0 0.0
        %3239 = vmatprep.subr.mxu0 0.0
        %3240 = vmatpush1.msra.mxu0 0.0
        %3241 = vmatprep.subr.mxu0 0.0
        %3242 = vmatpush1.msra.mxu0 0.0
        %3243 = vmatprep.subr.mxu0 0.0
        %3244 = vmatpush1.msra.mxu0 0.0
        %3245 = vmatprep.subr.mxu0 0.0
        %3246 = vmatpush1.msra.mxu0 0.0
        %3247 = vmatprep.subr.mxu0 0.0
        %3248 = vmatpush1.msra.mxu0 0.0
        %3249 = vmatprep.subr.mxu0 0.0
        %3250 = vmatpush1.msra.mxu0 0.0
        %3251 = vmatprep.subr.mxu0 0.0
        %3252 = vmatpush1.msra.mxu0 0.0
        %3253 = vmatprep.subr.mxu0 0.0
        %3254 = vmatpush1.msra.mxu0 0.0
        %3255 = vmatprep.subr.mxu0 0.0
        %3256 = vmatpush1.msra.mxu0 0.0
        %3257 = vmatprep.subr.mxu0 0.0
        %3258 = vmatpush1.msra.mxu0 0.0
        %3259 = vmatprep.subr.mxu0 0.0
        %3260 = vmatpush1.msra.mxu0 0.0
        %3261 = vmatprep.subr.mxu0 0.0
        %3262 = vmatpush1.msra.mxu0 0.0
        %3263 = vmatprep.subr.mxu0 0.0
        %3264 = vmatpush1.msra.mxu0 0.0
        %3265 = vmatprep.subr.mxu0 0.0
        %3266 = vmatpush1.msra.mxu0 0.0
        %3267 = vmatprep.mubr.f32.mxu0 0.0
        %3268 = vmatmul.mubr.f32.gmra.mrb[0].mxu0 %v3201
        %v3269 = vpop.f32.mrb[0].mxu0
        %v3270 = vadd.f32 0.0, %v3269
        %v3271 = vpop.f32.mrb[0].mxu0
        %3272 = vdwg.mxu0
        %3273 = vrot.lane.b32.xlu0 %v2933, 32
        %v3274 = vpop.permute.xlu0 %3273
        %v3277 = vsel %vm645, %v3270, 0
        %3279 = vmatprep.subr.mxu0 0.0
        %3280 = vmatpush1.msra.mxu0 %v3274
        %3281 = vmatprep.subr.mxu0 0.0
        %3282 = vmatpush1.msra.mxu0 0.0
        %3283 = vmatprep.subr.mxu0 0.0
        %3284 = vmatpush1.msra.mxu0 0.0
        %3285 = vmatprep.subr.mxu0 0.0
        %3286 = vmatpush1.msra.mxu0 0.0
        %3287 = vmatprep.subr.mxu0 0.0
        %3288 = vmatpush1.msra.mxu0 0.0
        %3289 = vmatprep.subr.mxu0 0.0
        %3290 = vmatpush1.msra.mxu0 0.0
        %3291 = vmatprep.subr.mxu0 0.0
        %3292 = vmatpush1.msra.mxu0 0.0
        %3293 = vmatprep.subr.mxu0 0.0
        %3294 = vmatpush1.msra.mxu0 0.0
        %3295 = vmatprep.subr.mxu0 0.0
        %3296 = vmatpush1.msra.mxu0 0.0
        %3297 = vmatprep.subr.mxu0 0.0
        %3298 = vmatpush1.msra.mxu0 0.0
        %3299 = vmatprep.subr.mxu0 0.0
        %3300 = vmatpush1.msra.mxu0 0.0
        %3301 = vmatprep.subr.mxu0 0.0
        %3302 = vmatpush1.msra.mxu0 0.0
        %3303 = vmatprep.subr.mxu0 0.0
        %3304 = vmatpush1.msra.mxu0 0.0
        %3305 = vmatprep.subr.mxu0 0.0
        %3306 = vmatpush1.msra.mxu0 0.0
        %3307 = vmatprep.subr.mxu0 0.0
        %3308 = vmatpush1.msra.mxu0 0.0
        %3309 = vmatprep.subr.mxu0 0.0
        %3310 = vmatpush1.msra.mxu0 0.0
        %3311 = vmatprep.subr.mxu0 0.0
        %3312 = vmatpush1.msra.mxu0 0.0
        %3313 = vmatprep.subr.mxu0 0.0
        %3314 = vmatpush1.msra.mxu0 0.0
        %3315 = vmatprep.subr.mxu0 0.0
        %3316 = vmatpush1.msra.mxu0 0.0
        %3317 = vmatprep.subr.mxu0 0.0
        %3318 = vmatpush1.msra.mxu0 0.0
        %3319 = vmatprep.subr.mxu0 0.0
        %3320 = vmatpush1.msra.mxu0 0.0
        %3321 = vmatprep.subr.mxu0 0.0
        %3322 = vmatpush1.msra.mxu0 0.0
        %3323 = vmatprep.subr.mxu0 0.0
        %3324 = vmatpush1.msra.mxu0 0.0
        %3325 = vmatprep.subr.mxu0 0.0
        %3326 = vmatpush1.msra.mxu0 0.0
        %3327 = vmatprep.subr.mxu0 0.0
        %3328 = vmatpush1.msra.mxu0 0.0
        %3329 = vmatprep.subr.mxu0 0.0
        %3330 = vmatpush1.msra.mxu0 0.0
        %3331 = vmatprep.subr.mxu0 0.0
        %3332 = vmatpush1.msra.mxu0 0.0
        %3333 = vmatprep.subr.mxu0 0.0
        %3334 = vmatpush1.msra.mxu0 0.0
        %3335 = vmatprep.subr.mxu0 0.0
        %3336 = vmatpush1.msra.mxu0 0.0
        %3337 = vmatprep.subr.mxu0 0.0
        %3338 = vmatpush1.msra.mxu0 0.0
        %3339 = vmatprep.subr.mxu0 0.0
        %3340 = vmatpush1.msra.mxu0 0.0
        %3341 = vmatprep.subr.mxu0 0.0
        %3342 = vmatpush1.msra.mxu0 0.0
        %3343 = vmatprep.mubr.f32.mxu0 0.0
        %3344 = vmatmul.mubr.f32.gmra.mrb[0].mxu0 %v3277
        %v3345 = vpop.f32.mrb[0].mxu0
        %v3346 = vadd.f32 0.0, %v3345
        %v3347 = vpop.f32.mrb[0].mxu0
        %3348 = vdwg.mxu0
        %v3349 = vlaneseq
        %v3350 = vshrl.u32 %v3349, 7
        %v3351 = vsub.s32 1, %v3350
        %v3352 = vrot.slane %v2938, %v3351
        %v3353 = vadd.f32 %v3352, %v3346
        %3354 = vrot.lane.b32.xlu0 %v3013, 120
        %v3355 = vpop.permute.xlu0 %3354
        %3356 = vrot.lane.b32.xlu0 %v3106, 120
        %v3357 = vpop.permute.xlu0 %3356
        %v3358 = vsel %vm645, %v3355, 0
        %v3360 = vsel %vm645, %v3357, 0
        %3362 = vmatprep.subr.mxu0 0.0
        %3363 = vmatpush1.xpose.msra.mxu0 %v3360
        %3364 = vmatprep.subr.mxu0 0.0
        %3365 = vmatpush1.xpose.msra.mxu0 0.0
        %3366 = vmatprep.subr.mxu0 0.0
        %3367 = vmatpush1.xpose.msra.mxu0 0.0
        %3368 = vmatprep.subr.mxu0 0.0
        %3369 = vmatpush1.xpose.msra.mxu0 0.0
        %3370 = vmatprep.subr.mxu0 0.0
        %3371 = vmatpush1.xpose.msra.mxu0 0.0
        %3372 = vmatprep.subr.mxu0 0.0
        %3373 = vmatpush1.xpose.msra.mxu0 0.0
        %3374 = vmatprep.subr.mxu0 0.0
        %3375 = vmatpush1.xpose.msra.mxu0 0.0
        %3376 = vmatprep.subr.mxu0 0.0
        %3377 = vmatpush1.xpose.msra.mxu0 0.0
        %3378 = vmatprep.subr.mxu0 0.0
        %3379 = vmatpush1.xpose.msra.mxu0 0.0
        %3380 = vmatprep.subr.mxu0 0.0
        %3381 = vmatpush1.xpose.msra.mxu0 0.0
        %3382 = vmatprep.subr.mxu0 0.0
        %3383 = vmatpush1.xpose.msra.mxu0 0.0
        %3384 = vmatprep.subr.mxu0 0.0
        %3385 = vmatpush1.xpose.msra.mxu0 0.0
        %3386 = vmatprep.subr.mxu0 0.0
        %3387 = vmatpush1.xpose.msra.mxu0 0.0
        %3388 = vmatprep.subr.mxu0 0.0
        %3389 = vmatpush1.xpose.msra.mxu0 0.0
        %3390 = vmatprep.subr.mxu0 0.0
        %3391 = vmatpush1.xpose.msra.mxu0 0.0
        %3392 = vmatprep.subr.mxu0 0.0
        %3393 = vmatpush1.xpose.msra.mxu0 0.0
        %3394 = vmatprep.subr.mxu0 0.0
        %3395 = vmatpush1.xpose.msra.mxu0 0.0
        %3396 = vmatprep.subr.mxu0 0.0
        %3397 = vmatpush1.xpose.msra.mxu0 0.0
        %3398 = vmatprep.subr.mxu0 0.0
        %3399 = vmatpush1.xpose.msra.mxu0 0.0
        %3400 = vmatprep.subr.mxu0 0.0
        %3401 = vmatpush1.xpose.msra.mxu0 0.0
        %3402 = vmatprep.subr.mxu0 0.0
        %3403 = vmatpush1.xpose.msra.mxu0 0.0
        %3404 = vmatprep.subr.mxu0 0.0
        %3405 = vmatpush1.xpose.msra.mxu0 0.0
        %3406 = vmatprep.subr.mxu0 0.0
        %3407 = vmatpush1.xpose.msra.mxu0 0.0
        %3408 = vmatprep.subr.mxu0 0.0
        %3409 = vmatpush1.xpose.msra.mxu0 0.0
        %3410 = vmatprep.subr.mxu0 0.0
        %3411 = vmatpush1.xpose.msra.mxu0 0.0
        %3412 = vmatprep.subr.mxu0 0.0
        %3413 = vmatpush1.xpose.msra.mxu0 0.0
        %3414 = vmatprep.subr.mxu0 0.0
        %3415 = vmatpush1.xpose.msra.mxu0 0.0
        %3416 = vmatprep.subr.mxu0 0.0
        %3417 = vmatpush1.xpose.msra.mxu0 0.0
        %3418 = vmatprep.subr.mxu0 0.0
        %3419 = vmatpush1.xpose.msra.mxu0 0.0
        %3420 = vmatprep.subr.mxu0 0.0
        %3421 = vmatpush1.xpose.msra.mxu0 0.0
        %3422 = vmatprep.subr.mxu0 0.0
        %3423 = vmatpush1.xpose.msra.mxu0 0.0
        %3424 = vmatprep.subr.mxu0 0.0
        %3425 = vmatpush1.xpose.msra.mxu0 0.0
        %3426 = vmatprep.mubr.f32.mxu0 0.0
        %3427 = vmatmul.mubr.f32.gmra.mrb[0].mxu0 %v3358
        %v3428 = vpop.f32.mrb[0].mxu0
        %v3429 = vadd.f32 0.0, %v3428
        %v3430 = vpop.f32.mrb[0].mxu0
        %3431 = vdwg.mxu0
        %v3432 = vmul.f32 %v3429, 0.17677669
        %v3433 = vsel %vm645, %v3432, -inf
        %3434 = vmax.xlane.f32.xlu0 %v3433
        %v3435 = vpop.xlane.xlu0 %3434
        %v3436 = vsub.f32 %v3432, %v3435
        %v3437 = vmul.f32 %v3436, 1.442695
        %v3438 = vpow.pop %v3437
        %v3439 = vsel %vm645, %v3438, 0.0
        %3440 = vadd.xlane.f32.xlu0 %v3439
        %v3441 = vpop.xlane.xlu0 %3440
        %v3442 = vrcp.pop %v3441
        %v3443 = vmul.f32 %v3438, %v3442
        %3444 = vrot.lane.b32.xlu0 %v3106, 88
        %v3445 = vpop.permute.xlu0 %3444
        %v3448 = vsel %vm645, %v3443, 0
        %3450 = vmatprep.subr.mxu0 0.0
        %3451 = vmatpush1.msra.mxu0 %v3445
        %3452 = vmatprep.subr.mxu0 0.0
        %3453 = vmatpush1.msra.mxu0 0.0
        %3454 = vmatprep.subr.mxu0 0.0
        %3455 = vmatpush1.msra.mxu0 0.0
        %3456 = vmatprep.subr.mxu0 0.0
        %3457 = vmatpush1.msra.mxu0 0.0
        %3458 = vmatprep.subr.mxu0 0.0
        %3459 = vmatpush1.msra.mxu0 0.0
        %3460 = vmatprep.subr.mxu0 0.0
        %3461 = vmatpush1.msra.mxu0 0.0
        %3462 = vmatprep.subr.mxu0 0.0
        %3463 = vmatpush1.msra.mxu0 0.0
        %3464 = vmatprep.subr.mxu0 0.0
        %3465 = vmatpush1.msra.mxu0 0.0
        %3466 = vmatprep.subr.mxu0 0.0
        %3467 = vmatpush1.msra.mxu0 0.0
        %3468 = vmatprep.subr.mxu0 0.0
        %3469 = vmatpush1.msra.mxu0 0.0
        %3470 = vmatprep.subr.mxu0 0.0
        %3471 = vmatpush1.msra.mxu0 0.0
        %3472 = vmatprep.subr.mxu0 0.0
        %3473 = vmatpush1.msra.mxu0 0.0
        %3474 = vmatprep.subr.mxu0 0.0
        %3475 = vmatpush1.msra.mxu0 0.0
        %3476 = vmatprep.subr.mxu0 0.0
        %3477 = vmatpush1.msra.mxu0 0.0
        %3478 = vmatprep.subr.mxu0 0.0
        %3479 = vmatpush1.msra.mxu0 0.0
        %3480 = vmatprep.subr.mxu0 0.0
        %3481 = vmatpush1.msra.mxu0 0.0
        %3482 = vmatprep.subr.mxu0 0.0
        %3483 = vmatpush1.msra.mxu0 0.0
        %3484 = vmatprep.subr.mxu0 0.0
        %3485 = vmatpush1.msra.mxu0 0.0
        %3486 = vmatprep.subr.mxu0 0.0
        %3487 = vmatpush1.msra.mxu0 0.0
        %3488 = vmatprep.subr.mxu0 0.0
        %3489 = vmatpush1.msra.mxu0 0.0
        %3490 = vmatprep.subr.mxu0 0.0
        %3491 = vmatpush1.msra.mxu0 0.0
        %3492 = vmatprep.subr.mxu0 0.0
        %3493 = vmatpush1.msra.mxu0 0.0
        %3494 = vmatprep.subr.mxu0 0.0
        %3495 = vmatpush1.msra.mxu0 0.0
        %3496 = vmatprep.subr.mxu0 0.0
        %3497 = vmatpush1.msra.mxu0 0.0
        %3498 = vmatprep.subr.mxu0 0.0
        %3499 = vmatpush1.msra.mxu0 0.0
        %3500 = vmatprep.subr.mxu0 0.0
        %3501 = vmatpush1.msra.mxu0 0.0
        %3502 = vmatprep.subr.mxu0 0.0
        %3503 = vmatpush1.msra.mxu0 0.0
        %3504 = vmatprep.subr.mxu0 0.0
        %3505 = vmatpush1.msra.mxu0 0.0
        %3506 = vmatprep.subr.mxu0 0.0
        %3507 = vmatpush1.msra.mxu0 0.0
        %3508 = vmatprep.subr.mxu0 0.0
        %3509 = vmatpush1.msra.mxu0 0.0
        %3510 = vmatprep.subr.mxu0 0.0
        %3511 = vmatpush1.msra.mxu0 0.0
        %3512 = vmatprep.subr.mxu0 0.0
        %3513 = vmatpush1.msra.mxu0 0.0
        %3514 = vmatprep.mubr.f32.mxu0 0.0
        %3515 = vmatmul.mubr.f32.gmra.mrb[0].mxu0 %v3448
        %v3516 = vpop.f32.mrb[0].mxu0
        %v3517 = vadd.f32 0.0, %v3516
        %v3518 = vpop.f32.mrb[0].mxu0
        %3519 = vdwg.mxu0
        %3520 = vrot.lane.b32.xlu0 %v2934, 32
        %v3521 = vpop.permute.xlu0 %3520
        %v3524 = vsel %vm645, %v3517, 0
        %3526 = vmatprep.subr.mxu0 0.0
        %3527 = vmatpush1.msra.mxu0 %v3521
        %3528 = vmatprep.subr.mxu0 0.0
        %3529 = vmatpush1.msra.mxu0 0.0
        %3530 = vmatprep.subr.mxu0 0.0
        %3531 = vmatpush1.msra.mxu0 0.0
        %3532 = vmatprep.subr.mxu0 0.0
        %3533 = vmatpush1.msra.mxu0 0.0
        %3534 = vmatprep.subr.mxu0 0.0
        %3535 = vmatpush1.msra.mxu0 0.0
        %3536 = vmatprep.subr.mxu0 0.0
        %3537 = vmatpush1.msra.mxu0 0.0
        %3538 = vmatprep.subr.mxu0 0.0
        %3539 = vmatpush1.msra.mxu0 0.0
        %3540 = vmatprep.subr.mxu0 0.0
        %3541 = vmatpush1.msra.mxu0 0.0
        %3542 = vmatprep.subr.mxu0 0.0
        %3543 = vmatpush1.msra.mxu0 0.0
        %3544 = vmatprep.subr.mxu0 0.0
        %3545 = vmatpush1.msra.mxu0 0.0
        %3546 = vmatprep.subr.mxu0 0.0
        %3547 = vmatpush1.msra.mxu0 0.0
        %3548 = vmatprep.subr.mxu0 0.0
        %3549 = vmatpush1.msra.mxu0 0.0
        %3550 = vmatprep.subr.mxu0 0.0
        %3551 = vmatpush1.msra.mxu0 0.0
        %3552 = vmatprep.subr.mxu0 0.0
        %3553 = vmatpush1.msra.mxu0 0.0
        %3554 = vmatprep.subr.mxu0 0.0
        %3555 = vmatpush1.msra.mxu0 0.0
        %3556 = vmatprep.subr.mxu0 0.0
        %3557 = vmatpush1.msra.mxu0 0.0
        %3558 = vmatprep.subr.mxu0 0.0
        %3559 = vmatpush1.msra.mxu0 0.0
        %3560 = vmatprep.subr.mxu0 0.0
        %3561 = vmatpush1.msra.mxu0 0.0
        %3562 = vmatprep.subr.mxu0 0.0
        %3563 = vmatpush1.msra.mxu0 0.0
        %3564 = vmatprep.subr.mxu0 0.0
        %3565 = vmatpush1.msra.mxu0 0.0
        %3566 = vmatprep.subr.mxu0 0.0
        %3567 = vmatpush1.msra.mxu0 0.0
        %3568 = vmatprep.subr.mxu0 0.0
        %3569 = vmatpush1.msra.mxu0 0.0
        %3570 = vmatprep.subr.mxu0 0.0
        %3571 = vmatpush1.msra.mxu0 0.0
        %3572 = vmatprep.subr.mxu0 0.0
        %3573 = vmatpush1.msra.mxu0 0.0
        %3574 = vmatprep.subr.mxu0 0.0
        %3575 = vmatpush1.msra.mxu0 0.0
        %3576 = vmatprep.subr.mxu0 0.0
        %3577 = vmatpush1.msra.mxu0 0.0
        %3578 = vmatprep.subr.mxu0 0.0
        %3579 = vmatpush1.msra.mxu0 0.0
        %3580 = vmatprep.subr.mxu0 0.0
        %3581 = vmatpush1.msra.mxu0 0.0
        %3582 = vmatprep.subr.mxu0 0.0
        %3583 = vmatpush1.msra.mxu0 0.0
        %3584 = vmatprep.subr.mxu0 0.0
        %3585 = vmatpush1.msra.mxu0 0.0
        %3586 = vmatprep.subr.mxu0 0.0
        %3587 = vmatpush1.msra.mxu0 0.0
        %3588 = vmatprep.subr.mxu0 0.0
        %3589 = vmatpush1.msra.mxu0 0.0
        %3590 = vmatprep.mubr.f32.mxu0 0.0
        %3591 = vmatmul.mubr.f32.gmra.mrb[0].mxu0 %v3524
        %v3592 = vpop.f32.mrb[0].mxu0
        %v3593 = vadd.f32 0.0, %v3592
        %v3594 = vpop.f32.mrb[0].mxu0
        %3595 = vdwg.mxu0
        %v3596 = vadd.f32 %v3353, %v3593
        %3597 = vrot.lane.b32.xlu0 %v3013, 112
        %v3598 = vpop.permute.xlu0 %3597
        %3599 = vrot.lane.b32.xlu0 %v3106, 112
        %v3600 = vpop.permute.xlu0 %3599
        %v3601 = vsel %vm645, %v3598, 0
        %v3603 = vsel %vm645, %v3600, 0
        %3605 = vmatprep.subr.mxu0 0.0
        %3606 = vmatpush1.xpose.msra.mxu0 %v3603
        %3607 = vmatprep.subr.mxu0 0.0
        %3608 = vmatpush1.xpose.msra.mxu0 0.0
        %3609 = vmatprep.subr.mxu0 0.0
        %3610 = vmatpush1.xpose.msra.mxu0 0.0
        %3611 = vmatprep.subr.mxu0 0.0
        %3612 = vmatpush1.xpose.msra.mxu0 0.0
        %3613 = vmatprep.subr.mxu0 0.0
        %3614 = vmatpush1.xpose.msra.mxu0 0.0
        %3615 = vmatprep.subr.mxu0 0.0
        %3616 = vmatpush1.xpose.msra.mxu0 0.0
        %3617 = vmatprep.subr.mxu0 0.0
        %3618 = vmatpush1.xpose.msra.mxu0 0.0
        %3619 = vmatprep.subr.mxu0 0.0
        %3620 = vmatpush1.xpose.msra.mxu0 0.0
        %3621 = vmatprep.subr.mxu0 0.0
        %3622 = vmatpush1.xpose.msra.mxu0 0.0
        %3623 = vmatprep.subr.mxu0 0.0
        %3624 = vmatpush1.xpose.msra.mxu0 0.0
        %3625 = vmatprep.subr.mxu0 0.0
        %3626 = vmatpush1.xpose.msra.mxu0 0.0
        %3627 = vmatprep.subr.mxu0 0.0
        %3628 = vmatpush1.xpose.msra.mxu0 0.0
        %3629 = vmatprep.subr.mxu0 0.0
        %3630 = vmatpush1.xpose.msra.mxu0 0.0
        %3631 = vmatprep.subr.mxu0 0.0
        %3632 = vmatpush1.xpose.msra.mxu0 0.0
        %3633 = vmatprep.subr.mxu0 0.0
        %3634 = vmatpush1.xpose.msra.mxu0 0.0
        %3635 = vmatprep.subr.mxu0 0.0
        %3636 = vmatpush1.xpose.msra.mxu0 0.0
        %3637 = vmatprep.subr.mxu0 0.0
        %3638 = vmatpush1.xpose.msra.mxu0 0.0
        %3639 = vmatprep.subr.mxu0 0.0
        %3640 = vmatpush1.xpose.msra.mxu0 0.0
        %3641 = vmatprep.subr.mxu0 0.0
        %3642 = vmatpush1.xpose.msra.mxu0 0.0
        %3643 = vmatprep.subr.mxu0 0.0
        %3644 = vmatpush1.xpose.msra.mxu0 0.0
        %3645 = vmatprep.subr.mxu0 0.0
        %3646 = vmatpush1.xpose.msra.mxu0 0.0
        %3647 = vmatprep.subr.mxu0 0.0
        %3648 = vmatpush1.xpose.msra.mxu0 0.0
        %3649 = vmatprep.subr.mxu0 0.0
        %3650 = vmatpush1.xpose.msra.mxu0 0.0
        %3651 = vmatprep.subr.mxu0 0.0
        %3652 = vmatpush1.xpose.msra.mxu0 0.0
        %3653 = vmatprep.subr.mxu0 0.0
        %3654 = vmatpush1.xpose.msra.mxu0 0.0
        %3655 = vmatprep.subr.mxu0 0.0
        %3656 = vmatpush1.xpose.msra.mxu0 0.0
        %3657 = vmatprep.subr.mxu0 0.0
        %3658 = vmatpush1.xpose.msra.mxu0 0.0
        %3659 = vmatprep.subr.mxu0 0.0
        %3660 = vmatpush1.xpose.msra.mxu0 0.0
        %3661 = vmatprep.subr.mxu0 0.0
        %3662 = vmatpush1.xpose.msra.mxu0 0.0
        %3663 = vmatprep.subr.mxu0 0.0
        %3664 = vmatpush1.xpose.msra.mxu0 0.0
        %3665 = vmatprep.subr.mxu0 0.0
        %3666 = vmatpush1.xpose.msra.mxu0 0.0
        %3667 = vmatprep.subr.mxu0 0.0
        %3668 = vmatpush1.xpose.msra.mxu0 0.0
        %3669 = vmatprep.mubr.f32.mxu0 0.0
        %3670 = vmatmul.mubr.f32.gmra.mrb[0].mxu0 %v3601
        %v3671 = vpop.f32.mrb[0].mxu0
        %v3672 = vadd.f32 0.0, %v3671
        %v3673 = vpop.f32.mrb[0].mxu0
        %3674 = vdwg.mxu0
        %v3675 = vmul.f32 %v3672, 0.17677669
        %v3676 = vsel %vm645, %v3675, -inf
        %3677 = vmax.xlane.f32.xlu0 %v3676
        %v3678 = vpop.xlane.xlu0 %3677
        %v3679 = vsub.f32 %v3675, %v3678
        %v3680 = vmul.f32 %v3679, 1.442695
        %v3681 = vpow.pop %v3680
        %v3682 = vsel %vm645, %v3681, 0.0
        %3683 = vadd.xlane.f32.xlu0 %v3682
        %v3684 = vpop.xlane.xlu0 %3683
        %v3685 = vrcp.pop %v3684
        %v3686 = vmul.f32 %v3681, %v3685
        %3687 = vrot.lane.b32.xlu0 %v3106, 80
        %v3688 = vpop.permute.xlu0 %3687
        %v3691 = vsel %vm645, %v3686, 0
        %3693 = vmatprep.subr.mxu0 0.0
        %3694 = vmatpush1.msra.mxu0 %v3688
        %3695 = vmatprep.subr.mxu0 0.0
        %3696 = vmatpush1.msra.mxu0 0.0
        %3697 = vmatprep.subr.mxu0 0.0
        %3698 = vmatpush1.msra.mxu0 0.0
        %3699 = vmatprep.subr.mxu0 0.0
        %3700 = vmatpush1.msra.mxu0 0.0
        %3701 = vmatprep.subr.mxu0 0.0
        %3702 = vmatpush1.msra.mxu0 0.0
        %3703 = vmatprep.subr.mxu0 0.0
        %3704 = vmatpush1.msra.mxu0 0.0
        %3705 = vmatprep.subr.mxu0 0.0
        %3706 = vmatpush1.msra.mxu0 0.0
        %3707 = vmatprep.subr.mxu0 0.0
        %3708 = vmatpush1.msra.mxu0 0.0
        %3709 = vmatprep.subr.mxu0 0.0
        %3710 = vmatpush1.msra.mxu0 0.0
        %3711 = vmatprep.subr.mxu0 0.0
        %3712 = vmatpush1.msra.mxu0 0.0
        %3713 = vmatprep.subr.mxu0 0.0
        %3714 = vmatpush1.msra.mxu0 0.0
        %3715 = vmatprep.subr.mxu0 0.0
        %3716 = vmatpush1.msra.mxu0 0.0
        %3717 = vmatprep.subr.mxu0 0.0
        %3718 = vmatpush1.msra.mxu0 0.0
        %3719 = vmatprep.subr.mxu0 0.0
        %3720 = vmatpush1.msra.mxu0 0.0
        %3721 = vmatprep.subr.mxu0 0.0
        %3722 = vmatpush1.msra.mxu0 0.0
        %3723 = vmatprep.subr.mxu0 0.0
        %3724 = vmatpush1.msra.mxu0 0.0
        %3725 = vmatprep.subr.mxu0 0.0
        %3726 = vmatpush1.msra.mxu0 0.0
        %3727 = vmatprep.subr.mxu0 0.0
        %3728 = vmatpush1.msra.mxu0 0.0
        %3729 = vmatprep.subr.mxu0 0.0
        %3730 = vmatpush1.msra.mxu0 0.0
        %3731 = vmatprep.subr.mxu0 0.0
        %3732 = vmatpush1.msra.mxu0 0.0
        %3733 = vmatprep.subr.mxu0 0.0
        %3734 = vmatpush1.msra.mxu0 0.0
        %3735 = vmatprep.subr.mxu0 0.0
        %3736 = vmatpush1.msra.mxu0 0.0
        %3737 = vmatprep.subr.mxu0 0.0
        %3738 = vmatpush1.msra.mxu0 0.0
        %3739 = vmatprep.subr.mxu0 0.0
        %3740 = vmatpush1.msra.mxu0 0.0
        %3741 = vmatprep.subr.mxu0 0.0
        %3742 = vmatpush1.msra.mxu0 0.0
        %3743 = vmatprep.subr.mxu0 0.0
        %3744 = vmatpush1.msra.mxu0 0.0
        %3745 = vmatprep.subr.mxu0 0.0
        %3746 = vmatpush1.msra.mxu0 0.0
        %3747 = vmatprep.subr.mxu0 0.0
        %3748 = vmatpush1.msra.mxu0 0.0
        %3749 = vmatprep.subr.mxu0 0.0
        %3750 = vmatpush1.msra.mxu0 0.0
        %3751 = vmatprep.subr.mxu0 0.0
        %3752 = vmatpush1.msra.mxu0 0.0
        %3753 = vmatprep.subr.mxu0 0.0
        %3754 = vmatpush1.msra.mxu0 0.0
        %3755 = vmatprep.subr.mxu0 0.0
        %3756 = vmatpush1.msra.mxu0 0.0
        %3757 = vmatprep.mubr.f32.mxu0 0.0
        %3758 = vmatmul.mubr.f32.gmra.mrb[0].mxu0 %v3691
        %v3759 = vpop.f32.mrb[0].mxu0
        %v3760 = vadd.f32 0.0, %v3759
        %v3761 = vpop.f32.mrb[0].mxu0
        %3762 = vdwg.mxu0
        %3763 = vrot.lane.b32.xlu0 %v2935, 32
        %v3764 = vpop.permute.xlu0 %3763
        %v3767 = vsel %vm645, %v3760, 0
        %3769 = vmatprep.subr.mxu0 0.0
        %3770 = vmatpush1.msra.mxu0 %v3764
        %3771 = vmatprep.subr.mxu0 0.0
        %3772 = vmatpush1.msra.mxu0 0.0
        %3773 = vmatprep.subr.mxu0 0.0
        %3774 = vmatpush1.msra.mxu0 0.0
        %3775 = vmatprep.subr.mxu0 0.0
        %3776 = vmatpush1.msra.mxu0 0.0
        %3777 = vmatprep.subr.mxu0 0.0
        %3778 = vmatpush1.msra.mxu0 0.0
        %3779 = vmatprep.subr.mxu0 0.0
        %3780 = vmatpush1.msra.mxu0 0.0
        %3781 = vmatprep.subr.mxu0 0.0
        %3782 = vmatpush1.msra.mxu0 0.0
        %3783 = vmatprep.subr.mxu0 0.0
        %3784 = vmatpush1.msra.mxu0 0.0
        %3785 = vmatprep.subr.mxu0 0.0
        %3786 = vmatpush1.msra.mxu0 0.0
        %3787 = vmatprep.subr.mxu0 0.0
        %3788 = vmatpush1.msra.mxu0 0.0
        %3789 = vmatprep.subr.mxu0 0.0
        %3790 = vmatpush1.msra.mxu0 0.0
        %3791 = vmatprep.subr.mxu0 0.0
        %3792 = vmatpush1.msra.mxu0 0.0
        %3793 = vmatprep.subr.mxu0 0.0
        %3794 = vmatpush1.msra.mxu0 0.0
        %3795 = vmatprep.subr.mxu0 0.0
        %3796 = vmatpush1.msra.mxu0 0.0
        %3797 = vmatprep.subr.mxu0 0.0
        %3798 = vmatpush1.msra.mxu0 0.0
        %3799 = vmatprep.subr.mxu0 0.0
        %3800 = vmatpush1.msra.mxu0 0.0
        %3801 = vmatprep.subr.mxu0 0.0
        %3802 = vmatpush1.msra.mxu0 0.0
        %3803 = vmatprep.subr.mxu0 0.0
        %3804 = vmatpush1.msra.mxu0 0.0
        %3805 = vmatprep.subr.mxu0 0.0
        %3806 = vmatpush1.msra.mxu0 0.0
        %3807 = vmatprep.subr.mxu0 0.0
        %3808 = vmatpush1.msra.mxu0 0.0
        %3809 = vmatprep.subr.mxu0 0.0
        %3810 = vmatpush1.msra.mxu0 0.0
        %3811 = vmatprep.subr.mxu0 0.0
        %3812 = vmatpush1.msra.mxu0 0.0
        %3813 = vmatprep.subr.mxu0 0.0
        %3814 = vmatpush1.msra.mxu0 0.0
        %3815 = vmatprep.subr.mxu0 0.0
        %3816 = vmatpush1.msra.mxu0 0.0
        %3817 = vmatprep.subr.mxu0 0.0
        %3818 = vmatpush1.msra.mxu0 0.0
        %3819 = vmatprep.subr.mxu0 0.0
        %3820 = vmatpush1.msra.mxu0 0.0
        %3821 = vmatprep.subr.mxu0 0.0
        %3822 = vmatpush1.msra.mxu0 0.0
        %3823 = vmatprep.subr.mxu0 0.0
        %3824 = vmatpush1.msra.mxu0 0.0
        %3825 = vmatprep.subr.mxu0 0.0
        %3826 = vmatpush1.msra.mxu0 0.0
        %3827 = vmatprep.subr.mxu0 0.0
        %3828 = vmatpush1.msra.mxu0 0.0
        %3829 = vmatprep.subr.mxu0 0.0
        %3830 = vmatpush1.msra.mxu0 0.0
        %3831 = vmatprep.subr.mxu0 0.0
        %3832 = vmatpush1.msra.mxu0 0.0
        %3833 = vmatprep.mubr.f32.mxu0 0.0
        %3834 = vmatmul.mubr.f32.gmra.mrb[0].mxu0 %v3767
        %v3835 = vpop.f32.mrb[0].mxu0
        %v3836 = vadd.f32 0.0, %v3835
        %v3837 = vpop.f32.mrb[0].mxu0
        %3838 = vdwg.mxu0
        %v3839 = vadd.f32 %v3596, %v3836
        %3840 = vrot.lane.b32.xlu0 %v3013, 104
        %v3841 = vpop.permute.xlu0 %3840
        %3842 = vrot.lane.b32.xlu0 %v3106, 104
        %v3843 = vpop.permute.xlu0 %3842
        %v3844 = vsel %vm645, %v3841, 0
        %v3846 = vsel %vm645, %v3843, 0
        %3848 = vmatprep.subr.mxu0 0.0
        %3849 = vmatpush1.xpose.msra.mxu0 %v3846
        %3850 = vmatprep.subr.mxu0 0.0
        %3851 = vmatpush1.xpose.msra.mxu0 0.0
        %3852 = vmatprep.subr.mxu0 0.0
        %3853 = vmatpush1.xpose.msra.mxu0 0.0
        %3854 = vmatprep.subr.mxu0 0.0
        %3855 = vmatpush1.xpose.msra.mxu0 0.0
        %3856 = vmatprep.subr.mxu0 0.0
        %3857 = vmatpush1.xpose.msra.mxu0 0.0
        %3858 = vmatprep.subr.mxu0 0.0
        %3859 = vmatpush1.xpose.msra.mxu0 0.0
        %3860 = vmatprep.subr.mxu0 0.0
        %3861 = vmatpush1.xpose.msra.mxu0 0.0
        %3862 = vmatprep.subr.mxu0 0.0
        %3863 = vmatpush1.xpose.msra.mxu0 0.0
        %3864 = vmatprep.subr.mxu0 0.0
        %3865 = vmatpush1.xpose.msra.mxu0 0.0
        %3866 = vmatprep.subr.mxu0 0.0
        %3867 = vmatpush1.xpose.msra.mxu0 0.0
        %3868 = vmatprep.subr.mxu0 0.0
        %3869 = vmatpush1.xpose.msra.mxu0 0.0
        %3870 = vmatprep.subr.mxu0 0.0
        %3871 = vmatpush1.xpose.msra.mxu0 0.0
        %3872 = vmatprep.subr.mxu0 0.0
        %3873 = vmatpush1.xpose.msra.mxu0 0.0
        %3874 = vmatprep.subr.mxu0 0.0
        %3875 = vmatpush1.xpose.msra.mxu0 0.0
        %3876 = vmatprep.subr.mxu0 0.0
        %3877 = vmatpush1.xpose.msra.mxu0 0.0
        %3878 = vmatprep.subr.mxu0 0.0
        %3879 = vmatpush1.xpose.msra.mxu0 0.0
        %3880 = vmatprep.subr.mxu0 0.0
        %3881 = vmatpush1.xpose.msra.mxu0 0.0
        %3882 = vmatprep.subr.mxu0 0.0
        %3883 = vmatpush1.xpose.msra.mxu0 0.0
        %3884 = vmatprep.subr.mxu0 0.0
        %3885 = vmatpush1.xpose.msra.mxu0 0.0
        %3886 = vmatprep.subr.mxu0 0.0
        %3887 = vmatpush1.xpose.msra.mxu0 0.0
        %3888 = vmatprep.subr.mxu0 0.0
        %3889 = vmatpush1.xpose.msra.mxu0 0.0
        %3890 = vmatprep.subr.mxu0 0.0
        %3891 = vmatpush1.xpose.msra.mxu0 0.0
        %3892 = vmatprep.subr.mxu0 0.0
        %3893 = vmatpush1.xpose.msra.mxu0 0.0
        %3894 = vmatprep.subr.mxu0 0.0
        %3895 = vmatpush1.xpose.msra.mxu0 0.0
        %3896 = vmatprep.subr.mxu0 0.0
        %3897 = vmatpush1.xpose.msra.mxu0 0.0
        %3898 = vmatprep.subr.mxu0 0.0
        %3899 = vmatpush1.xpose.msra.mxu0 0.0
        %3900 = vmatprep.subr.mxu0 0.0
        %3901 = vmatpush1.xpose.msra.mxu0 0.0
        %3902 = vmatprep.subr.mxu0 0.0
        %3903 = vmatpush1.xpose.msra.mxu0 0.0
        %3904 = vmatprep.subr.mxu0 0.0
        %3905 = vmatpush1.xpose.msra.mxu0 0.0
        %3906 = vmatprep.subr.mxu0 0.0
        %3907 = vmatpush1.xpose.msra.mxu0 0.0
        %3908 = vmatprep.subr.mxu0 0.0
        %3909 = vmatpush1.xpose.msra.mxu0 0.0
        %3910 = vmatprep.subr.mxu0 0.0
        %3911 = vmatpush1.xpose.msra.mxu0 0.0
        %3912 = vmatprep.mubr.f32.mxu0 0.0
        %3913 = vmatmul.mubr.f32.gmra.mrb[0].mxu0 %v3844
        %v3914 = vpop.f32.mrb[0].mxu0
        %v3915 = vadd.f32 0.0, %v3914
        %v3916 = vpop.f32.mrb[0].mxu0
        %3917 = vdwg.mxu0
        %v3918 = vmul.f32 %v3915, 0.17677669
        %v3919 = vsel %vm645, %v3918, -inf
        %3920 = vmax.xlane.f32.xlu0 %v3919
        %v3921 = vpop.xlane.xlu0 %3920
        %v3922 = vsub.f32 %v3918, %v3921
        %v3923 = vmul.f32 %v3922, 1.442695
        %v3924 = vpow.pop %v3923
        %v3925 = vsel %vm645, %v3924, 0.0
        %3926 = vadd.xlane.f32.xlu0 %v3925
        %v3927 = vpop.xlane.xlu0 %3926
        %v3928 = vrcp.pop %v3927
        %v3929 = vmul.f32 %v3924, %v3928
        %3930 = vrot.lane.b32.xlu0 %v3106, 72
        %v3931 = vpop.permute.xlu0 %3930
        %v3934 = vsel %vm645, %v3929, 0
        %3936 = vmatprep.subr.mxu0 0.0
        %3937 = vmatpush1.msra.mxu0 %v3931
        %3938 = vmatprep.subr.mxu0 0.0
        %3939 = vmatpush1.msra.mxu0 0.0
        %3940 = vmatprep.subr.mxu0 0.0
        %3941 = vmatpush1.msra.mxu0 0.0
        %3942 = vmatprep.subr.mxu0 0.0
        %3943 = vmatpush1.msra.mxu0 0.0
        %3944 = vmatprep.subr.mxu0 0.0
        %3945 = vmatpush1.msra.mxu0 0.0
        %3946 = vmatprep.subr.mxu0 0.0
        %3947 = vmatpush1.msra.mxu0 0.0
        %3948 = vmatprep.subr.mxu0 0.0
        %3949 = vmatpush1.msra.mxu0 0.0
        %3950 = vmatprep.subr.mxu0 0.0
        %3951 = vmatpush1.msra.mxu0 0.0
        %3952 = vmatprep.subr.mxu0 0.0
        %3953 = vmatpush1.msra.mxu0 0.0
        %3954 = vmatprep.subr.mxu0 0.0
        %3955 = vmatpush1.msra.mxu0 0.0
        %3956 = vmatprep.subr.mxu0 0.0
        %3957 = vmatpush1.msra.mxu0 0.0
        %3958 = vmatprep.subr.mxu0 0.0
        %3959 = vmatpush1.msra.mxu0 0.0
        %3960 = vmatprep.subr.mxu0 0.0
        %3961 = vmatpush1.msra.mxu0 0.0
        %3962 = vmatprep.subr.mxu0 0.0
        %3963 = vmatpush1.msra.mxu0 0.0
        %3964 = vmatprep.subr.mxu0 0.0
        %3965 = vmatpush1.msra.mxu0 0.0
        %3966 = vmatprep.subr.mxu0 0.0
        %3967 = vmatpush1.msra.mxu0 0.0
        %3968 = vmatprep.subr.mxu0 0.0
        %3969 = vmatpush1.msra.mxu0 0.0
        %3970 = vmatprep.subr.mxu0 0.0
        %3971 = vmatpush1.msra.mxu0 0.0
        %3972 = vmatprep.subr.mxu0 0.0
        %3973 = vmatpush1.msra.mxu0 0.0
        %3974 = vmatprep.subr.mxu0 0.0
        %3975 = vmatpush1.msra.mxu0 0.0
        %3976 = vmatprep.subr.mxu0 0.0
        %3977 = vmatpush1.msra.mxu0 0.0
        %3978 = vmatprep.subr.mxu0 0.0
        %3979 = vmatpush1.msra.mxu0 0.0
        %3980 = vmatprep.subr.mxu0 0.0
        %3981 = vmatpush1.msra.mxu0 0.0
        %3982 = vmatprep.subr.mxu0 0.0
        %3983 = vmatpush1.msra.mxu0 0.0
        %3984 = vmatprep.subr.mxu0 0.0
        %3985 = vmatpush1.msra.mxu0 0.0
        %3986 = vmatprep.subr.mxu0 0.0
        %3987 = vmatpush1.msra.mxu0 0.0
        %3988 = vmatprep.subr.mxu0 0.0
        %3989 = vmatpush1.msra.mxu0 0.0
        %3990 = vmatprep.subr.mxu0 0.0
        %3991 = vmatpush1.msra.mxu0 0.0
        %3992 = vmatprep.subr.mxu0 0.0
        %3993 = vmatpush1.msra.mxu0 0.0
        %3994 = vmatprep.subr.mxu0 0.0
        %3995 = vmatpush1.msra.mxu0 0.0
        %3996 = vmatprep.subr.mxu0 0.0
        %3997 = vmatpush1.msra.mxu0 0.0
        %3998 = vmatprep.subr.mxu0 0.0
        %3999 = vmatpush1.msra.mxu0 0.0
        %4000 = vmatprep.mubr.f32.mxu0 0.0
        %4001 = vmatmul.mubr.f32.gmra.mrb[0].mxu0 %v3934
        %v4002 = vpop.f32.mrb[0].mxu0
        %v4003 = vadd.f32 0.0, %v4002
        %v4004 = vpop.f32.mrb[0].mxu0
        %4005 = vdwg.mxu0
        %4006 = vrot.lane.b32.xlu0 %v2936, 32
        %v4007 = vpop.permute.xlu0 %4006
        %v4010 = vsel %vm645, %v4003, 0
        %4012 = vmatprep.subr.mxu0 0.0
        %4013 = vmatpush1.msra.mxu0 %v4007
        %4014 = vmatprep.subr.mxu0 0.0
        %4015 = vmatpush1.msra.mxu0 0.0
        %4016 = vmatprep.subr.mxu0 0.0
        %4017 = vmatpush1.msra.mxu0 0.0
        %4018 = vmatprep.subr.mxu0 0.0
        %4019 = vmatpush1.msra.mxu0 0.0
        %4020 = vmatprep.subr.mxu0 0.0
        %4021 = vmatpush1.msra.mxu0 0.0
        %4022 = vmatprep.subr.mxu0 0.0
        %4023 = vmatpush1.msra.mxu0 0.0
        %4024 = vmatprep.subr.mxu0 0.0
        %4025 = vmatpush1.msra.mxu0 0.0
        %4026 = vmatprep.subr.mxu0 0.0
        %4027 = vmatpush1.msra.mxu0 0.0
        %4028 = vmatprep.subr.mxu0 0.0
        %4029 = vmatpush1.msra.mxu0 0.0
        %4030 = vmatprep.subr.mxu0 0.0
        %4031 = vmatpush1.msra.mxu0 0.0
        %4032 = vmatprep.subr.mxu0 0.0
        %4033 = vmatpush1.msra.mxu0 0.0
        %4034 = vmatprep.subr.mxu0 0.0
        %4035 = vmatpush1.msra.mxu0 0.0
        %4036 = vmatprep.subr.mxu0 0.0
        %4037 = vmatpush1.msra.mxu0 0.0
        %4038 = vmatprep.subr.mxu0 0.0
        %4039 = vmatpush1.msra.mxu0 0.0
        %4040 = vmatprep.subr.mxu0 0.0
        %4041 = vmatpush1.msra.mxu0 0.0
        %4042 = vmatprep.subr.mxu0 0.0
        %4043 = vmatpush1.msra.mxu0 0.0
        %4044 = vmatprep.subr.mxu0 0.0
        %4045 = vmatpush1.msra.mxu0 0.0
        %4046 = vmatprep.subr.mxu0 0.0
        %4047 = vmatpush1.msra.mxu0 0.0
        %4048 = vmatprep.subr.mxu0 0.0
        %4049 = vmatpush1.msra.mxu0 0.0
        %4050 = vmatprep.subr.mxu0 0.0
        %4051 = vmatpush1.msra.mxu0 0.0
        %4052 = vmatprep.subr.mxu0 0.0
        %4053 = vmatpush1.msra.mxu0 0.0
        %4054 = vmatprep.subr.mxu0 0.0
        %4055 = vmatpush1.msra.mxu0 0.0
        %4056 = vmatprep.subr.mxu0 0.0
        %4057 = vmatpush1.msra.mxu0 0.0
        %4058 = vmatprep.subr.mxu0 0.0
        %4059 = vmatpush1.msra.mxu0 0.0
        %4060 = vmatprep.subr.mxu0 0.0
        %4061 = vmatpush1.msra.mxu0 0.0
        %4062 = vmatprep.subr.mxu0 0.0
        %4063 = vmatpush1.msra.mxu0 0.0
        %4064 = vmatprep.subr.mxu0 0.0
        %4065 = vmatpush1.msra.mxu0 0.0
        %4066 = vmatprep.subr.mxu0 0.0
        %4067 = vmatpush1.msra.mxu0 0.0
        %4068 = vmatprep.subr.mxu0 0.0
        %4069 = vmatpush1.msra.mxu0 0.0
        %4070 = vmatprep.subr.mxu0 0.0
        %4071 = vmatpush1.msra.mxu0 0.0
        %4072 = vmatprep.subr.mxu0 0.0
        %4073 = vmatpush1.msra.mxu0 0.0
        %4074 = vmatprep.subr.mxu0 0.0
        %4075 = vmatpush1.msra.mxu0 0.0
        %4076 = vmatprep.mubr.f32.mxu0 0.0
        %4077 = vmatmul.mubr.f32.gmra.mrb[0].mxu0 %v4010
        %v4078 = vpop.f32.mrb[0].mxu0
        %v4079 = vadd.f32 0.0, %v4078
        %v4080 = vpop.f32.mrb[0].mxu0
        %4081 = vdwg.mxu0
        %v4082 = vadd.f32 %v3839, %v4079
        %v4083 = vadd.f32 %v4082, %v2931
        %v4084 = vsel %vm568, %v4083, 0.0
        %4085 = vadd.xlane.f32.xlu0 %v4084
        %v4086 = vpop.xlane.xlu0 %4085
        %v4087 = vmul.f32 %v4086, %v1626
        %v4088 = vsub.f32 %v4083, %v4087
        %v4089 = vmul.f32 %v4088, %v4088
        %v4090 = vsel %vm568, %v4089, 0.0
        %4091 = vadd.xlane.f32.xlu0 %v4090
        %v4092 = vpop.xlane.xlu0 %4091
        %v4093 = vmul.f32 %v4092, %v1626
        %v4094 = vadd.f32 %v4093, 1e-05
        %v4095 = vrsqrt.pop %v4094
        %v4096 = vmul.f32 %v4088, %v4095
        %4098 = vrot.lane.b32.xlu0 %v3352, 96
        %v4099 = vpop.permute.xlu0 %4098
        %v4101 = vmul.f32 %v4096, %v4099
        %4102 = vrot.lane.b32.xlu0 %v3352, 64
        %v4103 = vpop.permute.xlu0 %4102
        %v4105 = vadd.f32 %v4101, %v4103
        %s4106 = scalar_lea.vmem %s7, 64
        %v4107 = vld [vmem:[%s4106] sm:$0xff]
        %v4108 = vld [vmem:[%s4106 + $0x8] sm:$0xff]
        %v4109 = vld [vmem:[%s4106 + $0x10] sm:$0xff]
        %v4110 = vld [vmem:[%s4106 + $0x18] sm:$0xff]
        %s4111 = scalar_lea.vmem %s8, 256
        %v4112 = vld [vmem:[%s4111] sm:$0xff]
        %v4113 = vld [vmem:[%s4111 + $0x8] sm:$0xff]
        %v4114 = vld [vmem:[%s4111 + $0x10] sm:$0xff]
        %v4115 = vld [vmem:[%s4111 + $0x18] sm:$0xff]
        %v4116 = vld [vmem:[%s4111 + $0x20] sm:$0xff]
        %v4117 = vld [vmem:[%s4111 + $0x28] sm:$0xff]
        %v4118 = vld [vmem:[%s4111 + $0x30] sm:$0xff]
        %v4119 = vld [vmem:[%s4111 + $0x38] sm:$0xff]
        %v4120 = vld [vmem:[%s4111 + $0x40] sm:$0xff]
        %v4121 = vld [vmem:[%s4111 + $0x48] sm:$0xff]
        %v4122 = vld [vmem:[%s4111 + $0x50] sm:$0xff]
        %v4123 = vld [vmem:[%s4111 + $0x58] sm:$0xff]
        %v4124 = vld [vmem:[%s4111 + $0x60] sm:$0xff]
        %v4125 = vld [vmem:[%s4111 + $0x68] sm:$0xff]
        %v4126 = vld [vmem:[%s4111 + $0x70] sm:$0xff]
        %v4127 = vld [vmem:[%s4111 + $0x78] sm:$0xff]
        %s4128 = scalar_lea.vmem %s9, 4
        %v4129 = vld [vmem:[%s4128] sm:$0x3]
        %v4130 = vlaneseq
        %v4131 = vshrl.u32 %v4130, 7
        %v4132 = vsub.s32 0, %v4131
        %v4133 = vrot.slane %v4129, %v4132
        %v4135 = vsel %vm568, %v4105, 0
        %4137 = vmatprep.subr.mxu0 0.0
        %4138 = vmatpush1.msra.mxu0 %v4107
        %4139 = vmatprep.subr.mxu0 0.0
        %4140 = vmatpush1.msra.mxu0 %v4108
        %4141 = vmatprep.subr.mxu0 0.0
        %4142 = vmatpush1.msra.mxu0 %v4109
        %4143 = vmatprep.subr.mxu0 0.0
        %4144 = vmatpush1.msra.mxu0 %v4110
        %4145 = vmatprep.subr.mxu0 0.0
        %4146 = vmatpush1.msra.mxu0 0.0
        %4147 = vmatprep.subr.mxu0 0.0
        %4148 = vmatpush1.msra.mxu0 0.0
        %4149 = vmatprep.subr.mxu0 0.0
        %4150 = vmatpush1.msra.mxu0 0.0
        %4151 = vmatprep.subr.mxu0 0.0
        %4152 = vmatpush1.msra.mxu0 0.0
        %4153 = vmatprep.subr.mxu0 0.0
        %4154 = vmatpush1.msra.mxu0 0.0
        %4155 = vmatprep.subr.mxu0 0.0
        %4156 = vmatpush1.msra.mxu0 0.0
        %4157 = vmatprep.subr.mxu0 0.0
        %4158 = vmatpush1.msra.mxu0 0.0
        %4159 = vmatprep.subr.mxu0 0.0
        %4160 = vmatpush1.msra.mxu0 0.0
        %4161 = vmatprep.subr.mxu0 0.0
        %4162 = vmatpush1.msra.mxu0 0.0
        %4163 = vmatprep.subr.mxu0 0.0
        %4164 = vmatpush1.msra.mxu0 0.0
        %4165 = vmatprep.subr.mxu0 0.0
        %4166 = vmatpush1.msra.mxu0 0.0
        %4167 = vmatprep.subr.mxu0 0.0
        %4168 = vmatpush1.msra.mxu0 0.0
        %4169 = vmatprep.subr.mxu0 0.0
        %4170 = vmatpush1.msra.mxu0 0.0
        %4171 = vmatprep.subr.mxu0 0.0
        %4172 = vmatpush1.msra.mxu0 0.0
        %4173 = vmatprep.subr.mxu0 0.0
        %4174 = vmatpush1.msra.mxu0 0.0
        %4175 = vmatprep.subr.mxu0 0.0
        %4176 = vmatpush1.msra.mxu0 0.0
        %4177 = vmatprep.subr.mxu0 0.0
        %4178 = vmatpush1.msra.mxu0 0.0
        %4179 = vmatprep.subr.mxu0 0.0
        %4180 = vmatpush1.msra.mxu0 0.0
        %4181 = vmatprep.subr.mxu0 0.0
        %4182 = vmatpush1.msra.mxu0 0.0
        %4183 = vmatprep.subr.mxu0 0.0
        %4184 = vmatpush1.msra.mxu0 0.0
        %4185 = vmatprep.subr.mxu0 0.0
        %4186 = vmatpush1.msra.mxu0 0.0
        %4187 = vmatprep.subr.mxu0 0.0
        %4188 = vmatpush1.msra.mxu0 0.0
        %4189 = vmatprep.subr.mxu0 0.0
        %4190 = vmatpush1.msra.mxu0 0.0
        %4191 = vmatprep.subr.mxu0 0.0
        %4192 = vmatpush1.msra.mxu0 0.0
        %4193 = vmatprep.subr.mxu0 0.0
        %4194 = vmatpush1.msra.mxu0 0.0
        %4195 = vmatprep.subr.mxu0 0.0
        %4196 = vmatpush1.msra.mxu0 0.0
        %4197 = vmatprep.subr.mxu0 0.0
        %4198 = vmatpush1.msra.mxu0 0.0
        %4199 = vmatprep.subr.mxu0 0.0
        %4200 = vmatpush1.msra.mxu0 0.0
        %4201 = vmatprep.mubr.f32.mxu0 0.0
        %4202 = vmatmul.mubr.f32.gmra.mrb[0].mxu0 %v4135
        %v4203 = vpop.f32.mrb[0].mxu0
        %v4204 = vadd.f32 %v4133, %v4203
        %v4205 = vpop.f32.mrb[0].mxu0
        %4206 = vdwg.mxu0
        %v4207 = vmax.f32 %v4204, 0.0
        %v4208 = vlaneseq
        %v4209 = vshrl.u32 %v4208, 7
        %v4210 = vsub.s32 1, %v4209
        %v4211 = vrot.slane %v4129, %v4210
        %4212 = vmatprep.subr.mxu0 0.0
        %4213 = vmatpush1.msra.mxu0 %v4112
        %4214 = vmatprep.subr.mxu0 0.0
        %4215 = vmatpush1.msra.mxu0 %v4113
        %4216 = vmatprep.subr.mxu0 0.0
        %4217 = vmatpush1.msra.mxu0 %v4114
        %4218 = vmatprep.subr.mxu0 0.0
        %4219 = vmatpush1.msra.mxu0 %v4115
        %4220 = vmatprep.subr.mxu0 0.0
        %4221 = vmatpush1.msra.mxu0 %v4116
        %4222 = vmatprep.subr.mxu0 0.0
        %4223 = vmatpush1.msra.mxu0 %v4117
        %4224 = vmatprep.subr.mxu0 0.0
        %4225 = vmatpush1.msra.mxu0 %v4118
        %4226 = vmatprep.subr.mxu0 0.0
        %4227 = vmatpush1.msra.mxu0 %v4119
        %4228 = vmatprep.subr.mxu0 0.0
        %4229 = vmatpush1.msra.mxu0 %v4120
        %4230 = vmatprep.subr.mxu0 0.0
        %4231 = vmatpush1.msra.mxu0 %v4121
        %4232 = vmatprep.subr.mxu0 0.0
        %4233 = vmatpush1.msra.mxu0 %v4122
        %4234 = vmatprep.subr.mxu0 0.0
        %4235 = vmatpush1.msra.mxu0 %v4123
        %4236 = vmatprep.subr.mxu0 0.0
        %4237 = vmatpush1.msra.mxu0 %v4124
        %4238 = vmatprep.subr.mxu0 0.0
        %4239 = vmatpush1.msra.mxu0 %v4125
        %4240 = vmatprep.subr.mxu0 0.0
        %4241 = vmatpush1.msra.mxu0 %v4126
        %4242 = vmatprep.subr.mxu0 0.0
        %4243 = vmatpush1.msra.mxu0 %v4127
        %4244 = vmatprep.subr.mxu0 0.0
        %4245 = vmatpush1.msra.mxu0 0.0
        %4246 = vmatprep.subr.mxu0 0.0
        %4247 = vmatpush1.msra.mxu0 0.0
        %4248 = vmatprep.subr.mxu0 0.0
        %4249 = vmatpush1.msra.mxu0 0.0
        %4250 = vmatprep.subr.mxu0 0.0
        %4251 = vmatpush1.msra.mxu0 0.0
        %4252 = vmatprep.subr.mxu0 0.0
        %4253 = vmatpush1.msra.mxu0 0.0
        %4254 = vmatprep.subr.mxu0 0.0
        %4255 = vmatpush1.msra.mxu0 0.0
        %4256 = vmatprep.subr.mxu0 0.0
        %4257 = vmatpush1.msra.mxu0 0.0
        %4258 = vmatprep.subr.mxu0 0.0
        %4259 = vmatpush1.msra.mxu0 0.0
        %4260 = vmatprep.subr.mxu0 0.0
        %4261 = vmatpush1.msra.mxu0 0.0
        %4262 = vmatprep.subr.mxu0 0.0
        %4263 = vmatpush1.msra.mxu0 0.0
        %4264 = vmatprep.subr.mxu0 0.0
        %4265 = vmatpush1.msra.mxu0 0.0
        %4266 = vmatprep.subr.mxu0 0.0
        %4267 = vmatpush1.msra.mxu0 0.0
        %4268 = vmatprep.subr.mxu0 0.0
        %4269 = vmatpush1.msra.mxu0 0.0
        %4270 = vmatprep.subr.mxu0 0.0
        %4271 = vmatpush1.msra.mxu0 0.0
        %4272 = vmatprep.subr.mxu0 0.0
        %4273 = vmatpush1.msra.mxu0 0.0
        %4274 = vmatprep.subr.mxu0 0.0
        %4275 = vmatpush1.msra.mxu0 0.0
        %4276 = vmatprep.mubr.f32.mxu0 0.0
        %4277 = vmatmul.mubr.f32.gmra.mrb[0].mxu0 %v4207
        %v4278 = vpop.f32.mrb[0].mxu0
        %v4279 = vadd.f32 %v4211, %v4278
        %v4280 = vpop.f32.mrb[0].mxu0
        %4281 = vdwg.mxu0
        %v4282 = vadd.f32 %v4279, %v4105
        %v4283 = vsel %vm568, %v4282, 0.0
        %4284 = vadd.xlane.f32.xlu0 %v4283
        %v4285 = vpop.xlane.xlu0 %4284
        %v4286 = vmul.f32 %v4285, %v1626
        %v4287 = vsub.f32 %v4282, %v4286
        %v4288 = vmul.f32 %v4287, %v4287
        %v4289 = vsel %vm568, %v4288, 0.0
        %4290 = vadd.xlane.f32.xlu0 %v4289
        %v4291 = vpop.xlane.xlu0 %4290
        %v4292 = vmul.f32 %v4291, %v1626
        %v4293 = vadd.f32 %v4292, 1e-05
        %v4294 = vrsqrt.pop %v4293
        %v4295 = vmul.f32 %v4287, %v4294
        %4297 = vrot.lane.b32.xlu0 %v4211, 96
        %v4298 = vpop.permute.xlu0 %4297
        %v4300 = vmul.f32 %v4295, %v4298
        %4301 = vrot.lane.b32.xlu0 %v4211, 64
        %v4302 = vpop.permute.xlu0 %4301
        %v4304 = vadd.f32 %v4300, %v4302
        %s4305 = scalar_lea.vmem %s5, 128
        %v4306 = vld [vmem:[%s4305] sm:$0xff]
        %v4307 = vld [vmem:[%s4305 + $0x8] sm:$0xff]
        %v4308 = vld [vmem:[%s4305 + $0x10] sm:$0xff]
        %v4309 = vld [vmem:[%s4305 + $0x18] sm:$0xff]
        %s4310 = scalar_lea.vmem %s6, 8
        %v4311 = vld [vmem:[%s4310] sm:$0x3]
        %v4312 = vlaneseq
        %v4313 = vshrl.u32 %v4312, 7
        %v4314 = vsub.s32 0, %v4313
        %v4315 = vrot.slane %v4311, %v4314
        %v4317 = vsel %vm568, %v4304, 0
        %4319 = vmatprep.subr.mxu0 0.0
        %4320 = vmatpush1.msra.mxu0 %v4306
        %4321 = vmatprep.subr.mxu0 0.0
        %4322 = vmatpush1.msra.mxu0 %v4307
        %4323 = vmatprep.subr.mxu0 0.0
        %4324 = vmatpush1.msra.mxu0 %v4308
        %4325 = vmatprep.subr.mxu0 0.0
        %4326 = vmatpush1.msra.mxu0 %v4309
        %4327 = vmatprep.subr.mxu0 0.0
        %4328 = vmatpush1.msra.mxu0 0.0
        %4329 = vmatprep.subr.mxu0 0.0
        %4330 = vmatpush1.msra.mxu0 0.0
        %4331 = vmatprep.subr.mxu0 0.0
        %4332 = vmatpush1.msra.mxu0 0.0
        %4333 = vmatprep.subr.mxu0 0.0
        %4334 = vmatpush1.msra.mxu0 0.0
        %4335 = vmatprep.subr.mxu0 0.0
        %4336 = vmatpush1.msra.mxu0 0.0
        %4337 = vmatprep.subr.mxu0 0.0
        %4338 = vmatpush1.msra.mxu0 0.0
        %4339 = vmatprep.subr.mxu0 0.0
        %4340 = vmatpush1.msra.mxu0 0.0
        %4341 = vmatprep.subr.mxu0 0.0
        %4342 = vmatpush1.msra.mxu0 0.0
        %4343 = vmatprep.subr.mxu0 0.0
        %4344 = vmatpush1.msra.mxu0 0.0
        %4345 = vmatprep.subr.mxu0 0.0
        %4346 = vmatpush1.msra.mxu0 0.0
        %4347 = vmatprep.subr.mxu0 0.0
        %4348 = vmatpush1.msra.mxu0 0.0
        %4349 = vmatprep.subr.mxu0 0.0
        %4350 = vmatpush1.msra.mxu0 0.0
        %4351 = vmatprep.subr.mxu0 0.0
        %4352 = vmatpush1.msra.mxu0 0.0
        %4353 = vmatprep.subr.mxu0 0.0
        %4354 = vmatpush1.msra.mxu0 0.0
        %4355 = vmatprep.subr.mxu0 0.0
        %4356 = vmatpush1.msra.mxu0 0.0
        %4357 = vmatprep.subr.mxu0 0.0
        %4358 = vmatpush1.msra.mxu0 0.0
        %4359 = vmatprep.subr.mxu0 0.0
        %4360 = vmatpush1.msra.mxu0 0.0
        %4361 = vmatprep.subr.mxu0 0.0
        %4362 = vmatpush1.msra.mxu0 0.0
        %4363 = vmatprep.subr.mxu0 0.0
        %4364 = vmatpush1.msra.mxu0 0.0
        %4365 = vmatprep.subr.mxu0 0.0
        %4366 = vmatpush1.msra.mxu0 0.0
        %4367 = vmatprep.subr.mxu0 0.0
        %4368 = vmatpush1.msra.mxu0 0.0
        %4369 = vmatprep.subr.mxu0 0.0
        %4370 = vmatpush1.msra.mxu0 0.0
        %4371 = vmatprep.subr.mxu0 0.0
        %4372 = vmatpush1.msra.mxu0 0.0
        %4373 = vmatprep.subr.mxu0 0.0
        %4374 = vmatpush1.msra.mxu0 0.0
        %4375 = vmatprep.subr.mxu0 0.0
        %4376 = vmatpush1.msra.mxu0 0.0
        %4377 = vmatprep.subr.mxu0 0.0
        %4378 = vmatpush1.msra.mxu0 0.0
        %4379 = vmatprep.subr.mxu0 0.0
        %4380 = vmatpush1.msra.mxu0 0.0
        %4381 = vmatprep.subr.mxu0 0.0
        %4382 = vmatpush1.msra.mxu0 0.0
        %4383 = vmatprep.mubr.f32.mxu0 0.0
        %4384 = vmatmul.mubr.f32.gmra.mrb[0].mxu0 %v4317
        %v4385 = vpop.f32.mrb[0].mxu0
        %v4386 = vadd.f32 %v4315, %v4385
        %v4387 = vpop.f32.mrb[0].mxu0
        %4388 = vdwg.mxu0
        %4390 = vrot.lane.b32.xlu0 %v4386, 96
        %v4391 = vpop.permute.xlu0 %4390
        %v4392 = vsel %vm645, %v4386, 0
        %v4394 = vsel %vm645, %v4391, 0
        %4396 = vmatprep.subr.mxu0 0.0
        %4397 = vmatpush1.xpose.msra.mxu0 %v4394
        %4398 = vmatprep.subr.mxu0 0.0
        %4399 = vmatpush1.xpose.msra.mxu0 0.0
        %4400 = vmatprep.subr.mxu0 0.0
        %4401 = vmatpush1.xpose.msra.mxu0 0.0
        %4402 = vmatprep.subr.mxu0 0.0
        %4403 = vmatpush1.xpose.msra.mxu0 0.0
        %4404 = vmatprep.subr.mxu0 0.0
        %4405 = vmatpush1.xpose.msra.mxu0 0.0
        %4406 = vmatprep.subr.mxu0 0.0
        %4407 = vmatpush1.xpose.msra.mxu0 0.0
        %4408 = vmatprep.subr.mxu0 0.0
        %4409 = vmatpush1.xpose.msra.mxu0 0.0
        %4410 = vmatprep.subr.mxu0 0.0
        %4411 = vmatpush1.xpose.msra.mxu0 0.0
        %4412 = vmatprep.subr.mxu0 0.0
        %4413 = vmatpush1.xpose.msra.mxu0 0.0
        %4414 = vmatprep.subr.mxu0 0.0
        %4415 = vmatpush1.xpose.msra.mxu0 0.0
        %4416 = vmatprep.subr.mxu0 0.0
        %4417 = vmatpush1.xpose.msra.mxu0 0.0
        %4418 = vmatprep.subr.mxu0 0.0
        %4419 = vmatpush1.xpose.msra.mxu0 0.0
        %4420 = vmatprep.subr.mxu0 0.0
        %4421 = vmatpush1.xpose.msra.mxu0 0.0
        %4422 = vmatprep.subr.mxu0 0.0
        %4423 = vmatpush1.xpose.msra.mxu0 0.0
        %4424 = vmatprep.subr.mxu0 0.0
        %4425 = vmatpush1.xpose.msra.mxu0 0.0
        %4426 = vmatprep.subr.mxu0 0.0
        %4427 = vmatpush1.xpose.msra.mxu0 0.0
        %4428 = vmatprep.subr.mxu0 0.0
        %4429 = vmatpush1.xpose.msra.mxu0 0.0
        %4430 = vmatprep.subr.mxu0 0.0
        %4431 = vmatpush1.xpose.msra.mxu0 0.0
        %4432 = vmatprep.subr.mxu0 0.0
        %4433 = vmatpush1.xpose.msra.mxu0 0.0
        %4434 = vmatprep.subr.mxu0 0.0
        %4435 = vmatpush1.xpose.msra.mxu0 0.0
        %4436 = vmatprep.subr.mxu0 0.0
        %4437 = vmatpush1.xpose.msra.mxu0 0.0
        %4438 = vmatprep.subr.mxu0 0.0
        %4439 = vmatpush1.xpose.msra.mxu0 0.0
        %4440 = vmatprep.subr.mxu0 0.0
        %4441 = vmatpush1.xpose.msra.mxu0 0.0
        %4442 = vmatprep.subr.mxu0 0.0
        %4443 = vmatpush1.xpose.msra.mxu0 0.0
        %4444 = vmatprep.subr.mxu0 0.0
        %4445 = vmatpush1.xpose.msra.mxu0 0.0
        %4446 = vmatprep.subr.mxu0 0.0
        %4447 = vmatpush1.xpose.msra.mxu0 0.0
        %4448 = vmatprep.subr.mxu0 0.0
        %4449 = vmatpush1.xpose.msra.mxu0 0.0
        %4450 = vmatprep.subr.mxu0 0.0
        %4451 = vmatpush1.xpose.msra.mxu0 0.0
        %4452 = vmatprep.subr.mxu0 0.0
        %4453 = vmatpush1.xpose.msra.mxu0 0.0
        %4454 = vmatprep.subr.mxu0 0.0
        %4455 = vmatpush1.xpose.msra.mxu0 0.0
        %4456 = vmatprep.subr.mxu0 0.0
        %4457 = vmatpush1.xpose.msra.mxu0 0.0
        %4458 = vmatprep.subr.mxu0 0.0
        %4459 = vmatpush1.xpose.msra.mxu0 0.0
        %4460 = vmatprep.mubr.f32.mxu0 0.0
        %4461 = vmatmul.mubr.f32.gmra.mrb[0].mxu0 %v4392
        %v4462 = vpop.f32.mrb[0].mxu0
        %v4463 = vadd.f32 %v556, %v4462
        %v4464 = vpop.f32.mrb[0].mxu0
        %4465 = vdwg.mxu0
        %v4466 = vmul.f32 %v4463, 0.17677669
        %v4467 = vsel %vm645, %v4466, -inf
        %4468 = vmax.xlane.f32.xlu0 %v4467
        %v4469 = vpop.xlane.xlu0 %4468
        %v4470 = vsub.f32 %v4466, %v4469
        %v4471 = vmul.f32 %v4470, 1.442695
        %v4472 = vpow.pop %v4471
        %v4473 = vsel %vm645, %v4472, 0.0
        %4474 = vadd.xlane.f32.xlu0 %v4473
        %v4475 = vpop.xlane.xlu0 %4474
        %v4476 = vrcp.pop %v4475
        %v4477 = vmul.f32 %v4472, %v4476
        %4478 = vrot.lane.b32.xlu0 %v4386, 64
        %v4479 = vpop.permute.xlu0 %4478
        %v4482 = vsel %vm645, %v4477, 0
        %4484 = vmatprep.subr.mxu0 0.0
        %4485 = vmatpush1.msra.mxu0 %v4479
        %4486 = vmatprep.subr.mxu0 0.0
        %4487 = vmatpush1.msra.mxu0 0.0
        %4488 = vmatprep.subr.mxu0 0.0
        %4489 = vmatpush1.msra.mxu0 0.0
        %4490 = vmatprep.subr.mxu0 0.0
        %4491 = vmatpush1.msra.mxu0 0.0
        %4492 = vmatprep.subr.mxu0 0.0
        %4493 = vmatpush1.msra.mxu0 0.0
        %4494 = vmatprep.subr.mxu0 0.0
        %4495 = vmatpush1.msra.mxu0 0.0
        %4496 = vmatprep.subr.mxu0 0.0
        %4497 = vmatpush1.msra.mxu0 0.0
        %4498 = vmatprep.subr.mxu0 0.0
        %4499 = vmatpush1.msra.mxu0 0.0
        %4500 = vmatprep.subr.mxu0 0.0
        %4501 = vmatpush1.msra.mxu0 0.0
        %4502 = vmatprep.subr.mxu0 0.0
        %4503 = vmatpush1.msra.mxu0 0.0
        %4504 = vmatprep.subr.mxu0 0.0
        %4505 = vmatpush1.msra.mxu0 0.0
        %4506 = vmatprep.subr.mxu0 0.0
        %4507 = vmatpush1.msra.mxu0 0.0
        %4508 = vmatprep.subr.mxu0 0.0
        %4509 = vmatpush1.msra.mxu0 0.0
        %4510 = vmatprep.subr.mxu0 0.0
        %4511 = vmatpush1.msra.mxu0 0.0
        %4512 = vmatprep.subr.mxu0 0.0
        %4513 = vmatpush1.msra.mxu0 0.0
        %4514 = vmatprep.subr.mxu0 0.0
        %4515 = vmatpush1.msra.mxu0 0.0
        %4516 = vmatprep.subr.mxu0 0.0
        %4517 = vmatpush1.msra.mxu0 0.0
        %4518 = vmatprep.subr.mxu0 0.0
        %4519 = vmatpush1.msra.mxu0 0.0
        %4520 = vmatprep.subr.mxu0 0.0
        %4521 = vmatpush1.msra.mxu0 0.0
        %4522 = vmatprep.subr.mxu0 0.0
        %4523 = vmatpush1.msra.mxu0 0.0
        %4524 = vmatprep.subr.mxu0 0.0
        %4525 = vmatpush1.msra.mxu0 0.0
        %4526 = vmatprep.subr.mxu0 0.0
        %4527 = vmatpush1.msra.mxu0 0.0
        %4528 = vmatprep.subr.mxu0 0.0
        %4529 = vmatpush1.msra.mxu0 0.0
        %4530 = vmatprep.subr.mxu0 0.0
        %4531 = vmatpush1.msra.mxu0 0.0
        %4532 = vmatprep.subr.mxu0 0.0
        %4533 = vmatpush1.msra.mxu0 0.0
        %4534 = vmatprep.subr.mxu0 0.0
        %4535 = vmatpush1.msra.mxu0 0.0
        %4536 = vmatprep.subr.mxu0 0.0
        %4537 = vmatpush1.msra.mxu0 0.0
        %4538 = vmatprep.subr.mxu0 0.0
        %4539 = vmatpush1.msra.mxu0 0.0
        %4540 = vmatprep.subr.mxu0 0.0
        %4541 = vmatpush1.msra.mxu0 0.0
        %4542 = vmatprep.subr.mxu0 0.0
        %4543 = vmatpush1.msra.mxu0 0.0
        %4544 = vmatprep.subr.mxu0 0.0
        %4545 = vmatpush1.msra.mxu0 0.0
        %4546 = vmatprep.subr.mxu0 0.0
        %4547 = vmatpush1.msra.mxu0 0.0
        %4548 = vmatprep.mubr.f32.mxu0 0.0
        %4549 = vmatmul.mubr.f32.gmra.mrb[0].mxu0 %v4482
        %v4550 = vpop.f32.mrb[0].mxu0
        %v4551 = vadd.f32 0.0, %v4550
        %v4552 = vpop.f32.mrb[0].mxu0
        %4553 = vdwg.mxu0
        %4555 = vrot.lane.b32.xlu0 %v4306, 32
        %v4556 = vpop.permute.xlu0 %4555
        %v4559 = vsel %vm645, %v4551, 0
        %4561 = vmatprep.subr.mxu0 0.0
        %4562 = vmatpush1.msra.mxu0 %v4556
        %4563 = vmatprep.subr.mxu0 0.0
        %4564 = vmatpush1.msra.mxu0 0.0
        %4565 = vmatprep.subr.mxu0 0.0
        %4566 = vmatpush1.msra.mxu0 0.0
        %4567 = vmatprep.subr.mxu0 0.0
        %4568 = vmatpush1.msra.mxu0 0.0
        %4569 = vmatprep.subr.mxu0 0.0
        %4570 = vmatpush1.msra.mxu0 0.0
        %4571 = vmatprep.subr.mxu0 0.0
        %4572 = vmatpush1.msra.mxu0 0.0
        %4573 = vmatprep.subr.mxu0 0.0
        %4574 = vmatpush1.msra.mxu0 0.0
        %4575 = vmatprep.subr.mxu0 0.0
        %4576 = vmatpush1.msra.mxu0 0.0
        %4577 = vmatprep.subr.mxu0 0.0
        %4578 = vmatpush1.msra.mxu0 0.0
        %4579 = vmatprep.subr.mxu0 0.0
        %4580 = vmatpush1.msra.mxu0 0.0
        %4581 = vmatprep.subr.mxu0 0.0
        %4582 = vmatpush1.msra.mxu0 0.0
        %4583 = vmatprep.subr.mxu0 0.0
        %4584 = vmatpush1.msra.mxu0 0.0
        %4585 = vmatprep.subr.mxu0 0.0
        %4586 = vmatpush1.msra.mxu0 0.0
        %4587 = vmatprep.subr.mxu0 0.0
        %4588 = vmatpush1.msra.mxu0 0.0
        %4589 = vmatprep.subr.mxu0 0.0
        %4590 = vmatpush1.msra.mxu0 0.0
        %4591 = vmatprep.subr.mxu0 0.0
        %4592 = vmatpush1.msra.mxu0 0.0
        %4593 = vmatprep.subr.mxu0 0.0
        %4594 = vmatpush1.msra.mxu0 0.0
        %4595 = vmatprep.subr.mxu0 0.0
        %4596 = vmatpush1.msra.mxu0 0.0
        %4597 = vmatprep.subr.mxu0 0.0
        %4598 = vmatpush1.msra.mxu0 0.0
        %4599 = vmatprep.subr.mxu0 0.0
        %4600 = vmatpush1.msra.mxu0 0.0
        %4601 = vmatprep.subr.mxu0 0.0
        %4602 = vmatpush1.msra.mxu0 0.0
        %4603 = vmatprep.subr.mxu0 0.0
        %4604 = vmatpush1.msra.mxu0 0.0
        %4605 = vmatprep.subr.mxu0 0.0
        %4606 = vmatpush1.msra.mxu0 0.0
        %4607 = vmatprep.subr.mxu0 0.0
        %4608 = vmatpush1.msra.mxu0 0.0
        %4609 = vmatprep.subr.mxu0 0.0
        %4610 = vmatpush1.msra.mxu0 0.0
        %4611 = vmatprep.subr.mxu0 0.0
        %4612 = vmatpush1.msra.mxu0 0.0
        %4613 = vmatprep.subr.mxu0 0.0
        %4614 = vmatpush1.msra.mxu0 0.0
        %4615 = vmatprep.subr.mxu0 0.0
        %4616 = vmatpush1.msra.mxu0 0.0
        %4617 = vmatprep.subr.mxu0 0.0
        %4618 = vmatpush1.msra.mxu0 0.0
        %4619 = vmatprep.subr.mxu0 0.0
        %4620 = vmatpush1.msra.mxu0 0.0
        %4621 = vmatprep.subr.mxu0 0.0
        %4622 = vmatpush1.msra.mxu0 0.0
        %4623 = vmatprep.subr.mxu0 0.0
        %4624 = vmatpush1.msra.mxu0 0.0
        %4625 = vmatprep.mubr.f32.mxu0 0.0
        %4626 = vmatmul.mubr.f32.gmra.mrb[0].mxu0 %v4559
        %v4627 = vpop.f32.mrb[0].mxu0
        %v4628 = vadd.f32 0.0, %v4627
        %v4629 = vpop.f32.mrb[0].mxu0
        %4630 = vdwg.mxu0
        %v4631 = vlaneseq
        %v4632 = vshrl.u32 %v4631, 7
        %v4633 = vsub.s32 1, %v4632
        %v4634 = vrot.slane %v4311, %v4633
        %v4635 = vadd.f32 %v4634, %v4628
        %4636 = vrot.lane.b32.xlu0 %v4386, 120
        %v4637 = vpop.permute.xlu0 %4636
        %4638 = vrot.lane.b32.xlu0 %v4386, 88
        %v4639 = vpop.permute.xlu0 %4638
        %v4640 = vsel %vm645, %v4637, 0
        %v4642 = vsel %vm645, %v4639, 0
        %4644 = vmatprep.subr.mxu0 0.0
        %4645 = vmatpush1.xpose.msra.mxu0 %v4642
        %4646 = vmatprep.subr.mxu0 0.0
        %4647 = vmatpush1.xpose.msra.mxu0 0.0
        %4648 = vmatprep.subr.mxu0 0.0
        %4649 = vmatpush1.xpose.msra.mxu0 0.0
        %4650 = vmatprep.subr.mxu0 0.0
        %4651 = vmatpush1.xpose.msra.mxu0 0.0
        %4652 = vmatprep.subr.mxu0 0.0
        %4653 = vmatpush1.xpose.msra.mxu0 0.0
        %4654 = vmatprep.subr.mxu0 0.0
        %4655 = vmatpush1.xpose.msra.mxu0 0.0
        %4656 = vmatprep.subr.mxu0 0.0
        %4657 = vmatpush1.xpose.msra.mxu0 0.0
        %4658 = vmatprep.subr.mxu0 0.0
        %4659 = vmatpush1.xpose.msra.mxu0 0.0
        %4660 = vmatprep.subr.mxu0 0.0
        %4661 = vmatpush1.xpose.msra.mxu0 0.0
        %4662 = vmatprep.subr.mxu0 0.0
        %4663 = vmatpush1.xpose.msra.mxu0 0.0
        %4664 = vmatprep.subr.mxu0 0.0
        %4665 = vmatpush1.xpose.msra.mxu0 0.0
        %4666 = vmatprep.subr.mxu0 0.0
        %4667 = vmatpush1.xpose.msra.mxu0 0.0
        %4668 = vmatprep.subr.mxu0 0.0
        %4669 = vmatpush1.xpose.msra.mxu0 0.0
        %4670 = vmatprep.subr.mxu0 0.0
        %4671 = vmatpush1.xpose.msra.mxu0 0.0
        %4672 = vmatprep.subr.mxu0 0.0
        %4673 = vmatpush1.xpose.msra.mxu0 0.0
        %4674 = vmatprep.subr.mxu0 0.0
        %4675 = vmatpush1.xpose.msra.mxu0 0.0
        %4676 = vmatprep.subr.mxu0 0.0
        %4677 = vmatpush1.xpose.msra.mxu0 0.0
        %4678 = vmatprep.subr.mxu0 0.0
        %4679 = vmatpush1.xpose.msra.mxu0 0.0
        %4680 = vmatprep.subr.mxu0 0.0
        %4681 = vmatpush1.xpose.msra.mxu0 0.0
        %4682 = vmatprep.subr.mxu0 0.0
        %4683 = vmatpush1.xpose.msra.mxu0 0.0
        %4684 = vmatprep.subr.mxu0 0.0
        %4685 = vmatpush1.xpose.msra.mxu0 0.0
        %4686 = vmatprep.subr.mxu0 0.0
        %4687 = vmatpush1.xpose.msra.mxu0 0.0
        %4688 = vmatprep.subr.mxu0 0.0
        %4689 = vmatpush1.xpose.msra.mxu0 0.0
        %4690 = vmatprep.subr.mxu0 0.0
        %4691 = vmatpush1.xpose.msra.mxu0 0.0
        %4692 = vmatprep.subr.mxu0 0.0
        %4693 = vmatpush1.xpose.msra.mxu0 0.0
        %4694 = vmatprep.subr.mxu0 0.0
        %4695 = vmatpush1.xpose.msra.mxu0 0.0
        %4696 = vmatprep.subr.mxu0 0.0
        %4697 = vmatpush1.xpose.msra.mxu0 0.0
        %4698 = vmatprep.subr.mxu0 0.0
        %4699 = vmatpush1.xpose.msra.mxu0 0.0
        %4700 = vmatprep.subr.mxu0 0.0
        %4701 = vmatpush1.xpose.msra.mxu0 0.0
        %4702 = vmatprep.subr.mxu0 0.0
        %4703 = vmatpush1.xpose.msra.mxu0 0.0
        %4704 = vmatprep.subr.mxu0 0.0
        %4705 = vmatpush1.xpose.msra.mxu0 0.0
        %4706 = vmatprep.subr.mxu0 0.0
        %4707 = vmatpush1.xpose.msra.mxu0 0.0
        %4708 = vmatprep.mubr.f32.mxu0 0.0
        %4709 = vmatmul.mubr.f32.gmra.mrb[0].mxu0 %v4640
        %v4710 = vpop.f32.mrb[0].mxu0
        %v4711 = vadd.f32 %v556, %v4710
        %v4712 = vpop.f32.mrb[0].mxu0
        %4713 = vdwg.mxu0
        %v4714 = vmul.f32 %v4711, 0.17677669
        %v4715 = vsel %vm645, %v4714, -inf
        %4716 = vmax.xlane.f32.xlu0 %v4715
        %v4717 = vpop.xlane.xlu0 %4716
        %v4718 = vsub.f32 %v4714, %v4717
        %v4719 = vmul.f32 %v4718, 1.442695
        %v4720 = vpow.pop %v4719
        %v4721 = vsel %vm645, %v4720, 0.0
        %4722 = vadd.xlane.f32.xlu0 %v4721
        %v4723 = vpop.xlane.xlu0 %4722
        %v4724 = vrcp.pop %v4723
        %v4725 = vmul.f32 %v4720, %v4724
        %4726 = vrot.lane.b32.xlu0 %v4386, 56
        %v4727 = vpop.permute.xlu0 %4726
        %v4730 = vsel %vm645, %v4725, 0
        %4732 = vmatprep.subr.mxu0 0.0
        %4733 = vmatpush1.msra.mxu0 %v4727
        %4734 = vmatprep.subr.mxu0 0.0
        %4735 = vmatpush1.msra.mxu0 0.0
        %4736 = vmatprep.subr.mxu0 0.0
        %4737 = vmatpush1.msra.mxu0 0.0
        %4738 = vmatprep.subr.mxu0 0.0
        %4739 = vmatpush1.msra.mxu0 0.0
        %4740 = vmatprep.subr.mxu0 0.0
        %4741 = vmatpush1.msra.mxu0 0.0
        %4742 = vmatprep.subr.mxu0 0.0
        %4743 = vmatpush1.msra.mxu0 0.0
        %4744 = vmatprep.subr.mxu0 0.0
        %4745 = vmatpush1.msra.mxu0 0.0
        %4746 = vmatprep.subr.mxu0 0.0
        %4747 = vmatpush1.msra.mxu0 0.0
        %4748 = vmatprep.subr.mxu0 0.0
        %4749 = vmatpush1.msra.mxu0 0.0
        %4750 = vmatprep.subr.mxu0 0.0
        %4751 = vmatpush1.msra.mxu0 0.0
        %4752 = vmatprep.subr.mxu0 0.0
        %4753 = vmatpush1.msra.mxu0 0.0
        %4754 = vmatprep.subr.mxu0 0.0
        %4755 = vmatpush1.msra.mxu0 0.0
        %4756 = vmatprep.subr.mxu0 0.0
        %4757 = vmatpush1.msra.mxu0 0.0
        %4758 = vmatprep.subr.mxu0 0.0
        %4759 = vmatpush1.msra.mxu0 0.0
        %4760 = vmatprep.subr.mxu0 0.0
        %4761 = vmatpush1.msra.mxu0 0.0
        %4762 = vmatprep.subr.mxu0 0.0
        %4763 = vmatpush1.msra.mxu0 0.0
        %4764 = vmatprep.subr.mxu0 0.0
        %4765 = vmatpush1.msra.mxu0 0.0
        %4766 = vmatprep.subr.mxu0 0.0
        %4767 = vmatpush1.msra.mxu0 0.0
        %4768 = vmatprep.subr.mxu0 0.0
        %4769 = vmatpush1.msra.mxu0 0.0
        %4770 = vmatprep.subr.mxu0 0.0
        %4771 = vmatpush1.msra.mxu0 0.0
        %4772 = vmatprep.subr.mxu0 0.0
        %4773 = vmatpush1.msra.mxu0 0.0
        %4774 = vmatprep.subr.mxu0 0.0
        %4775 = vmatpush1.msra.mxu0 0.0
        %4776 = vmatprep.subr.mxu0 0.0
        %4777 = vmatpush1.msra.mxu0 0.0
        %4778 = vmatprep.subr.mxu0 0.0
        %4779 = vmatpush1.msra.mxu0 0.0
        %4780 = vmatprep.subr.mxu0 0.0
        %4781 = vmatpush1.msra.mxu0 0.0
        %4782 = vmatprep.subr.mxu0 0.0
        %4783 = vmatpush1.msra.mxu0 0.0
        %4784 = vmatprep.subr.mxu0 0.0
        %4785 = vmatpush1.msra.mxu0 0.0
        %4786 = vmatprep.subr.mxu0 0.0
        %4787 = vmatpush1.msra.mxu0 0.0
        %4788 = vmatprep.subr.mxu0 0.0
        %4789 = vmatpush1.msra.mxu0 0.0
        %4790 = vmatprep.subr.mxu0 0.0
        %4791 = vmatpush1.msra.mxu0 0.0
        %4792 = vmatprep.subr.mxu0 0.0
        %4793 = vmatpush1.msra.mxu0 0.0
        %4794 = vmatprep.subr.mxu0 0.0
        %4795 = vmatpush1.msra.mxu0 0.0
        %4796 = vmatprep.mubr.f32.mxu0 0.0
        %4797 = vmatmul.mubr.f32.gmra.mrb[0].mxu0 %v4730
        %v4798 = vpop.f32.mrb[0].mxu0
        %v4799 = vadd.f32 0.0, %v4798
        %v4800 = vpop.f32.mrb[0].mxu0
        %4801 = vdwg.mxu0
        %4803 = vrot.lane.b32.xlu0 %v4307, 32
        %v4804 = vpop.permute.xlu0 %4803
        %v4807 = vsel %vm645, %v4799, 0
        %4809 = vmatprep.subr.mxu0 0.0
        %4810 = vmatpush1.msra.mxu0 %v4804
        %4811 = vmatprep.subr.mxu0 0.0
        %4812 = vmatpush1.msra.mxu0 0.0
        %4813 = vmatprep.subr.mxu0 0.0
        %4814 = vmatpush1.msra.mxu0 0.0
        %4815 = vmatprep.subr.mxu0 0.0
        %4816 = vmatpush1.msra.mxu0 0.0
        %4817 = vmatprep.subr.mxu0 0.0
        %4818 = vmatpush1.msra.mxu0 0.0
        %4819 = vmatprep.subr.mxu0 0.0
        %4820 = vmatpush1.msra.mxu0 0.0
        %4821 = vmatprep.subr.mxu0 0.0
        %4822 = vmatpush1.msra.mxu0 0.0
        %4823 = vmatprep.subr.mxu0 0.0
        %4824 = vmatpush1.msra.mxu0 0.0
        %4825 = vmatprep.subr.mxu0 0.0
        %4826 = vmatpush1.msra.mxu0 0.0
        %4827 = vmatprep.subr.mxu0 0.0
        %4828 = vmatpush1.msra.mxu0 0.0
        %4829 = vmatprep.subr.mxu0 0.0
        %4830 = vmatpush1.msra.mxu0 0.0
        %4831 = vmatprep.subr.mxu0 0.0
        %4832 = vmatpush1.msra.mxu0 0.0
        %4833 = vmatprep.subr.mxu0 0.0
        %4834 = vmatpush1.msra.mxu0 0.0
        %4835 = vmatprep.subr.mxu0 0.0
        %4836 = vmatpush1.msra.mxu0 0.0
        %4837 = vmatprep.subr.mxu0 0.0
        %4838 = vmatpush1.msra.mxu0 0.0
        %4839 = vmatprep.subr.mxu0 0.0
        %4840 = vmatpush1.msra.mxu0 0.0
        %4841 = vmatprep.subr.mxu0 0.0
        %4842 = vmatpush1.msra.mxu0 0.0
        %4843 = vmatprep.subr.mxu0 0.0
        %4844 = vmatpush1.msra.mxu0 0.0
        %4845 = vmatprep.subr.mxu0 0.0
        %4846 = vmatpush1.msra.mxu0 0.0
        %4847 = vmatprep.subr.mxu0 0.0
        %4848 = vmatpush1.msra.mxu0 0.0
        %4849 = vmatprep.subr.mxu0 0.0
        %4850 = vmatpush1.msra.mxu0 0.0
        %4851 = vmatprep.subr.mxu0 0.0
        %4852 = vmatpush1.msra.mxu0 0.0
        %4853 = vmatprep.subr.mxu0 0.0
        %4854 = vmatpush1.msra.mxu0 0.0
        %4855 = vmatprep.subr.mxu0 0.0
        %4856 = vmatpush1.msra.mxu0 0.0
        %4857 = vmatprep.subr.mxu0 0.0
        %4858 = vmatpush1.msra.mxu0 0.0
        %4859 = vmatprep.subr.mxu0 0.0
        %4860 = vmatpush1.msra.mxu0 0.0
        %4861 = vmatprep.subr.mxu0 0.0
        %4862 = vmatpush1.msra.mxu0 0.0
        %4863 = vmatprep.subr.mxu0 0.0
        %4864 = vmatpush1.msra.mxu0 0.0
        %4865 = vmatprep.subr.mxu0 0.0
        %4866 = vmatpush1.msra.mxu0 0.0
        %4867 = vmatprep.subr.mxu0 0.0
        %4868 = vmatpush1.msra.mxu0 0.0
        %4869 = vmatprep.subr.mxu0 0.0
        %4870 = vmatpush1.msra.mxu0 0.0
        %4871 = vmatprep.subr.mxu0 0.0
        %4872 = vmatpush1.msra.mxu0 0.0
        %4873 = vmatprep.mubr.f32.mxu0 0.0
        %4874 = vmatmul.mubr.f32.gmra.mrb[0].mxu0 %v4807
        %v4875 = vpop.f32.mrb[0].mxu0
        %v4876 = vadd.f32 0.0, %v4875
        %v4877 = vpop.f32.mrb[0].mxu0
        %4878 = vdwg.mxu0
        %v4879 = vadd.f32 %v4635, %v4876
        %4880 = vrot.lane.b32.xlu0 %v4386, 112
        %v4881 = vpop.permute.xlu0 %4880
        %4882 = vrot.lane.b32.xlu0 %v4386, 80
        %v4883 = vpop.permute.xlu0 %4882
        %v4884 = vsel %vm645, %v4881, 0
        %v4886 = vsel %vm645, %v4883, 0
        %4888 = vmatprep.subr.mxu0 0.0
        %4889 = vmatpush1.xpose.msra.mxu0 %v4886
        %4890 = vmatprep.subr.mxu0 0.0
        %4891 = vmatpush1.xpose.msra.mxu0 0.0
        %4892 = vmatprep.subr.mxu0 0.0
        %4893 = vmatpush1.xpose.msra.mxu0 0.0
        %4894 = vmatprep.subr.mxu0 0.0
        %4895 = vmatpush1.xpose.msra.mxu0 0.0
        %4896 = vmatprep.subr.mxu0 0.0
        %4897 = vmatpush1.xpose.msra.mxu0 0.0
        %4898 = vmatprep.subr.mxu0 0.0
        %4899 = vmatpush1.xpose.msra.mxu0 0.0
        %4900 = vmatprep.subr.mxu0 0.0
        %4901 = vmatpush1.xpose.msra.mxu0 0.0
        %4902 = vmatprep.subr.mxu0 0.0
        %4903 = vmatpush1.xpose.msra.mxu0 0.0
        %4904 = vmatprep.subr.mxu0 0.0
        %4905 = vmatpush1.xpose.msra.mxu0 0.0
        %4906 = vmatprep.subr.mxu0 0.0
        %4907 = vmatpush1.xpose.msra.mxu0 0.0
        %4908 = vmatprep.subr.mxu0 0.0
        %4909 = vmatpush1.xpose.msra.mxu0 0.0
        %4910 = vmatprep.subr.mxu0 0.0
        %4911 = vmatpush1.xpose.msra.mxu0 0.0
        %4912 = vmatprep.subr.mxu0 0.0
        %4913 = vmatpush1.xpose.msra.mxu0 0.0
        %4914 = vmatprep.subr.mxu0 0.0
        %4915 = vmatpush1.xpose.msra.mxu0 0.0
        %4916 = vmatprep.subr.mxu0 0.0
        %4917 = vmatpush1.xpose.msra.mxu0 0.0
        %4918 = vmatprep.subr.mxu0 0.0
        %4919 = vmatpush1.xpose.msra.mxu0 0.0
        %4920 = vmatprep.subr.mxu0 0.0
        %4921 = vmatpush1.xpose.msra.mxu0 0.0
        %4922 = vmatprep.subr.mxu0 0.0
        %4923 = vmatpush1.xpose.msra.mxu0 0.0
        %4924 = vmatprep.subr.mxu0 0.0
        %4925 = vmatpush1.xpose.msra.mxu0 0.0
        %4926 = vmatprep.subr.mxu0 0.0
        %4927 = vmatpush1.xpose.msra.mxu0 0.0
        %4928 = vmatprep.subr.mxu0 0.0
        %4929 = vmatpush1.xpose.msra.mxu0 0.0
        %4930 = vmatprep.subr.mxu0 0.0
        %4931 = vmatpush1.xpose.msra.mxu0 0.0
        %4932 = vmatprep.subr.mxu0 0.0
        %4933 = vmatpush1.xpose.msra.mxu0 0.0
        %4934 = vmatprep.subr.mxu0 0.0
        %4935 = vmatpush1.xpose.msra.mxu0 0.0
        %4936 = vmatprep.subr.mxu0 0.0
        %4937 = vmatpush1.xpose.msra.mxu0 0.0
        %4938 = vmatprep.subr.mxu0 0.0
        %4939 = vmatpush1.xpose.msra.mxu0 0.0
        %4940 = vmatprep.subr.mxu0 0.0
        %4941 = vmatpush1.xpose.msra.mxu0 0.0
        %4942 = vmatprep.subr.mxu0 0.0
        %4943 = vmatpush1.xpose.msra.mxu0 0.0
        %4944 = vmatprep.subr.mxu0 0.0
        %4945 = vmatpush1.xpose.msra.mxu0 0.0
        %4946 = vmatprep.subr.mxu0 0.0
        %4947 = vmatpush1.xpose.msra.mxu0 0.0
        %4948 = vmatprep.subr.mxu0 0.0
        %4949 = vmatpush1.xpose.msra.mxu0 0.0
        %4950 = vmatprep.subr.mxu0 0.0
        %4951 = vmatpush1.xpose.msra.mxu0 0.0
        %4952 = vmatprep.mubr.f32.mxu0 0.0
        %4953 = vmatmul.mubr.f32.gmra.mrb[0].mxu0 %v4884
        %v4954 = vpop.f32.mrb[0].mxu0
        %v4955 = vadd.f32 %v556, %v4954
        %v4956 = vpop.f32.mrb[0].mxu0
        %4957 = vdwg.mxu0
        %v4958 = vmul.f32 %v4955, 0.17677669
        %v4959 = vsel %vm645, %v4958, -inf
        %4960 = vmax.xlane.f32.xlu0 %v4959
        %v4961 = vpop.xlane.xlu0 %4960
        %v4962 = vsub.f32 %v4958, %v4961
        %v4963 = vmul.f32 %v4962, 1.442695
        %v4964 = vpow.pop %v4963
        %v4965 = vsel %vm645, %v4964, 0.0
        %4966 = vadd.xlane.f32.xlu0 %v4965
        %v4967 = vpop.xlane.xlu0 %4966
        %v4968 = vrcp.pop %v4967
        %v4969 = vmul.f32 %v4964, %v4968
        %4970 = vrot.lane.b32.xlu0 %v4386, 48
        %v4971 = vpop.permute.xlu0 %4970
        %v4974 = vsel %vm645, %v4969, 0
        %4976 = vmatprep.subr.mxu0 0.0
        %4977 = vmatpush1.msra.mxu0 %v4971
        %4978 = vmatprep.subr.mxu0 0.0
        %4979 = vmatpush1.msra.mxu0 0.0
        %4980 = vmatprep.subr.mxu0 0.0
        %4981 = vmatpush1.msra.mxu0 0.0
        %4982 = vmatprep.subr.mxu0 0.0
        %4983 = vmatpush1.msra.mxu0 0.0
        %4984 = vmatprep.subr.mxu0 0.0
        %4985 = vmatpush1.msra.mxu0 0.0
        %4986 = vmatprep.subr.mxu0 0.0
        %4987 = vmatpush1.msra.mxu0 0.0
        %4988 = vmatprep.subr.mxu0 0.0
        %4989 = vmatpush1.msra.mxu0 0.0
        %4990 = vmatprep.subr.mxu0 0.0
        %4991 = vmatpush1.msra.mxu0 0.0
        %4992 = vmatprep.subr.mxu0 0.0
        %4993 = vmatpush1.msra.mxu0 0.0
        %4994 = vmatprep.subr.mxu0 0.0
        %4995 = vmatpush1.msra.mxu0 0.0
        %4996 = vmatprep.subr.mxu0 0.0
        %4997 = vmatpush1.msra.mxu0 0.0
        %4998 = vmatprep.subr.mxu0 0.0
        %4999 = vmatpush1.msra.mxu0 0.0
        %5000 = vmatprep.subr.mxu0 0.0
        %5001 = vmatpush1.msra.mxu0 0.0
        %5002 = vmatprep.subr.mxu0 0.0
        %5003 = vmatpush1.msra.mxu0 0.0
        %5004 = vmatprep.subr.mxu0 0.0
        %5005 = vmatpush1.msra.mxu0 0.0
        %5006 = vmatprep.subr.mxu0 0.0
        %5007 = vmatpush1.msra.mxu0 0.0
        %5008 = vmatprep.subr.mxu0 0.0
        %5009 = vmatpush1.msra.mxu0 0.0
        %5010 = vmatprep.subr.mxu0 0.0
        %5011 = vmatpush1.msra.mxu0 0.0
        %5012 = vmatprep.subr.mxu0 0.0
        %5013 = vmatpush1.msra.mxu0 0.0
        %5014 = vmatprep.subr.mxu0 0.0
        %5015 = vmatpush1.msra.mxu0 0.0
        %5016 = vmatprep.subr.mxu0 0.0
        %5017 = vmatpush1.msra.mxu0 0.0
        %5018 = vmatprep.subr.mxu0 0.0
        %5019 = vmatpush1.msra.mxu0 0.0
        %5020 = vmatprep.subr.mxu0 0.0
        %5021 = vmatpush1.msra.mxu0 0.0
        %5022 = vmatprep.subr.mxu0 0.0
        %5023 = vmatpush1.msra.mxu0 0.0
        %5024 = vmatprep.subr.mxu0 0.0
        %5025 = vmatpush1.msra.mxu0 0.0
        %5026 = vmatprep.subr.mxu0 0.0
        %5027 = vmatpush1.msra.mxu0 0.0
        %5028 = vmatprep.subr.mxu0 0.0
        %5029 = vmatpush1.msra.mxu0 0.0
        %5030 = vmatprep.subr.mxu0 0.0
        %5031 = vmatpush1.msra.mxu0 0.0
        %5032 = vmatprep.subr.mxu0 0.0
        %5033 = vmatpush1.msra.mxu0 0.0
        %5034 = vmatprep.subr.mxu0 0.0
        %5035 = vmatpush1.msra.mxu0 0.0
        %5036 = vmatprep.subr.mxu0 0.0
        %5037 = vmatpush1.msra.mxu0 0.0
        %5038 = vmatprep.subr.mxu0 0.0
        %5039 = vmatpush1.msra.mxu0 0.0
        %5040 = vmatprep.mubr.f32.mxu0 0.0
        %5041 = vmatmul.mubr.f32.gmra.mrb[0].mxu0 %v4974
        %v5042 = vpop.f32.mrb[0].mxu0
        %v5043 = vadd.f32 0.0, %v5042
        %v5044 = vpop.f32.mrb[0].mxu0
        %5045 = vdwg.mxu0
        %5047 = vrot.lane.b32.xlu0 %v4308, 32
        %v5048 = vpop.permute.xlu0 %5047
        %v5051 = vsel %vm645, %v5043, 0
        %5053 = vmatprep.subr.mxu0 0.0
        %5054 = vmatpush1.msra.mxu0 %v5048
        %5055 = vmatprep.subr.mxu0 0.0
        %5056 = vmatpush1.msra.mxu0 0.0
        %5057 = vmatprep.subr.mxu0 0.0
        %5058 = vmatpush1.msra.mxu0 0.0
        %5059 = vmatprep.subr.mxu0 0.0
        %5060 = vmatpush1.msra.mxu0 0.0
        %5061 = vmatprep.subr.mxu0 0.0
        %5062 = vmatpush1.msra.mxu0 0.0
        %5063 = vmatprep.subr.mxu0 0.0
        %5064 = vmatpush1.msra.mxu0 0.0
        %5065 = vmatprep.subr.mxu0 0.0
        %5066 = vmatpush1.msra.mxu0 0.0
        %5067 = vmatprep.subr.mxu0 0.0
        %5068 = vmatpush1.msra.mxu0 0.0
        %5069 = vmatprep.subr.mxu0 0.0
        %5070 = vmatpush1.msra.mxu0 0.0
        %5071 = vmatprep.subr.mxu0 0.0
        %5072 = vmatpush1.msra.mxu0 0.0
        %5073 = vmatprep.subr.mxu0 0.0
        %5074 = vmatpush1.msra.mxu0 0.0
        %5075 = vmatprep.subr.mxu0 0.0
        %5076 = vmatpush1.msra.mxu0 0.0
        %5077 = vmatprep.subr.mxu0 0.0
        %5078 = vmatpush1.msra.mxu0 0.0
        %5079 = vmatprep.subr.mxu0 0.0
        %5080 = vmatpush1.msra.mxu0 0.0
        %5081 = vmatprep.subr.mxu0 0.0
        %5082 = vmatpush1.msra.mxu0 0.0
        %5083 = vmatprep.subr.mxu0 0.0
        %5084 = vmatpush1.msra.mxu0 0.0
        %5085 = vmatprep.subr.mxu0 0.0
        %5086 = vmatpush1.msra.mxu0 0.0
        %5087 = vmatprep.subr.mxu0 0.0
        %5088 = vmatpush1.msra.mxu0 0.0
        %5089 = vmatprep.subr.mxu0 0.0
        %5090 = vmatpush1.msra.mxu0 0.0
        %5091 = vmatprep.subr.mxu0 0.0
        %5092 = vmatpush1.msra.mxu0 0.0
        %5093 = vmatprep.subr.mxu0 0.0
        %5094 = vmatpush1.msra.mxu0 0.0
        %5095 = vmatprep.subr.mxu0 0.0
        %5096 = vmatpush1.msra.mxu0 0.0
        %5097 = vmatprep.subr.mxu0 0.0
        %5098 = vmatpush1.msra.mxu0 0.0
        %5099 = vmatprep.subr.mxu0 0.0
        %5100 = vmatpush1.msra.mxu0 0.0
        %5101 = vmatprep.subr.mxu0 0.0
        %5102 = vmatpush1.msra.mxu0 0.0
        %5103 = vmatprep.subr.mxu0 0.0
        %5104 = vmatpush1.msra.mxu0 0.0
        %5105 = vmatprep.subr.mxu0 0.0
        %5106 = vmatpush1.msra.mxu0 0.0
        %5107 = vmatprep.subr.mxu0 0.0
        %5108 = vmatpush1.msra.mxu0 0.0
        %5109 = vmatprep.subr.mxu0 0.0
        %5110 = vmatpush1.msra.mxu0 0.0
        %5111 = vmatprep.subr.mxu0 0.0
        %5112 = vmatpush1.msra.mxu0 0.0
        %5113 = vmatprep.subr.mxu0 0.0
        %5114 = vmatpush1.msra.mxu0 0.0
        %5115 = vmatprep.subr.mxu0 0.0
        %5116 = vmatpush1.msra.mxu0 0.0
        %5117 = vmatprep.mubr.f32.mxu0 0.0
        %5118 = vmatmul.mubr.f32.gmra.mrb[0].mxu0 %v5051
        %v5119 = vpop.f32.mrb[0].mxu0
        %v5120 = vadd.f32 0.0, %v5119
        %v5121 = vpop.f32.mrb[0].mxu0
        %5122 = vdwg.mxu0
        %v5123 = vadd.f32 %v4879, %v5120
        %5124 = vrot.lane.b32.xlu0 %v4386, 104
        %v5125 = vpop.permute.xlu0 %5124
        %5126 = vrot.lane.b32.xlu0 %v4386, 72
        %v5127 = vpop.permute.xlu0 %5126
        %v5128 = vsel %vm645, %v5125, 0
        %v5130 = vsel %vm645, %v5127, 0
        %5132 = vmatprep.subr.mxu0 0.0
        %5133 = vmatpush1.xpose.msra.mxu0 %v5130
        %5134 = vmatprep.subr.mxu0 0.0
        %5135 = vmatpush1.xpose.msra.mxu0 0.0
        %5136 = vmatprep.subr.mxu0 0.0
        %5137 = vmatpush1.xpose.msra.mxu0 0.0
        %5138 = vmatprep.subr.mxu0 0.0
        %5139 = vmatpush1.xpose.msra.mxu0 0.0
        %5140 = vmatprep.subr.mxu0 0.0
        %5141 = vmatpush1.xpose.msra.mxu0 0.0
        %5142 = vmatprep.subr.mxu0 0.0
        %5143 = vmatpush1.xpose.msra.mxu0 0.0
        %5144 = vmatprep.subr.mxu0 0.0
        %5145 = vmatpush1.xpose.msra.mxu0 0.0
        %5146 = vmatprep.subr.mxu0 0.0
        %5147 = vmatpush1.xpose.msra.mxu0 0.0
        %5148 = vmatprep.subr.mxu0 0.0
        %5149 = vmatpush1.xpose.msra.mxu0 0.0
        %5150 = vmatprep.subr.mxu0 0.0
        %5151 = vmatpush1.xpose.msra.mxu0 0.0
        %5152 = vmatprep.subr.mxu0 0.0
        %5153 = vmatpush1.xpose.msra.mxu0 0.0
        %5154 = vmatprep.subr.mxu0 0.0
        %5155 = vmatpush1.xpose.msra.mxu0 0.0
        %5156 = vmatprep.subr.mxu0 0.0
        %5157 = vmatpush1.xpose.msra.mxu0 0.0
        %5158 = vmatprep.subr.mxu0 0.0
        %5159 = vmatpush1.xpose.msra.mxu0 0.0
        %5160 = vmatprep.subr.mxu0 0.0
        %5161 = vmatpush1.xpose.msra.mxu0 0.0
        %5162 = vmatprep.subr.mxu0 0.0
        %5163 = vmatpush1.xpose.msra.mxu0 0.0
        %5164 = vmatprep.subr.mxu0 0.0
        %5165 = vmatpush1.xpose.msra.mxu0 0.0
        %5166 = vmatprep.subr.mxu0 0.0
        %5167 = vmatpush1.xpose.msra.mxu0 0.0
        %5168 = vmatprep.subr.mxu0 0.0
        %5169 = vmatpush1.xpose.msra.mxu0 0.0
        %5170 = vmatprep.subr.mxu0 0.0
        %5171 = vmatpush1.xpose.msra.mxu0 0.0
        %5172 = vmatprep.subr.mxu0 0.0
        %5173 = vmatpush1.xpose.msra.mxu0 0.0
        %5174 = vmatprep.subr.mxu0 0.0
        %5175 = vmatpush1.xpose.msra.mxu0 0.0
        %5176 = vmatprep.subr.mxu0 0.0
        %5177 = vmatpush1.xpose.msra.mxu0 0.0
        %5178 = vmatprep.subr.mxu0 0.0
        %5179 = vmatpush1.xpose.msra.mxu0 0.0
        %5180 = vmatprep.subr.mxu0 0.0
        %5181 = vmatpush1.xpose.msra.mxu0 0.0
        %5182 = vmatprep.subr.mxu0 0.0
        %5183 = vmatpush1.xpose.msra.mxu0 0.0
        %5184 = vmatprep.subr.mxu0 0.0
        %5185 = vmatpush1.xpose.msra.mxu0 0.0
        %5186 = vmatprep.subr.mxu0 0.0
        %5187 = vmatpush1.xpose.msra.mxu0 0.0
        %5188 = vmatprep.subr.mxu0 0.0
        %5189 = vmatpush1.xpose.msra.mxu0 0.0
        %5190 = vmatprep.subr.mxu0 0.0
        %5191 = vmatpush1.xpose.msra.mxu0 0.0
        %5192 = vmatprep.subr.mxu0 0.0
        %5193 = vmatpush1.xpose.msra.mxu0 0.0
        %5194 = vmatprep.subr.mxu0 0.0
        %5195 = vmatpush1.xpose.msra.mxu0 0.0
        %5196 = vmatprep.mubr.f32.mxu0 0.0
        %5197 = vmatmul.mubr.f32.gmra.mrb[0].mxu0 %v5128
        %v5198 = vpop.f32.mrb[0].mxu0
        %v5199 = vadd.f32 %v556, %v5198
        %v5200 = vpop.f32.mrb[0].mxu0
        %5201 = vdwg.mxu0
        %v5202 = vmul.f32 %v5199, 0.17677669
        %v5203 = vsel %vm645, %v5202, -inf
        %5204 = vmax.xlane.f32.xlu0 %v5203
        %v5205 = vpop.xlane.xlu0 %5204
        %v5206 = vsub.f32 %v5202, %v5205
        %v5207 = vmul.f32 %v5206, 1.442695
        %v5208 = vpow.pop %v5207
        %v5209 = vsel %vm645, %v5208, 0.0
        %5210 = vadd.xlane.f32.xlu0 %v5209
        %v5211 = vpop.xlane.xlu0 %5210
        %v5212 = vrcp.pop %v5211
        %v5213 = vmul.f32 %v5208, %v5212
        %5214 = vrot.lane.b32.xlu0 %v4386, 40
        %v5215 = vpop.permute.xlu0 %5214
        %v5218 = vsel %vm645, %v5213, 0
        %5220 = vmatprep.subr.mxu0 0.0
        %5221 = vmatpush1.msra.mxu0 %v5215
        %5222 = vmatprep.subr.mxu0 0.0
        %5223 = vmatpush1.msra.mxu0 0.0
        %5224 = vmatprep.subr.mxu0 0.0
        %5225 = vmatpush1.msra.mxu0 0.0
        %5226 = vmatprep.subr.mxu0 0.0
        %5227 = vmatpush1.msra.mxu0 0.0
        %5228 = vmatprep.subr.mxu0 0.0
        %5229 = vmatpush1.msra.mxu0 0.0
        %5230 = vmatprep.subr.mxu0 0.0
        %5231 = vmatpush1.msra.mxu0 0.0
        %5232 = vmatprep.subr.mxu0 0.0
        %5233 = vmatpush1.msra.mxu0 0.0
        %5234 = vmatprep.subr.mxu0 0.0
        %5235 = vmatpush1.msra.mxu0 0.0
        %5236 = vmatprep.subr.mxu0 0.0
        %5237 = vmatpush1.msra.mxu0 0.0
        %5238 = vmatprep.subr.mxu0 0.0
        %5239 = vmatpush1.msra.mxu0 0.0
        %5240 = vmatprep.subr.mxu0 0.0
        %5241 = vmatpush1.msra.mxu0 0.0
        %5242 = vmatprep.subr.mxu0 0.0
        %5243 = vmatpush1.msra.mxu0 0.0
        %5244 = vmatprep.subr.mxu0 0.0
        %5245 = vmatpush1.msra.mxu0 0.0
        %5246 = vmatprep.subr.mxu0 0.0
        %5247 = vmatpush1.msra.mxu0 0.0
        %5248 = vmatprep.subr.mxu0 0.0
        %5249 = vmatpush1.msra.mxu0 0.0
        %5250 = vmatprep.subr.mxu0 0.0
        %5251 = vmatpush1.msra.mxu0 0.0
        %5252 = vmatprep.subr.mxu0 0.0
        %5253 = vmatpush1.msra.mxu0 0.0
        %5254 = vmatprep.subr.mxu0 0.0
        %5255 = vmatpush1.msra.mxu0 0.0
        %5256 = vmatprep.subr.mxu0 0.0
        %5257 = vmatpush1.msra.mxu0 0.0
        %5258 = vmatprep.subr.mxu0 0.0
        %5259 = vmatpush1.msra.mxu0 0.0
        %5260 = vmatprep.subr.mxu0 0.0
        %5261 = vmatpush1.msra.mxu0 0.0
        %5262 = vmatprep.subr.mxu0 0.0
        %5263 = vmatpush1.msra.mxu0 0.0
        %5264 = vmatprep.subr.mxu0 0.0
        %5265 = vmatpush1.msra.mxu0 0.0
        %5266 = vmatprep.subr.mxu0 0.0
        %5267 = vmatpush1.msra.mxu0 0.0
        %5268 = vmatprep.subr.mxu0 0.0
        %5269 = vmatpush1.msra.mxu0 0.0
        %5270 = vmatprep.subr.mxu0 0.0
        %5271 = vmatpush1.msra.mxu0 0.0
        %5272 = vmatprep.subr.mxu0 0.0
        %5273 = vmatpush1.msra.mxu0 0.0
        %5274 = vmatprep.subr.mxu0 0.0
        %5275 = vmatpush1.msra.mxu0 0.0
        %5276 = vmatprep.subr.mxu0 0.0
        %5277 = vmatpush1.msra.mxu0 0.0
        %5278 = vmatprep.subr.mxu0 0.0
        %5279 = vmatpush1.msra.mxu0 0.0
        %5280 = vmatprep.subr.mxu0 0.0
        %5281 = vmatpush1.msra.mxu0 0.0
        %5282 = vmatprep.subr.mxu0 0.0
        %5283 = vmatpush1.msra.mxu0 0.0
        %5284 = vmatprep.mubr.f32.mxu0 0.0
        %5285 = vmatmul.mubr.f32.gmra.mrb[0].mxu0 %v5218
        %v5286 = vpop.f32.mrb[0].mxu0
        %v5287 = vadd.f32 0.0, %v5286
        %v5288 = vpop.f32.mrb[0].mxu0
        %5289 = vdwg.mxu0
        %5291 = vrot.lane.b32.xlu0 %v4309, 32
        %v5292 = vpop.permute.xlu0 %5291
        %v5295 = vsel %vm645, %v5287, 0
        %5297 = vmatprep.subr.mxu0 0.0
        %5298 = vmatpush1.msra.mxu0 %v5292
        %5299 = vmatprep.subr.mxu0 0.0
        %5300 = vmatpush1.msra.mxu0 0.0
        %5301 = vmatprep.subr.mxu0 0.0
        %5302 = vmatpush1.msra.mxu0 0.0
        %5303 = vmatprep.subr.mxu0 0.0
        %5304 = vmatpush1.msra.mxu0 0.0
        %5305 = vmatprep.subr.mxu0 0.0
        %5306 = vmatpush1.msra.mxu0 0.0
        %5307 = vmatprep.subr.mxu0 0.0
        %5308 = vmatpush1.msra.mxu0 0.0
        %5309 = vmatprep.subr.mxu0 0.0
        %5310 = vmatpush1.msra.mxu0 0.0
        %5311 = vmatprep.subr.mxu0 0.0
        %5312 = vmatpush1.msra.mxu0 0.0
        %5313 = vmatprep.subr.mxu0 0.0
        %5314 = vmatpush1.msra.mxu0 0.0
        %5315 = vmatprep.subr.mxu0 0.0
        %5316 = vmatpush1.msra.mxu0 0.0
        %5317 = vmatprep.subr.mxu0 0.0
        %5318 = vmatpush1.msra.mxu0 0.0
        %5319 = vmatprep.subr.mxu0 0.0
        %5320 = vmatpush1.msra.mxu0 0.0
        %5321 = vmatprep.subr.mxu0 0.0
        %5322 = vmatpush1.msra.mxu0 0.0
        %5323 = vmatprep.subr.mxu0 0.0
        %5324 = vmatpush1.msra.mxu0 0.0
        %5325 = vmatprep.subr.mxu0 0.0
        %5326 = vmatpush1.msra.mxu0 0.0
        %5327 = vmatprep.subr.mxu0 0.0
        %5328 = vmatpush1.msra.mxu0 0.0
        %5329 = vmatprep.subr.mxu0 0.0
        %5330 = vmatpush1.msra.mxu0 0.0
        %5331 = vmatprep.subr.mxu0 0.0
        %5332 = vmatpush1.msra.mxu0 0.0
        %5333 = vmatprep.subr.mxu0 0.0
        %5334 = vmatpush1.msra.mxu0 0.0
        %5335 = vmatprep.subr.mxu0 0.0
        %5336 = vmatpush1.msra.mxu0 0.0
        %5337 = vmatprep.subr.mxu0 0.0
        %5338 = vmatpush1.msra.mxu0 0.0
        %5339 = vmatprep.subr.mxu0 0.0
        %5340 = vmatpush1.msra.mxu0 0.0
        %5341 = vmatprep.subr.mxu0 0.0
        %5342 = vmatpush1.msra.mxu0 0.0
        %5343 = vmatprep.subr.mxu0 0.0
        %5344 = vmatpush1.msra.mxu0 0.0
        %5345 = vmatprep.subr.mxu0 0.0
        %5346 = vmatpush1.msra.mxu0 0.0
        %5347 = vmatprep.subr.mxu0 0.0
        %5348 = vmatpush1.msra.mxu0 0.0
        %5349 = vmatprep.subr.mxu0 0.0
        %5350 = vmatpush1.msra.mxu0 0.0
        %5351 = vmatprep.subr.mxu0 0.0
        %5352 = vmatpush1.msra.mxu0 0.0
        %5353 = vmatprep.subr.mxu0 0.0
        %5354 = vmatpush1.msra.mxu0 0.0
        %5355 = vmatprep.subr.mxu0 0.0
        %5356 = vmatpush1.msra.mxu0 0.0
        %5357 = vmatprep.subr.mxu0 0.0
        %5358 = vmatpush1.msra.mxu0 0.0
        %5359 = vmatprep.subr.mxu0 0.0
        %5360 = vmatpush1.msra.mxu0 0.0
        %5361 = vmatprep.mubr.f32.mxu0 0.0
        %5362 = vmatmul.mubr.f32.gmra.mrb[0].mxu0 %v5295
        %v5363 = vpop.f32.mrb[0].mxu0
        %v5364 = vadd.f32 0.0, %v5363
        %v5365 = vpop.f32.mrb[0].mxu0
        %5366 = vdwg.mxu0
        %v5367 = vadd.f32 %v5123, %v5364
        %v5368 = vadd.f32 %v5367, %v4304
        %v5369 = vsel %vm568, %v5368, 0.0
        %5370 = vadd.xlane.f32.xlu0 %v5369
        %v5371 = vpop.xlane.xlu0 %5370
        %v5372 = vmul.f32 %v5371, %v1626
        %v5373 = vsub.f32 %v5368, %v5372
        %v5374 = vmul.f32 %v5373, %v5373
        %v5375 = vsel %vm568, %v5374, 0.0
        %5376 = vadd.xlane.f32.xlu0 %v5375
        %v5377 = vpop.xlane.xlu0 %5376
        %v5378 = vmul.f32 %v5377, %v1626
        %v5379 = vadd.f32 %v5378, 1e-05
        %v5380 = vrsqrt.pop %v5379
        %v5381 = vmul.f32 %v5373, %v5380
        %5383 = vrot.lane.b32.xlu0 %v4634, 96
        %v5384 = vpop.permute.xlu0 %5383
        %v5386 = vmul.f32 %v5381, %v5384
        %5387 = vrot.lane.b32.xlu0 %v4634, 64
        %v5388 = vpop.permute.xlu0 %5387
        %v5390 = vadd.f32 %v5386, %v5388
        %s5391 = scalar_lea.vmem %s5, 160
        %v5392 = vld [vmem:[%s5391] sm:$0xff]
        %v5393 = vld [vmem:[%s5391 + $0x8] sm:$0xff]
        %v5394 = vld [vmem:[%s5391 + $0x10] sm:$0xff]
        %v5395 = vld [vmem:[%s5391 + $0x18] sm:$0xff]
        %s5396 = scalar_lea.vmem %s6, 10
        %v5397 = vld [vmem:[%s5396] sm:$0x3]
        %v5398 = vlaneseq
        %v5399 = vshrl.u32 %v5398, 7
        %v5400 = vsub.s32 0, %v5399
        %v5401 = vrot.slane %v5397, %v5400
        %v5403 = vsel %vm568, %v5390, 0
        %5405 = vmatprep.subr.mxu0 0.0
        %5406 = vmatpush1.msra.mxu0 %v5392
        %5407 = vmatprep.subr.mxu0 0.0
        %5408 = vmatpush1.msra.mxu0 %v5393
        %5409 = vmatprep.subr.mxu0 0.0
        %5410 = vmatpush1.msra.mxu0 %v5394
        %5411 = vmatprep.subr.mxu0 0.0
        %5412 = vmatpush1.msra.mxu0 %v5395
        %5413 = vmatprep.subr.mxu0 0.0
        %5414 = vmatpush1.msra.mxu0 0.0
        %5415 = vmatprep.subr.mxu0 0.0
        %5416 = vmatpush1.msra.mxu0 0.0
        %5417 = vmatprep.subr.mxu0 0.0
        %5418 = vmatpush1.msra.mxu0 0.0
        %5419 = vmatprep.subr.mxu0 0.0
        %5420 = vmatpush1.msra.mxu0 0.0
        %5421 = vmatprep.subr.mxu0 0.0
        %5422 = vmatpush1.msra.mxu0 0.0
        %5423 = vmatprep.subr.mxu0 0.0
        %5424 = vmatpush1.msra.mxu0 0.0
        %5425 = vmatprep.subr.mxu0 0.0
        %5426 = vmatpush1.msra.mxu0 0.0
        %5427 = vmatprep.subr.mxu0 0.0
        %5428 = vmatpush1.msra.mxu0 0.0
        %5429 = vmatprep.subr.mxu0 0.0
        %5430 = vmatpush1.msra.mxu0 0.0
        %5431 = vmatprep.subr.mxu0 0.0
        %5432 = vmatpush1.msra.mxu0 0.0
        %5433 = vmatprep.subr.mxu0 0.0
        %5434 = vmatpush1.msra.mxu0 0.0
        %5435 = vmatprep.subr.mxu0 0.0
        %5436 = vmatpush1.msra.mxu0 0.0
        %5437 = vmatprep.subr.mxu0 0.0
        %5438 = vmatpush1.msra.mxu0 0.0
        %5439 = vmatprep.subr.mxu0 0.0
        %5440 = vmatpush1.msra.mxu0 0.0
        %5441 = vmatprep.subr.mxu0 0.0
        %5442 = vmatpush1.msra.mxu0 0.0
        %5443 = vmatprep.subr.mxu0 0.0
        %5444 = vmatpush1.msra.mxu0 0.0
        %5445 = vmatprep.subr.mxu0 0.0
        %5446 = vmatpush1.msra.mxu0 0.0
        %5447 = vmatprep.subr.mxu0 0.0
        %5448 = vmatpush1.msra.mxu0 0.0
        %5449 = vmatprep.subr.mxu0 0.0
        %5450 = vmatpush1.msra.mxu0 0.0
        %5451 = vmatprep.subr.mxu0 0.0
        %5452 = vmatpush1.msra.mxu0 0.0
        %5453 = vmatprep.subr.mxu0 0.0
        %5454 = vmatpush1.msra.mxu0 0.0
        %5455 = vmatprep.subr.mxu0 0.0
        %5456 = vmatpush1.msra.mxu0 0.0
        %5457 = vmatprep.subr.mxu0 0.0
        %5458 = vmatpush1.msra.mxu0 0.0
        %5459 = vmatprep.subr.mxu0 0.0
        %5460 = vmatpush1.msra.mxu0 0.0
        %5461 = vmatprep.subr.mxu0 0.0
        %5462 = vmatpush1.msra.mxu0 0.0
        %5463 = vmatprep.subr.mxu0 0.0
        %5464 = vmatpush1.msra.mxu0 0.0
        %5465 = vmatprep.subr.mxu0 0.0
        %5466 = vmatpush1.msra.mxu0 0.0
        %5467 = vmatprep.subr.mxu0 0.0
        %5468 = vmatpush1.msra.mxu0 0.0
        %5469 = vmatprep.mubr.f32.mxu0 0.0
        %5470 = vmatmul.mubr.f32.gmra.mrb[0].mxu0 %v5403
        %v5471 = vpop.f32.mrb[0].mxu0
        %v5472 = vadd.f32 %v5401, %v5471
        %v5473 = vpop.f32.mrb[0].mxu0
        %5474 = vdwg.mxu0
        %5479 = vrot.lane.b32.xlu0 %v5392, 96
        %v5480 = vpop.permute.xlu0 %5479
        %5481 = vrot.lane.b32.xlu0 %v5393, 96
        %v5482 = vpop.permute.xlu0 %5481
        %5483 = vrot.lane.b32.xlu0 %v5394, 96
        %v5484 = vpop.permute.xlu0 %5483
        %5485 = vrot.lane.b32.xlu0 %v5395, 96
        %v5486 = vpop.permute.xlu0 %5485
        %5492 = vrot.lane.b32.xlu0 %v5401, 96
        %v5493 = vpop.permute.xlu0 %5492
        %5495 = vmatprep.subr.mxu0 0.0
        %5496 = vmatpush1.msra.mxu0 %v5480
        %5497 = vmatprep.subr.mxu0 0.0
        %5498 = vmatpush1.msra.mxu0 %v5482
        %5499 = vmatprep.subr.mxu0 0.0
        %5500 = vmatpush1.msra.mxu0 %v5484
        %5501 = vmatprep.subr.mxu0 0.0
        %5502 = vmatpush1.msra.mxu0 %v5486
        %5503 = vmatprep.subr.mxu0 0.0
        %5504 = vmatpush1.msra.mxu0 0.0
        %5505 = vmatprep.subr.mxu0 0.0
        %5506 = vmatpush1.msra.mxu0 0.0
        %5507 = vmatprep.subr.mxu0 0.0
        %5508 = vmatpush1.msra.mxu0 0.0
        %5509 = vmatprep.subr.mxu0 0.0
        %5510 = vmatpush1.msra.mxu0 0.0
        %5511 = vmatprep.subr.mxu0 0.0
        %5512 = vmatpush1.msra.mxu0 0.0
        %5513 = vmatprep.subr.mxu0 0.0
        %5514 = vmatpush1.msra.mxu0 0.0
        %5515 = vmatprep.subr.mxu0 0.0
        %5516 = vmatpush1.msra.mxu0 0.0
        %5517 = vmatprep.subr.mxu0 0.0
        %5518 = vmatpush1.msra.mxu0 0.0
        %5519 = vmatprep.subr.mxu0 0.0
        %5520 = vmatpush1.msra.mxu0 0.0
        %5521 = vmatprep.subr.mxu0 0.0
        %5522 = vmatpush1.msra.mxu0 0.0
        %5523 = vmatprep.subr.mxu0 0.0
        %5524 = vmatpush1.msra.mxu0 0.0
        %5525 = vmatprep.subr.mxu0 0.0
        %5526 = vmatpush1.msra.mxu0 0.0
        %5527 = vmatprep.subr.mxu0 0.0
        %5528 = vmatpush1.msra.mxu0 0.0
        %5529 = vmatprep.subr.mxu0 0.0
        %5530 = vmatpush1.msra.mxu0 0.0
        %5531 = vmatprep.subr.mxu0 0.0
        %5532 = vmatpush1.msra.mxu0 0.0
        %5533 = vmatprep.subr.mxu0 0.0
        %5534 = vmatpush1.msra.mxu0 0.0
        %5535 = vmatprep.subr.mxu0 0.0
        %5536 = vmatpush1.msra.mxu0 0.0
        %5537 = vmatprep.subr.mxu0 0.0
        %5538 = vmatpush1.msra.mxu0 0.0
        %5539 = vmatprep.subr.mxu0 0.0
        %5540 = vmatpush1.msra.mxu0 0.0
        %5541 = vmatprep.subr.mxu0 0.0
        %5542 = vmatpush1.msra.mxu0 0.0
        %5543 = vmatprep.subr.mxu0 0.0
        %5544 = vmatpush1.msra.mxu0 0.0
        %5545 = vmatprep.subr.mxu0 0.0
        %5546 = vmatpush1.msra.mxu0 0.0
        %5547 = vmatprep.subr.mxu0 0.0
        %5548 = vmatpush1.msra.mxu0 0.0
        %5549 = vmatprep.subr.mxu0 0.0
        %5550 = vmatpush1.msra.mxu0 0.0
        %5551 = vmatprep.subr.mxu0 0.0
        %5552 = vmatpush1.msra.mxu0 0.0
        %5553 = vmatprep.subr.mxu0 0.0
        %5554 = vmatpush1.msra.mxu0 0.0
        %5555 = vmatprep.subr.mxu0 0.0
        %5556 = vmatpush1.msra.mxu0 0.0
        %5557 = vmatprep.subr.mxu0 0.0
        %5558 = vmatpush1.msra.mxu0 0.0
        %5559 = vmatprep.mubr.f32.mxu0 0.0
        %5560 = vmatmul.mubr.f32.gmra.mrb[0].mxu0 %v3037
        %v5561 = vpop.f32.mrb[0].mxu0
        %v5562 = vadd.f32 %v5493, %v5561
        %v5563 = vpop.f32.mrb[0].mxu0
        %5564 = vdwg.mxu0
        %v5566 = vsel %vm645, %v5472, 0
        %v5569 = vsel %vm645, %v5562, 0
        %5571 = vmatprep.subr.mxu0 0.0
        %5572 = vmatpush1.xpose.msra.mxu0 %v5569
        %5573 = vmatprep.subr.mxu0 0.0
        %5574 = vmatpush1.xpose.msra.mxu0 0.0
        %5575 = vmatprep.subr.mxu0 0.0
        %5576 = vmatpush1.xpose.msra.mxu0 0.0
        %5577 = vmatprep.subr.mxu0 0.0
        %5578 = vmatpush1.xpose.msra.mxu0 0.0
        %5579 = vmatprep.subr.mxu0 0.0
        %5580 = vmatpush1.xpose.msra.mxu0 0.0
        %5581 = vmatprep.subr.mxu0 0.0
        %5582 = vmatpush1.xpose.msra.mxu0 0.0
        %5583 = vmatprep.subr.mxu0 0.0
        %5584 = vmatpush1.xpose.msra.mxu0 0.0
        %5585 = vmatprep.subr.mxu0 0.0
        %5586 = vmatpush1.xpose.msra.mxu0 0.0
        %5587 = vmatprep.subr.mxu0 0.0
        %5588 = vmatpush1.xpose.msra.mxu0 0.0
        %5589 = vmatprep.subr.mxu0 0.0
        %5590 = vmatpush1.xpose.msra.mxu0 0.0
        %5591 = vmatprep.subr.mxu0 0.0
        %5592 = vmatpush1.xpose.msra.mxu0 0.0
        %5593 = vmatprep.subr.mxu0 0.0
        %5594 = vmatpush1.xpose.msra.mxu0 0.0
        %5595 = vmatprep.subr.mxu0 0.0
        %5596 = vmatpush1.xpose.msra.mxu0 0.0
        %5597 = vmatprep.subr.mxu0 0.0
        %5598 = vmatpush1.xpose.msra.mxu0 0.0
        %5599 = vmatprep.subr.mxu0 0.0
        %5600 = vmatpush1.xpose.msra.mxu0 0.0
        %5601 = vmatprep.subr.mxu0 0.0
        %5602 = vmatpush1.xpose.msra.mxu0 0.0
        %5603 = vmatprep.subr.mxu0 0.0
        %5604 = vmatpush1.xpose.msra.mxu0 0.0
        %5605 = vmatprep.subr.mxu0 0.0
        %5606 = vmatpush1.xpose.msra.mxu0 0.0
        %5607 = vmatprep.subr.mxu0 0.0
        %5608 = vmatpush1.xpose.msra.mxu0 0.0
        %5609 = vmatprep.subr.mxu0 0.0
        %5610 = vmatpush1.xpose.msra.mxu0 0.0
        %5611 = vmatprep.subr.mxu0 0.0
        %5612 = vmatpush1.xpose.msra.mxu0 0.0
        %5613 = vmatprep.subr.mxu0 0.0
        %5614 = vmatpush1.xpose.msra.mxu0 0.0
        %5615 = vmatprep.subr.mxu0 0.0
        %5616 = vmatpush1.xpose.msra.mxu0 0.0
        %5617 = vmatprep.subr.mxu0 0.0
        %5618 = vmatpush1.xpose.msra.mxu0 0.0
        %5619 = vmatprep.subr.mxu0 0.0
        %5620 = vmatpush1.xpose.msra.mxu0 0.0
        %5621 = vmatprep.subr.mxu0 0.0
        %5622 = vmatpush1.xpose.msra.mxu0 0.0
        %5623 = vmatprep.subr.mxu0 0.0
        %5624 = vmatpush1.xpose.msra.mxu0 0.0
        %5625 = vmatprep.subr.mxu0 0.0
        %5626 = vmatpush1.xpose.msra.mxu0 0.0
        %5627 = vmatprep.subr.mxu0 0.0
        %5628 = vmatpush1.xpose.msra.mxu0 0.0
        %5629 = vmatprep.subr.mxu0 0.0
        %5630 = vmatpush1.xpose.msra.mxu0 0.0
        %5631 = vmatprep.subr.mxu0 0.0
        %5632 = vmatpush1.xpose.msra.mxu0 0.0
        %5633 = vmatprep.subr.mxu0 0.0
        %5634 = vmatpush1.xpose.msra.mxu0 0.0
        %5635 = vmatprep.mubr.f32.mxu0 0.0
        %5636 = vmatmul.mubr.f32.gmra.mrb[0].mxu0 %v5566
        %v5637 = vpop.f32.mrb[0].mxu0
        %v5638 = vadd.f32 0.0, %v5637
        %v5639 = vpop.f32.mrb[0].mxu0
        %5640 = vdwg.mxu0
        %v5641 = vmul.f32 %v5638, 0.17677669
        %v5642 = vsel %vm645, %v5641, -inf
        %5643 = vmax.xlane.f32.xlu0 %v5642
        %v5644 = vpop.xlane.xlu0 %5643
        %v5645 = vsub.f32 %v5641, %v5644
        %v5646 = vmul.f32 %v5645, 1.442695
        %v5647 = vpow.pop %v5646
        %v5648 = vsel %vm645, %v5647, 0.0
        %5649 = vadd.xlane.f32.xlu0 %v5648
        %v5650 = vpop.xlane.xlu0 %5649
        %v5651 = vrcp.pop %v5650
        %v5652 = vmul.f32 %v5647, %v5651
        %5653 = vrot.lane.b32.xlu0 %v5562, 96
        %v5654 = vpop.permute.xlu0 %5653
        %v5657 = vsel %vm645, %v5652, 0
        %5659 = vmatprep.subr.mxu0 0.0
        %5660 = vmatpush1.msra.mxu0 %v5654
        %5661 = vmatprep.subr.mxu0 0.0
        %5662 = vmatpush1.msra.mxu0 0.0
        %5663 = vmatprep.subr.mxu0 0.0
        %5664 = vmatpush1.msra.mxu0 0.0
        %5665 = vmatprep.subr.mxu0 0.0
        %5666 = vmatpush1.msra.mxu0 0.0
        %5667 = vmatprep.subr.mxu0 0.0
        %5668 = vmatpush1.msra.mxu0 0.0
        %5669 = vmatprep.subr.mxu0 0.0
        %5670 = vmatpush1.msra.mxu0 0.0
        %5671 = vmatprep.subr.mxu0 0.0
        %5672 = vmatpush1.msra.mxu0 0.0
        %5673 = vmatprep.subr.mxu0 0.0
        %5674 = vmatpush1.msra.mxu0 0.0
        %5675 = vmatprep.subr.mxu0 0.0
        %5676 = vmatpush1.msra.mxu0 0.0
        %5677 = vmatprep.subr.mxu0 0.0
        %5678 = vmatpush1.msra.mxu0 0.0
        %5679 = vmatprep.subr.mxu0 0.0
        %5680 = vmatpush1.msra.mxu0 0.0
        %5681 = vmatprep.subr.mxu0 0.0
        %5682 = vmatpush1.msra.mxu0 0.0
        %5683 = vmatprep.subr.mxu0 0.0
        %5684 = vmatpush1.msra.mxu0 0.0
        %5685 = vmatprep.subr.mxu0 0.0
        %5686 = vmatpush1.msra.mxu0 0.0
        %5687 = vmatprep.subr.mxu0 0.0
        %5688 = vmatpush1.msra.mxu0 0.0
        %5689 = vmatprep.subr.mxu0 0.0
        %5690 = vmatpush1.msra.mxu0 0.0
        %5691 = vmatprep.subr.mxu0 0.0
        %5692 = vmatpush1.msra.mxu0 0.0
        %5693 = vmatprep.subr.mxu0 0.0
        %5694 = vmatpush1.msra.mxu0 0.0
        %5695 = vmatprep.subr.mxu0 0.0
        %5696 = vmatpush1.msra.mxu0 0.0
        %5697 = vmatprep.subr.mxu0 0.0
        %5698 = vmatpush1.msra.mxu0 0.0
        %5699 = vmatprep.subr.mxu0 0.0
        %5700 = vmatpush1.msra.mxu0 0.0
        %5701 = vmatprep.subr.mxu0 0.0
        %5702 = vmatpush1.msra.mxu0 0.0
        %5703 = vmatprep.subr.mxu0 0.0
        %5704 = vmatpush1.msra.mxu0 0.0
        %5705 = vmatprep.subr.mxu0 0.0
        %5706 = vmatpush1.msra.mxu0 0.0
        %5707 = vmatprep.subr.mxu0 0.0
        %5708 = vmatpush1.msra.mxu0 0.0
        %5709 = vmatprep.subr.mxu0 0.0
        %5710 = vmatpush1.msra.mxu0 0.0
        %5711 = vmatprep.subr.mxu0 0.0
        %5712 = vmatpush1.msra.mxu0 0.0
        %5713 = vmatprep.subr.mxu0 0.0
        %5714 = vmatpush1.msra.mxu0 0.0
        %5715 = vmatprep.subr.mxu0 0.0
        %5716 = vmatpush1.msra.mxu0 0.0
        %5717 = vmatprep.subr.mxu0 0.0
        %5718 = vmatpush1.msra.mxu0 0.0
        %5719 = vmatprep.subr.mxu0 0.0
        %5720 = vmatpush1.msra.mxu0 0.0
        %5721 = vmatprep.subr.mxu0 0.0
        %5722 = vmatpush1.msra.mxu0 0.0
        %5723 = vmatprep.mubr.f32.mxu0 0.0
        %5724 = vmatmul.mubr.f32.gmra.mrb[0].mxu0 %v5657
        %v5725 = vpop.f32.mrb[0].mxu0
        %v5726 = vadd.f32 0.0, %v5725
        %v5727 = vpop.f32.mrb[0].mxu0
        %5728 = vdwg.mxu0
        %5729 = vrot.lane.b32.xlu0 %v5392, 32
        %v5730 = vpop.permute.xlu0 %5729
        %v5733 = vsel %vm645, %v5726, 0
        %5735 = vmatprep.subr.mxu0 0.0
        %5736 = vmatpush1.msra.mxu0 %v5730
        %5737 = vmatprep.subr.mxu0 0.0
        %5738 = vmatpush1.msra.mxu0 0.0
        %5739 = vmatprep.subr.mxu0 0.0
        %5740 = vmatpush1.msra.mxu0 0.0
        %5741 = vmatprep.subr.mxu0 0.0
        %5742 = vmatpush1.msra.mxu0 0.0
        %5743 = vmatprep.subr.mxu0 0.0
        %5744 = vmatpush1.msra.mxu0 0.0
        %5745 = vmatprep.subr.mxu0 0.0
        %5746 = vmatpush1.msra.mxu0 0.0
        %5747 = vmatprep.subr.mxu0 0.0
        %5748 = vmatpush1.msra.mxu0 0.0
        %5749 = vmatprep.subr.mxu0 0.0
        %5750 = vmatpush1.msra.mxu0 0.0
        %5751 = vmatprep.subr.mxu0 0.0
        %5752 = vmatpush1.msra.mxu0 0.0
        %5753 = vmatprep.subr.mxu0 0.0
        %5754 = vmatpush1.msra.mxu0 0.0
        %5755 = vmatprep.subr.mxu0 0.0
        %5756 = vmatpush1.msra.mxu0 0.0
        %5757 = vmatprep.subr.mxu0 0.0
        %5758 = vmatpush1.msra.mxu0 0.0
        %5759 = vmatprep.subr.mxu0 0.0
        %5760 = vmatpush1.msra.mxu0 0.0
        %5761 = vmatprep.subr.mxu0 0.0
        %5762 = vmatpush1.msra.mxu0 0.0
        %5763 = vmatprep.subr.mxu0 0.0
        %5764 = vmatpush1.msra.mxu0 0.0
        %5765 = vmatprep.subr.mxu0 0.0
        %5766 = vmatpush1.msra.mxu0 0.0
        %5767 = vmatprep.subr.mxu0 0.0
        %5768 = vmatpush1.msra.mxu0 0.0
        %5769 = vmatprep.subr.mxu0 0.0
        %5770 = vmatpush1.msra.mxu0 0.0
        %5771 = vmatprep.subr.mxu0 0.0
        %5772 = vmatpush1.msra.mxu0 0.0
        %5773 = vmatprep.subr.mxu0 0.0
        %5774 = vmatpush1.msra.mxu0 0.0
        %5775 = vmatprep.subr.mxu0 0.0
        %5776 = vmatpush1.msra.mxu0 0.0
        %5777 = vmatprep.subr.mxu0 0.0
        %5778 = vmatpush1.msra.mxu0 0.0
        %5779 = vmatprep.subr.mxu0 0.0
        %5780 = vmatpush1.msra.mxu0 0.0
        %5781 = vmatprep.subr.mxu0 0.0
        %5782 = vmatpush1.msra.mxu0 0.0
        %5783 = vmatprep.subr.mxu0 0.0
        %5784 = vmatpush1.msra.mxu0 0.0
        %5785 = vmatprep.subr.mxu0 0.0
        %5786 = vmatpush1.msra.mxu0 0.0
        %5787 = vmatprep.subr.mxu0 0.0
        %5788 = vmatpush1.msra.mxu0 0.0
        %5789 = vmatprep.subr.mxu0 0.0
        %5790 = vmatpush1.msra.mxu0 0.0
        %5791 = vmatprep.subr.mxu0 0.0
        %5792 = vmatpush1.msra.mxu0 0.0
        %5793 = vmatprep.subr.mxu0 0.0
        %5794 = vmatpush1.msra.mxu0 0.0
        %5795 = vmatprep.subr.mxu0 0.0
        %5796 = vmatpush1.msra.mxu0 0.0
        %5797 = vmatprep.subr.mxu0 0.0
        %5798 = vmatpush1.msra.mxu0 0.0
        %5799 = vmatprep.mubr.f32.mxu0 0.0
        %5800 = vmatmul.mubr.f32.gmra.mrb[0].mxu0 %v5733
        %v5801 = vpop.f32.mrb[0].mxu0
        %v5802 = vadd.f32 0.0, %v5801
        %v5803 = vpop.f32.mrb[0].mxu0
        %5804 = vdwg.mxu0
        %v5805 = vlaneseq
        %v5806 = vshrl.u32 %v5805, 7
        %v5807 = vsub.s32 1, %v5806
        %v5808 = vrot.slane %v5397, %v5807
        %v5809 = vadd.f32 %v5808, %v5802
        %5810 = vrot.lane.b32.xlu0 %v5472, 120
        %v5811 = vpop.permute.xlu0 %5810
        %5812 = vrot.lane.b32.xlu0 %v5562, 120
        %v5813 = vpop.permute.xlu0 %5812
        %v5814 = vsel %vm645, %v5811, 0
        %v5816 = vsel %vm645, %v5813, 0
        %5818 = vmatprep.subr.mxu0 0.0
        %5819 = vmatpush1.xpose.msra.mxu0 %v5816
        %5820 = vmatprep.subr.mxu0 0.0
        %5821 = vmatpush1.xpose.msra.mxu0 0.0
        %5822 = vmatprep.subr.mxu0 0.0
        %5823 = vmatpush1.xpose.msra.mxu0 0.0
        %5824 = vmatprep.subr.mxu0 0.0
        %5825 = vmatpush1.xpose.msra.mxu0 0.0
        %5826 = vmatprep.subr.mxu0 0.0
        %5827 = vmatpush1.xpose.msra.mxu0 0.0
        %5828 = vmatprep.subr.mxu0 0.0
        %5829 = vmatpush1.xpose.msra.mxu0 0.0
        %5830 = vmatprep.subr.mxu0 0.0
        %5831 = vmatpush1.xpose.msra.mxu0 0.0
        %5832 = vmatprep.subr.mxu0 0.0
        %5833 = vmatpush1.xpose.msra.mxu0 0.0
        %5834 = vmatprep.subr.mxu0 0.0
        %5835 = vmatpush1.xpose.msra.mxu0 0.0
        %5836 = vmatprep.subr.mxu0 0.0
        %5837 = vmatpush1.xpose.msra.mxu0 0.0
        %5838 = vmatprep.subr.mxu0 0.0
        %5839 = vmatpush1.xpose.msra.mxu0 0.0
        %5840 = vmatprep.subr.mxu0 0.0
        %5841 = vmatpush1.xpose.msra.mxu0 0.0
        %5842 = vmatprep.subr.mxu0 0.0
        %5843 = vmatpush1.xpose.msra.mxu0 0.0
        %5844 = vmatprep.subr.mxu0 0.0
        %5845 = vmatpush1.xpose.msra.mxu0 0.0
        %5846 = vmatprep.subr.mxu0 0.0
        %5847 = vmatpush1.xpose.msra.mxu0 0.0
        %5848 = vmatprep.subr.mxu0 0.0
        %5849 = vmatpush1.xpose.msra.mxu0 0.0
        %5850 = vmatprep.subr.mxu0 0.0
        %5851 = vmatpush1.xpose.msra.mxu0 0.0
        %5852 = vmatprep.subr.mxu0 0.0
        %5853 = vmatpush1.xpose.msra.mxu0 0.0
        %5854 = vmatprep.subr.mxu0 0.0
        %5855 = vmatpush1.xpose.msra.mxu0 0.0
        %5856 = vmatprep.subr.mxu0 0.0
        %5857 = vmatpush1.xpose.msra.mxu0 0.0
        %5858 = vmatprep.subr.mxu0 0.0
        %5859 = vmatpush1.xpose.msra.mxu0 0.0
        %5860 = vmatprep.subr.mxu0 0.0
        %5861 = vmatpush1.xpose.msra.mxu0 0.0
        %5862 = vmatprep.subr.mxu0 0.0
        %5863 = vmatpush1.xpose.msra.mxu0 0.0
        %5864 = vmatprep.subr.mxu0 0.0
        %5865 = vmatpush1.xpose.msra.mxu0 0.0
        %5866 = vmatprep.subr.mxu0 0.0
        %5867 = vmatpush1.xpose.msra.mxu0 0.0
        %5868 = vmatprep.subr.mxu0 0.0
        %5869 = vmatpush1.xpose.msra.mxu0 0.0
        %5870 = vmatprep.subr.mxu0 0.0
        %5871 = vmatpush1.xpose.msra.mxu0 0.0
        %5872 = vmatprep.subr.mxu0 0.0
        %5873 = vmatpush1.xpose.msra.mxu0 0.0
        %5874 = vmatprep.subr.mxu0 0.0
        %5875 = vmatpush1.xpose.msra.mxu0 0.0
        %5876 = vmatprep.subr.mxu0 0.0
        %5877 = vmatpush1.xpose.msra.mxu0 0.0
        %5878 = vmatprep.subr.mxu0 0.0
        %5879 = vmatpush1.xpose.msra.mxu0 0.0
        %5880 = vmatprep.subr.mxu0 0.0
        %5881 = vmatpush1.xpose.msra.mxu0 0.0
        %5882 = vmatprep.mubr.f32.mxu0 0.0
        %5883 = vmatmul.mubr.f32.gmra.mrb[0].mxu0 %v5814
        %v5884 = vpop.f32.mrb[0].mxu0
        %v5885 = vadd.f32 0.0, %v5884
        %v5886 = vpop.f32.mrb[0].mxu0
        %5887 = vdwg.mxu0
        %v5888 = vmul.f32 %v5885, 0.17677669
        %v5889 = vsel %vm645, %v5888, -inf
        %5890 = vmax.xlane.f32.xlu0 %v5889
        %v5891 = vpop.xlane.xlu0 %5890
        %v5892 = vsub.f32 %v5888, %v5891
        %v5893 = vmul.f32 %v5892, 1.442695
        %v5894 = vpow.pop %v5893
        %v5895 = vsel %vm645, %v5894, 0.0
        %5896 = vadd.xlane.f32.xlu0 %v5895
        %v5897 = vpop.xlane.xlu0 %5896
        %v5898 = vrcp.pop %v5897
        %v5899 = vmul.f32 %v5894, %v5898
        %5900 = vrot.lane.b32.xlu0 %v5562, 88
        %v5901 = vpop.permute.xlu0 %5900
        %v5904 = vsel %vm645, %v5899, 0
        %5906 = vmatprep.subr.mxu0 0.0
        %5907 = vmatpush1.msra.mxu0 %v5901
        %5908 = vmatprep.subr.mxu0 0.0
        %5909 = vmatpush1.msra.mxu0 0.0
        %5910 = vmatprep.subr.mxu0 0.0
        %5911 = vmatpush1.msra.mxu0 0.0
        %5912 = vmatprep.subr.mxu0 0.0
        %5913 = vmatpush1.msra.mxu0 0.0
        %5914 = vmatprep.subr.mxu0 0.0
        %5915 = vmatpush1.msra.mxu0 0.0
        %5916 = vmatprep.subr.mxu0 0.0
        %5917 = vmatpush1.msra.mxu0 0.0
        %5918 = vmatprep.subr.mxu0 0.0
        %5919 = vmatpush1.msra.mxu0 0.0
        %5920 = vmatprep.subr.mxu0 0.0
        %5921 = vmatpush1.msra.mxu0 0.0
        %5922 = vmatprep.subr.mxu0 0.0
        %5923 = vmatpush1.msra.mxu0 0.0
        %5924 = vmatprep.subr.mxu0 0.0
        %5925 = vmatpush1.msra.mxu0 0.0
        %5926 = vmatprep.subr.mxu0 0.0
        %5927 = vmatpush1.msra.mxu0 0.0
        %5928 = vmatprep.subr.mxu0 0.0
        %5929 = vmatpush1.msra.mxu0 0.0
        %5930 = vmatprep.subr.mxu0 0.0
        %5931 = vmatpush1.msra.mxu0 0.0
        %5932 = vmatprep.subr.mxu0 0.0
        %5933 = vmatpush1.msra.mxu0 0.0
        %5934 = vmatprep.subr.mxu0 0.0
        %5935 = vmatpush1.msra.mxu0 0.0
        %5936 = vmatprep.subr.mxu0 0.0
        %5937 = vmatpush1.msra.mxu0 0.0
        %5938 = vmatprep.subr.mxu0 0.0
        %5939 = vmatpush1.msra.mxu0 0.0
        %5940 = vmatprep.subr.mxu0 0.0
        %5941 = vmatpush1.msra.mxu0 0.0
        %5942 = vmatprep.subr.mxu0 0.0
        %5943 = vmatpush1.msra.mxu0 0.0
        %5944 = vmatprep.subr.mxu0 0.0
        %5945 = vmatpush1.msra.mxu0 0.0
        %5946 = vmatprep.subr.mxu0 0.0
        %5947 = vmatpush1.msra.mxu0 0.0
        %5948 = vmatprep.subr.mxu0 0.0
        %5949 = vmatpush1.msra.mxu0 0.0
        %5950 = vmatprep.subr.mxu0 0.0
        %5951 = vmatpush1.msra.mxu0 0.0
        %5952 = vmatprep.subr.mxu0 0.0
        %5953 = vmatpush1.msra.mxu0 0.0
        %5954 = vmatprep.subr.mxu0 0.0
        %5955 = vmatpush1.msra.mxu0 0.0
        %5956 = vmatprep.subr.mxu0 0.0
        %5957 = vmatpush1.msra.mxu0 0.0
        %5958 = vmatprep.subr.mxu0 0.0
        %5959 = vmatpush1.msra.mxu0 0.0
        %5960 = vmatprep.subr.mxu0 0.0
        %5961 = vmatpush1.msra.mxu0 0.0
        %5962 = vmatprep.subr.mxu0 0.0
        %5963 = vmatpush1.msra.mxu0 0.0
        %5964 = vmatprep.subr.mxu0 0.0
        %5965 = vmatpush1.msra.mxu0 0.0
        %5966 = vmatprep.subr.mxu0 0.0
        %5967 = vmatpush1.msra.mxu0 0.0
        %5968 = vmatprep.subr.mxu0 0.0
        %5969 = vmatpush1.msra.mxu0 0.0
        %5970 = vmatprep.mubr.f32.mxu0 0.0
        %5971 = vmatmul.mubr.f32.gmra.mrb[0].mxu0 %v5904
        %v5972 = vpop.f32.mrb[0].mxu0
        %v5973 = vadd.f32 0.0, %v5972
        %v5974 = vpop.f32.mrb[0].mxu0
        %5975 = vdwg.mxu0
        %5976 = vrot.lane.b32.xlu0 %v5393, 32
        %v5977 = vpop.permute.xlu0 %5976
        %v5980 = vsel %vm645, %v5973, 0
        %5982 = vmatprep.subr.mxu0 0.0
        %5983 = vmatpush1.msra.mxu0 %v5977
        %5984 = vmatprep.subr.mxu0 0.0
        %5985 = vmatpush1.msra.mxu0 0.0
        %5986 = vmatprep.subr.mxu0 0.0
        %5987 = vmatpush1.msra.mxu0 0.0
        %5988 = vmatprep.subr.mxu0 0.0
        %5989 = vmatpush1.msra.mxu0 0.0
        %5990 = vmatprep.subr.mxu0 0.0
        %5991 = vmatpush1.msra.mxu0 0.0
        %5992 = vmatprep.subr.mxu0 0.0
        %5993 = vmatpush1.msra.mxu0 0.0
        %5994 = vmatprep.subr.mxu0 0.0
        %5995 = vmatpush1.msra.mxu0 0.0
        %5996 = vmatprep.subr.mxu0 0.0
        %5997 = vmatpush1.msra.mxu0 0.0
        %5998 = vmatprep.subr.mxu0 0.0
        %5999 = vmatpush1.msra.mxu0 0.0
        %6000 = vmatprep.subr.mxu0 0.0
        %6001 = vmatpush1.msra.mxu0 0.0
        %6002 = vmatprep.subr.mxu0 0.0
        %6003 = vmatpush1.msra.mxu0 0.0
        %6004 = vmatprep.subr.mxu0 0.0
        %6005 = vmatpush1.msra.mxu0 0.0
        %6006 = vmatprep.subr.mxu0 0.0
        %6007 = vmatpush1.msra.mxu0 0.0
        %6008 = vmatprep.subr.mxu0 0.0
        %6009 = vmatpush1.msra.mxu0 0.0
        %6010 = vmatprep.subr.mxu0 0.0
        %6011 = vmatpush1.msra.mxu0 0.0
        %6012 = vmatprep.subr.mxu0 0.0
        %6013 = vmatpush1.msra.mxu0 0.0
        %6014 = vmatprep.subr.mxu0 0.0
        %6015 = vmatpush1.msra.mxu0 0.0
        %6016 = vmatprep.subr.mxu0 0.0
        %6017 = vmatpush1.msra.mxu0 0.0
        %6018 = vmatprep.subr.mxu0 0.0
        %6019 = vmatpush1.msra.mxu0 0.0
        %6020 = vmatprep.subr.mxu0 0.0
        %6021 = vmatpush1.msra.mxu0 0.0
        %6022 = vmatprep.subr.mxu0 0.0
        %6023 = vmatpush1.msra.mxu0 0.0
        %6024 = vmatprep.subr.mxu0 0.0
        %6025 = vmatpush1.msra.mxu0 0.0
        %6026 = vmatprep.subr.mxu0 0.0
        %6027 = vmatpush1.msra.mxu0 0.0
        %6028 = vmatprep.subr.mxu0 0.0
        %6029 = vmatpush1.msra.mxu0 0.0
        %6030 = vmatprep.subr.mxu0 0.0
        %6031 = vmatpush1.msra.mxu0 0.0
        %6032 = vmatprep.subr.mxu0 0.0
        %6033 = vmatpush1.msra.mxu0 0.0
        %6034 = vmatprep.subr.mxu0 0.0
        %6035 = vmatpush1.msra.mxu0 0.0
        %6036 = vmatprep.subr.mxu0 0.0
        %6037 = vmatpush1.msra.mxu0 0.0
        %6038 = vmatprep.subr.mxu0 0.0
        %6039 = vmatpush1.msra.mxu0 0.0
        %6040 = vmatprep.subr.mxu0 0.0
        %6041 = vmatpush1.msra.mxu0 0.0
        %6042 = vmatprep.subr.mxu0 0.0
        %6043 = vmatpush1.msra.mxu0 0.0
        %6044 = vmatprep.subr.mxu0 0.0
        %6045 = vmatpush1.msra.mxu0 0.0
        %6046 = vmatprep.mubr.f32.mxu0 0.0
        %6047 = vmatmul.mubr.f32.gmra.mrb[0].mxu0 %v5980
        %v6048 = vpop.f32.mrb[0].mxu0
        %v6049 = vadd.f32 0.0, %v6048
        %v6050 = vpop.f32.mrb[0].mxu0
        %6051 = vdwg.mxu0
        %v6052 = vadd.f32 %v5809, %v6049
        %6053 = vrot.lane.b32.xlu0 %v5472, 112
        %v6054 = vpop.permute.xlu0 %6053
        %6055 = vrot.lane.b32.xlu0 %v5562, 112
        %v6056 = vpop.permute.xlu0 %6055
        %v6057 = vsel %vm645, %v6054, 0
        %v6059 = vsel %vm645, %v6056, 0
        %6061 = vmatprep.subr.mxu0 0.0
        %6062 = vmatpush1.xpose.msra.mxu0 %v6059
        %6063 = vmatprep.subr.mxu0 0.0
        %6064 = vmatpush1.xpose.msra.mxu0 0.0
        %6065 = vmatprep.subr.mxu0 0.0
        %6066 = vmatpush1.xpose.msra.mxu0 0.0
        %6067 = vmatprep.subr.mxu0 0.0
        %6068 = vmatpush1.xpose.msra.mxu0 0.0
        %6069 = vmatprep.subr.mxu0 0.0
        %6070 = vmatpush1.xpose.msra.mxu0 0.0
        %6071 = vmatprep.subr.mxu0 0.0
        %6072 = vmatpush1.xpose.msra.mxu0 0.0
        %6073 = vmatprep.subr.mxu0 0.0
        %6074 = vmatpush1.xpose.msra.mxu0 0.0
        %6075 = vmatprep.subr.mxu0 0.0
        %6076 = vmatpush1.xpose.msra.mxu0 0.0
        %6077 = vmatprep.subr.mxu0 0.0
        %6078 = vmatpush1.xpose.msra.mxu0 0.0
        %6079 = vmatprep.subr.mxu0 0.0
        %6080 = vmatpush1.xpose.msra.mxu0 0.0
        %6081 = vmatprep.subr.mxu0 0.0
        %6082 = vmatpush1.xpose.msra.mxu0 0.0
        %6083 = vmatprep.subr.mxu0 0.0
        %6084 = vmatpush1.xpose.msra.mxu0 0.0
        %6085 = vmatprep.subr.mxu0 0.0
        %6086 = vmatpush1.xpose.msra.mxu0 0.0
        %6087 = vmatprep.subr.mxu0 0.0
        %6088 = vmatpush1.xpose.msra.mxu0 0.0
        %6089 = vmatprep.subr.mxu0 0.0
        %6090 = vmatpush1.xpose.msra.mxu0 0.0
        %6091 = vmatprep.subr.mxu0 0.0
        %6092 = vmatpush1.xpose.msra.mxu0 0.0
        %6093 = vmatprep.subr.mxu0 0.0
        %6094 = vmatpush1.xpose.msra.mxu0 0.0
        %6095 = vmatprep.subr.mxu0 0.0
        %6096 = vmatpush1.xpose.msra.mxu0 0.0
        %6097 = vmatprep.subr.mxu0 0.0
        %6098 = vmatpush1.xpose.msra.mxu0 0.0
        %6099 = vmatprep.subr.mxu0 0.0
        %6100 = vmatpush1.xpose.msra.mxu0 0.0
        %6101 = vmatprep.subr.mxu0 0.0
        %6102 = vmatpush1.xpose.msra.mxu0 0.0
        %6103 = vmatprep.subr.mxu0 0.0
        %6104 = vmatpush1.xpose.msra.mxu0 0.0
        %6105 = vmatprep.subr.mxu0 0.0
        %6106 = vmatpush1.xpose.msra.mxu0 0.0
        %6107 = vmatprep.subr.mxu0 0.0
        %6108 = vmatpush1.xpose.msra.mxu0 0.0
        %6109 = vmatprep.subr.mxu0 0.0
        %6110 = vmatpush1.xpose.msra.mxu0 0.0
        %6111 = vmatprep.subr.mxu0 0.0
        %6112 = vmatpush1.xpose.msra.mxu0 0.0
        %6113 = vmatprep.subr.mxu0 0.0
        %6114 = vmatpush1.xpose.msra.mxu0 0.0
        %6115 = vmatprep.subr.mxu0 0.0
        %6116 = vmatpush1.xpose.msra.mxu0 0.0
        %6117 = vmatprep.subr.mxu0 0.0
        %6118 = vmatpush1.xpose.msra.mxu0 0.0
        %6119 = vmatprep.subr.mxu0 0.0
        %6120 = vmatpush1.xpose.msra.mxu0 0.0
        %6121 = vmatprep.subr.mxu0 0.0
        %6122 = vmatpush1.xpose.msra.mxu0 0.0
        %6123 = vmatprep.subr.mxu0 0.0
        %6124 = vmatpush1.xpose.msra.mxu0 0.0
        %6125 = vmatprep.mubr.f32.mxu0 0.0
        %6126 = vmatmul.mubr.f32.gmra.mrb[0].mxu0 %v6057
        %v6127 = vpop.f32.mrb[0].mxu0
        %v6128 = vadd.f32 0.0, %v6127
        %v6129 = vpop.f32.mrb[0].mxu0
        %6130 = vdwg.mxu0
        %v6131 = vmul.f32 %v6128, 0.17677669
        %v6132 = vsel %vm645, %v6131, -inf
        %6133 = vmax.xlane.f32.xlu0 %v6132
        %v6134 = vpop.xlane.xlu0 %6133
        %v6135 = vsub.f32 %v6131, %v6134
        %v6136 = vmul.f32 %v6135, 1.442695
        %v6137 = vpow.pop %v6136
        %v6138 = vsel %vm645, %v6137, 0.0
        %6139 = vadd.xlane.f32.xlu0 %v6138
        %v6140 = vpop.xlane.xlu0 %6139
        %v6141 = vrcp.pop %v6140
        %v6142 = vmul.f32 %v6137, %v6141
        %6143 = vrot.lane.b32.xlu0 %v5562, 80
        %v6144 = vpop.permute.xlu0 %6143
        %v6147 = vsel %vm645, %v6142, 0
        %6149 = vmatprep.subr.mxu0 0.0
        %6150 = vmatpush1.msra.mxu0 %v6144
        %6151 = vmatprep.subr.mxu0 0.0
        %6152 = vmatpush1.msra.mxu0 0.0
        %6153 = vmatprep.subr.mxu0 0.0
        %6154 = vmatpush1.msra.mxu0 0.0
        %6155 = vmatprep.subr.mxu0 0.0
        %6156 = vmatpush1.msra.mxu0 0.0
        %6157 = vmatprep.subr.mxu0 0.0
        %6158 = vmatpush1.msra.mxu0 0.0
        %6159 = vmatprep.subr.mxu0 0.0
        %6160 = vmatpush1.msra.mxu0 0.0
        %6161 = vmatprep.subr.mxu0 0.0
        %6162 = vmatpush1.msra.mxu0 0.0
        %6163 = vmatprep.subr.mxu0 0.0
        %6164 = vmatpush1.msra.mxu0 0.0
        %6165 = vmatprep.subr.mxu0 0.0
        %6166 = vmatpush1.msra.mxu0 0.0
        %6167 = vmatprep.subr.mxu0 0.0
        %6168 = vmatpush1.msra.mxu0 0.0
        %6169 = vmatprep.subr.mxu0 0.0
        %6170 = vmatpush1.msra.mxu0 0.0
        %6171 = vmatprep.subr.mxu0 0.0
        %6172 = vmatpush1.msra.mxu0 0.0
        %6173 = vmatprep.subr.mxu0 0.0
        %6174 = vmatpush1.msra.mxu0 0.0
        %6175 = vmatprep.subr.mxu0 0.0
        %6176 = vmatpush1.msra.mxu0 0.0
        %6177 = vmatprep.subr.mxu0 0.0
        %6178 = vmatpush1.msra.mxu0 0.0
        %6179 = vmatprep.subr.mxu0 0.0
        %6180 = vmatpush1.msra.mxu0 0.0
        %6181 = vmatprep.subr.mxu0 0.0
        %6182 = vmatpush1.msra.mxu0 0.0
        %6183 = vmatprep.subr.mxu0 0.0
        %6184 = vmatpush1.msra.mxu0 0.0
        %6185 = vmatprep.subr.mxu0 0.0
        %6186 = vmatpush1.msra.mxu0 0.0
        %6187 = vmatprep.subr.mxu0 0.0
        %6188 = vmatpush1.msra.mxu0 0.0
        %6189 = vmatprep.subr.mxu0 0.0
        %6190 = vmatpush1.msra.mxu0 0.0
        %6191 = vmatprep.subr.mxu0 0.0
        %6192 = vmatpush1.msra.mxu0 0.0
        %6193 = vmatprep.subr.mxu0 0.0
        %6194 = vmatpush1.msra.mxu0 0.0
        %6195 = vmatprep.subr.mxu0 0.0
        %6196 = vmatpush1.msra.mxu0 0.0
        %6197 = vmatprep.subr.mxu0 0.0
        %6198 = vmatpush1.msra.mxu0 0.0
        %6199 = vmatprep.subr.mxu0 0.0
        %6200 = vmatpush1.msra.mxu0 0.0
        %6201 = vmatprep.subr.mxu0 0.0
        %6202 = vmatpush1.msra.mxu0 0.0
        %6203 = vmatprep.subr.mxu0 0.0
        %6204 = vmatpush1.msra.mxu0 0.0
        %6205 = vmatprep.subr.mxu0 0.0
        %6206 = vmatpush1.msra.mxu0 0.0
        %6207 = vmatprep.subr.mxu0 0.0
        %6208 = vmatpush1.msra.mxu0 0.0
        %6209 = vmatprep.subr.mxu0 0.0
        %6210 = vmatpush1.msra.mxu0 0.0
        %6211 = vmatprep.subr.mxu0 0.0
        %6212 = vmatpush1.msra.mxu0 0.0
        %6213 = vmatprep.mubr.f32.mxu0 0.0
        %6214 = vmatmul.mubr.f32.gmra.mrb[0].mxu0 %v6147
        %v6215 = vpop.f32.mrb[0].mxu0
        %v6216 = vadd.f32 0.0, %v6215
        %v6217 = vpop.f32.mrb[0].mxu0
        %6218 = vdwg.mxu0
        %6219 = vrot.lane.b32.xlu0 %v5394, 32
        %v6220 = vpop.permute.xlu0 %6219
        %v6223 = vsel %vm645, %v6216, 0
        %6225 = vmatprep.subr.mxu0 0.0
        %6226 = vmatpush1.msra.mxu0 %v6220
        %6227 = vmatprep.subr.mxu0 0.0
        %6228 = vmatpush1.msra.mxu0 0.0
        %6229 = vmatprep.subr.mxu0 0.0
        %6230 = vmatpush1.msra.mxu0 0.0
        %6231 = vmatprep.subr.mxu0 0.0
        %6232 = vmatpush1.msra.mxu0 0.0
        %6233 = vmatprep.subr.mxu0 0.0
        %6234 = vmatpush1.msra.mxu0 0.0
        %6235 = vmatprep.subr.mxu0 0.0
        %6236 = vmatpush1.msra.mxu0 0.0
        %6237 = vmatprep.subr.mxu0 0.0
        %6238 = vmatpush1.msra.mxu0 0.0
        %6239 = vmatprep.subr.mxu0 0.0
        %6240 = vmatpush1.msra.mxu0 0.0
        %6241 = vmatprep.subr.mxu0 0.0
        %6242 = vmatpush1.msra.mxu0 0.0
        %6243 = vmatprep.subr.mxu0 0.0
        %6244 = vmatpush1.msra.mxu0 0.0
        %6245 = vmatprep.subr.mxu0 0.0
        %6246 = vmatpush1.msra.mxu0 0.0
        %6247 = vmatprep.subr.mxu0 0.0
        %6248 = vmatpush1.msra.mxu0 0.0
        %6249 = vmatprep.subr.mxu0 0.0
        %6250 = vmatpush1.msra.mxu0 0.0
        %6251 = vmatprep.subr.mxu0 0.0
        %6252 = vmatpush1.msra.mxu0 0.0
        %6253 = vmatprep.subr.mxu0 0.0
        %6254 = vmatpush1.msra.mxu0 0.0
        %6255 = vmatprep.subr.mxu0 0.0
        %6256 = vmatpush1.msra.mxu0 0.0
        %6257 = vmatprep.subr.mxu0 0.0
        %6258 = vmatpush1.msra.mxu0 0.0
        %6259 = vmatprep.subr.mxu0 0.0
        %6260 = vmatpush1.msra.mxu0 0.0
        %6261 = vmatprep.subr.mxu0 0.0
        %6262 = vmatpush1.msra.mxu0 0.0
        %6263 = vmatprep.subr.mxu0 0.0
        %6264 = vmatpush1.msra.mxu0 0.0
        %6265 = vmatprep.subr.mxu0 0.0
        %6266 = vmatpush1.msra.mxu0 0.0
        %6267 = vmatprep.subr.mxu0 0.0
        %6268 = vmatpush1.msra.mxu0 0.0
        %6269 = vmatprep.subr.mxu0 0.0
        %6270 = vmatpush1.msra.mxu0 0.0
        %6271 = vmatprep.subr.mxu0 0.0
        %6272 = vmatpush1.msra.mxu0 0.0
        %6273 = vmatprep.subr.mxu0 0.0
        %6274 = vmatpush1.msra.mxu0 0.0
        %6275 = vmatprep.subr.mxu0 0.0
        %6276 = vmatpush1.msra.mxu0 0.0
        %6277 = vmatprep.subr.mxu0 0.0
        %6278 = vmatpush1.msra.mxu0 0.0
        %6279 = vmatprep.subr.mxu0 0.0
        %6280 = vmatpush1.msra.mxu0 0.0
        %6281 = vmatprep.subr.mxu0 0.0
        %6282 = vmatpush1.msra.mxu0 0.0
        %6283 = vmatprep.subr.mxu0 0.0
        %6284 = vmatpush1.msra.mxu0 0.0
        %6285 = vmatprep.subr.mxu0 0.0
        %6286 = vmatpush1.msra.mxu0 0.0
        %6287 = vmatprep.subr.mxu0 0.0
        %6288 = vmatpush1.msra.mxu0 0.0
        %6289 = vmatprep.mubr.f32.mxu0 0.0
        %6290 = vmatmul.mubr.f32.gmra.mrb[0].mxu0 %v6223
        %v6291 = vpop.f32.mrb[0].mxu0
        %v6292 = vadd.f32 0.0, %v6291
        %v6293 = vpop.f32.mrb[0].mxu0
        %6294 = vdwg.mxu0
        %v6295 = vadd.f32 %v6052, %v6292
        %6296 = vrot.lane.b32.xlu0 %v5472, 104
        %v6297 = vpop.permute.xlu0 %6296
        %6298 = vrot.lane.b32.xlu0 %v5562, 104
        %v6299 = vpop.permute.xlu0 %6298
        %v6300 = vsel %vm645, %v6297, 0
        %v6302 = vsel %vm645, %v6299, 0
        %6304 = vmatprep.subr.mxu0 0.0
        %6305 = vmatpush1.xpose.msra.mxu0 %v6302
        %6306 = vmatprep.subr.mxu0 0.0
        %6307 = vmatpush1.xpose.msra.mxu0 0.0
        %6308 = vmatprep.subr.mxu0 0.0
        %6309 = vmatpush1.xpose.msra.mxu0 0.0
        %6310 = vmatprep.subr.mxu0 0.0
        %6311 = vmatpush1.xpose.msra.mxu0 0.0
        %6312 = vmatprep.subr.mxu0 0.0
        %6313 = vmatpush1.xpose.msra.mxu0 0.0
        %6314 = vmatprep.subr.mxu0 0.0
        %6315 = vmatpush1.xpose.msra.mxu0 0.0
        %6316 = vmatprep.subr.mxu0 0.0
        %6317 = vmatpush1.xpose.msra.mxu0 0.0
        %6318 = vmatprep.subr.mxu0 0.0
        %6319 = vmatpush1.xpose.msra.mxu0 0.0
        %6320 = vmatprep.subr.mxu0 0.0
        %6321 = vmatpush1.xpose.msra.mxu0 0.0
        %6322 = vmatprep.subr.mxu0 0.0
        %6323 = vmatpush1.xpose.msra.mxu0 0.0
        %6324 = vmatprep.subr.mxu0 0.0
        %6325 = vmatpush1.xpose.msra.mxu0 0.0
        %6326 = vmatprep.subr.mxu0 0.0
        %6327 = vmatpush1.xpose.msra.mxu0 0.0
        %6328 = vmatprep.subr.mxu0 0.0
        %6329 = vmatpush1.xpose.msra.mxu0 0.0
        %6330 = vmatprep.subr.mxu0 0.0
        %6331 = vmatpush1.xpose.msra.mxu0 0.0
        %6332 = vmatprep.subr.mxu0 0.0
        %6333 = vmatpush1.xpose.msra.mxu0 0.0
        %6334 = vmatprep.subr.mxu0 0.0
        %6335 = vmatpush1.xpose.msra.mxu0 0.0
        %6336 = vmatprep.subr.mxu0 0.0
        %6337 = vmatpush1.xpose.msra.mxu0 0.0
        %6338 = vmatprep.subr.mxu0 0.0
        %6339 = vmatpush1.xpose.msra.mxu0 0.0
        %6340 = vmatprep.subr.mxu0 0.0
        %6341 = vmatpush1.xpose.msra.mxu0 0.0
        %6342 = vmatprep.subr.mxu0 0.0
        %6343 = vmatpush1.xpose.msra.mxu0 0.0
        %6344 = vmatprep.subr.mxu0 0.0
        %6345 = vmatpush1.xpose.msra.mxu0 0.0
        %6346 = vmatprep.subr.mxu0 0.0
        %6347 = vmatpush1.xpose.msra.mxu0 0.0
        %6348 = vmatprep.subr.mxu0 0.0
        %6349 = vmatpush1.xpose.msra.mxu0 0.0
        %6350 = vmatprep.subr.mxu0 0.0
        %6351 = vmatpush1.xpose.msra.mxu0 0.0
        %6352 = vmatprep.subr.mxu0 0.0
        %6353 = vmatpush1.xpose.msra.mxu0 0.0
        %6354 = vmatprep.subr.mxu0 0.0
        %6355 = vmatpush1.xpose.msra.mxu0 0.0
        %6356 = vmatprep.subr.mxu0 0.0
        %6357 = vmatpush1.xpose.msra.mxu0 0.0
        %6358 = vmatprep.subr.mxu0 0.0
        %6359 = vmatpush1.xpose.msra.mxu0 0.0
        %6360 = vmatprep.subr.mxu0 0.0
        %6361 = vmatpush1.xpose.msra.mxu0 0.0
        %6362 = vmatprep.subr.mxu0 0.0
        %6363 = vmatpush1.xpose.msra.mxu0 0.0
        %6364 = vmatprep.subr.mxu0 0.0
        %6365 = vmatpush1.xpose.msra.mxu0 0.0
        %6366 = vmatprep.subr.mxu0 0.0
        %6367 = vmatpush1.xpose.msra.mxu0 0.0
        %6368 = vmatprep.mubr.f32.mxu0 0.0
        %6369 = vmatmul.mubr.f32.gmra.mrb[0].mxu0 %v6300
        %v6370 = vpop.f32.mrb[0].mxu0
        %v6371 = vadd.f32 0.0, %v6370
        %v6372 = vpop.f32.mrb[0].mxu0
        %6373 = vdwg.mxu0
        %v6374 = vmul.f32 %v6371, 0.17677669
        %v6375 = vsel %vm645, %v6374, -inf
        %6376 = vmax.xlane.f32.xlu0 %v6375
        %v6377 = vpop.xlane.xlu0 %6376
        %v6378 = vsub.f32 %v6374, %v6377
        %v6379 = vmul.f32 %v6378, 1.442695
        %v6380 = vpow.pop %v6379
        %v6381 = vsel %vm645, %v6380, 0.0
        %6382 = vadd.xlane.f32.xlu0 %v6381
        %v6383 = vpop.xlane.xlu0 %6382
        %v6384 = vrcp.pop %v6383
        %v6385 = vmul.f32 %v6380, %v6384
        %6386 = vrot.lane.b32.xlu0 %v5562, 72
        %v6387 = vpop.permute.xlu0 %6386
        %v6390 = vsel %vm645, %v6385, 0
        %6392 = vmatprep.subr.mxu0 0.0
        %6393 = vmatpush1.msra.mxu0 %v6387
        %6394 = vmatprep.subr.mxu0 0.0
        %6395 = vmatpush1.msra.mxu0 0.0
        %6396 = vmatprep.subr.mxu0 0.0
        %6397 = vmatpush1.msra.mxu0 0.0
        %6398 = vmatprep.subr.mxu0 0.0
        %6399 = vmatpush1.msra.mxu0 0.0
        %6400 = vmatprep.subr.mxu0 0.0
        %6401 = vmatpush1.msra.mxu0 0.0
        %6402 = vmatprep.subr.mxu0 0.0
        %6403 = vmatpush1.msra.mxu0 0.0
        %6404 = vmatprep.subr.mxu0 0.0
        %6405 = vmatpush1.msra.mxu0 0.0
        %6406 = vmatprep.subr.mxu0 0.0
        %6407 = vmatpush1.msra.mxu0 0.0
        %6408 = vmatprep.subr.mxu0 0.0
        %6409 = vmatpush1.msra.mxu0 0.0
        %6410 = vmatprep.subr.mxu0 0.0
        %6411 = vmatpush1.msra.mxu0 0.0
        %6412 = vmatprep.subr.mxu0 0.0
        %6413 = vmatpush1.msra.mxu0 0.0
        %6414 = vmatprep.subr.mxu0 0.0
        %6415 = vmatpush1.msra.mxu0 0.0
        %6416 = vmatprep.subr.mxu0 0.0
        %6417 = vmatpush1.msra.mxu0 0.0
        %6418 = vmatprep.subr.mxu0 0.0
        %6419 = vmatpush1.msra.mxu0 0.0
        %6420 = vmatprep.subr.mxu0 0.0
        %6421 = vmatpush1.msra.mxu0 0.0
        %6422 = vmatprep.subr.mxu0 0.0
        %6423 = vmatpush1.msra.mxu0 0.0
        %6424 = vmatprep.subr.mxu0 0.0
        %6425 = vmatpush1.msra.mxu0 0.0
        %6426 = vmatprep.subr.mxu0 0.0
        %6427 = vmatpush1.msra.mxu0 0.0
        %6428 = vmatprep.subr.mxu0 0.0
        %6429 = vmatpush1.msra.mxu0 0.0
        %6430 = vmatprep.subr.mxu0 0.0
        %6431 = vmatpush1.msra.mxu0 0.0
        %6432 = vmatprep.subr.mxu0 0.0
        %6433 = vmatpush1.msra.mxu0 0.0
        %6434 = vmatprep.subr.mxu0 0.0
        %6435 = vmatpush1.msra.mxu0 0.0
        %6436 = vmatprep.subr.mxu0 0.0
        %6437 = vmatpush1.msra.mxu0 0.0
        %6438 = vmatprep.subr.mxu0 0.0
        %6439 = vmatpush1.msra.mxu0 0.0
        %6440 = vmatprep.subr.mxu0 0.0
        %6441 = vmatpush1.msra.mxu0 0.0
        %6442 = vmatprep.subr.mxu0 0.0
        %6443 = vmatpush1.msra.mxu0 0.0
        %6444 = vmatprep.subr.mxu0 0.0
        %6445 = vmatpush1.msra.mxu0 0.0
        %6446 = vmatprep.subr.mxu0 0.0
        %6447 = vmatpush1.msra.mxu0 0.0
        %6448 = vmatprep.subr.mxu0 0.0
        %6449 = vmatpush1.msra.mxu0 0.0
        %6450 = vmatprep.subr.mxu0 0.0
        %6451 = vmatpush1.msra.mxu0 0.0
        %6452 = vmatprep.subr.mxu0 0.0
        %6453 = vmatpush1.msra.mxu0 0.0
        %6454 = vmatprep.subr.mxu0 0.0
        %6455 = vmatpush1.msra.mxu0 0.0
        %6456 = vmatprep.mubr.f32.mxu0 0.0
        %6457 = vmatmul.mubr.f32.gmra.mrb[0].mxu0 %v6390
        %v6458 = vpop.f32.mrb[0].mxu0
        %v6459 = vadd.f32 0.0, %v6458
        %v6460 = vpop.f32.mrb[0].mxu0
        %6461 = vdwg.mxu0
        %6462 = vrot.lane.b32.xlu0 %v5395, 32
        %v6463 = vpop.permute.xlu0 %6462
        %v6466 = vsel %vm645, %v6459, 0
        %6468 = vmatprep.subr.mxu0 0.0
        %6469 = vmatpush1.msra.mxu0 %v6463
        %6470 = vmatprep.subr.mxu0 0.0
        %6471 = vmatpush1.msra.mxu0 0.0
        %6472 = vmatprep.subr.mxu0 0.0
        %6473 = vmatpush1.msra.mxu0 0.0
        %6474 = vmatprep.subr.mxu0 0.0
        %6475 = vmatpush1.msra.mxu0 0.0
        %6476 = vmatprep.subr.mxu0 0.0
        %6477 = vmatpush1.msra.mxu0 0.0
        %6478 = vmatprep.subr.mxu0 0.0
        %6479 = vmatpush1.msra.mxu0 0.0
        %6480 = vmatprep.subr.mxu0 0.0
        %6481 = vmatpush1.msra.mxu0 0.0
        %6482 = vmatprep.subr.mxu0 0.0
        %6483 = vmatpush1.msra.mxu0 0.0
        %6484 = vmatprep.subr.mxu0 0.0
        %6485 = vmatpush1.msra.mxu0 0.0
        %6486 = vmatprep.subr.mxu0 0.0
        %6487 = vmatpush1.msra.mxu0 0.0
        %6488 = vmatprep.subr.mxu0 0.0
        %6489 = vmatpush1.msra.mxu0 0.0
        %6490 = vmatprep.subr.mxu0 0.0
        %6491 = vmatpush1.msra.mxu0 0.0
        %6492 = vmatprep.subr.mxu0 0.0
        %6493 = vmatpush1.msra.mxu0 0.0
        %6494 = vmatprep.subr.mxu0 0.0
        %6495 = vmatpush1.msra.mxu0 0.0
        %6496 = vmatprep.subr.mxu0 0.0
        %6497 = vmatpush1.msra.mxu0 0.0
        %6498 = vmatprep.subr.mxu0 0.0
        %6499 = vmatpush1.msra.mxu0 0.0
        %6500 = vmatprep.subr.mxu0 0.0
        %6501 = vmatpush1.msra.mxu0 0.0
        %6502 = vmatprep.subr.mxu0 0.0
        %6503 = vmatpush1.msra.mxu0 0.0
        %6504 = vmatprep.subr.mxu0 0.0
        %6505 = vmatpush1.msra.mxu0 0.0
        %6506 = vmatprep.subr.mxu0 0.0
        %6507 = vmatpush1.msra.mxu0 0.0
        %6508 = vmatprep.subr.mxu0 0.0
        %6509 = vmatpush1.msra.mxu0 0.0
        %6510 = vmatprep.subr.mxu0 0.0
        %6511 = vmatpush1.msra.mxu0 0.0
        %6512 = vmatprep.subr.mxu0 0.0
        %6513 = vmatpush1.msra.mxu0 0.0
        %6514 = vmatprep.subr.mxu0 0.0
        %6515 = vmatpush1.msra.mxu0 0.0
        %6516 = vmatprep.subr.mxu0 0.0
        %6517 = vmatpush1.msra.mxu0 0.0
        %6518 = vmatprep.subr.mxu0 0.0
        %6519 = vmatpush1.msra.mxu0 0.0
        %6520 = vmatprep.subr.mxu0 0.0
        %6521 = vmatpush1.msra.mxu0 0.0
        %6522 = vmatprep.subr.mxu0 0.0
        %6523 = vmatpush1.msra.mxu0 0.0
        %6524 = vmatprep.subr.mxu0 0.0
        %6525 = vmatpush1.msra.mxu0 0.0
        %6526 = vmatprep.subr.mxu0 0.0
        %6527 = vmatpush1.msra.mxu0 0.0
        %6528 = vmatprep.subr.mxu0 0.0
        %6529 = vmatpush1.msra.mxu0 0.0
        %6530 = vmatprep.subr.mxu0 0.0
        %6531 = vmatpush1.msra.mxu0 0.0
        %6532 = vmatprep.mubr.f32.mxu0 0.0
        %6533 = vmatmul.mubr.f32.gmra.mrb[0].mxu0 %v6466
        %v6534 = vpop.f32.mrb[0].mxu0
        %v6535 = vadd.f32 0.0, %v6534
        %v6536 = vpop.f32.mrb[0].mxu0
        %6537 = vdwg.mxu0
        %v6538 = vadd.f32 %v6295, %v6535
        %v6539 = vadd.f32 %v6538, %v5390
        %v6540 = vsel %vm568, %v6539, 0.0
        %6541 = vadd.xlane.f32.xlu0 %v6540
        %v6542 = vpop.xlane.xlu0 %6541
        %v6543 = vmul.f32 %v6542, %v1626
        %v6544 = vsub.f32 %v6539, %v6543
        %v6545 = vmul.f32 %v6544, %v6544
        %v6546 = vsel %vm568, %v6545, 0.0
        %6547 = vadd.xlane.f32.xlu0 %v6546
        %v6548 = vpop.xlane.xlu0 %6547
        %v6549 = vmul.f32 %v6548, %v1626
        %v6550 = vadd.f32 %v6549, 1e-05
        %v6551 = vrsqrt.pop %v6550
        %v6552 = vmul.f32 %v6544, %v6551
        %6554 = vrot.lane.b32.xlu0 %v5808, 96
        %v6555 = vpop.permute.xlu0 %6554
        %v6557 = vmul.f32 %v6552, %v6555
        %6558 = vrot.lane.b32.xlu0 %v5808, 64
        %v6559 = vpop.permute.xlu0 %6558
        %v6561 = vadd.f32 %v6557, %v6559
        %s6562 = scalar_lea.vmem %s7, 96
        %v6563 = vld [vmem:[%s6562] sm:$0xff]
        %v6564 = vld [vmem:[%s6562 + $0x8] sm:$0xff]
        %v6565 = vld [vmem:[%s6562 + $0x10] sm:$0xff]
        %v6566 = vld [vmem:[%s6562 + $0x18] sm:$0xff]
        %s6567 = scalar_lea.vmem %s8, 384
        %v6568 = vld [vmem:[%s6567] sm:$0xff]
        %v6569 = vld [vmem:[%s6567 + $0x8] sm:$0xff]
        %v6570 = vld [vmem:[%s6567 + $0x10] sm:$0xff]
        %v6571 = vld [vmem:[%s6567 + $0x18] sm:$0xff]
        %v6572 = vld [vmem:[%s6567 + $0x20] sm:$0xff]
        %v6573 = vld [vmem:[%s6567 + $0x28] sm:$0xff]
        %v6574 = vld [vmem:[%s6567 + $0x30] sm:$0xff]
        %v6575 = vld [vmem:[%s6567 + $0x38] sm:$0xff]
        %v6576 = vld [vmem:[%s6567 + $0x40] sm:$0xff]
        %v6577 = vld [vmem:[%s6567 + $0x48] sm:$0xff]
        %v6578 = vld [vmem:[%s6567 + $0x50] sm:$0xff]
        %v6579 = vld [vmem:[%s6567 + $0x58] sm:$0xff]
        %v6580 = vld [vmem:[%s6567 + $0x60] sm:$0xff]
        %v6581 = vld [vmem:[%s6567 + $0x68] sm:$0xff]
        %v6582 = vld [vmem:[%s6567 + $0x70] sm:$0xff]
        %v6583 = vld [vmem:[%s6567 + $0x78] sm:$0xff]
        %s6584 = scalar_lea.vmem %s9, 6
        %v6585 = vld [vmem:[%s6584] sm:$0x3]
        %v6586 = vlaneseq
        %v6587 = vshrl.u32 %v6586, 7
        %v6588 = vsub.s32 0, %v6587
        %v6589 = vrot.slane %v6585, %v6588
        %v6591 = vsel %vm568, %v6561, 0
        %6593 = vmatprep.subr.mxu0 0.0
        %6594 = vmatpush1.msra.mxu0 %v6563
        %6595 = vmatprep.subr.mxu0 0.0
        %6596 = vmatpush1.msra.mxu0 %v6564
        %6597 = vmatprep.subr.mxu0 0.0
        %6598 = vmatpush1.msra.mxu0 %v6565
        %6599 = vmatprep.subr.mxu0 0.0
        %6600 = vmatpush1.msra.mxu0 %v6566
        %6601 = vmatprep.subr.mxu0 0.0
        %6602 = vmatpush1.msra.mxu0 0.0
        %6603 = vmatprep.subr.mxu0 0.0
        %6604 = vmatpush1.msra.mxu0 0.0
        %6605 = vmatprep.subr.mxu0 0.0
        %6606 = vmatpush1.msra.mxu0 0.0
        %6607 = vmatprep.subr.mxu0 0.0
        %6608 = vmatpush1.msra.mxu0 0.0
        %6609 = vmatprep.subr.mxu0 0.0
        %6610 = vmatpush1.msra.mxu0 0.0
        %6611 = vmatprep.subr.mxu0 0.0
        %6612 = vmatpush1.msra.mxu0 0.0
        %6613 = vmatprep.subr.mxu0 0.0
        %6614 = vmatpush1.msra.mxu0 0.0
        %6615 = vmatprep.subr.mxu0 0.0
        %6616 = vmatpush1.msra.mxu0 0.0
        %6617 = vmatprep.subr.mxu0 0.0
        %6618 = vmatpush1.msra.mxu0 0.0
        %6619 = vmatprep.subr.mxu0 0.0
        %6620 = vmatpush1.msra.mxu0 0.0
        %6621 = vmatprep.subr.mxu0 0.0
        %6622 = vmatpush1.msra.mxu0 0.0
        %6623 = vmatprep.subr.mxu0 0.0
        %6624 = vmatpush1.msra.mxu0 0.0
        %6625 = vmatprep.subr.mxu0 0.0
        %6626 = vmatpush1.msra.mxu0 0.0
        %6627 = vmatprep.subr.mxu0 0.0
        %6628 = vmatpush1.msra.mxu0 0.0
        %6629 = vmatprep.subr.mxu0 0.0
        %6630 = vmatpush1.msra.mxu0 0.0
        %6631 = vmatprep.subr.mxu0 0.0
        %6632 = vmatpush1.msra.mxu0 0.0
        %6633 = vmatprep.subr.mxu0 0.0
        %6634 = vmatpush1.msra.mxu0 0.0
        %6635 = vmatprep.subr.mxu0 0.0
        %6636 = vmatpush1.msra.mxu0 0.0
        %6637 = vmatprep.subr.mxu0 0.0
        %6638 = vmatpush1.msra.mxu0 0.0
        %6639 = vmatprep.subr.mxu0 0.0
        %6640 = vmatpush1.msra.mxu0 0.0
        %6641 = vmatprep.subr.mxu0 0.0
        %6642 = vmatpush1.msra.mxu0 0.0
        %6643 = vmatprep.subr.mxu0 0.0
        %6644 = vmatpush1.msra.mxu0 0.0
        %6645 = vmatprep.subr.mxu0 0.0
        %6646 = vmatpush1.msra.mxu0 0.0
        %6647 = vmatprep.subr.mxu0 0.0
        %6648 = vmatpush1.msra.mxu0 0.0
        %6649 = vmatprep.subr.mxu0 0.0
        %6650 = vmatpush1.msra.mxu0 0.0
        %6651 = vmatprep.subr.mxu0 0.0
        %6652 = vmatpush1.msra.mxu0 0.0
        %6653 = vmatprep.subr.mxu0 0.0
        %6654 = vmatpush1.msra.mxu0 0.0
        %6655 = vmatprep.subr.mxu0 0.0
        %6656 = vmatpush1.msra.mxu0 0.0
        %6657 = vmatprep.mubr.f32.mxu0 0.0
        %6658 = vmatmul.mubr.f32.gmra.mrb[0].mxu0 %v6591
        %v6659 = vpop.f32.mrb[0].mxu0
        %v6660 = vadd.f32 %v6589, %v6659
        %v6661 = vpop.f32.mrb[0].mxu0
        %6662 = vdwg.mxu0
        %v6663 = vmax.f32 %v6660, 0.0
        %v6664 = vlaneseq
        %v6665 = vshrl.u32 %v6664, 7
        %v6666 = vsub.s32 1, %v6665
        %v6667 = vrot.slane %v6585, %v6666
        %6668 = vmatprep.subr.mxu0 0.0
        %6669 = vmatpush1.msra.mxu0 %v6568
        %6670 = vmatprep.subr.mxu0 0.0
        %6671 = vmatpush1.msra.mxu0 %v6569
        %6672 = vmatprep.subr.mxu0 0.0
        %6673 = vmatpush1.msra.mxu0 %v6570
        %6674 = vmatprep.subr.mxu0 0.0
        %6675 = vmatpush1.msra.mxu0 %v6571
        %6676 = vmatprep.subr.mxu0 0.0
        %6677 = vmatpush1.msra.mxu0 %v6572
        %6678 = vmatprep.subr.mxu0 0.0
        %6679 = vmatpush1.msra.mxu0 %v6573
        %6680 = vmatprep.subr.mxu0 0.0
        %6681 = vmatpush1.msra.mxu0 %v6574
        %6682 = vmatprep.subr.mxu0 0.0
        %6683 = vmatpush1.msra.mxu0 %v6575
        %6684 = vmatprep.subr.mxu0 0.0
        %6685 = vmatpush1.msra.mxu0 %v6576
        %6686 = vmatprep.subr.mxu0 0.0
        %6687 = vmatpush1.msra.mxu0 %v6577
        %6688 = vmatprep.subr.mxu0 0.0
        %6689 = vmatpush1.msra.mxu0 %v6578
        %6690 = vmatprep.subr.mxu0 0.0
        %6691 = vmatpush1.msra.mxu0 %v6579
        %6692 = vmatprep.subr.mxu0 0.0
        %6693 = vmatpush1.msra.mxu0 %v6580
        %6694 = vmatprep.subr.mxu0 0.0
        %6695 = vmatpush1.msra.mxu0 %v6581
        %6696 = vmatprep.subr.mxu0 0.0
        %6697 = vmatpush1.msra.mxu0 %v6582
        %6698 = vmatprep.subr.mxu0 0.0
        %6699 = vmatpush1.msra.mxu0 %v6583
        %6700 = vmatprep.subr.mxu0 0.0
        %6701 = vmatpush1.msra.mxu0 0.0
        %6702 = vmatprep.subr.mxu0 0.0
        %6703 = vmatpush1.msra.mxu0 0.0
        %6704 = vmatprep.subr.mxu0 0.0
        %6705 = vmatpush1.msra.mxu0 0.0
        %6706 = vmatprep.subr.mxu0 0.0
        %6707 = vmatpush1.msra.mxu0 0.0
        %6708 = vmatprep.subr.mxu0 0.0
        %6709 = vmatpush1.msra.mxu0 0.0
        %6710 = vmatprep.subr.mxu0 0.0
        %6711 = vmatpush1.msra.mxu0 0.0
        %6712 = vmatprep.subr.mxu0 0.0
        %6713 = vmatpush1.msra.mxu0 0.0
        %6714 = vmatprep.subr.mxu0 0.0
        %6715 = vmatpush1.msra.mxu0 0.0
        %6716 = vmatprep.subr.mxu0 0.0
        %6717 = vmatpush1.msra.mxu0 0.0
        %6718 = vmatprep.subr.mxu0 0.0
        %6719 = vmatpush1.msra.mxu0 0.0
        %6720 = vmatprep.subr.mxu0 0.0
        %6721 = vmatpush1.msra.mxu0 0.0
        %6722 = vmatprep.subr.mxu0 0.0
        %6723 = vmatpush1.msra.mxu0 0.0
        %6724 = vmatprep.subr.mxu0 0.0
        %6725 = vmatpush1.msra.mxu0 0.0
        %6726 = vmatprep.subr.mxu0 0.0
        %6727 = vmatpush1.msra.mxu0 0.0
        %6728 = vmatprep.subr.mxu0 0.0
        %6729 = vmatpush1.msra.mxu0 0.0
        %6730 = vmatprep.subr.mxu0 0.0
        %6731 = vmatpush1.msra.mxu0 0.0
        %6732 = vmatprep.mubr.f32.mxu0 0.0
        %6733 = vmatmul.mubr.f32.gmra.mrb[0].mxu0 %v6663
        %v6734 = vpop.f32.mrb[0].mxu0
        %v6735 = vadd.f32 %v6667, %v6734
        %v6736 = vpop.f32.mrb[0].mxu0
        %6737 = vdwg.mxu0
        %v6738 = vadd.f32 %v6735, %v6561
        %v6739 = vsel %vm568, %v6738, 0.0
        %6740 = vadd.xlane.f32.xlu0 %v6739
        %v6741 = vpop.xlane.xlu0 %6740
        %v6742 = vmul.f32 %v6741, %v1626
        %v6743 = vsub.f32 %v6738, %v6742
        %v6744 = vmul.f32 %v6743, %v6743
        %v6745 = vsel %vm568, %v6744, 0.0
        %6746 = vadd.xlane.f32.xlu0 %v6745
        %v6747 = vpop.xlane.xlu0 %6746
        %v6748 = vmul.f32 %v6747, %v1626
        %v6749 = vadd.f32 %v6748, 1e-05
        %v6750 = vrsqrt.pop %v6749
        %v6751 = vmul.f32 %v6743, %v6750
        %6753 = vrot.lane.b32.xlu0 %v6667, 96
        %v6754 = vpop.permute.xlu0 %6753
        %v6756 = vmul.f32 %v6751, %v6754
        %6757 = vrot.lane.b32.xlu0 %v6667, 64
        %v6758 = vpop.permute.xlu0 %6757
        %v6760 = vadd.f32 %v6756, %v6758
        %v6761 = vld [vmem:[%s10] sm:$0xff]
        %v6762 = vld [vmem:[%s10 + $0x8] sm:$0xff]
        %v6763 = vld [vmem:[%s10 + $0x10] sm:$0xff]
        %v6764 = vld [vmem:[%s10 + $0x18] sm:$0xff]
        %v6765 = vld [vmem:[%s10 + $0x20] sm:$0xff]
        %v6766 = vld [vmem:[%s10 + $0x28] sm:$0xff]
        %v6767 = vld [vmem:[%s10 + $0x30] sm:$0xff]
        %v6768 = vld [vmem:[%s10 + $0x38] sm:$0xff]
        %v6769 = vld [vmem:[%s11] sm:$0x3]
        %v6771 = vlaneseq
        %v6772 = vshrl.u32 %v6771, 7
        %v6773 = vsub.s32 0, %v6772
        %v6774 = vrot.slane %v6769, %v6773
        %v6777 = vsel %vm568, %v6760, 0
        %6779 = vmatprep.subr.mxu0 0.0
        %6780 = vmatpush1.msra.mxu0 %v6761
        %6781 = vmatprep.subr.mxu0 0.0
        %6782 = vmatpush1.msra.mxu0 %v6763
        %6783 = vmatprep.subr.mxu0 0.0
        %6784 = vmatpush1.msra.mxu0 %v6765
        %6785 = vmatprep.subr.mxu0 0.0
        %6786 = vmatpush1.msra.mxu0 %v6767
        %6787 = vmatprep.subr.mxu0 0.0
        %6788 = vmatpush1.msra.mxu0 0.0
        %6789 = vmatprep.subr.mxu0 0.0
        %6790 = vmatpush1.msra.mxu0 0.0
        %6791 = vmatprep.subr.mxu0 0.0
        %6792 = vmatpush1.msra.mxu0 0.0
        %6793 = vmatprep.subr.mxu0 0.0
        %6794 = vmatpush1.msra.mxu0 0.0
        %6795 = vmatprep.subr.mxu0 0.0
        %6796 = vmatpush1.msra.mxu0 0.0
        %6797 = vmatprep.subr.mxu0 0.0
        %6798 = vmatpush1.msra.mxu0 0.0
        %6799 = vmatprep.subr.mxu0 0.0
        %6800 = vmatpush1.msra.mxu0 0.0
        %6801 = vmatprep.subr.mxu0 0.0
        %6802 = vmatpush1.msra.mxu0 0.0
        %6803 = vmatprep.subr.mxu0 0.0
        %6804 = vmatpush1.msra.mxu0 0.0
        %6805 = vmatprep.subr.mxu0 0.0
        %6806 = vmatpush1.msra.mxu0 0.0
        %6807 = vmatprep.subr.mxu0 0.0
        %6808 = vmatpush1.msra.mxu0 0.0
        %6809 = vmatprep.subr.mxu0 0.0
        %6810 = vmatpush1.msra.mxu0 0.0
        %6811 = vmatprep.subr.mxu0 0.0
        %6812 = vmatpush1.msra.mxu0 0.0
        %6813 = vmatprep.subr.mxu0 0.0
        %6814 = vmatpush1.msra.mxu0 0.0
        %6815 = vmatprep.subr.mxu0 0.0
        %6816 = vmatpush1.msra.mxu0 0.0
        %6817 = vmatprep.subr.mxu0 0.0
        %6818 = vmatpush1.msra.mxu0 0.0
        %6819 = vmatprep.subr.mxu0 0.0
        %6820 = vmatpush1.msra.mxu0 0.0
        %6821 = vmatprep.subr.mxu0 0.0
        %6822 = vmatpush1.msra.mxu0 0.0
        %6823 = vmatprep.subr.mxu0 0.0
        %6824 = vmatpush1.msra.mxu0 0.0
        %6825 = vmatprep.subr.mxu0 0.0
        %6826 = vmatpush1.msra.mxu0 0.0
        %6827 = vmatprep.subr.mxu0 0.0
        %6828 = vmatpush1.msra.mxu0 0.0
        %6829 = vmatprep.subr.mxu0 0.0
        %6830 = vmatpush1.msra.mxu0 0.0
        %6831 = vmatprep.subr.mxu0 0.0
        %6832 = vmatpush1.msra.mxu0 0.0
        %6833 = vmatprep.subr.mxu0 0.0
        %6834 = vmatpush1.msra.mxu0 0.0
        %6835 = vmatprep.subr.mxu0 0.0
        %6836 = vmatpush1.msra.mxu0 0.0
        %6837 = vmatprep.subr.mxu0 0.0
        %6838 = vmatpush1.msra.mxu0 0.0
        %6839 = vmatprep.subr.mxu0 0.0
        %6840 = vmatpush1.msra.mxu0 0.0
        %6841 = vmatprep.subr.mxu0 0.0
        %6842 = vmatpush1.msra.mxu0 0.0
        %6843 = vmatprep.mubr.f32.mxu0 0.0
        %6844 = vmatmul.mubr.f32.gmra.mrb[0].mxu0 %v6777
        %v6845 = vpop.f32.mrb[0].mxu0
        %v6846 = vadd.f32 %v6774, %v6845
        %v6847 = vpop.f32.mrb[0].mxu0
        %6848 = vdwg.mxu0
        %v6849 = vmax.f32 %v6846, 0.0
        %v6850 = vlaneseq
        %v6851 = vshrl.u32 %v6850, 7
        %v6852 = vsub.s32 1, %v6851
        %v6853 = vrot.slane %v6769, %v6852
        %6862 = vrot.lane.b32.xlu0 %v6761, 96
        %v6863 = vpop.permute.xlu0 %6862
        %6864 = vrot.lane.b32.xlu0 %v6762, 96
        %v6865 = vpop.permute.xlu0 %6864
        %6866 = vrot.lane.b32.xlu0 %v6763, 96
        %v6867 = vpop.permute.xlu0 %6866
        %6868 = vrot.lane.b32.xlu0 %v6764, 96
        %v6869 = vpop.permute.xlu0 %6868
        %6870 = vrot.lane.b32.xlu0 %v6765, 96
        %v6871 = vpop.permute.xlu0 %6870
        %6872 = vrot.lane.b32.xlu0 %v6766, 96
        %v6873 = vpop.permute.xlu0 %6872
        %6874 = vrot.lane.b32.xlu0 %v6767, 96
        %v6875 = vpop.permute.xlu0 %6874
        %6876 = vrot.lane.b32.xlu0 %v6768, 96
        %v6877 = vpop.permute.xlu0 %6876
        %vm6878 = vcmask 785408
        %v6879 = vsel %vm6878, %v6863, %v6865
        %v6880 = vsel %vm6878, %v6867, %v6869
        %v6881 = vsel %vm6878, %v6871, %v6873
        %v6882 = vsel %vm6878, %v6875, %v6877
        %6887 = vrot.lane.b32.xlu0 %v6774, 96
        %v6888 = vpop.permute.xlu0 %6887
        %6889 = vrot.lane.b32.xlu0 %v6853, 96
        %v6890 = vpop.permute.xlu0 %6889
        %v6891 = vsel %vm6878, %v6888, %v6890
        %v6894 = vsel %vm568, %v6849, 0
        %6896 = vmatprep.subr.mxu0 0.0
        %6897 = vmatpush1.msra.mxu0 %v6879
        %6898 = vmatprep.subr.mxu0 0.0
        %6899 = vmatpush1.msra.mxu0 %v6880
        %6900 = vmatprep.subr.mxu0 0.0
        %6901 = vmatpush1.msra.mxu0 %v6881
        %6902 = vmatprep.subr.mxu0 0.0
        %6903 = vmatpush1.msra.mxu0 %v6882
        %6904 = vmatprep.subr.mxu0 0.0
        %6905 = vmatpush1.msra.mxu0 0.0
        %6906 = vmatprep.subr.mxu0 0.0
        %6907 = vmatpush1.msra.mxu0 0.0
        %6908 = vmatprep.subr.mxu0 0.0
        %6909 = vmatpush1.msra.mxu0 0.0
        %6910 = vmatprep.subr.mxu0 0.0
        %6911 = vmatpush1.msra.mxu0 0.0
        %6912 = vmatprep.subr.mxu0 0.0
        %6913 = vmatpush1.msra.mxu0 0.0
        %6914 = vmatprep.subr.mxu0 0.0
        %6915 = vmatpush1.msra.mxu0 0.0
        %6916 = vmatprep.subr.mxu0 0.0
        %6917 = vmatpush1.msra.mxu0 0.0
        %6918 = vmatprep.subr.mxu0 0.0
        %6919 = vmatpush1.msra.mxu0 0.0
        %6920 = vmatprep.subr.mxu0 0.0
        %6921 = vmatpush1.msra.mxu0 0.0
        %6922 = vmatprep.subr.mxu0 0.0
        %6923 = vmatpush1.msra.mxu0 0.0
        %6924 = vmatprep.subr.mxu0 0.0
        %6925 = vmatpush1.msra.mxu0 0.0
        %6926 = vmatprep.subr.mxu0 0.0
        %6927 = vmatpush1.msra.mxu0 0.0
        %6928 = vmatprep.subr.mxu0 0.0
        %6929 = vmatpush1.msra.mxu0 0.0
        %6930 = vmatprep.subr.mxu0 0.0
        %6931 = vmatpush1.msra.mxu0 0.0
        %6932 = vmatprep.subr.mxu0 0.0
        %6933 = vmatpush1.msra.mxu0 0.0
        %6934 = vmatprep.subr.mxu0 0.0
        %6935 = vmatpush1.msra.mxu0 0.0
        %6936 = vmatprep.subr.mxu0 0.0
        %6937 = vmatpush1.msra.mxu0 0.0
        %6938 = vmatprep.subr.mxu0 0.0
        %6939 = vmatpush1.msra.mxu0 0.0
        %6940 = vmatprep.subr.mxu0 0.0
        %6941 = vmatpush1.msra.mxu0 0.0
        %6942 = vmatprep.subr.mxu0 0.0
        %6943 = vmatpush1.msra.mxu0 0.0
        %6944 = vmatprep.subr.mxu0 0.0
        %6945 = vmatpush1.msra.mxu0 0.0
        %6946 = vmatprep.subr.mxu0 0.0
        %6947 = vmatpush1.msra.mxu0 0.0
        %6948 = vmatprep.subr.mxu0 0.0
        %6949 = vmatpush1.msra.mxu0 0.0
        %6950 = vmatprep.subr.mxu0 0.0
        %6951 = vmatpush1.msra.mxu0 0.0
        %6952 = vmatprep.subr.mxu0 0.0
        %6953 = vmatpush1.msra.mxu0 0.0
        %6954 = vmatprep.subr.mxu0 0.0
        %6955 = vmatpush1.msra.mxu0 0.0
        %6956 = vmatprep.subr.mxu0 0.0
        %6957 = vmatpush1.msra.mxu0 0.0
        %6958 = vmatprep.subr.mxu0 0.0
        %6959 = vmatpush1.msra.mxu0 0.0
        %6960 = vmatprep.mubr.f32.mxu0 0.0
        %6961 = vmatmul.mubr.f32.gmra.mrb[0].mxu0 %v6894
        %v6962 = vpop.f32.mrb[0].mxu0
        %v6963 = vadd.f32 %v6891, %v6962
        %v6964 = vpop.f32.mrb[0].mxu0
        %6965 = vdwg.mxu0
        %6966 = vst [vmem:[%s430] sm:$0xff] %v6963
        %s6967 = sand.u32 %s301, 1
        %s6968 = scalar_lea.sflag [#allocation3], %s6967
        %s6969 = sand.u32 %s301, 1
        %s6970 = smul.addr %s6969, 8
        %s6971 = scalar_lea.vmem [#allocation2], %s6970
        // Predicated region
        $region69: #{transformer_forward.1} parent=67 // pred_check
          %p6972 = pneg %p311
        $region70: #{transformer_forward.1} parent=67 // pred_check_branch
          %6974 = sbr.rel (%p6972) target = $region72
        $region71: #{transformer_forward.1} parent=67 // pred_region
          %s6976 = ssub.s32 128, 128
          %6977 = vsyncadd %s6968, %s6976
          %s6978 = smul.addr %s26, 128
          %s6979 = scalar_lea.hbm %s12, %s6978
          %s6981 = sshll.u32 %s6971, 4
          %s6982 = int_to_ptr.vmem [resolvable:$true] %s6981
          %6984 = dma.vmem_to_hbm [thread:$0]  %s6982, 128, %s6979, %s6968
        $region72: #{transformer_forward.1} parent=67 // pred_fallthru
          _
      $region68: #{transformer_forward.1} parent=5 // pred_fallthru
        _
      %p6985 = scmp.le.s32.totalorder 2, %s21
      // Predicated region
      $region73: #{transformer_forward.1} parent=5 // pred_check
        %p6986 = pneg %p6985
      $region74: #{transformer_forward.1} parent=5 // pred_check_branch
        %6988 = sbr.rel (%p6986) target = $region76
      $region75: #{transformer_forward.1} parent=5 // pred_region
        %s6989 = ssub.s32 %s21, 2
        // Predicated region
        $region77: #{transformer_forward.1} parent=75 // pred_check
          %p6990 = pneg %p317
        $region78: #{transformer_forward.1} parent=75 // pred_check_branch
          %6992 = sbr.rel (%p6990) target = $region80
        $region79: #{transformer_forward.1} parent=75 // pred_region
          %s6993 = sand.u32 %s302, 1
          %s6994 = scalar_lea.sflag [#allocation3], %s6993
          %s6995 = sand.u32 %s302, 1
          %s6996 = smul.addr %s6995, 8
          %s6997 = scalar_lea.vmem [#allocation2], %s6996
          %6998 = dma.done %s6994, 128
        $region80: #{transformer_forward.1} parent=75 // pred_fallthru
          _
      $region76: #{transformer_forward.1} parent=5 // pred_fallthru
        _
    $region6: #{transformer_forward.1} parent=1 // loop_footer
      %s25 = sadd.s32 1, %s21
    $region7: #{transformer_forward.1} parent=1 // loop_footer_branch
      %20 = sbr.rel target = $region3
    $region8: #{transformer_forward.1} parent=1 // loop_exit
      _
    %6999 = vsyncpa [#allocation3], 1
    %s7000 = scalar_lea.sflag [#allocation3], 1
    %7001 = vsyncpa %s7000, 1

</llo_original>
